<compile_context>
chip_gen: v7x
topology: tpu7x:2x2x1
jax: 0.10.0
libtpu: 0.0.40
codegen_flags: <defaults>
</compile_context>

<pallas_src>
import functools

import jax
import jax.numpy as jnp
from jax.experimental import pallas as pl
from jax.experimental.pallas import tpu as pltpu


def _round_up(n, m):
    return ((n + m - 1) // m) * m


def _pad_to(x, target, axis):
    pad = target - x.shape[axis]
    if pad == 0:
        return x
    widths = [(0, 0)] * x.ndim
    widths[axis] = (0, pad)
    return jnp.pad(x, widths)


def _fused_mlp_kernel(x_ref, w1_ref, b1_ref, w2_ref, b2_ref, w3_ref, b3_ref,
                      w4_ref, b4_ref, o_ref, acc_ref):
    k = pl.program_id(0)

    @pl.when(k == 0)
    def _():
        acc_ref[...] = jnp.zeros_like(acc_ref)

    # Layer 1: partial matmul over the K grid axis (bf16 MXU, f32 accumulate).
    acc_ref[...] += jnp.dot(
        x_ref[...].astype(jnp.bfloat16), w1_ref[...],
        preferred_element_type=jnp.float32)

    # On the last K step: bias+ReLU for layer 1, then layers 2-4 fully in VMEM.
    @pl.when(k == pl.num_programs(0) - 1)
    def _():
        h = jnp.maximum(acc_ref[...] + b1_ref[...], 0.0)
        h = jnp.maximum(
            jnp.dot(h.astype(jnp.bfloat16), w2_ref[...],
                    preferred_element_type=jnp.float32) + b2_ref[...], 0.0)
        h = jnp.maximum(
            jnp.dot(h.astype(jnp.bfloat16), w3_ref[...],
                    preferred_element_type=jnp.float32) + b3_ref[...], 0.0)
        h = jnp.maximum(
            jnp.dot(h.astype(jnp.bfloat16), w4_ref[...],
                    preferred_element_type=jnp.float32) + b4_ref[...], 0.0)
        o_ref[...] = h.astype(o_ref.dtype)


def fused_mlp(x_p, ws, bs, *, tk=1152):
    """x_p:[Mp,K1] f32 (K1 % tk == 0); ws bf16 [Kin,Nout]; bs f32 [1,Nout]."""
    Mp, K1 = x_p.shape
    N1 = ws[0].shape[1]
    N2 = ws[1].shape[1]
    N3 = ws[2].shape[1]
    N4 = ws[3].shape[1]
    assert K1 % tk == 0
    grid = (K1 // tk,)

    return pl.pallas_call(
        _fused_mlp_kernel,
        out_shape=jax.ShapeDtypeStruct((Mp, N4), jnp.float32),
        grid_spec=pltpu.PrefetchScalarGridSpec(
            num_scalar_prefetch=0,
            grid=grid,
            in_specs=[
                pl.BlockSpec((Mp, tk), lambda k: (0, k)),      # x chunk
                pl.BlockSpec((tk, N1), lambda k: (k, 0)),      # w1 chunk (streamed)
                pl.BlockSpec((1, N1), lambda k: (0, 0)),       # b1 (resident)
                pl.BlockSpec((N1, N2), lambda k: (0, 0)),      # w2 (resident)
                pl.BlockSpec((1, N2), lambda k: (0, 0)),       # b2
                pl.BlockSpec((N2, N3), lambda k: (0, 0)),      # w3 (resident)
                pl.BlockSpec((1, N3), lambda k: (0, 0)),       # b3
                pl.BlockSpec((N3, N4), lambda k: (0, 0)),      # w4 (resident)
                pl.BlockSpec((1, N4), lambda k: (0, 0)),       # b4
            ],
            out_specs=pl.BlockSpec((Mp, N4), lambda k: (0, 0)),
            scratch_shapes=[pltpu.VMEM((Mp, N1), jnp.float32)],
        ),
        compiler_params=pltpu.CompilerParams(
            dimension_semantics=("arbitrary",),      # K is a reduction axis
            vmem_limit_bytes=32 * 1024 * 1024,       # ~13 MiB used; safe on v5e/v6e/v7x
        ),
    )(x_p, ws[0], bs[0], ws[1], bs[1], ws[2], bs[2], ws[3], bs[3])


@functools.partial(jax.jit, static_argnames=("num_class",))
def mlp_forward(x, ws, bs, *, num_class):
    """Whole forward (pad -> fused kernel -> slice) in one jit / one dispatch."""
    M, K = x.shape
    Mp = _round_up(M, 8)
    Kp = ws[0].shape[0]
    x_p = _pad_to(_pad_to(x, Mp, 0), Kp, 1)
    out = fused_mlp(x_p, ws, bs)
    return out[:M, :num_class]


def init_linear_params(key, in_features, out_features):
    """Deterministic init matching torch.nn.Linear default (uniform +/- 1/sqrt(fan_in))."""
    kw, kb = jax.random.split(key)
    bound = 1.0 / jnp.sqrt(jnp.float32(in_features))
    # Store weight as [in_features, out_features] (transposed PyTorch layout).
    w = jax.random.uniform(
        kw, (in_features, out_features), jnp.float32, -bound, bound)
    b = jax.random.uniform(kb, (out_features,), jnp.float32, -bound, bound)
    return w, b


class MLPCombinedPallas:
    def __init__(self, num_class, key):
        dims = [(3456, 1000), (1000, 1000), (1000, 1000), (1000, num_class)]
        keys = jax.random.split(key, len(dims))
        self.num_class = num_class
        self.out_dims = [d for _, d in dims]
        ws, bs = [], []
        for (din, dout), k in zip(dims, keys):
            w, b = init_linear_params(k, din, dout)
            din_p = _round_up(din, 128)
            dout_p = _round_up(dout, 128)
            # bf16 weights halve HBM traffic; zero padding keeps padded lanes at 0.
            w_p = _pad_to(_pad_to(w, din_p, 0), dout_p, 1).astype(jnp.bfloat16)
            b_p = _pad_to(b, dout_p, 0).reshape(1, dout_p).astype(jnp.float32)
            ws.append(w_p)
            bs.append(b_p)
        self.ws = tuple(ws)
        self.bs = tuple(bs)

    def __call__(self, x):
        # x: [batch, 3456] float32
        return mlp_forward(x, self.ws, self.bs, num_class=self.num_class)


def reference_forward(model, x):
    """Pure-JAX reference mimicking the kernel's precision (bf16 matmul, f32 acc)."""
    y = x
    din = x.shape[1]
    for w_p, b_p, dout in zip(model.ws, model.bs, model.out_dims):
        w = w_p[:din, :dout]
        b = b_p[0, :dout]
        y = jnp.dot(y.astype(jnp.bfloat16), w,
                    preferred_element_type=jnp.float32) + b
        y = jnp.maximum(y, 0.0)
        din = dout
    return y


if __name__ == "__main__":
    key = jax.random.PRNGKey(0)
    k_param, k_x = jax.random.split(key)

    num_class = 10
    batch = 8
    model = MLPCombinedPallas(num_class, k_param)

    x = jax.random.normal(k_x, (batch, 3456), jnp.float32)

    out = model(x)
    out = jax.block_until_ready(out)

    ref = reference_forward(model, x)
    assert out.shape == (batch, num_class), out.shape
    assert jnp.allclose(out, ref, atol=1e-2, rtol=1e-2), "mismatch vs reference"

    print("KERNEL_OK")
</pallas_src>

<mosaic_0001>
module attributes {stable_mosaic.version = 11 : i64} {
  func.func @_fused_mlp_kernel(%arg0: i32, %arg1: memref<8x1152xf32, #tpu.memory_space<vmem>>, %arg2: memref<1152x1024xbf16, #tpu.memory_space<vmem>>, %arg3: memref<1x1024xf32, #tpu.memory_space<vmem>>, %arg4: memref<1024x1024xbf16, #tpu.memory_space<vmem>>, %arg5: memref<1x1024xf32, #tpu.memory_space<vmem>>, %arg6: memref<1024x1024xbf16, #tpu.memory_space<vmem>>, %arg7: memref<1x1024xf32, #tpu.memory_space<vmem>>, %arg8: memref<1024x128xbf16, #tpu.memory_space<vmem>>, %arg9: memref<1x128xf32, #tpu.memory_space<vmem>>, %arg10: memref<8x128xf32, #tpu.memory_space<vmem>>, %arg11: memref<8x1024xf32, #tpu.memory_space<vmem>>) attributes {dimension_semantics = [#tpu.dimension_semantics<arbitrary>], iteration_bounds = array<i64: 3>, scalar_prefetch = 0 : i64, scratch_operands = 1 : i64, tpu.core_type = #tpu.core_type<tc>, window_params = [{transform_indices = @transform_0, window_bounds = array<i64: 8, 1152>}, {transform_indices = @transform_1, window_bounds = array<i64: 1152, 1024>}, {pipeline_mode = #tpu.pipeline_mode<synchronous>, transform_indices = @transform_2, window_bounds = array<i64: 1, 1024>}, {pipeline_mode = #tpu.pipeline_mode<synchronous>, transform_indices = @transform_3, window_bounds = array<i64: 1024, 1024>}, {pipeline_mode = #tpu.pipeline_mode<synchronous>, transform_indices = @transform_4, window_bounds = array<i64: 1, 1024>}, {pipeline_mode = #tpu.pipeline_mode<synchronous>, transform_indices = @transform_5, window_bounds = array<i64: 1024, 1024>}, {pipeline_mode = #tpu.pipeline_mode<synchronous>, transform_indices = @transform_6, window_bounds = array<i64: 1, 1024>}, {pipeline_mode = #tpu.pipeline_mode<synchronous>, transform_indices = @transform_7, window_bounds = array<i64: 1024, 128>}, {pipeline_mode = #tpu.pipeline_mode<synchronous>, transform_indices = @transform_8, window_bounds = array<i64: 1, 128>}, {pipeline_mode = #tpu.pipeline_mode<synchronous>, transform_indices = @transform_9, window_bounds = array<i64: 8, 128>}]} {
    %c0_i32 = arith.constant 0 : i32
    %0 = arith.cmpi eq, %arg0, %c0_i32 : i32
    %1 = arith.extui %0 : i1 to i32
    %c0_i32_0 = arith.constant 0 : i32
    %2 = arith.cmpi ne, %1, %c0_i32_0 : i32
    scf.if %2 {
      %cst_9 = arith.constant 0.000000e+00 : f32
      %13 = vector.broadcast %cst_9 : f32 to vector<8x1024xf32>
      %c0_10 = arith.constant 0 : index
      %c0_11 = arith.constant 0 : index
      %14 = vector.load %arg11[%c0_10, %c0_11] : memref<8x1024xf32, #tpu.memory_space<vmem>>, vector<8x1024xf32>
      tpu.vector_store %arg11[%c0_10, %c0_11], %13 {strides = array<i32>} : memref<8x1024xf32, #tpu.memory_space<vmem>>, vector<8x1024xf32>,
    } else {
    }
    %c0 = arith.constant 0 : index
    %c0_1 = arith.constant 0 : index
    %3 = vector.load %arg11[%c0, %c0_1] : memref<8x1024xf32, #tpu.memory_space<vmem>>, vector<8x1024xf32>
    %c0_2 = arith.constant 0 : index
    %c0_3 = arith.constant 0 : index
    %4 = vector.load %arg1[%c0_2, %c0_3] : memref<8x1152xf32, #tpu.memory_space<vmem>>, vector<8x1152xf32>
    %5 = arith.truncf %4 : vector<8x1152xf32> to vector<8x1152xbf16>
    %c0_4 = arith.constant 0 : index
    %c0_5 = arith.constant 0 : index
    %6 = vector.load %arg2[%c0_4, %c0_5] : memref<1152x1024xbf16, #tpu.memory_space<vmem>>, vector<1152x1024xbf16>
    %cst = arith.constant dense<0.000000e+00> : vector<8x1024xf32>
    %7 = tpu.matmul %5, %6, %cst {dimension_numbers = #tpu.dot_dimension_numbers<[1], [0], [0], [1], [0, 0, 1, 1], [], []>} : vector<8x1152xbf16>, vector<1152x1024xbf16>, vector<8x1024xf32> -> vector<8x1024xf32>
    %8 = arith.addf %3, %7 : vector<8x1024xf32>
    %c0_6 = arith.constant 0 : index
    %c0_7 = arith.constant 0 : index
    %9 = vector.load %arg11[%c0_6, %c0_7] : memref<8x1024xf32, #tpu.memory_space<vmem>>, vector<8x1024xf32>
    tpu.vector_store %arg11[%c0_6, %c0_7], %8 {strides = array<i32>} : memref<8x1024xf32, #tpu.memory_space<vmem>>, vector<8x1024xf32>,
    %c2_i32 = arith.constant 2 : i32
    %10 = arith.cmpi eq, %arg0, %c2_i32 : i32
    %11 = arith.extui %10 : i1 to i32
    %c0_i32_8 = arith.constant 0 : i32
    %12 = arith.cmpi ne, %11, %c0_i32_8 : i32
    scf.if %12 {
      %c0_9 = arith.constant 0 : index
      %c0_10 = arith.constant 0 : index
      %13 = vector.load %arg11[%c0_9, %c0_10] : memref<8x1024xf32, #tpu.memory_space<vmem>>, vector<8x1024xf32>
      %c0_11 = arith.constant 0 : index
      %c0_12 = arith.constant 0 : index
      %14 = vector.load %arg3[%c0_11, %c0_12] : memref<1x1024xf32, #tpu.memory_space<vmem>>, vector<1x1024xf32>
      %15 = vector.broadcast %14 : vector<1x1024xf32> to vector<8x1024xf32>
      %16 = arith.addf %13, %15 : vector<8x1024xf32>
      %cst_13 = arith.constant 0.000000e+00 : f32
      %17 = vector.broadcast %cst_13 : f32 to vector<8x1024xf32>
      %18 = arith.maximumf %16, %17 : vector<8x1024xf32>
      %19 = arith.truncf %18 : vector<8x1024xf32> to vector<8x1024xbf16>
      %c0_14 = arith.constant 0 : index
      %c0_15 = arith.constant 0 : index
      %20 = vector.load %arg4[%c0_14, %c0_15] : memref<1024x1024xbf16, #tpu.memory_space<vmem>>, vector<1024x1024xbf16>
      %cst_16 = arith.constant dense<0.000000e+00> : vector<8x1024xf32>
      %21 = tpu.matmul %19, %20, %cst_16 {dimension_numbers = #tpu.dot_dimension_numbers<[1], [0], [0], [1], [0, 0, 1, 1], [], []>} : vector<8x1024xbf16>, vector<1024x1024xbf16>, vector<8x1024xf32> -> vector<8x1024xf32>
      %c0_17 = arith.constant 0 : index
      %c0_18 = arith.constant 0 : index
      %22 = vector.load %arg5[%c0_17, %c0_18] : memref<1x1024xf32, #tpu.memory_space<vmem>>, vector<1x1024xf32>
      %23 = vector.broadcast %22 : vector<1x1024xf32> to vector<8x1024xf32>
      %24 = arith.addf %21, %23 : vector<8x1024xf32>
      %cst_19 = arith.constant 0.000000e+00 : f32
      %25 = vector.broadcast %cst_19 : f32 to vector<8x1024xf32>
      %26 = arith.maximumf %24, %25 : vector<8x1024xf32>
      %27 = arith.truncf %26 : vector<8x1024xf32> to vector<8x1024xbf16>
      %c0_20 = arith.constant 0 : index
      %c0_21 = arith.constant 0 : index
      %28 = vector.load %arg6[%c0_20, %c0_21] : memref<1024x1024xbf16, #tpu.memory_space<vmem>>, vector<1024x1024xbf16>
      %cst_22 = arith.constant dense<0.000000e+00> : vector<8x1024xf32>
      %29 = tpu.matmul %27, %28, %cst_22 {dimension_numbers = #tpu.dot_dimension_numbers<[1], [0], [0], [1], [0, 0, 1, 1], [], []>} : vector<8x1024xbf16>, vector<1024x1024xbf16>, vector<8x1024xf32> -> vector<8x1024xf32>
      %c0_23 = arith.constant 0 : index
      %c0_24 = arith.constant 0 : index
      %30 = vector.load %arg7[%c0_23, %c0_24] : memref<1x1024xf32, #tpu.memory_space<vmem>>, vector<1x1024xf32>
      %31 = vector.broadcast %30 : vector<1x1024xf32> to vector<8x1024xf32>
      %32 = arith.addf %29, %31 : vector<8x1024xf32>
      %cst_25 = arith.constant 0.000000e+00 : f32
      %33 = vector.broadcast %cst_25 : f32 to vector<8x1024xf32>
      %34 = arith.maximumf %32, %33 : vector<8x1024xf32>
      %35 = arith.truncf %34 : vector<8x1024xf32> to vector<8x1024xbf16>
      %c0_26 = arith.constant 0 : index
      %c0_27 = arith.constant 0 : index
      %36 = vector.load %arg8[%c0_26, %c0_27] : memref<1024x128xbf16, #tpu.memory_space<vmem>>, vector<1024x128xbf16>
      %cst_28 = arith.constant dense<0.000000e+00> : vector<8x128xf32>
      %37 = tpu.matmul %35, %36, %cst_28 {dimension_numbers = #tpu.dot_dimension_numbers<[1], [0], [0], [1], [0, 0, 1, 1], [], []>} : vector<8x1024xbf16>, vector<1024x128xbf16>, vector<8x128xf32> -> vector<8x128xf32>
      %c0_29 = arith.constant 0 : index
      %c0_30 = arith.constant 0 : index
      %38 = vector.load %arg9[%c0_29, %c0_30] : memref<1x128xf32, #tpu.memory_space<vmem>>, vector<1x128xf32>
      %39 = vector.broadcast %38 : vector<1x128xf32> to vector<8x128xf32>
      %40 = arith.addf %37, %39 : vector<8x128xf32>
      %cst_31 = arith.constant 0.000000e+00 : f32
      %41 = vector.broadcast %cst_31 : f32 to vector<8x128xf32>
      %42 = arith.maximumf %40, %41 : vector<8x128xf32>
      %c0_32 = arith.constant 0 : index
      %c0_33 = arith.constant 0 : index
      %43 = vector.load %arg10[%c0_32, %c0_33] : memref<8x128xf32, #tpu.memory_space<vmem>>, vector<8x128xf32>
      tpu.vector_store %arg10[%c0_32, %c0_33], %42 {strides = array<i32>} : memref<8x128xf32, #tpu.memory_space<vmem>>, vector<8x128xf32>,
    } else {
    }
    return
  }
  func.func @transform_0(%arg0: i32) -> (i32, i32) {
    %c0_i32 = arith.constant 0 : i32
    %c0_i32_0 = arith.constant 0 : i32
    return %c0_i32, %arg0 : i32, i32
  }
  func.func @transform_1(%arg0: i32) -> (i32, i32) {
    %c0_i32 = arith.constant 0 : i32
    %c0_i32_0 = arith.constant 0 : i32
    return %arg0, %c0_i32 : i32, i32
  }
  func.func @transform_2(%arg0: i32) -> (i32, i32) {
    %c0_i32 = arith.constant 0 : i32
    %c0_i32_0 = arith.constant 0 : i32
    %c0_i32_1 = arith.constant 0 : i32
    return %c0_i32, %c0_i32_0 : i32, i32
  }
  func.func @transform_3(%arg0: i32) -> (i32, i32) {
    %c0_i32 = arith.constant 0 : i32
    %c0_i32_0 = arith.constant 0 : i32
    %c0_i32_1 = arith.constant 0 : i32
    return %c0_i32, %c0_i32_0 : i32, i32
  }
  func.func @transform_4(%arg0: i32) -> (i32, i32) {
    %c0_i32 = arith.constant 0 : i32
    %c0_i32_0 = arith.constant 0 : i32
    %c0_i32_1 = arith.constant 0 : i32
    return %c0_i32, %c0_i32_0 : i32, i32
  }
  func.func @transform_5(%arg0: i32) -> (i32, i32) {
    %c0_i32 = arith.constant 0 : i32
    %c0_i32_0 = arith.constant 0 : i32
    %c0_i32_1 = arith.constant 0 : i32
    return %c0_i32, %c0_i32_0 : i32, i32
  }
  func.func @transform_6(%arg0: i32) -> (i32, i32) {
    %c0_i32 = arith.constant 0 : i32
    %c0_i32_0 = arith.constant 0 : i32
    %c0_i32_1 = arith.constant 0 : i32
    return %c0_i32, %c0_i32_0 : i32, i32
  }
  func.func @transform_7(%arg0: i32) -> (i32, i32) {
    %c0_i32 = arith.constant 0 : i32
    %c0_i32_0 = arith.constant 0 : i32
    %c0_i32_1 = arith.constant 0 : i32
    return %c0_i32, %c0_i32_0 : i32, i32
  }
  func.func @transform_8(%arg0: i32) -> (i32, i32) {
    %c0_i32 = arith.constant 0 : i32
    %c0_i32_0 = arith.constant 0 : i32
    %c0_i32_1 = arith.constant 0 : i32
    return %c0_i32, %c0_i32_0 : i32, i32
  }
  func.func @transform_9(%arg0: i32) -> (i32, i32) {
    %c0_i32 = arith.constant 0 : i32
    %c0_i32_0 = arith.constant 0 : i32
    %c0_i32_1 = arith.constant 0 : i32
    return %c0_i32, %c0_i32_0 : i32, i32
  }
}

</mosaic_0001>

<llo_original>
// kernel: mlp_forward.1
$region0: #{mlp_forward.1}
  #allocation0 [shape = 'u32[]', space=smem, size = 0x4, offset = 0x4, fixed_abs, tag = 'smem constant byte address 0x4 - core index']
  #allocation1 [shape = 'u32[144,128]{1,0:T(1,128)}', space=vmem, size = 0x12000, scoped, tag = 'internal scratch']
  #allocation2 [shape = 'f32[8,1024]{1,0:T(8,128)}', space=vmem, size = 0x8000, scoped, tag = 'scratch operand']
  %s0 = inlined_call_operand.hbm [shape: f32[8,3456], index: 0, kind: input, shape index: {}]
  %s1 = inlined_call_operand.hbm [shape: bf16[3456,1024], index: 1, kind: input, shape index: {}]
  %s2 = inlined_call_operand.hbm [shape: f32[1,1024], index: 2, kind: input, shape index: {}]
  %s3 = inlined_call_operand.hbm [shape: bf16[1024,1024], index: 3, kind: input, shape index: {}]
  %s4 = inlined_call_operand.hbm [shape: f32[1,1024], index: 4, kind: input, shape index: {}]
  %s5 = inlined_call_operand.hbm [shape: bf16[1024,1024], index: 5, kind: input, shape index: {}]
  %s6 = inlined_call_operand.hbm [shape: f32[1,1024], index: 6, kind: input, shape index: {}]
  %s7 = inlined_call_operand.hbm [shape: bf16[1024,128], index: 7, kind: input, shape index: {}]
  %s8 = inlined_call_operand.hbm [shape: f32[1,128], index: 8, kind: input, shape index: {}]
  %s9 = inlined_call_operand.hbm [shape: f32[8,128], index: 9, kind: output, shape index: {}]
  %s10 = sld [smem:[#allocation0]]
  $region113: #{mlp_forward.1} parent=0
    _
  %s12 = ssub.s32 1, %s10
  %s13 = scalar_select 0, %s12, %s10
  $region1: #{mlp_forward.1} parent=0
    #allocation3 [shape = 'u8[73728]{0}', space=vmem, size = 0x12000, scoped, tag = 'input window, operand 0']
    #allocation4 [shape = 's32[2]{0}', space=sflag, size = 0x8, scoped, tag = 'scoped memory for mlp_forward.1']
    #allocation5 [shape = 's32[2]{0}', space=sflag, size = 0x8, scoped, tag = 'scoped memory for mlp_forward.1']
    #allocation6 [shape = 'u8[4718592]{0}', space=vmem, size = 0x480000, scoped, tag = 'input window, operand 1']
    #allocation7 [shape = 's32[2]{0}', space=sflag, size = 0x8, scoped, tag = 'scoped memory for mlp_forward.1']
    #allocation8 [shape = 'u8[4096]{0}', space=vmem, size = 0x1000, scoped, tag = 'input window, operand 2, single buffered']
    #allocation9 [shape = 'u8[2097152]{0}', space=vmem, size = 0x200000, scoped, tag = 'input window, operand 3, single buffered']
    #allocation10 [shape = 's32[1]{0}', space=sflag, size = 0x4, scoped, tag = 'scoped memory for mlp_forward.1']
    #allocation11 [shape = 'u8[4096]{0}', space=vmem, size = 0x1000, scoped, tag = 'input window, operand 4, single buffered']
    #allocation12 [shape = 'u8[2097152]{0}', space=vmem, size = 0x200000, scoped, tag = 'input window, operand 5, single buffered']
    #allocation13 [shape = 's32[1]{0}', space=sflag, size = 0x4, scoped, tag = 'scoped memory for mlp_forward.1']
    #allocation14 [shape = 'u8[4096]{0}', space=vmem, size = 0x1000, scoped, tag = 'input window, operand 6, single buffered']
    #allocation15 [shape = 'u8[262144]{0}', space=vmem, size = 0x40000, scoped, tag = 'input window, operand 7, single buffered']
    #allocation16 [shape = 's32[1]{0}', space=sflag, size = 0x4, scoped, tag = 'scoped memory for mlp_forward.1']
    #allocation17 [shape = 'u8[512]{0}', space=vmem, size = 0x400, scoped, tag = 'input window, operand 8, single buffered']
    #allocation18 [shape = 'u8[4096]{0}', space=vmem, size = 0x1000, scoped, tag = 'output window, operand 0, single buffered']
    %14 = vsyncpa [#allocation4], 0
    %s15 = scalar_lea.sflag [#allocation4], 1
    %16 = vsyncpa %s15, 0
    %17 = vsyncpa [#allocation7], 0
    %s18 = scalar_lea.sflag [#allocation7], 1
    %19 = vsyncpa %s18, 0
    %20 = vsyncpa [#allocation10], 0
    %21 = vsyncpa [#allocation13], 0
    %22 = vsyncpa [#allocation16], 0
    %23 = vsyncpa [#allocation5], 0
    loop: start=0, step=1, limit=5
    $region2: #{mlp_forward.1} parent=1 // loop_pre_header
      _
    $region3: #{mlp_forward.1} parent=1 // loop_header
      %s25 = sphi 0, %s29
      %p26 = scmp.ge.s32.totalorder %s25, 5
      %s35 = sphi 0, %s37
      %s38 = sphi 0, %s35
      %s39 = sphi 0, %s38
      %s55 = sphi 0, %s39
      %s61 = sphi 0, %s63
      %s64 = sphi 0, %s61
      %s65 = sphi 0, %s64
      %s81 = sphi 0, %s65
      %s85 = sphi 0, %s85
      %s87 = sphi 0, %s85
      %s88 = sphi 0, %s87
      %s102 = sphi 0, %s88
      %s106 = sphi 0, %s106
      %s108 = sphi 0, %s106
      %s109 = sphi 0, %s108
      %s123 = sphi 0, %s109
      %s127 = sphi 0, %s127
      %s129 = sphi 0, %s127
      %s130 = sphi 0, %s129
      %s144 = sphi 0, %s130
      %s148 = sphi 0, %s148
      %s150 = sphi 0, %s148
      %s151 = sphi 0, %s150
      %s165 = sphi 0, %s151
      %s169 = sphi 0, %s169
      %s171 = sphi 0, %s169
      %s172 = sphi 0, %s171
      %s186 = sphi 0, %s172
      %s190 = sphi 0, %s190
      %s192 = sphi 0, %s190
      %s193 = sphi 0, %s192
      %s207 = sphi 0, %s193
      %s211 = sphi 0, %s211
      %s213 = sphi 0, %s211
      %s214 = sphi 0, %s213
      %s228 = sphi 0, %s214
      %s232 = sphi 0, %s232
      %s234 = sphi 0, %s232
      %s235 = sphi 0, %s234
      %s249 = sphi 0, %s235
    $region4: #{mlp_forward.1} parent=1 // loop_header_branch
      %28 = sbr.rel (%p26) target = $region8
    $region5: #{mlp_forward.1} parent=1 // loop_body
      %s30 = ssub.s32 %s25, 1
      %s31 = ssub.s32 %s25, 2
      %s32 = sadd.s32 %s25, 1
      %s33 = ssub.s32 %s25, %s32
      %p34 = scmp.eq.s32.totalorder %s33, 0
      %s36 = sadd.s32 %s35, 1
      %s37 = scalar_select %p34, %s35, %s36
      %p40 = pneg %p34
      %p41 = scmp.eq.s32.totalorder %s25, 2
      %p42 = por %p40, %p41
      %p43 = scmp.ne.s32.totalorder %s35, %s38
      %p44 = scmp.eq.s32.totalorder %s25, 0
      %p45 = por %p43, %p44
      %p46 = scmp.ne.s32.totalorder %s35, %s38
      %p47 = scmp.eq.s32.totalorder %s30, 2
      %p48 = por %p46, %p47
      %p49 = scmp.ne.s32.totalorder %s38, %s39
      %p50 = scmp.eq.s32.totalorder %s30, 0
      %p51 = por %p49, %p50
      %p52 = scmp.ne.s32.totalorder %s38, %s39
      %p53 = scmp.eq.s32.totalorder %s31, 2
      %p54 = por %p52, %p53
      %p56 = scmp.ne.s32.totalorder %s39, %s55
      %p57 = scmp.eq.s32.totalorder %s31, 0
      %p58 = por %p56, %p57
      %s59 = ssub.s32 %s25, %s32
      %p60 = scmp.eq.s32.totalorder %s59, 0
      %s62 = sadd.s32 %s61, 1
      %s63 = scalar_select %p60, %s61, %s62
      %p66 = pneg %p60
      %p67 = scmp.eq.s32.totalorder %s25, 2
      %p68 = por %p66, %p67
      %p69 = scmp.ne.s32.totalorder %s61, %s64
      %p70 = scmp.eq.s32.totalorder %s25, 0
      %p71 = por %p69, %p70
      %p72 = scmp.ne.s32.totalorder %s61, %s64
      %p73 = scmp.eq.s32.totalorder %s30, 2
      %p74 = por %p72, %p73
      %p75 = scmp.ne.s32.totalorder %s64, %s65
      %p76 = scmp.eq.s32.totalorder %s30, 0
      %p77 = por %p75, %p76
      %p78 = scmp.ne.s32.totalorder %s64, %s65
      %p79 = scmp.eq.s32.totalorder %s31, 2
      %p80 = por %p78, %p79
      %p82 = scmp.ne.s32.totalorder %s65, %s81
      %p83 = scmp.eq.s32.totalorder %s31, 0
      %p84 = por %p82, %p83
      %s86 = sadd.s32 %s85, 1
      %p89 = scmp.eq.s32.totalorder %s25, 2
      %p90 = scmp.ne.s32.totalorder %s85, %s87
      %p91 = scmp.eq.s32.totalorder %s25, 0
      %p92 = por %p90, %p91
      %p93 = scmp.ne.s32.totalorder %s85, %s87
      %p94 = scmp.eq.s32.totalorder %s30, 2
      %p95 = por %p93, %p94
      %p96 = scmp.ne.s32.totalorder %s87, %s88
      %p97 = scmp.eq.s32.totalorder %s30, 0
      %p98 = por %p96, %p97
      %p99 = scmp.ne.s32.totalorder %s87, %s88
      %p100 = scmp.eq.s32.totalorder %s31, 2
      %p101 = por %p99, %p100
      %p103 = scmp.ne.s32.totalorder %s88, %s102
      %p104 = scmp.eq.s32.totalorder %s31, 0
      %p105 = por %p103, %p104
      %s107 = sadd.s32 %s106, 1
      %p110 = scmp.eq.s32.totalorder %s25, 2
      %p111 = scmp.ne.s32.totalorder %s106, %s108
      %p112 = scmp.eq.s32.totalorder %s25, 0
      %p113 = por %p111, %p112
      %p114 = scmp.ne.s32.totalorder %s106, %s108
      %p115 = scmp.eq.s32.totalorder %s30, 2
      %p116 = por %p114, %p115
      %p117 = scmp.ne.s32.totalorder %s108, %s109
      %p118 = scmp.eq.s32.totalorder %s30, 0
      %p119 = por %p117, %p118
      %p120 = scmp.ne.s32.totalorder %s108, %s109
      %p121 = scmp.eq.s32.totalorder %s31, 2
      %p122 = por %p120, %p121
      %p124 = scmp.ne.s32.totalorder %s109, %s123
      %p125 = scmp.eq.s32.totalorder %s31, 0
      %p126 = por %p124, %p125
      %s128 = sadd.s32 %s127, 1
      %p131 = scmp.eq.s32.totalorder %s25, 2
      %p132 = scmp.ne.s32.totalorder %s127, %s129
      %p133 = scmp.eq.s32.totalorder %s25, 0
      %p134 = por %p132, %p133
      %p135 = scmp.ne.s32.totalorder %s127, %s129
      %p136 = scmp.eq.s32.totalorder %s30, 2
      %p137 = por %p135, %p136
      %p138 = scmp.ne.s32.totalorder %s129, %s130
      %p139 = scmp.eq.s32.totalorder %s30, 0
      %p140 = por %p138, %p139
      %p141 = scmp.ne.s32.totalorder %s129, %s130
      %p142 = scmp.eq.s32.totalorder %s31, 2
      %p143 = por %p141, %p142
      %p145 = scmp.ne.s32.totalorder %s130, %s144
      %p146 = scmp.eq.s32.totalorder %s31, 0
      %p147 = por %p145, %p146
      %s149 = sadd.s32 %s148, 1
      %p152 = scmp.eq.s32.totalorder %s25, 2
      %p153 = scmp.ne.s32.totalorder %s148, %s150
      %p154 = scmp.eq.s32.totalorder %s25, 0
      %p155 = por %p153, %p154
      %p156 = scmp.ne.s32.totalorder %s148, %s150
      %p157 = scmp.eq.s32.totalorder %s30, 2
      %p158 = por %p156, %p157
      %p159 = scmp.ne.s32.totalorder %s150, %s151
      %p160 = scmp.eq.s32.totalorder %s30, 0
      %p161 = por %p159, %p160
      %p162 = scmp.ne.s32.totalorder %s150, %s151
      %p163 = scmp.eq.s32.totalorder %s31, 2
      %p164 = por %p162, %p163
      %p166 = scmp.ne.s32.totalorder %s151, %s165
      %p167 = scmp.eq.s32.totalorder %s31, 0
      %p168 = por %p166, %p167
      %s170 = sadd.s32 %s169, 1
      %p173 = scmp.eq.s32.totalorder %s25, 2
      %p174 = scmp.ne.s32.totalorder %s169, %s171
      %p175 = scmp.eq.s32.totalorder %s25, 0
      %p176 = por %p174, %p175
      %p177 = scmp.ne.s32.totalorder %s169, %s171
      %p178 = scmp.eq.s32.totalorder %s30, 2
      %p179 = por %p177, %p178
      %p180 = scmp.ne.s32.totalorder %s171, %s172
      %p181 = scmp.eq.s32.totalorder %s30, 0
      %p182 = por %p180, %p181
      %p183 = scmp.ne.s32.totalorder %s171, %s172
      %p184 = scmp.eq.s32.totalorder %s31, 2
      %p185 = por %p183, %p184
      %p187 = scmp.ne.s32.totalorder %s172, %s186
      %p188 = scmp.eq.s32.totalorder %s31, 0
      %p189 = por %p187, %p188
      %s191 = sadd.s32 %s190, 1
      %p194 = scmp.eq.s32.totalorder %s25, 2
      %p195 = scmp.ne.s32.totalorder %s190, %s192
      %p196 = scmp.eq.s32.totalorder %s25, 0
      %p197 = por %p195, %p196
      %p198 = scmp.ne.s32.totalorder %s190, %s192
      %p199 = scmp.eq.s32.totalorder %s30, 2
      %p200 = por %p198, %p199
      %p201 = scmp.ne.s32.totalorder %s192, %s193
      %p202 = scmp.eq.s32.totalorder %s30, 0
      %p203 = por %p201, %p202
      %p204 = scmp.ne.s32.totalorder %s192, %s193
      %p205 = scmp.eq.s32.totalorder %s31, 2
      %p206 = por %p204, %p205
      %p208 = scmp.ne.s32.totalorder %s193, %s207
      %p209 = scmp.eq.s32.totalorder %s31, 0
      %p210 = por %p208, %p209
      %s212 = sadd.s32 %s211, 1
      %p215 = scmp.eq.s32.totalorder %s25, 2
      %p216 = scmp.ne.s32.totalorder %s211, %s213
      %p217 = scmp.eq.s32.totalorder %s25, 0
      %p218 = por %p216, %p217
      %p219 = scmp.ne.s32.totalorder %s211, %s213
      %p220 = scmp.eq.s32.totalorder %s30, 2
      %p221 = por %p219, %p220
      %p222 = scmp.ne.s32.totalorder %s213, %s214
      %p223 = scmp.eq.s32.totalorder %s30, 0
      %p224 = por %p222, %p223
      %p225 = scmp.ne.s32.totalorder %s213, %s214
      %p226 = scmp.eq.s32.totalorder %s31, 2
      %p227 = por %p225, %p226
      %p229 = scmp.ne.s32.totalorder %s214, %s228
      %p230 = scmp.eq.s32.totalorder %s31, 0
      %p231 = por %p229, %p230
      %s233 = sadd.s32 %s232, 1
      %p236 = scmp.eq.s32.totalorder %s25, 2
      %p237 = scmp.ne.s32.totalorder %s232, %s234
      %p238 = scmp.eq.s32.totalorder %s25, 0
      %p239 = por %p237, %p238
      %p240 = scmp.ne.s32.totalorder %s232, %s234
      %p241 = scmp.eq.s32.totalorder %s30, 2
      %p242 = por %p240, %p241
      %p243 = scmp.ne.s32.totalorder %s234, %s235
      %p244 = scmp.eq.s32.totalorder %s30, 0
      %p245 = por %p243, %p244
      %p246 = scmp.ne.s32.totalorder %s234, %s235
      %p247 = scmp.eq.s32.totalorder %s31, 2
      %p248 = por %p246, %p247
      %p250 = scmp.ne.s32.totalorder %s235, %s249
      %p251 = scmp.eq.s32.totalorder %s31, 0
      %p252 = por %p250, %p251
      %p253 = scmp.le.s32.totalorder 1, %s25
      %p254 = scmp.lt.s32.totalorder %s25, 4
      %p255 = pnand %p253, %p254
      %p256 = pneg %p255
      // Predicated region
      $region9: #{mlp_forward.1} parent=5 // pred_check
        _
      $region10: #{mlp_forward.1} parent=5 // pred_check_branch
        %258 = sbr.rel (%p255) target = $region12
      $region11: #{mlp_forward.1} parent=5 // pred_region
        %s259 = ssub.s32 %s25, 1
        // Predicated region
        $region13: #{mlp_forward.1} parent=11 // pred_check
          %p260 = pneg %p98
        $region14: #{mlp_forward.1} parent=11 // pred_check_branch
          %262 = sbr.rel (%p260) target = $region16
        $region15: #{mlp_forward.1} parent=11 // pred_region
          %s264 = ssub.s32 128, 128
          %265 = vsyncadd [#allocation7], %s264
          %s267 = sshll.u32 [#allocation8], 4
          %s268 = int_to_ptr.vmem [resolvable:$true] %s267
          %270 = dma.hbm_to_vmem [thread:$0]  %s2, 128, %s268, [#allocation7]
        $region16: #{mlp_forward.1} parent=11 // pred_fallthru
          _
        // Predicated region
        $region17: #{mlp_forward.1} parent=11 // pred_check
          %p271 = pneg %p119
        $region18: #{mlp_forward.1} parent=11 // pred_check_branch
          %273 = sbr.rel (%p271) target = $region20
        $region19: #{mlp_forward.1} parent=11 // pred_region
          %s275 = ssub.s32 65536, 65536
          %276 = vsyncadd [#allocation10], %s275
          %s277 = sshll.u32 [#allocation9], 4
          %s278 = int_to_ptr.vmem [resolvable:$true] %s277
          %283 = dma.hbm_to_vmem [thread:$0]  %s3, 65536, %s278, [#allocation10], 512, 512, 32
        $region20: #{mlp_forward.1} parent=11 // pred_fallthru
          _
        // Predicated region
        $region21: #{mlp_forward.1} parent=11 // pred_check
          %p284 = pneg %p140
        $region22: #{mlp_forward.1} parent=11 // pred_check_branch
          %286 = sbr.rel (%p284) target = $region24
        $region23: #{mlp_forward.1} parent=11 // pred_region
          %s288 = ssub.s32 128, 128
          %289 = vsyncadd [#allocation10], %s288
          %s291 = sshll.u32 [#allocation11], 4
          %s292 = int_to_ptr.vmem [resolvable:$true] %s291
          %294 = dma.hbm_to_vmem [thread:$0]  %s4, 128, %s292, [#allocation10]
        $region24: #{mlp_forward.1} parent=11 // pred_fallthru
          _
        // Predicated region
        $region25: #{mlp_forward.1} parent=11 // pred_check
          %p295 = pneg %p161
        $region26: #{mlp_forward.1} parent=11 // pred_check_branch
          %297 = sbr.rel (%p295) target = $region28
        $region27: #{mlp_forward.1} parent=11 // pred_region
          %s299 = ssub.s32 65536, 65536
          %300 = vsyncadd [#allocation13], %s299
          %s301 = sshll.u32 [#allocation12], 4
          %s302 = int_to_ptr.vmem [resolvable:$true] %s301
          %307 = dma.hbm_to_vmem [thread:$0]  %s5, 65536, %s302, [#allocation13], 512, 512, 32
        $region28: #{mlp_forward.1} parent=11 // pred_fallthru
          _
        // Predicated region
        $region29: #{mlp_forward.1} parent=11 // pred_check
          %p308 = pneg %p182
        $region30: #{mlp_forward.1} parent=11 // pred_check_branch
          %310 = sbr.rel (%p308) target = $region32
        $region31: #{mlp_forward.1} parent=11 // pred_region
          %s312 = ssub.s32 128, 128
          %313 = vsyncadd [#allocation13], %s312
          %s315 = sshll.u32 [#allocation14], 4
          %s316 = int_to_ptr.vmem [resolvable:$true] %s315
          %318 = dma.hbm_to_vmem [thread:$0]  %s6, 128, %s316, [#allocation13]
        $region32: #{mlp_forward.1} parent=11 // pred_fallthru
          _
        // Predicated region
        $region33: #{mlp_forward.1} parent=11 // pred_check
          %p319 = pneg %p203
        $region34: #{mlp_forward.1} parent=11 // pred_check_branch
          %321 = sbr.rel (%p319) target = $region36
        $region35: #{mlp_forward.1} parent=11 // pred_region
          %s323 = ssub.s32 8192, 8192
          %324 = vsyncadd [#allocation16], %s323
          %s325 = sshll.u32 [#allocation15], 4
          %s326 = int_to_ptr.vmem [resolvable:$true] %s325
          %331 = dma.hbm_to_vmem [thread:$0]  %s7, 8192, %s326, [#allocation16], 64, 64, 4
        $region36: #{mlp_forward.1} parent=11 // pred_fallthru
          _
        // Predicated region
        $region37: #{mlp_forward.1} parent=11 // pred_check
          %p332 = pneg %p224
        $region38: #{mlp_forward.1} parent=11 // pred_check_branch
          %334 = sbr.rel (%p332) target = $region40
        $region39: #{mlp_forward.1} parent=11 // pred_region
          %s336 = ssub.s32 16, 16
          %337 = vsyncadd [#allocation16], %s336
          %s339 = sshll.u32 [#allocation17], 4
          %s340 = int_to_ptr.vmem [resolvable:$true] %s339
          %342 = dma.hbm_to_vmem [thread:$0]  %s8, 16, %s340, [#allocation16]
        $region40: #{mlp_forward.1} parent=11 // pred_fallthru
          _
      $region12: #{mlp_forward.1} parent=5 // pred_fallthru
        _
      %p343 = scmp.lt.s32.totalorder %s25, 3
      // Predicated region
      $region41: #{mlp_forward.1} parent=5 // pred_check
        %p344 = pneg %p343
      $region42: #{mlp_forward.1} parent=5 // pred_check_branch
        %346 = sbr.rel (%p344) target = $region44
      $region43: #{mlp_forward.1} parent=5 // pred_region
        // Predicated region
        $region45: #{mlp_forward.1} parent=43 // pred_check
          %p347 = pneg %p45
        $region46: #{mlp_forward.1} parent=43 // pred_check_branch
          %349 = sbr.rel (%p347) target = $region48
        $region47: #{mlp_forward.1} parent=43 // pred_region
          %s350 = sand.u32 %s35, 1
          %s351 = scalar_lea.sflag [#allocation4], %s350
          %s352 = sand.u32 %s35, 1
          %s353 = smul.addr %s352, 72
          %s354 = scalar_lea.vmem [#allocation3], %s353
          %s355 = smul.u32 9, %s25
          %s357 = ssub.s32 1152, 1152
          %358 = vsyncadd %s351, %s357
          %s359 = smul.addr %s355, 128
          %s360 = scalar_lea.hbm %s0, %s359
          %s362 = sshll.u32 %s354, 4
          %s363 = int_to_ptr.vmem [resolvable:$true] %s362
          %365 = dma.hbm_to_vmem [thread:$0]  %s360, 1152, %s363, %s351
        $region48: #{mlp_forward.1} parent=43 // pred_fallthru
          _
        // Predicated region
        $region49: #{mlp_forward.1} parent=43 // pred_check
          %p366 = pneg %p71
        $region50: #{mlp_forward.1} parent=43 // pred_check_branch
          %368 = sbr.rel (%p366) target = $region52
        $region51: #{mlp_forward.1} parent=43 // pred_region
          %s369 = sand.u32 %s25, 1
          %s370 = scalar_lea.sflag [#allocation7], %s369
          %s371 = sand.u32 %s61, 1
          %s372 = smul.addr %s371, 4608
          %s373 = scalar_lea.vmem [#allocation6], %s372
          %s374 = smul.u32 144, %s25
          %s376 = ssub.s32 73728, 73728
          %377 = vsyncadd %s370, %s376
          %s378 = smul.addr %s374, 8
          %s379 = smul.addr %s378, 64
          %s380 = scalar_lea.hbm %s1, %s379
          %s381 = sshll.u32 %s373, 4
          %s382 = int_to_ptr.vmem [resolvable:$true] %s381
          %387 = dma.hbm_to_vmem [thread:$0]  %s380, 73728, %s382, %s370, 512, 512, 32
        $region52: #{mlp_forward.1} parent=43 // pred_fallthru
          _
      $region44: #{mlp_forward.1} parent=5 // pred_fallthru
        _
      %p388 = scmp.le.s32.totalorder 1, %s25
      %p389 = scmp.lt.s32.totalorder %s25, 4
      %p390 = pnand %p388, %p389
      %p391 = pneg %p390
      // Predicated region
      $region53: #{mlp_forward.1} parent=5 // pred_check
        _
      $region54: #{mlp_forward.1} parent=5 // pred_check_branch
        %393 = sbr.rel (%p390) target = $region56
      $region55: #{mlp_forward.1} parent=5 // pred_region
        %s394 = ssub.s32 %s25, 1
        %s395 = sand.u32 %s38, 1
        %s396 = scalar_lea.sflag [#allocation4], %s395
        %s397 = sand.u32 %s38, 1
        %s398 = smul.addr %s397, 72
        %s399 = scalar_lea.vmem [#allocation3], %s398
        // Predicated region
        $region57: #{mlp_forward.1} parent=55 // pred_check
          %p400 = pneg %p51
        $region58: #{mlp_forward.1} parent=55 // pred_check_branch
          %402 = sbr.rel (%p400) target = $region60
        $region59: #{mlp_forward.1} parent=55 // pred_region
          %403 = dma.done %s396, 1152
        $region60: #{mlp_forward.1} parent=55 // pred_fallthru
          _
        %s404 = sand.u32 %s30, 1
        %s405 = scalar_lea.sflag [#allocation7], %s404
        %s406 = sand.u32 %s64, 1
        %s407 = smul.addr %s406, 4608
        %s408 = scalar_lea.vmem [#allocation6], %s407
        // Predicated region
        $region61: #{mlp_forward.1} parent=55 // pred_check
          %p409 = pneg %p77
        $region62: #{mlp_forward.1} parent=55 // pred_check_branch
          %411 = sbr.rel (%p409) target = $region64
        $region63: #{mlp_forward.1} parent=55 // pred_region
          %412 = dma.done %s405, 73728
        $region64: #{mlp_forward.1} parent=55 // pred_fallthru
          _
        // Predicated region
        $region65: #{mlp_forward.1} parent=55 // pred_check
          %p413 = pneg %p98
        $region66: #{mlp_forward.1} parent=55 // pred_check_branch
          %415 = sbr.rel (%p413) target = $region68
        $region67: #{mlp_forward.1} parent=55 // pred_region
          %416 = dma.done [#allocation7], 128
        $region68: #{mlp_forward.1} parent=55 // pred_fallthru
          _
        // Predicated region
        $region69: #{mlp_forward.1} parent=55 // pred_check
          %p417 = pneg %p119
        $region70: #{mlp_forward.1} parent=55 // pred_check_branch
          %419 = sbr.rel (%p417) target = $region72
        $region71: #{mlp_forward.1} parent=55 // pred_region
          %420 = dma.done [#allocation10], 65536
        $region72: #{mlp_forward.1} parent=55 // pred_fallthru
          _
        // Predicated region
        $region73: #{mlp_forward.1} parent=55 // pred_check
          %p421 = pneg %p140
        $region74: #{mlp_forward.1} parent=55 // pred_check_branch
          %423 = sbr.rel (%p421) target = $region76
        $region75: #{mlp_forward.1} parent=55 // pred_region
          %424 = dma.done [#allocation10], 128
        $region76: #{mlp_forward.1} parent=55 // pred_fallthru
          _
        // Predicated region
        $region77: #{mlp_forward.1} parent=55 // pred_check
          %p425 = pneg %p161
        $region78: #{mlp_forward.1} parent=55 // pred_check_branch
          %427 = sbr.rel (%p425) target = $region80
        $region79: #{mlp_forward.1} parent=55 // pred_region
          %428 = dma.done [#allocation13], 65536
        $region80: #{mlp_forward.1} parent=55 // pred_fallthru
          _
        // Predicated region
        $region81: #{mlp_forward.1} parent=55 // pred_check
          %p429 = pneg %p182
        $region82: #{mlp_forward.1} parent=55 // pred_check_branch
          %431 = sbr.rel (%p429) target = $region84
        $region83: #{mlp_forward.1} parent=55 // pred_region
          %432 = dma.done [#allocation13], 128
        $region84: #{mlp_forward.1} parent=55 // pred_fallthru
          _
        // Predicated region
        $region85: #{mlp_forward.1} parent=55 // pred_check
          %p433 = pneg %p203
        $region86: #{mlp_forward.1} parent=55 // pred_check_branch
          %435 = sbr.rel (%p433) target = $region88
        $region87: #{mlp_forward.1} parent=55 // pred_region
          %436 = dma.done [#allocation16], 8192
        $region88: #{mlp_forward.1} parent=55 // pred_fallthru
          _
        // Predicated region
        $region89: #{mlp_forward.1} parent=55 // pred_check
          %p437 = pneg %p224
        $region90: #{mlp_forward.1} parent=55 // pred_check_branch
          %439 = sbr.rel (%p437) target = $region92
        $region91: #{mlp_forward.1} parent=55 // pred_region
          %440 = dma.done [#allocation16], 16
        $region92: #{mlp_forward.1} parent=55 // pred_fallthru
          _
        %s441 = sand.u32 %s38, 1
        %s442 = scalar_lea.sflag [#allocation4], %s441
        %s443 = sand.u32 %s38, 1
        %s444 = smul.addr %s443, 72
        %s445 = scalar_lea.vmem [#allocation3], %s444
        %p446 = pneg %p51
        %p447 = pneg %p48
        %s448 = sand.u32 %s30, 1
        %s449 = scalar_lea.sflag [#allocation7], %s448
        %s450 = sand.u32 %s64, 1
        %s451 = smul.addr %s450, 4608
        %s452 = scalar_lea.vmem [#allocation6], %s451
        %p453 = pneg %p77
        %p454 = pneg %p74
        %p455 = pneg %p98
        %p456 = pneg %p95
        %p457 = pneg %p119
        %p458 = pneg %p116
        %p459 = pneg %p140
        %p460 = pneg %p137
        %p461 = pneg %p161
        %p462 = pneg %p158
        %p463 = pneg %p182
        %p464 = pneg %p179
        %p465 = pneg %p203
        %p466 = pneg %p200
        %p467 = pneg %p224
        %p468 = pneg %p221
        %p469 = pneg %p245
        %p470 = pneg %p242
        %s471 = smul.u32 9, %s30
        %s472 = smul.u32 144, %s30
        %p474 = scmp.eq.s32.totalorder %s30, 0
        // Predicated region
        $region93: #{mlp_forward.1} parent=55 // pred_check
          %p475 = pneg %p474
        $region94: #{mlp_forward.1} parent=55 // pred_check_branch
          %477 = sbr.rel (%p475) target = $region96
        $region95: #{mlp_forward.1} parent=55 // pred_region
          %478 = vst [vmem:[#allocation2] sm:$0xff] 0.0
          %479 = vst [vmem:[#allocation2 + $0x8] sm:$0xff] 0.0
          %480 = vst [vmem:[#allocation2 + $0x10] sm:$0xff] 0.0
          %481 = vst [vmem:[#allocation2 + $0x18] sm:$0xff] 0.0
          %482 = vst [vmem:[#allocation2 + $0x20] sm:$0xff] 0.0
          %483 = vst [vmem:[#allocation2 + $0x28] sm:$0xff] 0.0
          %484 = vst [vmem:[#allocation2 + $0x30] sm:$0xff] 0.0
          %485 = vst [vmem:[#allocation2 + $0x38] sm:$0xff] 0.0
        $region96: #{mlp_forward.1} parent=55 // pred_fallthru
          _
        %v486 = vld [vmem:[#allocation2] sm:$0xff]
        %v487 = vld [vmem:[#allocation2 + $0x8] sm:$0xff]
        %v488 = vld [vmem:[#allocation2 + $0x10] sm:$0xff]
        %v489 = vld [vmem:[#allocation2 + $0x18] sm:$0xff]
        %v490 = vld [vmem:[#allocation2 + $0x20] sm:$0xff]
        %v491 = vld [vmem:[#allocation2 + $0x28] sm:$0xff]
        %v492 = vld [vmem:[#allocation2 + $0x30] sm:$0xff]
        %v493 = vld [vmem:[#allocation2 + $0x38] sm:$0xff]
        %v494 = vld [vmem:[%s399] sm:$0xff]
        %v495 = vld [vmem:[%s399 + $0x8] sm:$0xff]
        %v496 = vld [vmem:[%s399 + $0x10] sm:$0xff]
        %v497 = vld [vmem:[%s399 + $0x18] sm:$0xff]
        %v498 = vld [vmem:[%s399 + $0x20] sm:$0xff]
        %v499 = vld [vmem:[%s399 + $0x28] sm:$0xff]
        %v500 = vld [vmem:[%s399 + $0x30] sm:$0xff]
        %v501 = vld [vmem:[%s399 + $0x38] sm:$0xff]
        %v502 = vld [vmem:[%s399 + $0x40] sm:$0xff]
        %v503 = vpack.c.bf16 %v494, %v494
        %v504 = vpack.c.bf16 %v495, %v495
        %v505 = vpack.c.bf16 %v496, %v496
        %v506 = vpack.c.bf16 %v497, %v497
        %v507 = vpack.c.bf16 %v498, %v498
        %v508 = vpack.c.bf16 %v499, %v499
        %v509 = vpack.c.bf16 %v500, %v500
        %v510 = vpack.c.bf16 %v501, %v501
        %v511 = vpack.c.bf16 %v502, %v502
        %v512 = vld [vmem:[%s408] sm:$0xff]
        %v513 = vld [vmem:[%s408 + $0x8] sm:$0xff]
        %v514 = vld [vmem:[%s408 + $0x10] sm:$0xff]
        %v515 = vld [vmem:[%s408 + $0x18] sm:$0xff]
        %v516 = vld [vmem:[%s408 + $0x20] sm:$0xff]
        %v517 = vld [vmem:[%s408 + $0x28] sm:$0xff]
        %v518 = vld [vmem:[%s408 + $0x30] sm:$0xff]
        %v519 = vld [vmem:[%s408 + $0x38] sm:$0xff]
        %v520 = vld [vmem:[%s408 + $0x40] sm:$0xff]
        %v521 = vld [vmem:[%s408 + $0x48] sm:$0xff]
        %v522 = vld [vmem:[%s408 + $0x50] sm:$0xff]
        %v523 = vld [vmem:[%s408 + $0x58] sm:$0xff]
        %v524 = vld [vmem:[%s408 + $0x60] sm:$0xff]
        %v525 = vld [vmem:[%s408 + $0x68] sm:$0xff]
        %v526 = vld [vmem:[%s408 + $0x70] sm:$0xff]
        %v527 = vld [vmem:[%s408 + $0x78] sm:$0xff]
        %v528 = vld [vmem:[%s408 + $0x80] sm:$0xff]
        %v529 = vld [vmem:[%s408 + $0x88] sm:$0xff]
        %v530 = vld [vmem:[%s408 + $0x90] sm:$0xff]
        %v531 = vld [vmem:[%s408 + $0x98] sm:$0xff]
        %v532 = vld [vmem:[%s408 + $0xa0] sm:$0xff]
        %v533 = vld [vmem:[%s408 + $0xa8] sm:$0xff]
        %v534 = vld [vmem:[%s408 + $0xb0] sm:$0xff]
        %v535 = vld [vmem:[%s408 + $0xb8] sm:$0xff]
        %v536 = vld [vmem:[%s408 + $0xc0] sm:$0xff]
        %v537 = vld [vmem:[%s408 + $0xc8] sm:$0xff]
        %v538 = vld [vmem:[%s408 + $0xd0] sm:$0xff]
        %v539 = vld [vmem:[%s408 + $0xd8] sm:$0xff]
        %v540 = vld [vmem:[%s408 + $0xe0] sm:$0xff]
        %v541 = vld [vmem:[%s408 + $0xe8] sm:$0xff]
        %v542 = vld [vmem:[%s408 + $0xf0] sm:$0xff]
        %v543 = vld [vmem:[%s408 + $0xf8] sm:$0xff]
        %v544 = vld [vmem:[%s408 + $0x100] sm:$0xff]
        %v545 = vld [vmem:[%s408 + $0x108] sm:$0xff]
        %v546 = vld [vmem:[%s408 + $0x110] sm:$0xff]
        %v547 = vld [vmem:[%s408 + $0x118] sm:$0xff]
        %v548 = vld [vmem:[%s408 + $0x120] sm:$0xff]
        %v549 = vld [vmem:[%s408 + $0x128] sm:$0xff]
        %v550 = vld [vmem:[%s408 + $0x130] sm:$0xff]
        %v551 = vld [vmem:[%s408 + $0x138] sm:$0xff]
        %v552 = vld [vmem:[%s408 + $0x140] sm:$0xff]
        %v553 = vld [vmem:[%s408 + $0x148] sm:$0xff]
        %v554 = vld [vmem:[%s408 + $0x150] sm:$0xff]
        %v555 = vld [vmem:[%s408 + $0x158] sm:$0xff]
        %v556 = vld [vmem:[%s408 + $0x160] sm:$0xff]
        %v557 = vld [vmem:[%s408 + $0x168] sm:$0xff]
        %v558 = vld [vmem:[%s408 + $0x170] sm:$0xff]
        %v559 = vld [vmem:[%s408 + $0x178] sm:$0xff]
        %v560 = vld [vmem:[%s408 + $0x180] sm:$0xff]
        %v561 = vld [vmem:[%s408 + $0x188] sm:$0xff]
        %v562 = vld [vmem:[%s408 + $0x190] sm:$0xff]
        %v563 = vld [vmem:[%s408 + $0x198] sm:$0xff]
        %v564 = vld [vmem:[%s408 + $0x1a0] sm:$0xff]
        %v565 = vld [vmem:[%s408 + $0x1a8] sm:$0xff]
        %v566 = vld [vmem:[%s408 + $0x1b0] sm:$0xff]
        %v567 = vld [vmem:[%s408 + $0x1b8] sm:$0xff]
        %v568 = vld [vmem:[%s408 + $0x1c0] sm:$0xff]
        %v569 = vld [vmem:[%s408 + $0x1c8] sm:$0xff]
        %v570 = vld [vmem:[%s408 + $0x1d0] sm:$0xff]
        %v571 = vld [vmem:[%s408 + $0x1d8] sm:$0xff]
        %v572 = vld [vmem:[%s408 + $0x1e0] sm:$0xff]
        %v573 = vld [vmem:[%s408 + $0x1e8] sm:$0xff]
        %v574 = vld [vmem:[%s408 + $0x1f0] sm:$0xff]
        %v575 = vld [vmem:[%s408 + $0x1f8] sm:$0xff]
        %v576 = vld [vmem:[%s408 + $0x200] sm:$0xff]
        %v577 = vld [vmem:[%s408 + $0x208] sm:$0xff]
        %v578 = vld [vmem:[%s408 + $0x210] sm:$0xff]
        %v579 = vld [vmem:[%s408 + $0x218] sm:$0xff]
        %v580 = vld [vmem:[%s408 + $0x220] sm:$0xff]
        %v581 = vld [vmem:[%s408 + $0x228] sm:$0xff]
        %v582 = vld [vmem:[%s408 + $0x230] sm:$0xff]
        %v583 = vld [vmem:[%s408 + $0x238] sm:$0xff]
        %v584 = vld [vmem:[%s408 + $0x240] sm:$0xff]
        %v585 = vld [vmem:[%s408 + $0x248] sm:$0xff]
        %v586 = vld [vmem:[%s408 + $0x250] sm:$0xff]
        %v587 = vld [vmem:[%s408 + $0x258] sm:$0xff]
        %v588 = vld [vmem:[%s408 + $0x260] sm:$0xff]
        %v589 = vld [vmem:[%s408 + $0x268] sm:$0xff]
        %v590 = vld [vmem:[%s408 + $0x270] sm:$0xff]
        %v591 = vld [vmem:[%s408 + $0x278] sm:$0xff]
        %v592 = vld [vmem:[%s408 + $0x280] sm:$0xff]
        %v593 = vld [vmem:[%s408 + $0x288] sm:$0xff]
        %v594 = vld [vmem:[%s408 + $0x290] sm:$0xff]
        %v595 = vld [vmem:[%s408 + $0x298] sm:$0xff]
        %v596 = vld [vmem:[%s408 + $0x2a0] sm:$0xff]
        %v597 = vld [vmem:[%s408 + $0x2a8] sm:$0xff]
        %v598 = vld [vmem:[%s408 + $0x2b0] sm:$0xff]
        %v599 = vld [vmem:[%s408 + $0x2b8] sm:$0xff]
        %v600 = vld [vmem:[%s408 + $0x2c0] sm:$0xff]
        %v601 = vld [vmem:[%s408 + $0x2c8] sm:$0xff]
        %v602 = vld [vmem:[%s408 + $0x2d0] sm:$0xff]
        %v603 = vld [vmem:[%s408 + $0x2d8] sm:$0xff]
        %v604 = vld [vmem:[%s408 + $0x2e0] sm:$0xff]
        %v605 = vld [vmem:[%s408 + $0x2e8] sm:$0xff]
        %v606 = vld [vmem:[%s408 + $0x2f0] sm:$0xff]
        %v607 = vld [vmem:[%s408 + $0x2f8] sm:$0xff]
        %v608 = vld [vmem:[%s408 + $0x300] sm:$0xff]
        %v609 = vld [vmem:[%s408 + $0x308] sm:$0xff]
        %v610 = vld [vmem:[%s408 + $0x310] sm:$0xff]
        %v611 = vld [vmem:[%s408 + $0x318] sm:$0xff]
        %v612 = vld [vmem:[%s408 + $0x320] sm:$0xff]
        %v613 = vld [vmem:[%s408 + $0x328] sm:$0xff]
        %v614 = vld [vmem:[%s408 + $0x330] sm:$0xff]
        %v615 = vld [vmem:[%s408 + $0x338] sm:$0xff]
        %v616 = vld [vmem:[%s408 + $0x340] sm:$0xff]
        %v617 = vld [vmem:[%s408 + $0x348] sm:$0xff]
        %v618 = vld [vmem:[%s408 + $0x350] sm:$0xff]
        %v619 = vld [vmem:[%s408 + $0x358] sm:$0xff]
        %v620 = vld [vmem:[%s408 + $0x360] sm:$0xff]
        %v621 = vld [vmem:[%s408 + $0x368] sm:$0xff]
        %v622 = vld [vmem:[%s408 + $0x370] sm:$0xff]
        %v623 = vld [vmem:[%s408 + $0x378] sm:$0xff]
        %v624 = vld [vmem:[%s408 + $0x380] sm:$0xff]
        %v625 = vld [vmem:[%s408 + $0x388] sm:$0xff]
        %v626 = vld [vmem:[%s408 + $0x390] sm:$0xff]
        %v627 = vld [vmem:[%s408 + $0x398] sm:$0xff]
        %v628 = vld [vmem:[%s408 + $0x3a0] sm:$0xff]
        %v629 = vld [vmem:[%s408 + $0x3a8] sm:$0xff]
        %v630 = vld [vmem:[%s408 + $0x3b0] sm:$0xff]
        %v631 = vld [vmem:[%s408 + $0x3b8] sm:$0xff]
        %v632 = vld [vmem:[%s408 + $0x3c0] sm:$0xff]
        %v633 = vld [vmem:[%s408 + $0x3c8] sm:$0xff]
        %v634 = vld [vmem:[%s408 + $0x3d0] sm:$0xff]
        %v635 = vld [vmem:[%s408 + $0x3d8] sm:$0xff]
        %v636 = vld [vmem:[%s408 + $0x3e0] sm:$0xff]
        %v637 = vld [vmem:[%s408 + $0x3e8] sm:$0xff]
        %v638 = vld [vmem:[%s408 + $0x3f0] sm:$0xff]
        %v639 = vld [vmem:[%s408 + $0x3f8] sm:$0xff]
        %v640 = vld [vmem:[%s408 + $0x400] sm:$0xff]
        %v641 = vld [vmem:[%s408 + $0x408] sm:$0xff]
        %v642 = vld [vmem:[%s408 + $0x410] sm:$0xff]
        %v643 = vld [vmem:[%s408 + $0x418] sm:$0xff]
        %v644 = vld [vmem:[%s408 + $0x420] sm:$0xff]
        %v645 = vld [vmem:[%s408 + $0x428] sm:$0xff]
        %v646 = vld [vmem:[%s408 + $0x430] sm:$0xff]
        %v647 = vld [vmem:[%s408 + $0x438] sm:$0xff]
        %v648 = vld [vmem:[%s408 + $0x440] sm:$0xff]
        %v649 = vld [vmem:[%s408 + $0x448] sm:$0xff]
        %v650 = vld [vmem:[%s408 + $0x450] sm:$0xff]
        %v651 = vld [vmem:[%s408 + $0x458] sm:$0xff]
        %v652 = vld [vmem:[%s408 + $0x460] sm:$0xff]
        %v653 = vld [vmem:[%s408 + $0x468] sm:$0xff]
        %v654 = vld [vmem:[%s408 + $0x470] sm:$0xff]
        %v655 = vld [vmem:[%s408 + $0x478] sm:$0xff]
        %v656 = vld [vmem:[%s408 + $0x480] sm:$0xff]
        %v657 = vld [vmem:[%s408 + $0x488] sm:$0xff]
        %v658 = vld [vmem:[%s408 + $0x490] sm:$0xff]
        %v659 = vld [vmem:[%s408 + $0x498] sm:$0xff]
        %v660 = vld [vmem:[%s408 + $0x4a0] sm:$0xff]
        %v661 = vld [vmem:[%s408 + $0x4a8] sm:$0xff]
        %v662 = vld [vmem:[%s408 + $0x4b0] sm:$0xff]
        %v663 = vld [vmem:[%s408 + $0x4b8] sm:$0xff]
        %v664 = vld [vmem:[%s408 + $0x4c0] sm:$0xff]
        %v665 = vld [vmem:[%s408 + $0x4c8] sm:$0xff]
        %v666 = vld [vmem:[%s408 + $0x4d0] sm:$0xff]
        %v667 = vld [vmem:[%s408 + $0x4d8] sm:$0xff]
        %v668 = vld [vmem:[%s408 + $0x4e0] sm:$0xff]
        %v669 = vld [vmem:[%s408 + $0x4e8] sm:$0xff]
        %v670 = vld [vmem:[%s408 + $0x4f0] sm:$0xff]
        %v671 = vld [vmem:[%s408 + $0x4f8] sm:$0xff]
        %v672 = vld [vmem:[%s408 + $0x500] sm:$0xff]
        %v673 = vld [vmem:[%s408 + $0x508] sm:$0xff]
        %v674 = vld [vmem:[%s408 + $0x510] sm:$0xff]
        %v675 = vld [vmem:[%s408 + $0x518] sm:$0xff]
        %v676 = vld [vmem:[%s408 + $0x520] sm:$0xff]
        %v677 = vld [vmem:[%s408 + $0x528] sm:$0xff]
        %v678 = vld [vmem:[%s408 + $0x530] sm:$0xff]
        %v679 = vld [vmem:[%s408 + $0x538] sm:$0xff]
        %v680 = vld [vmem:[%s408 + $0x540] sm:$0xff]
        %v681 = vld [vmem:[%s408 + $0x548] sm:$0xff]
        %v682 = vld [vmem:[%s408 + $0x550] sm:$0xff]
        %v683 = vld [vmem:[%s408 + $0x558] sm:$0xff]
        %v684 = vld [vmem:[%s408 + $0x560] sm:$0xff]
        %v685 = vld [vmem:[%s408 + $0x568] sm:$0xff]
        %v686 = vld [vmem:[%s408 + $0x570] sm:$0xff]
        %v687 = vld [vmem:[%s408 + $0x578] sm:$0xff]
        %v688 = vld [vmem:[%s408 + $0x580] sm:$0xff]
        %v689 = vld [vmem:[%s408 + $0x588] sm:$0xff]
        %v690 = vld [vmem:[%s408 + $0x590] sm:$0xff]
        %v691 = vld [vmem:[%s408 + $0x598] sm:$0xff]
        %v692 = vld [vmem:[%s408 + $0x5a0] sm:$0xff]
        %v693 = vld [vmem:[%s408 + $0x5a8] sm:$0xff]
        %v694 = vld [vmem:[%s408 + $0x5b0] sm:$0xff]
        %v695 = vld [vmem:[%s408 + $0x5b8] sm:$0xff]
        %v696 = vld [vmem:[%s408 + $0x5c0] sm:$0xff]
        %v697 = vld [vmem:[%s408 + $0x5c8] sm:$0xff]
        %v698 = vld [vmem:[%s408 + $0x5d0] sm:$0xff]
        %v699 = vld [vmem:[%s408 + $0x5d8] sm:$0xff]
        %v700 = vld [vmem:[%s408 + $0x5e0] sm:$0xff]
        %v701 = vld [vmem:[%s408 + $0x5e8] sm:$0xff]
        %v702 = vld [vmem:[%s408 + $0x5f0] sm:$0xff]
        %v703 = vld [vmem:[%s408 + $0x5f8] sm:$0xff]
        %v704 = vld [vmem:[%s408 + $0x600] sm:$0xff]
        %v705 = vld [vmem:[%s408 + $0x608] sm:$0xff]
        %v706 = vld [vmem:[%s408 + $0x610] sm:$0xff]
        %v707 = vld [vmem:[%s408 + $0x618] sm:$0xff]
        %v708 = vld [vmem:[%s408 + $0x620] sm:$0xff]
        %v709 = vld [vmem:[%s408 + $0x628] sm:$0xff]
        %v710 = vld [vmem:[%s408 + $0x630] sm:$0xff]
        %v711 = vld [vmem:[%s408 + $0x638] sm:$0xff]
        %v712 = vld [vmem:[%s408 + $0x640] sm:$0xff]
        %v713 = vld [vmem:[%s408 + $0x648] sm:$0xff]
        %v714 = vld [vmem:[%s408 + $0x650] sm:$0xff]
        %v715 = vld [vmem:[%s408 + $0x658] sm:$0xff]
        %v716 = vld [vmem:[%s408 + $0x660] sm:$0xff]
        %v717 = vld [vmem:[%s408 + $0x668] sm:$0xff]
        %v718 = vld [vmem:[%s408 + $0x670] sm:$0xff]
        %v719 = vld [vmem:[%s408 + $0x678] sm:$0xff]
        %v720 = vld [vmem:[%s408 + $0x680] sm:$0xff]
        %v721 = vld [vmem:[%s408 + $0x688] sm:$0xff]
        %v722 = vld [vmem:[%s408 + $0x690] sm:$0xff]
        %v723 = vld [vmem:[%s408 + $0x698] sm:$0xff]
        %v724 = vld [vmem:[%s408 + $0x6a0] sm:$0xff]
        %v725 = vld [vmem:[%s408 + $0x6a8] sm:$0xff]
        %v726 = vld [vmem:[%s408 + $0x6b0] sm:$0xff]
        %v727 = vld [vmem:[%s408 + $0x6b8] sm:$0xff]
        %v728 = vld [vmem:[%s408 + $0x6c0] sm:$0xff]
        %v729 = vld [vmem:[%s408 + $0x6c8] sm:$0xff]
        %v730 = vld [vmem:[%s408 + $0x6d0] sm:$0xff]
        %v731 = vld [vmem:[%s408 + $0x6d8] sm:$0xff]
        %v732 = vld [vmem:[%s408 + $0x6e0] sm:$0xff]
        %v733 = vld [vmem:[%s408 + $0x6e8] sm:$0xff]
        %v734 = vld [vmem:[%s408 + $0x6f0] sm:$0xff]
        %v735 = vld [vmem:[%s408 + $0x6f8] sm:$0xff]
        %v736 = vld [vmem:[%s408 + $0x700] sm:$0xff]
        %v737 = vld [vmem:[%s408 + $0x708] sm:$0xff]
        %v738 = vld [vmem:[%s408 + $0x710] sm:$0xff]
        %v739 = vld [vmem:[%s408 + $0x718] sm:$0xff]
        %v740 = vld [vmem:[%s408 + $0x720] sm:$0xff]
        %v741 = vld [vmem:[%s408 + $0x728] sm:$0xff]
        %v742 = vld [vmem:[%s408 + $0x730] sm:$0xff]
        %v743 = vld [vmem:[%s408 + $0x738] sm:$0xff]
        %v744 = vld [vmem:[%s408 + $0x740] sm:$0xff]
        %v745 = vld [vmem:[%s408 + $0x748] sm:$0xff]
        %v746 = vld [vmem:[%s408 + $0x750] sm:$0xff]
        %v747 = vld [vmem:[%s408 + $0x758] sm:$0xff]
        %v748 = vld [vmem:[%s408 + $0x760] sm:$0xff]
        %v749 = vld [vmem:[%s408 + $0x768] sm:$0xff]
        %v750 = vld [vmem:[%s408 + $0x770] sm:$0xff]
        %v751 = vld [vmem:[%s408 + $0x778] sm:$0xff]
        %v752 = vld [vmem:[%s408 + $0x780] sm:$0xff]
        %v753 = vld [vmem:[%s408 + $0x788] sm:$0xff]
        %v754 = vld [vmem:[%s408 + $0x790] sm:$0xff]
        %v755 = vld [vmem:[%s408 + $0x798] sm:$0xff]
        %v756 = vld [vmem:[%s408 + $0x7a0] sm:$0xff]
        %v757 = vld [vmem:[%s408 + $0x7a8] sm:$0xff]
        %v758 = vld [vmem:[%s408 + $0x7b0] sm:$0xff]
        %v759 = vld [vmem:[%s408 + $0x7b8] sm:$0xff]
        %v760 = vld [vmem:[%s408 + $0x7c0] sm:$0xff]
        %v761 = vld [vmem:[%s408 + $0x7c8] sm:$0xff]
        %v762 = vld [vmem:[%s408 + $0x7d0] sm:$0xff]
        %v763 = vld [vmem:[%s408 + $0x7d8] sm:$0xff]
        %v764 = vld [vmem:[%s408 + $0x7e0] sm:$0xff]
        %v765 = vld [vmem:[%s408 + $0x7e8] sm:$0xff]
        %v766 = vld [vmem:[%s408 + $0x7f0] sm:$0xff]
        %v767 = vld [vmem:[%s408 + $0x7f8] sm:$0xff]
        %v768 = vld [vmem:[%s408 + $0x800] sm:$0xff]
        %v769 = vld [vmem:[%s408 + $0x808] sm:$0xff]
        %v770 = vld [vmem:[%s408 + $0x810] sm:$0xff]
        %v771 = vld [vmem:[%s408 + $0x818] sm:$0xff]
        %v772 = vld [vmem:[%s408 + $0x820] sm:$0xff]
        %v773 = vld [vmem:[%s408 + $0x828] sm:$0xff]
        %v774 = vld [vmem:[%s408 + $0x830] sm:$0xff]
        %v775 = vld [vmem:[%s408 + $0x838] sm:$0xff]
        %v776 = vld [vmem:[%s408 + $0x840] sm:$0xff]
        %v777 = vld [vmem:[%s408 + $0x848] sm:$0xff]
        %v778 = vld [vmem:[%s408 + $0x850] sm:$0xff]
        %v779 = vld [vmem:[%s408 + $0x858] sm:$0xff]
        %v780 = vld [vmem:[%s408 + $0x860] sm:$0xff]
        %v781 = vld [vmem:[%s408 + $0x868] sm:$0xff]
        %v782 = vld [vmem:[%s408 + $0x870] sm:$0xff]
        %v783 = vld [vmem:[%s408 + $0x878] sm:$0xff]
        %v784 = vld [vmem:[%s408 + $0x880] sm:$0xff]
        %v785 = vld [vmem:[%s408 + $0x888] sm:$0xff]
        %v786 = vld [vmem:[%s408 + $0x890] sm:$0xff]
        %v787 = vld [vmem:[%s408 + $0x898] sm:$0xff]
        %v788 = vld [vmem:[%s408 + $0x8a0] sm:$0xff]
        %v789 = vld [vmem:[%s408 + $0x8a8] sm:$0xff]
        %v790 = vld [vmem:[%s408 + $0x8b0] sm:$0xff]
        %v791 = vld [vmem:[%s408 + $0x8b8] sm:$0xff]
        %v792 = vld [vmem:[%s408 + $0x8c0] sm:$0xff]
        %v793 = vld [vmem:[%s408 + $0x8c8] sm:$0xff]
        %v794 = vld [vmem:[%s408 + $0x8d0] sm:$0xff]
        %v795 = vld [vmem:[%s408 + $0x8d8] sm:$0xff]
        %v796 = vld [vmem:[%s408 + $0x8e0] sm:$0xff]
        %v797 = vld [vmem:[%s408 + $0x8e8] sm:$0xff]
        %v798 = vld [vmem:[%s408 + $0x8f0] sm:$0xff]
        %v799 = vld [vmem:[%s408 + $0x8f8] sm:$0xff]
        %v800 = vld [vmem:[%s408 + $0x900] sm:$0xff]
        %v801 = vld [vmem:[%s408 + $0x908] sm:$0xff]
        %v802 = vld [vmem:[%s408 + $0x910] sm:$0xff]
        %v803 = vld [vmem:[%s408 + $0x918] sm:$0xff]
        %v804 = vld [vmem:[%s408 + $0x920] sm:$0xff]
        %v805 = vld [vmem:[%s408 + $0x928] sm:$0xff]
        %v806 = vld [vmem:[%s408 + $0x930] sm:$0xff]
        %v807 = vld [vmem:[%s408 + $0x938] sm:$0xff]
        %v808 = vld [vmem:[%s408 + $0x940] sm:$0xff]
        %v809 = vld [vmem:[%s408 + $0x948] sm:$0xff]
        %v810 = vld [vmem:[%s408 + $0x950] sm:$0xff]
        %v811 = vld [vmem:[%s408 + $0x958] sm:$0xff]
        %v812 = vld [vmem:[%s408 + $0x960] sm:$0xff]
        %v813 = vld [vmem:[%s408 + $0x968] sm:$0xff]
        %v814 = vld [vmem:[%s408 + $0x970] sm:$0xff]
        %v815 = vld [vmem:[%s408 + $0x978] sm:$0xff]
        %v816 = vld [vmem:[%s408 + $0x980] sm:$0xff]
        %v817 = vld [vmem:[%s408 + $0x988] sm:$0xff]
        %v818 = vld [vmem:[%s408 + $0x990] sm:$0xff]
        %v819 = vld [vmem:[%s408 + $0x998] sm:$0xff]
        %v820 = vld [vmem:[%s408 + $0x9a0] sm:$0xff]
        %v821 = vld [vmem:[%s408 + $0x9a8] sm:$0xff]
        %v822 = vld [vmem:[%s408 + $0x9b0] sm:$0xff]
        %v823 = vld [vmem:[%s408 + $0x9b8] sm:$0xff]
        %v824 = vld [vmem:[%s408 + $0x9c0] sm:$0xff]
        %v825 = vld [vmem:[%s408 + $0x9c8] sm:$0xff]
        %v826 = vld [vmem:[%s408 + $0x9d0] sm:$0xff]
        %v827 = vld [vmem:[%s408 + $0x9d8] sm:$0xff]
        %v828 = vld [vmem:[%s408 + $0x9e0] sm:$0xff]
        %v829 = vld [vmem:[%s408 + $0x9e8] sm:$0xff]
        %v830 = vld [vmem:[%s408 + $0x9f0] sm:$0xff]
        %v831 = vld [vmem:[%s408 + $0x9f8] sm:$0xff]
        %v832 = vld [vmem:[%s408 + $0xa00] sm:$0xff]
        %v833 = vld [vmem:[%s408 + $0xa08] sm:$0xff]
        %v834 = vld [vmem:[%s408 + $0xa10] sm:$0xff]
        %v835 = vld [vmem:[%s408 + $0xa18] sm:$0xff]
        %v836 = vld [vmem:[%s408 + $0xa20] sm:$0xff]
        %v837 = vld [vmem:[%s408 + $0xa28] sm:$0xff]
        %v838 = vld [vmem:[%s408 + $0xa30] sm:$0xff]
        %v839 = vld [vmem:[%s408 + $0xa38] sm:$0xff]
        %v840 = vld [vmem:[%s408 + $0xa40] sm:$0xff]
        %v841 = vld [vmem:[%s408 + $0xa48] sm:$0xff]
        %v842 = vld [vmem:[%s408 + $0xa50] sm:$0xff]
        %v843 = vld [vmem:[%s408 + $0xa58] sm:$0xff]
        %v844 = vld [vmem:[%s408 + $0xa60] sm:$0xff]
        %v845 = vld [vmem:[%s408 + $0xa68] sm:$0xff]
        %v846 = vld [vmem:[%s408 + $0xa70] sm:$0xff]
        %v847 = vld [vmem:[%s408 + $0xa78] sm:$0xff]
        %v848 = vld [vmem:[%s408 + $0xa80] sm:$0xff]
        %v849 = vld [vmem:[%s408 + $0xa88] sm:$0xff]
        %v850 = vld [vmem:[%s408 + $0xa90] sm:$0xff]
        %v851 = vld [vmem:[%s408 + $0xa98] sm:$0xff]
        %v852 = vld [vmem:[%s408 + $0xaa0] sm:$0xff]
        %v853 = vld [vmem:[%s408 + $0xaa8] sm:$0xff]
        %v854 = vld [vmem:[%s408 + $0xab0] sm:$0xff]
        %v855 = vld [vmem:[%s408 + $0xab8] sm:$0xff]
        %v856 = vld [vmem:[%s408 + $0xac0] sm:$0xff]
        %v857 = vld [vmem:[%s408 + $0xac8] sm:$0xff]
        %v858 = vld [vmem:[%s408 + $0xad0] sm:$0xff]
        %v859 = vld [vmem:[%s408 + $0xad8] sm:$0xff]
        %v860 = vld [vmem:[%s408 + $0xae0] sm:$0xff]
        %v861 = vld [vmem:[%s408 + $0xae8] sm:$0xff]
        %v862 = vld [vmem:[%s408 + $0xaf0] sm:$0xff]
        %v863 = vld [vmem:[%s408 + $0xaf8] sm:$0xff]
        %v864 = vld [vmem:[%s408 + $0xb00] sm:$0xff]
        %v865 = vld [vmem:[%s408 + $0xb08] sm:$0xff]
        %v866 = vld [vmem:[%s408 + $0xb10] sm:$0xff]
        %v867 = vld [vmem:[%s408 + $0xb18] sm:$0xff]
        %v868 = vld [vmem:[%s408 + $0xb20] sm:$0xff]
        %v869 = vld [vmem:[%s408 + $0xb28] sm:$0xff]
        %v870 = vld [vmem:[%s408 + $0xb30] sm:$0xff]
        %v871 = vld [vmem:[%s408 + $0xb38] sm:$0xff]
        %v872 = vld [vmem:[%s408 + $0xb40] sm:$0xff]
        %v873 = vld [vmem:[%s408 + $0xb48] sm:$0xff]
        %v874 = vld [vmem:[%s408 + $0xb50] sm:$0xff]
        %v875 = vld [vmem:[%s408 + $0xb58] sm:$0xff]
        %v876 = vld [vmem:[%s408 + $0xb60] sm:$0xff]
        %v877 = vld [vmem:[%s408 + $0xb68] sm:$0xff]
        %v878 = vld [vmem:[%s408 + $0xb70] sm:$0xff]
        %v879 = vld [vmem:[%s408 + $0xb78] sm:$0xff]
        %v880 = vld [vmem:[%s408 + $0xb80] sm:$0xff]
        %v881 = vld [vmem:[%s408 + $0xb88] sm:$0xff]
        %v882 = vld [vmem:[%s408 + $0xb90] sm:$0xff]
        %v883 = vld [vmem:[%s408 + $0xb98] sm:$0xff]
        %v884 = vld [vmem:[%s408 + $0xba0] sm:$0xff]
        %v885 = vld [vmem:[%s408 + $0xba8] sm:$0xff]
        %v886 = vld [vmem:[%s408 + $0xbb0] sm:$0xff]
        %v887 = vld [vmem:[%s408 + $0xbb8] sm:$0xff]
        %v888 = vld [vmem:[%s408 + $0xbc0] sm:$0xff]
        %v889 = vld [vmem:[%s408 + $0xbc8] sm:$0xff]
        %v890 = vld [vmem:[%s408 + $0xbd0] sm:$0xff]
        %v891 = vld [vmem:[%s408 + $0xbd8] sm:$0xff]
        %v892 = vld [vmem:[%s408 + $0xbe0] sm:$0xff]
        %v893 = vld [vmem:[%s408 + $0xbe8] sm:$0xff]
        %v894 = vld [vmem:[%s408 + $0xbf0] sm:$0xff]
        %v895 = vld [vmem:[%s408 + $0xbf8] sm:$0xff]
        %v896 = vld [vmem:[%s408 + $0xc00] sm:$0xff]
        %v897 = vld [vmem:[%s408 + $0xc08] sm:$0xff]
        %v898 = vld [vmem:[%s408 + $0xc10] sm:$0xff]
        %v899 = vld [vmem:[%s408 + $0xc18] sm:$0xff]
        %v900 = vld [vmem:[%s408 + $0xc20] sm:$0xff]
        %v901 = vld [vmem:[%s408 + $0xc28] sm:$0xff]
        %v902 = vld [vmem:[%s408 + $0xc30] sm:$0xff]
        %v903 = vld [vmem:[%s408 + $0xc38] sm:$0xff]
        %v904 = vld [vmem:[%s408 + $0xc40] sm:$0xff]
        %v905 = vld [vmem:[%s408 + $0xc48] sm:$0xff]
        %v906 = vld [vmem:[%s408 + $0xc50] sm:$0xff]
        %v907 = vld [vmem:[%s408 + $0xc58] sm:$0xff]
        %v908 = vld [vmem:[%s408 + $0xc60] sm:$0xff]
        %v909 = vld [vmem:[%s408 + $0xc68] sm:$0xff]
        %v910 = vld [vmem:[%s408 + $0xc70] sm:$0xff]
        %v911 = vld [vmem:[%s408 + $0xc78] sm:$0xff]
        %v912 = vld [vmem:[%s408 + $0xc80] sm:$0xff]
        %v913 = vld [vmem:[%s408 + $0xc88] sm:$0xff]
        %v914 = vld [vmem:[%s408 + $0xc90] sm:$0xff]
        %v915 = vld [vmem:[%s408 + $0xc98] sm:$0xff]
        %v916 = vld [vmem:[%s408 + $0xca0] sm:$0xff]
        %v917 = vld [vmem:[%s408 + $0xca8] sm:$0xff]
        %v918 = vld [vmem:[%s408 + $0xcb0] sm:$0xff]
        %v919 = vld [vmem:[%s408 + $0xcb8] sm:$0xff]
        %v920 = vld [vmem:[%s408 + $0xcc0] sm:$0xff]
        %v921 = vld [vmem:[%s408 + $0xcc8] sm:$0xff]
        %v922 = vld [vmem:[%s408 + $0xcd0] sm:$0xff]
        %v923 = vld [vmem:[%s408 + $0xcd8] sm:$0xff]
        %v924 = vld [vmem:[%s408 + $0xce0] sm:$0xff]
        %v925 = vld [vmem:[%s408 + $0xce8] sm:$0xff]
        %v926 = vld [vmem:[%s408 + $0xcf0] sm:$0xff]
        %v927 = vld [vmem:[%s408 + $0xcf8] sm:$0xff]
        %v928 = vld [vmem:[%s408 + $0xd00] sm:$0xff]
        %v929 = vld [vmem:[%s408 + $0xd08] sm:$0xff]
        %v930 = vld [vmem:[%s408 + $0xd10] sm:$0xff]
        %v931 = vld [vmem:[%s408 + $0xd18] sm:$0xff]
        %v932 = vld [vmem:[%s408 + $0xd20] sm:$0xff]
        %v933 = vld [vmem:[%s408 + $0xd28] sm:$0xff]
        %v934 = vld [vmem:[%s408 + $0xd30] sm:$0xff]
        %v935 = vld [vmem:[%s408 + $0xd38] sm:$0xff]
        %v936 = vld [vmem:[%s408 + $0xd40] sm:$0xff]
        %v937 = vld [vmem:[%s408 + $0xd48] sm:$0xff]
        %v938 = vld [vmem:[%s408 + $0xd50] sm:$0xff]
        %v939 = vld [vmem:[%s408 + $0xd58] sm:$0xff]
        %v940 = vld [vmem:[%s408 + $0xd60] sm:$0xff]
        %v941 = vld [vmem:[%s408 + $0xd68] sm:$0xff]
        %v942 = vld [vmem:[%s408 + $0xd70] sm:$0xff]
        %v943 = vld [vmem:[%s408 + $0xd78] sm:$0xff]
        %v944 = vld [vmem:[%s408 + $0xd80] sm:$0xff]
        %v945 = vld [vmem:[%s408 + $0xd88] sm:$0xff]
        %v946 = vld [vmem:[%s408 + $0xd90] sm:$0xff]
        %v947 = vld [vmem:[%s408 + $0xd98] sm:$0xff]
        %v948 = vld [vmem:[%s408 + $0xda0] sm:$0xff]
        %v949 = vld [vmem:[%s408 + $0xda8] sm:$0xff]
        %v950 = vld [vmem:[%s408 + $0xdb0] sm:$0xff]
        %v951 = vld [vmem:[%s408 + $0xdb8] sm:$0xff]
        %v952 = vld [vmem:[%s408 + $0xdc0] sm:$0xff]
        %v953 = vld [vmem:[%s408 + $0xdc8] sm:$0xff]
        %v954 = vld [vmem:[%s408 + $0xdd0] sm:$0xff]
        %v955 = vld [vmem:[%s408 + $0xdd8] sm:$0xff]
        %v956 = vld [vmem:[%s408 + $0xde0] sm:$0xff]
        %v957 = vld [vmem:[%s408 + $0xde8] sm:$0xff]
        %v958 = vld [vmem:[%s408 + $0xdf0] sm:$0xff]
        %v959 = vld [vmem:[%s408 + $0xdf8] sm:$0xff]
        %v960 = vld [vmem:[%s408 + $0xe00] sm:$0xff]
        %v961 = vld [vmem:[%s408 + $0xe08] sm:$0xff]
        %v962 = vld [vmem:[%s408 + $0xe10] sm:$0xff]
        %v963 = vld [vmem:[%s408 + $0xe18] sm:$0xff]
        %v964 = vld [vmem:[%s408 + $0xe20] sm:$0xff]
        %v965 = vld [vmem:[%s408 + $0xe28] sm:$0xff]
        %v966 = vld [vmem:[%s408 + $0xe30] sm:$0xff]
        %v967 = vld [vmem:[%s408 + $0xe38] sm:$0xff]
        %v968 = vld [vmem:[%s408 + $0xe40] sm:$0xff]
        %v969 = vld [vmem:[%s408 + $0xe48] sm:$0xff]
        %v970 = vld [vmem:[%s408 + $0xe50] sm:$0xff]
        %v971 = vld [vmem:[%s408 + $0xe58] sm:$0xff]
        %v972 = vld [vmem:[%s408 + $0xe60] sm:$0xff]
        %v973 = vld [vmem:[%s408 + $0xe68] sm:$0xff]
        %v974 = vld [vmem:[%s408 + $0xe70] sm:$0xff]
        %v975 = vld [vmem:[%s408 + $0xe78] sm:$0xff]
        %v976 = vld [vmem:[%s408 + $0xe80] sm:$0xff]
        %v977 = vld [vmem:[%s408 + $0xe88] sm:$0xff]
        %v978 = vld [vmem:[%s408 + $0xe90] sm:$0xff]
        %v979 = vld [vmem:[%s408 + $0xe98] sm:$0xff]
        %v980 = vld [vmem:[%s408 + $0xea0] sm:$0xff]
        %v981 = vld [vmem:[%s408 + $0xea8] sm:$0xff]
        %v982 = vld [vmem:[%s408 + $0xeb0] sm:$0xff]
        %v983 = vld [vmem:[%s408 + $0xeb8] sm:$0xff]
        %v984 = vld [vmem:[%s408 + $0xec0] sm:$0xff]
        %v985 = vld [vmem:[%s408 + $0xec8] sm:$0xff]
        %v986 = vld [vmem:[%s408 + $0xed0] sm:$0xff]
        %v987 = vld [vmem:[%s408 + $0xed8] sm:$0xff]
        %v988 = vld [vmem:[%s408 + $0xee0] sm:$0xff]
        %v989 = vld [vmem:[%s408 + $0xee8] sm:$0xff]
        %v990 = vld [vmem:[%s408 + $0xef0] sm:$0xff]
        %v991 = vld [vmem:[%s408 + $0xef8] sm:$0xff]
        %v992 = vld [vmem:[%s408 + $0xf00] sm:$0xff]
        %v993 = vld [vmem:[%s408 + $0xf08] sm:$0xff]
        %v994 = vld [vmem:[%s408 + $0xf10] sm:$0xff]
        %v995 = vld [vmem:[%s408 + $0xf18] sm:$0xff]
        %v996 = vld [vmem:[%s408 + $0xf20] sm:$0xff]
        %v997 = vld [vmem:[%s408 + $0xf28] sm:$0xff]
        %v998 = vld [vmem:[%s408 + $0xf30] sm:$0xff]
        %v999 = vld [vmem:[%s408 + $0xf38] sm:$0xff]
        %v1000 = vld [vmem:[%s408 + $0xf40] sm:$0xff]
        %v1001 = vld [vmem:[%s408 + $0xf48] sm:$0xff]
        %v1002 = vld [vmem:[%s408 + $0xf50] sm:$0xff]
        %v1003 = vld [vmem:[%s408 + $0xf58] sm:$0xff]
        %v1004 = vld [vmem:[%s408 + $0xf60] sm:$0xff]
        %v1005 = vld [vmem:[%s408 + $0xf68] sm:$0xff]
        %v1006 = vld [vmem:[%s408 + $0xf70] sm:$0xff]
        %v1007 = vld [vmem:[%s408 + $0xf78] sm:$0xff]
        %v1008 = vld [vmem:[%s408 + $0xf80] sm:$0xff]
        %v1009 = vld [vmem:[%s408 + $0xf88] sm:$0xff]
        %v1010 = vld [vmem:[%s408 + $0xf90] sm:$0xff]
        %v1011 = vld [vmem:[%s408 + $0xf98] sm:$0xff]
        %v1012 = vld [vmem:[%s408 + $0xfa0] sm:$0xff]
        %v1013 = vld [vmem:[%s408 + $0xfa8] sm:$0xff]
        %v1014 = vld [vmem:[%s408 + $0xfb0] sm:$0xff]
        %v1015 = vld [vmem:[%s408 + $0xfb8] sm:$0xff]
        %v1016 = vld [vmem:[%s408 + $0xfc0] sm:$0xff]
        %v1017 = vld [vmem:[%s408 + $0xfc8] sm:$0xff]
        %v1018 = vld [vmem:[%s408 + $0xfd0] sm:$0xff]
        %v1019 = vld [vmem:[%s408 + $0xfd8] sm:$0xff]
        %v1020 = vld [vmem:[%s408 + $0xfe0] sm:$0xff]
        %v1021 = vld [vmem:[%s408 + $0xfe8] sm:$0xff]
        %v1022 = vld [vmem:[%s408 + $0xff0] sm:$0xff]
        %v1023 = vld [vmem:[%s408 + $0xff8] sm:$0xff]
        %v1024 = vld [vmem:[%s408 + $0x1000] sm:$0xff]
        %v1025 = vld [vmem:[%s408 + $0x1008] sm:$0xff]
        %v1026 = vld [vmem:[%s408 + $0x1010] sm:$0xff]
        %v1027 = vld [vmem:[%s408 + $0x1018] sm:$0xff]
        %v1028 = vld [vmem:[%s408 + $0x1020] sm:$0xff]
        %v1029 = vld [vmem:[%s408 + $0x1028] sm:$0xff]
        %v1030 = vld [vmem:[%s408 + $0x1030] sm:$0xff]
        %v1031 = vld [vmem:[%s408 + $0x1038] sm:$0xff]
        %v1032 = vld [vmem:[%s408 + $0x1040] sm:$0xff]
        %v1033 = vld [vmem:[%s408 + $0x1048] sm:$0xff]
        %v1034 = vld [vmem:[%s408 + $0x1050] sm:$0xff]
        %v1035 = vld [vmem:[%s408 + $0x1058] sm:$0xff]
        %v1036 = vld [vmem:[%s408 + $0x1060] sm:$0xff]
        %v1037 = vld [vmem:[%s408 + $0x1068] sm:$0xff]
        %v1038 = vld [vmem:[%s408 + $0x1070] sm:$0xff]
        %v1039 = vld [vmem:[%s408 + $0x1078] sm:$0xff]
        %v1040 = vld [vmem:[%s408 + $0x1080] sm:$0xff]
        %v1041 = vld [vmem:[%s408 + $0x1088] sm:$0xff]
        %v1042 = vld [vmem:[%s408 + $0x1090] sm:$0xff]
        %v1043 = vld [vmem:[%s408 + $0x1098] sm:$0xff]
        %v1044 = vld [vmem:[%s408 + $0x10a0] sm:$0xff]
        %v1045 = vld [vmem:[%s408 + $0x10a8] sm:$0xff]
        %v1046 = vld [vmem:[%s408 + $0x10b0] sm:$0xff]
        %v1047 = vld [vmem:[%s408 + $0x10b8] sm:$0xff]
        %v1048 = vld [vmem:[%s408 + $0x10c0] sm:$0xff]
        %v1049 = vld [vmem:[%s408 + $0x10c8] sm:$0xff]
        %v1050 = vld [vmem:[%s408 + $0x10d0] sm:$0xff]
        %v1051 = vld [vmem:[%s408 + $0x10d8] sm:$0xff]
        %v1052 = vld [vmem:[%s408 + $0x10e0] sm:$0xff]
        %v1053 = vld [vmem:[%s408 + $0x10e8] sm:$0xff]
        %v1054 = vld [vmem:[%s408 + $0x10f0] sm:$0xff]
        %v1055 = vld [vmem:[%s408 + $0x10f8] sm:$0xff]
        %v1056 = vld [vmem:[%s408 + $0x1100] sm:$0xff]
        %v1057 = vld [vmem:[%s408 + $0x1108] sm:$0xff]
        %v1058 = vld [vmem:[%s408 + $0x1110] sm:$0xff]
        %v1059 = vld [vmem:[%s408 + $0x1118] sm:$0xff]
        %v1060 = vld [vmem:[%s408 + $0x1120] sm:$0xff]
        %v1061 = vld [vmem:[%s408 + $0x1128] sm:$0xff]
        %v1062 = vld [vmem:[%s408 + $0x1130] sm:$0xff]
        %v1063 = vld [vmem:[%s408 + $0x1138] sm:$0xff]
        %v1064 = vld [vmem:[%s408 + $0x1140] sm:$0xff]
        %v1065 = vld [vmem:[%s408 + $0x1148] sm:$0xff]
        %v1066 = vld [vmem:[%s408 + $0x1150] sm:$0xff]
        %v1067 = vld [vmem:[%s408 + $0x1158] sm:$0xff]
        %v1068 = vld [vmem:[%s408 + $0x1160] sm:$0xff]
        %v1069 = vld [vmem:[%s408 + $0x1168] sm:$0xff]
        %v1070 = vld [vmem:[%s408 + $0x1170] sm:$0xff]
        %v1071 = vld [vmem:[%s408 + $0x1178] sm:$0xff]
        %v1072 = vld [vmem:[%s408 + $0x1180] sm:$0xff]
        %v1073 = vld [vmem:[%s408 + $0x1188] sm:$0xff]
        %v1074 = vld [vmem:[%s408 + $0x1190] sm:$0xff]
        %v1075 = vld [vmem:[%s408 + $0x1198] sm:$0xff]
        %v1076 = vld [vmem:[%s408 + $0x11a0] sm:$0xff]
        %v1077 = vld [vmem:[%s408 + $0x11a8] sm:$0xff]
        %v1078 = vld [vmem:[%s408 + $0x11b0] sm:$0xff]
        %v1079 = vld [vmem:[%s408 + $0x11b8] sm:$0xff]
        %v1080 = vld [vmem:[%s408 + $0x11c0] sm:$0xff]
        %v1081 = vld [vmem:[%s408 + $0x11c8] sm:$0xff]
        %v1082 = vld [vmem:[%s408 + $0x11d0] sm:$0xff]
        %v1083 = vld [vmem:[%s408 + $0x11d8] sm:$0xff]
        %v1084 = vld [vmem:[%s408 + $0x11e0] sm:$0xff]
        %v1085 = vld [vmem:[%s408 + $0x11e8] sm:$0xff]
        %v1086 = vld [vmem:[%s408 + $0x11f0] sm:$0xff]
        %v1087 = vld [vmem:[%s408 + $0x11f8] sm:$0xff]
        %v1664 = vunpack.c.l.b16 %v512
        %v1665 = vunpack.c.h.b16 %v512
        %v1666 = vunpack.c.l.b16 %v513
        %v1667 = vunpack.c.h.b16 %v513
        %v1668 = vunpack.c.l.b16 %v514
        %v1669 = vunpack.c.h.b16 %v514
        %v1670 = vunpack.c.l.b16 %v515
        %v1671 = vunpack.c.h.b16 %v515
        %v1672 = vunpack.c.l.b16 %v516
        %v1673 = vunpack.c.h.b16 %v516
        %v1674 = vunpack.c.l.b16 %v517
        %v1675 = vunpack.c.h.b16 %v517
        %v1676 = vunpack.c.l.b16 %v518
        %v1677 = vunpack.c.h.b16 %v518
        %v1678 = vunpack.c.l.b16 %v519
        %v1679 = vunpack.c.h.b16 %v519
        %v1680 = vunpack.c.l.b16 %v520
        %v1681 = vunpack.c.h.b16 %v520
        %v1682 = vunpack.c.l.b16 %v521
        %v1683 = vunpack.c.h.b16 %v521
        %v1684 = vunpack.c.l.b16 %v522
        %v1685 = vunpack.c.h.b16 %v522
        %v1686 = vunpack.c.l.b16 %v523
        %v1687 = vunpack.c.h.b16 %v523
        %v1688 = vunpack.c.l.b16 %v524
        %v1689 = vunpack.c.h.b16 %v524
        %v1690 = vunpack.c.l.b16 %v525
        %v1691 = vunpack.c.h.b16 %v525
        %v1692 = vunpack.c.l.b16 %v526
        %v1693 = vunpack.c.h.b16 %v526
        %v1694 = vunpack.c.l.b16 %v527
        %v1695 = vunpack.c.h.b16 %v527
        %v1696 = vunpack.c.l.b16 %v528
        %v1697 = vunpack.c.h.b16 %v528
        %v1698 = vunpack.c.l.b16 %v529
        %v1699 = vunpack.c.h.b16 %v529
        %v1700 = vunpack.c.l.b16 %v530
        %v1701 = vunpack.c.h.b16 %v530
        %v1702 = vunpack.c.l.b16 %v531
        %v1703 = vunpack.c.h.b16 %v531
        %v1704 = vunpack.c.l.b16 %v532
        %v1705 = vunpack.c.h.b16 %v532
        %v1706 = vunpack.c.l.b16 %v533
        %v1707 = vunpack.c.h.b16 %v533
        %v1708 = vunpack.c.l.b16 %v534
        %v1709 = vunpack.c.h.b16 %v534
        %v1710 = vunpack.c.l.b16 %v535
        %v1711 = vunpack.c.h.b16 %v535
        %v1712 = vunpack.c.l.b16 %v536
        %v1713 = vunpack.c.h.b16 %v536
        %v1714 = vunpack.c.l.b16 %v537
        %v1715 = vunpack.c.h.b16 %v537
        %v1716 = vunpack.c.l.b16 %v538
        %v1717 = vunpack.c.h.b16 %v538
        %v1718 = vunpack.c.l.b16 %v539
        %v1719 = vunpack.c.h.b16 %v539
        %v1720 = vunpack.c.l.b16 %v540
        %v1721 = vunpack.c.h.b16 %v540
        %v1722 = vunpack.c.l.b16 %v541
        %v1723 = vunpack.c.h.b16 %v541
        %v1724 = vunpack.c.l.b16 %v542
        %v1725 = vunpack.c.h.b16 %v542
        %v1726 = vunpack.c.l.b16 %v543
        %v1727 = vunpack.c.h.b16 %v543
        %v1728 = vunpack.c.l.b16 %v544
        %v1729 = vunpack.c.h.b16 %v544
        %v1730 = vunpack.c.l.b16 %v545
        %v1731 = vunpack.c.h.b16 %v545
        %v1732 = vunpack.c.l.b16 %v546
        %v1733 = vunpack.c.h.b16 %v546
        %v1734 = vunpack.c.l.b16 %v547
        %v1735 = vunpack.c.h.b16 %v547
        %v1736 = vunpack.c.l.b16 %v548
        %v1737 = vunpack.c.h.b16 %v548
        %v1738 = vunpack.c.l.b16 %v549
        %v1739 = vunpack.c.h.b16 %v549
        %v1740 = vunpack.c.l.b16 %v550
        %v1741 = vunpack.c.h.b16 %v550
        %v1742 = vunpack.c.l.b16 %v551
        %v1743 = vunpack.c.h.b16 %v551
        %v1744 = vunpack.c.l.b16 %v552
        %v1745 = vunpack.c.h.b16 %v552
        %v1746 = vunpack.c.l.b16 %v553
        %v1747 = vunpack.c.h.b16 %v553
        %v1748 = vunpack.c.l.b16 %v554
        %v1749 = vunpack.c.h.b16 %v554
        %v1750 = vunpack.c.l.b16 %v555
        %v1751 = vunpack.c.h.b16 %v555
        %v1752 = vunpack.c.l.b16 %v556
        %v1753 = vunpack.c.h.b16 %v556
        %v1754 = vunpack.c.l.b16 %v557
        %v1755 = vunpack.c.h.b16 %v557
        %v1756 = vunpack.c.l.b16 %v558
        %v1757 = vunpack.c.h.b16 %v558
        %v1758 = vunpack.c.l.b16 %v559
        %v1759 = vunpack.c.h.b16 %v559
        %v1760 = vunpack.c.l.b16 %v560
        %v1761 = vunpack.c.h.b16 %v560
        %v1762 = vunpack.c.l.b16 %v561
        %v1763 = vunpack.c.h.b16 %v561
        %v1764 = vunpack.c.l.b16 %v562
        %v1765 = vunpack.c.h.b16 %v562
        %v1766 = vunpack.c.l.b16 %v563
        %v1767 = vunpack.c.h.b16 %v563
        %v1768 = vunpack.c.l.b16 %v564
        %v1769 = vunpack.c.h.b16 %v564
        %v1770 = vunpack.c.l.b16 %v565
        %v1771 = vunpack.c.h.b16 %v565
        %v1772 = vunpack.c.l.b16 %v566
        %v1773 = vunpack.c.h.b16 %v566
        %v1774 = vunpack.c.l.b16 %v567
        %v1775 = vunpack.c.h.b16 %v567
        %v1776 = vunpack.c.l.b16 %v568
        %v1777 = vunpack.c.h.b16 %v568
        %v1778 = vunpack.c.l.b16 %v569
        %v1779 = vunpack.c.h.b16 %v569
        %v1780 = vunpack.c.l.b16 %v570
        %v1781 = vunpack.c.h.b16 %v570
        %v1782 = vunpack.c.l.b16 %v571
        %v1783 = vunpack.c.h.b16 %v571
        %v1784 = vunpack.c.l.b16 %v572
        %v1785 = vunpack.c.h.b16 %v572
        %v1786 = vunpack.c.l.b16 %v573
        %v1787 = vunpack.c.h.b16 %v573
        %v1788 = vunpack.c.l.b16 %v574
        %v1789 = vunpack.c.h.b16 %v574
        %v1790 = vunpack.c.l.b16 %v575
        %v1791 = vunpack.c.h.b16 %v575
        %v1792 = vunpack.c.l.b16 %v576
        %v1793 = vunpack.c.h.b16 %v576
        %v1794 = vunpack.c.l.b16 %v577
        %v1795 = vunpack.c.h.b16 %v577
        %v1796 = vunpack.c.l.b16 %v578
        %v1797 = vunpack.c.h.b16 %v578
        %v1798 = vunpack.c.l.b16 %v579
        %v1799 = vunpack.c.h.b16 %v579
        %v1800 = vunpack.c.l.b16 %v580
        %v1801 = vunpack.c.h.b16 %v580
        %v1802 = vunpack.c.l.b16 %v581
        %v1803 = vunpack.c.h.b16 %v581
        %v1804 = vunpack.c.l.b16 %v582
        %v1805 = vunpack.c.h.b16 %v582
        %v1806 = vunpack.c.l.b16 %v583
        %v1807 = vunpack.c.h.b16 %v583
        %v1808 = vunpack.c.l.b16 %v584
        %v1809 = vunpack.c.h.b16 %v584
        %v1810 = vunpack.c.l.b16 %v585
        %v1811 = vunpack.c.h.b16 %v585
        %v1812 = vunpack.c.l.b16 %v586
        %v1813 = vunpack.c.h.b16 %v586
        %v1814 = vunpack.c.l.b16 %v587
        %v1815 = vunpack.c.h.b16 %v587
        %v1816 = vunpack.c.l.b16 %v588
        %v1817 = vunpack.c.h.b16 %v588
        %v1818 = vunpack.c.l.b16 %v589
        %v1819 = vunpack.c.h.b16 %v589
        %v1820 = vunpack.c.l.b16 %v590
        %v1821 = vunpack.c.h.b16 %v590
        %v1822 = vunpack.c.l.b16 %v591
        %v1823 = vunpack.c.h.b16 %v591
        %v1824 = vunpack.c.l.b16 %v592
        %v1825 = vunpack.c.h.b16 %v592
        %v1826 = vunpack.c.l.b16 %v593
        %v1827 = vunpack.c.h.b16 %v593
        %v1828 = vunpack.c.l.b16 %v594
        %v1829 = vunpack.c.h.b16 %v594
        %v1830 = vunpack.c.l.b16 %v595
        %v1831 = vunpack.c.h.b16 %v595
        %v1832 = vunpack.c.l.b16 %v596
        %v1833 = vunpack.c.h.b16 %v596
        %v1834 = vunpack.c.l.b16 %v597
        %v1835 = vunpack.c.h.b16 %v597
        %v1836 = vunpack.c.l.b16 %v598
        %v1837 = vunpack.c.h.b16 %v598
        %v1838 = vunpack.c.l.b16 %v599
        %v1839 = vunpack.c.h.b16 %v599
        %v1840 = vunpack.c.l.b16 %v600
        %v1841 = vunpack.c.h.b16 %v600
        %v1842 = vunpack.c.l.b16 %v601
        %v1843 = vunpack.c.h.b16 %v601
        %v1844 = vunpack.c.l.b16 %v602
        %v1845 = vunpack.c.h.b16 %v602
        %v1846 = vunpack.c.l.b16 %v603
        %v1847 = vunpack.c.h.b16 %v603
        %v1848 = vunpack.c.l.b16 %v604
        %v1849 = vunpack.c.h.b16 %v604
        %v1850 = vunpack.c.l.b16 %v605
        %v1851 = vunpack.c.h.b16 %v605
        %v1852 = vunpack.c.l.b16 %v606
        %v1853 = vunpack.c.h.b16 %v606
        %v1854 = vunpack.c.l.b16 %v607
        %v1855 = vunpack.c.h.b16 %v607
        %v1856 = vunpack.c.l.b16 %v608
        %v1857 = vunpack.c.h.b16 %v608
        %v1858 = vunpack.c.l.b16 %v609
        %v1859 = vunpack.c.h.b16 %v609
        %v1860 = vunpack.c.l.b16 %v610
        %v1861 = vunpack.c.h.b16 %v610
        %v1862 = vunpack.c.l.b16 %v611
        %v1863 = vunpack.c.h.b16 %v611
        %v1864 = vunpack.c.l.b16 %v612
        %v1865 = vunpack.c.h.b16 %v612
        %v1866 = vunpack.c.l.b16 %v613
        %v1867 = vunpack.c.h.b16 %v613
        %v1868 = vunpack.c.l.b16 %v614
        %v1869 = vunpack.c.h.b16 %v614
        %v1870 = vunpack.c.l.b16 %v615
        %v1871 = vunpack.c.h.b16 %v615
        %v1872 = vunpack.c.l.b16 %v616
        %v1873 = vunpack.c.h.b16 %v616
        %v1874 = vunpack.c.l.b16 %v617
        %v1875 = vunpack.c.h.b16 %v617
        %v1876 = vunpack.c.l.b16 %v618
        %v1877 = vunpack.c.h.b16 %v618
        %v1878 = vunpack.c.l.b16 %v619
        %v1879 = vunpack.c.h.b16 %v619
        %v1880 = vunpack.c.l.b16 %v620
        %v1881 = vunpack.c.h.b16 %v620
        %v1882 = vunpack.c.l.b16 %v621
        %v1883 = vunpack.c.h.b16 %v621
        %v1884 = vunpack.c.l.b16 %v622
        %v1885 = vunpack.c.h.b16 %v622
        %v1886 = vunpack.c.l.b16 %v623
        %v1887 = vunpack.c.h.b16 %v623
        %v1888 = vunpack.c.l.b16 %v624
        %v1889 = vunpack.c.h.b16 %v624
        %v1890 = vunpack.c.l.b16 %v625
        %v1891 = vunpack.c.h.b16 %v625
        %v1892 = vunpack.c.l.b16 %v626
        %v1893 = vunpack.c.h.b16 %v626
        %v1894 = vunpack.c.l.b16 %v627
        %v1895 = vunpack.c.h.b16 %v627
        %v1896 = vunpack.c.l.b16 %v628
        %v1897 = vunpack.c.h.b16 %v628
        %v1898 = vunpack.c.l.b16 %v629
        %v1899 = vunpack.c.h.b16 %v629
        %v1900 = vunpack.c.l.b16 %v630
        %v1901 = vunpack.c.h.b16 %v630
        %v1902 = vunpack.c.l.b16 %v631
        %v1903 = vunpack.c.h.b16 %v631
        %v1904 = vunpack.c.l.b16 %v632
        %v1905 = vunpack.c.h.b16 %v632
        %v1906 = vunpack.c.l.b16 %v633
        %v1907 = vunpack.c.h.b16 %v633
        %v1908 = vunpack.c.l.b16 %v634
        %v1909 = vunpack.c.h.b16 %v634
        %v1910 = vunpack.c.l.b16 %v635
        %v1911 = vunpack.c.h.b16 %v635
        %v1912 = vunpack.c.l.b16 %v636
        %v1913 = vunpack.c.h.b16 %v636
        %v1914 = vunpack.c.l.b16 %v637
        %v1915 = vunpack.c.h.b16 %v637
        %v1916 = vunpack.c.l.b16 %v638
        %v1917 = vunpack.c.h.b16 %v638
        %v1918 = vunpack.c.l.b16 %v639
        %v1919 = vunpack.c.h.b16 %v639
        %v1920 = vunpack.c.l.b16 %v640
        %v1921 = vunpack.c.h.b16 %v640
        %v1922 = vunpack.c.l.b16 %v641
        %v1923 = vunpack.c.h.b16 %v641
        %v1924 = vunpack.c.l.b16 %v642
        %v1925 = vunpack.c.h.b16 %v642
        %v1926 = vunpack.c.l.b16 %v643
        %v1927 = vunpack.c.h.b16 %v643
        %v1928 = vunpack.c.l.b16 %v644
        %v1929 = vunpack.c.h.b16 %v644
        %v1930 = vunpack.c.l.b16 %v645
        %v1931 = vunpack.c.h.b16 %v645
        %v1932 = vunpack.c.l.b16 %v646
        %v1933 = vunpack.c.h.b16 %v646
        %v1934 = vunpack.c.l.b16 %v647
        %v1935 = vunpack.c.h.b16 %v647
        %v1936 = vunpack.c.l.b16 %v648
        %v1937 = vunpack.c.h.b16 %v648
        %v1938 = vunpack.c.l.b16 %v649
        %v1939 = vunpack.c.h.b16 %v649
        %v1940 = vunpack.c.l.b16 %v650
        %v1941 = vunpack.c.h.b16 %v650
        %v1942 = vunpack.c.l.b16 %v651
        %v1943 = vunpack.c.h.b16 %v651
        %v1944 = vunpack.c.l.b16 %v652
        %v1945 = vunpack.c.h.b16 %v652
        %v1946 = vunpack.c.l.b16 %v653
        %v1947 = vunpack.c.h.b16 %v653
        %v1948 = vunpack.c.l.b16 %v654
        %v1949 = vunpack.c.h.b16 %v654
        %v1950 = vunpack.c.l.b16 %v655
        %v1951 = vunpack.c.h.b16 %v655
        %v1952 = vunpack.c.l.b16 %v656
        %v1953 = vunpack.c.h.b16 %v656
        %v1954 = vunpack.c.l.b16 %v657
        %v1955 = vunpack.c.h.b16 %v657
        %v1956 = vunpack.c.l.b16 %v658
        %v1957 = vunpack.c.h.b16 %v658
        %v1958 = vunpack.c.l.b16 %v659
        %v1959 = vunpack.c.h.b16 %v659
        %v1960 = vunpack.c.l.b16 %v660
        %v1961 = vunpack.c.h.b16 %v660
        %v1962 = vunpack.c.l.b16 %v661
        %v1963 = vunpack.c.h.b16 %v661
        %v1964 = vunpack.c.l.b16 %v662
        %v1965 = vunpack.c.h.b16 %v662
        %v1966 = vunpack.c.l.b16 %v663
        %v1967 = vunpack.c.h.b16 %v663
        %v1968 = vunpack.c.l.b16 %v664
        %v1969 = vunpack.c.h.b16 %v664
        %v1970 = vunpack.c.l.b16 %v665
        %v1971 = vunpack.c.h.b16 %v665
        %v1972 = vunpack.c.l.b16 %v666
        %v1973 = vunpack.c.h.b16 %v666
        %v1974 = vunpack.c.l.b16 %v667
        %v1975 = vunpack.c.h.b16 %v667
        %v1976 = vunpack.c.l.b16 %v668
        %v1977 = vunpack.c.h.b16 %v668
        %v1978 = vunpack.c.l.b16 %v669
        %v1979 = vunpack.c.h.b16 %v669
        %v1980 = vunpack.c.l.b16 %v670
        %v1981 = vunpack.c.h.b16 %v670
        %v1982 = vunpack.c.l.b16 %v671
        %v1983 = vunpack.c.h.b16 %v671
        %v1984 = vunpack.c.l.b16 %v672
        %v1985 = vunpack.c.h.b16 %v672
        %v1986 = vunpack.c.l.b16 %v673
        %v1987 = vunpack.c.h.b16 %v673
        %v1988 = vunpack.c.l.b16 %v674
        %v1989 = vunpack.c.h.b16 %v674
        %v1990 = vunpack.c.l.b16 %v675
        %v1991 = vunpack.c.h.b16 %v675
        %v1992 = vunpack.c.l.b16 %v676
        %v1993 = vunpack.c.h.b16 %v676
        %v1994 = vunpack.c.l.b16 %v677
        %v1995 = vunpack.c.h.b16 %v677
        %v1996 = vunpack.c.l.b16 %v678
        %v1997 = vunpack.c.h.b16 %v678
        %v1998 = vunpack.c.l.b16 %v679
        %v1999 = vunpack.c.h.b16 %v679
        %v2000 = vunpack.c.l.b16 %v680
        %v2001 = vunpack.c.h.b16 %v680
        %v2002 = vunpack.c.l.b16 %v681
        %v2003 = vunpack.c.h.b16 %v681
        %v2004 = vunpack.c.l.b16 %v682
        %v2005 = vunpack.c.h.b16 %v682
        %v2006 = vunpack.c.l.b16 %v683
        %v2007 = vunpack.c.h.b16 %v683
        %v2008 = vunpack.c.l.b16 %v684
        %v2009 = vunpack.c.h.b16 %v684
        %v2010 = vunpack.c.l.b16 %v685
        %v2011 = vunpack.c.h.b16 %v685
        %v2012 = vunpack.c.l.b16 %v686
        %v2013 = vunpack.c.h.b16 %v686
        %v2014 = vunpack.c.l.b16 %v687
        %v2015 = vunpack.c.h.b16 %v687
        %v2016 = vunpack.c.l.b16 %v688
        %v2017 = vunpack.c.h.b16 %v688
        %v2018 = vunpack.c.l.b16 %v689
        %v2019 = vunpack.c.h.b16 %v689
        %v2020 = vunpack.c.l.b16 %v690
        %v2021 = vunpack.c.h.b16 %v690
        %v2022 = vunpack.c.l.b16 %v691
        %v2023 = vunpack.c.h.b16 %v691
        %v2024 = vunpack.c.l.b16 %v692
        %v2025 = vunpack.c.h.b16 %v692
        %v2026 = vunpack.c.l.b16 %v693
        %v2027 = vunpack.c.h.b16 %v693
        %v2028 = vunpack.c.l.b16 %v694
        %v2029 = vunpack.c.h.b16 %v694
        %v2030 = vunpack.c.l.b16 %v695
        %v2031 = vunpack.c.h.b16 %v695
        %v2032 = vunpack.c.l.b16 %v696
        %v2033 = vunpack.c.h.b16 %v696
        %v2034 = vunpack.c.l.b16 %v697
        %v2035 = vunpack.c.h.b16 %v697
        %v2036 = vunpack.c.l.b16 %v698
        %v2037 = vunpack.c.h.b16 %v698
        %v2038 = vunpack.c.l.b16 %v699
        %v2039 = vunpack.c.h.b16 %v699
        %v2040 = vunpack.c.l.b16 %v700
        %v2041 = vunpack.c.h.b16 %v700
        %v2042 = vunpack.c.l.b16 %v701
        %v2043 = vunpack.c.h.b16 %v701
        %v2044 = vunpack.c.l.b16 %v702
        %v2045 = vunpack.c.h.b16 %v702
        %v2046 = vunpack.c.l.b16 %v703
        %v2047 = vunpack.c.h.b16 %v703
        %v2048 = vunpack.c.l.b16 %v704
        %v2049 = vunpack.c.h.b16 %v704
        %v2050 = vunpack.c.l.b16 %v705
        %v2051 = vunpack.c.h.b16 %v705
        %v2052 = vunpack.c.l.b16 %v706
        %v2053 = vunpack.c.h.b16 %v706
        %v2054 = vunpack.c.l.b16 %v707
        %v2055 = vunpack.c.h.b16 %v707
        %v2056 = vunpack.c.l.b16 %v708
        %v2057 = vunpack.c.h.b16 %v708
        %v2058 = vunpack.c.l.b16 %v709
        %v2059 = vunpack.c.h.b16 %v709
        %v2060 = vunpack.c.l.b16 %v710
        %v2061 = vunpack.c.h.b16 %v710
        %v2062 = vunpack.c.l.b16 %v711
        %v2063 = vunpack.c.h.b16 %v711
        %v2064 = vunpack.c.l.b16 %v712
        %v2065 = vunpack.c.h.b16 %v712
        %v2066 = vunpack.c.l.b16 %v713
        %v2067 = vunpack.c.h.b16 %v713
        %v2068 = vunpack.c.l.b16 %v714
        %v2069 = vunpack.c.h.b16 %v714
        %v2070 = vunpack.c.l.b16 %v715
        %v2071 = vunpack.c.h.b16 %v715
        %v2072 = vunpack.c.l.b16 %v716
        %v2073 = vunpack.c.h.b16 %v716
        %v2074 = vunpack.c.l.b16 %v717
        %v2075 = vunpack.c.h.b16 %v717
        %v2076 = vunpack.c.l.b16 %v718
        %v2077 = vunpack.c.h.b16 %v718
        %v2078 = vunpack.c.l.b16 %v719
        %v2079 = vunpack.c.h.b16 %v719
        %v2080 = vunpack.c.l.b16 %v720
        %v2081 = vunpack.c.h.b16 %v720
        %v2082 = vunpack.c.l.b16 %v721
        %v2083 = vunpack.c.h.b16 %v721
        %v2084 = vunpack.c.l.b16 %v722
        %v2085 = vunpack.c.h.b16 %v722
        %v2086 = vunpack.c.l.b16 %v723
        %v2087 = vunpack.c.h.b16 %v723
        %v2088 = vunpack.c.l.b16 %v724
        %v2089 = vunpack.c.h.b16 %v724
        %v2090 = vunpack.c.l.b16 %v725
        %v2091 = vunpack.c.h.b16 %v725
        %v2092 = vunpack.c.l.b16 %v726
        %v2093 = vunpack.c.h.b16 %v726
        %v2094 = vunpack.c.l.b16 %v727
        %v2095 = vunpack.c.h.b16 %v727
        %v2096 = vunpack.c.l.b16 %v728
        %v2097 = vunpack.c.h.b16 %v728
        %v2098 = vunpack.c.l.b16 %v729
        %v2099 = vunpack.c.h.b16 %v729
        %v2100 = vunpack.c.l.b16 %v730
        %v2101 = vunpack.c.h.b16 %v730
        %v2102 = vunpack.c.l.b16 %v731
        %v2103 = vunpack.c.h.b16 %v731
        %v2104 = vunpack.c.l.b16 %v732
        %v2105 = vunpack.c.h.b16 %v732
        %v2106 = vunpack.c.l.b16 %v733
        %v2107 = vunpack.c.h.b16 %v733
        %v2108 = vunpack.c.l.b16 %v734
        %v2109 = vunpack.c.h.b16 %v734
        %v2110 = vunpack.c.l.b16 %v735
        %v2111 = vunpack.c.h.b16 %v735
        %v2112 = vunpack.c.l.b16 %v736
        %v2113 = vunpack.c.h.b16 %v736
        %v2114 = vunpack.c.l.b16 %v737
        %v2115 = vunpack.c.h.b16 %v737
        %v2116 = vunpack.c.l.b16 %v738
        %v2117 = vunpack.c.h.b16 %v738
        %v2118 = vunpack.c.l.b16 %v739
        %v2119 = vunpack.c.h.b16 %v739
        %v2120 = vunpack.c.l.b16 %v740
        %v2121 = vunpack.c.h.b16 %v740
        %v2122 = vunpack.c.l.b16 %v741
        %v2123 = vunpack.c.h.b16 %v741
        %v2124 = vunpack.c.l.b16 %v742
        %v2125 = vunpack.c.h.b16 %v742
        %v2126 = vunpack.c.l.b16 %v743
        %v2127 = vunpack.c.h.b16 %v743
        %v2128 = vunpack.c.l.b16 %v744
        %v2129 = vunpack.c.h.b16 %v744
        %v2130 = vunpack.c.l.b16 %v745
        %v2131 = vunpack.c.h.b16 %v745
        %v2132 = vunpack.c.l.b16 %v746
        %v2133 = vunpack.c.h.b16 %v746
        %v2134 = vunpack.c.l.b16 %v747
        %v2135 = vunpack.c.h.b16 %v747
        %v2136 = vunpack.c.l.b16 %v748
        %v2137 = vunpack.c.h.b16 %v748
        %v2138 = vunpack.c.l.b16 %v749
        %v2139 = vunpack.c.h.b16 %v749
        %v2140 = vunpack.c.l.b16 %v750
        %v2141 = vunpack.c.h.b16 %v750
        %v2142 = vunpack.c.l.b16 %v751
        %v2143 = vunpack.c.h.b16 %v751
        %v2144 = vunpack.c.l.b16 %v752
        %v2145 = vunpack.c.h.b16 %v752
        %v2146 = vunpack.c.l.b16 %v753
        %v2147 = vunpack.c.h.b16 %v753
        %v2148 = vunpack.c.l.b16 %v754
        %v2149 = vunpack.c.h.b16 %v754
        %v2150 = vunpack.c.l.b16 %v755
        %v2151 = vunpack.c.h.b16 %v755
        %v2152 = vunpack.c.l.b16 %v756
        %v2153 = vunpack.c.h.b16 %v756
        %v2154 = vunpack.c.l.b16 %v757
        %v2155 = vunpack.c.h.b16 %v757
        %v2156 = vunpack.c.l.b16 %v758
        %v2157 = vunpack.c.h.b16 %v758
        %v2158 = vunpack.c.l.b16 %v759
        %v2159 = vunpack.c.h.b16 %v759
        %v2160 = vunpack.c.l.b16 %v760
        %v2161 = vunpack.c.h.b16 %v760
        %v2162 = vunpack.c.l.b16 %v761
        %v2163 = vunpack.c.h.b16 %v761
        %v2164 = vunpack.c.l.b16 %v762
        %v2165 = vunpack.c.h.b16 %v762
        %v2166 = vunpack.c.l.b16 %v763
        %v2167 = vunpack.c.h.b16 %v763
        %v2168 = vunpack.c.l.b16 %v764
        %v2169 = vunpack.c.h.b16 %v764
        %v2170 = vunpack.c.l.b16 %v765
        %v2171 = vunpack.c.h.b16 %v765
        %v2172 = vunpack.c.l.b16 %v766
        %v2173 = vunpack.c.h.b16 %v766
        %v2174 = vunpack.c.l.b16 %v767
        %v2175 = vunpack.c.h.b16 %v767
        %v2176 = vunpack.c.l.b16 %v768
        %v2177 = vunpack.c.h.b16 %v768
        %v2178 = vunpack.c.l.b16 %v769
        %v2179 = vunpack.c.h.b16 %v769
        %v2180 = vunpack.c.l.b16 %v770
        %v2181 = vunpack.c.h.b16 %v770
        %v2182 = vunpack.c.l.b16 %v771
        %v2183 = vunpack.c.h.b16 %v771
        %v2184 = vunpack.c.l.b16 %v772
        %v2185 = vunpack.c.h.b16 %v772
        %v2186 = vunpack.c.l.b16 %v773
        %v2187 = vunpack.c.h.b16 %v773
        %v2188 = vunpack.c.l.b16 %v774
        %v2189 = vunpack.c.h.b16 %v774
        %v2190 = vunpack.c.l.b16 %v775
        %v2191 = vunpack.c.h.b16 %v775
        %v2192 = vunpack.c.l.b16 %v776
        %v2193 = vunpack.c.h.b16 %v776
        %v2194 = vunpack.c.l.b16 %v777
        %v2195 = vunpack.c.h.b16 %v777
        %v2196 = vunpack.c.l.b16 %v778
        %v2197 = vunpack.c.h.b16 %v778
        %v2198 = vunpack.c.l.b16 %v779
        %v2199 = vunpack.c.h.b16 %v779
        %v2200 = vunpack.c.l.b16 %v780
        %v2201 = vunpack.c.h.b16 %v780
        %v2202 = vunpack.c.l.b16 %v781
        %v2203 = vunpack.c.h.b16 %v781
        %v2204 = vunpack.c.l.b16 %v782
        %v2205 = vunpack.c.h.b16 %v782
        %v2206 = vunpack.c.l.b16 %v783
        %v2207 = vunpack.c.h.b16 %v783
        %v2208 = vunpack.c.l.b16 %v784
        %v2209 = vunpack.c.h.b16 %v784
        %v2210 = vunpack.c.l.b16 %v785
        %v2211 = vunpack.c.h.b16 %v785
        %v2212 = vunpack.c.l.b16 %v786
        %v2213 = vunpack.c.h.b16 %v786
        %v2214 = vunpack.c.l.b16 %v787
        %v2215 = vunpack.c.h.b16 %v787
        %v2216 = vunpack.c.l.b16 %v788
        %v2217 = vunpack.c.h.b16 %v788
        %v2218 = vunpack.c.l.b16 %v789
        %v2219 = vunpack.c.h.b16 %v789
        %v2220 = vunpack.c.l.b16 %v790
        %v2221 = vunpack.c.h.b16 %v790
        %v2222 = vunpack.c.l.b16 %v791
        %v2223 = vunpack.c.h.b16 %v791
        %v2224 = vunpack.c.l.b16 %v792
        %v2225 = vunpack.c.h.b16 %v792
        %v2226 = vunpack.c.l.b16 %v793
        %v2227 = vunpack.c.h.b16 %v793
        %v2228 = vunpack.c.l.b16 %v794
        %v2229 = vunpack.c.h.b16 %v794
        %v2230 = vunpack.c.l.b16 %v795
        %v2231 = vunpack.c.h.b16 %v795
        %v2232 = vunpack.c.l.b16 %v796
        %v2233 = vunpack.c.h.b16 %v796
        %v2234 = vunpack.c.l.b16 %v797
        %v2235 = vunpack.c.h.b16 %v797
        %v2236 = vunpack.c.l.b16 %v798
        %v2237 = vunpack.c.h.b16 %v798
        %v2238 = vunpack.c.l.b16 %v799
        %v2239 = vunpack.c.h.b16 %v799
        %v2240 = vunpack.c.l.b16 %v800
        %v2241 = vunpack.c.h.b16 %v800
        %v2242 = vunpack.c.l.b16 %v801
        %v2243 = vunpack.c.h.b16 %v801
        %v2244 = vunpack.c.l.b16 %v802
        %v2245 = vunpack.c.h.b16 %v802
        %v2246 = vunpack.c.l.b16 %v803
        %v2247 = vunpack.c.h.b16 %v803
        %v2248 = vunpack.c.l.b16 %v804
        %v2249 = vunpack.c.h.b16 %v804
        %v2250 = vunpack.c.l.b16 %v805
        %v2251 = vunpack.c.h.b16 %v805
        %v2252 = vunpack.c.l.b16 %v806
        %v2253 = vunpack.c.h.b16 %v806
        %v2254 = vunpack.c.l.b16 %v807
        %v2255 = vunpack.c.h.b16 %v807
        %v2256 = vunpack.c.l.b16 %v808
        %v2257 = vunpack.c.h.b16 %v808
        %v2258 = vunpack.c.l.b16 %v809
        %v2259 = vunpack.c.h.b16 %v809
        %v2260 = vunpack.c.l.b16 %v810
        %v2261 = vunpack.c.h.b16 %v810
        %v2262 = vunpack.c.l.b16 %v811
        %v2263 = vunpack.c.h.b16 %v811
        %v2264 = vunpack.c.l.b16 %v812
        %v2265 = vunpack.c.h.b16 %v812
        %v2266 = vunpack.c.l.b16 %v813
        %v2267 = vunpack.c.h.b16 %v813
        %v2268 = vunpack.c.l.b16 %v814
        %v2269 = vunpack.c.h.b16 %v814
        %v2270 = vunpack.c.l.b16 %v815
        %v2271 = vunpack.c.h.b16 %v815
        %v2272 = vunpack.c.l.b16 %v816
        %v2273 = vunpack.c.h.b16 %v816
        %v2274 = vunpack.c.l.b16 %v817
        %v2275 = vunpack.c.h.b16 %v817
        %v2276 = vunpack.c.l.b16 %v818
        %v2277 = vunpack.c.h.b16 %v818
        %v2278 = vunpack.c.l.b16 %v819
        %v2279 = vunpack.c.h.b16 %v819
        %v2280 = vunpack.c.l.b16 %v820
        %v2281 = vunpack.c.h.b16 %v820
        %v2282 = vunpack.c.l.b16 %v821
        %v2283 = vunpack.c.h.b16 %v821
        %v2284 = vunpack.c.l.b16 %v822
        %v2285 = vunpack.c.h.b16 %v822
        %v2286 = vunpack.c.l.b16 %v823
        %v2287 = vunpack.c.h.b16 %v823
        %v2288 = vunpack.c.l.b16 %v824
        %v2289 = vunpack.c.h.b16 %v824
        %v2290 = vunpack.c.l.b16 %v825
        %v2291 = vunpack.c.h.b16 %v825
        %v2292 = vunpack.c.l.b16 %v826
        %v2293 = vunpack.c.h.b16 %v826
        %v2294 = vunpack.c.l.b16 %v827
        %v2295 = vunpack.c.h.b16 %v827
        %v2296 = vunpack.c.l.b16 %v828
        %v2297 = vunpack.c.h.b16 %v828
        %v2298 = vunpack.c.l.b16 %v829
        %v2299 = vunpack.c.h.b16 %v829
        %v2300 = vunpack.c.l.b16 %v830
        %v2301 = vunpack.c.h.b16 %v830
        %v2302 = vunpack.c.l.b16 %v831
        %v2303 = vunpack.c.h.b16 %v831
        %v2304 = vunpack.c.l.b16 %v832
        %v2305 = vunpack.c.h.b16 %v832
        %v2306 = vunpack.c.l.b16 %v833
        %v2307 = vunpack.c.h.b16 %v833
        %v2308 = vunpack.c.l.b16 %v834
        %v2309 = vunpack.c.h.b16 %v834
        %v2310 = vunpack.c.l.b16 %v835
        %v2311 = vunpack.c.h.b16 %v835
        %v2312 = vunpack.c.l.b16 %v836
        %v2313 = vunpack.c.h.b16 %v836
        %v2314 = vunpack.c.l.b16 %v837
        %v2315 = vunpack.c.h.b16 %v837
        %v2316 = vunpack.c.l.b16 %v838
        %v2317 = vunpack.c.h.b16 %v838
        %v2318 = vunpack.c.l.b16 %v839
        %v2319 = vunpack.c.h.b16 %v839
        %v2320 = vunpack.c.l.b16 %v840
        %v2321 = vunpack.c.h.b16 %v840
        %v2322 = vunpack.c.l.b16 %v841
        %v2323 = vunpack.c.h.b16 %v841
        %v2324 = vunpack.c.l.b16 %v842
        %v2325 = vunpack.c.h.b16 %v842
        %v2326 = vunpack.c.l.b16 %v843
        %v2327 = vunpack.c.h.b16 %v843
        %v2328 = vunpack.c.l.b16 %v844
        %v2329 = vunpack.c.h.b16 %v844
        %v2330 = vunpack.c.l.b16 %v845
        %v2331 = vunpack.c.h.b16 %v845
        %v2332 = vunpack.c.l.b16 %v846
        %v2333 = vunpack.c.h.b16 %v846
        %v2334 = vunpack.c.l.b16 %v847
        %v2335 = vunpack.c.h.b16 %v847
        %v2336 = vunpack.c.l.b16 %v848
        %v2337 = vunpack.c.h.b16 %v848
        %v2338 = vunpack.c.l.b16 %v849
        %v2339 = vunpack.c.h.b16 %v849
        %v2340 = vunpack.c.l.b16 %v850
        %v2341 = vunpack.c.h.b16 %v850
        %v2342 = vunpack.c.l.b16 %v851
        %v2343 = vunpack.c.h.b16 %v851
        %v2344 = vunpack.c.l.b16 %v852
        %v2345 = vunpack.c.h.b16 %v852
        %v2346 = vunpack.c.l.b16 %v853
        %v2347 = vunpack.c.h.b16 %v853
        %v2348 = vunpack.c.l.b16 %v854
        %v2349 = vunpack.c.h.b16 %v854
        %v2350 = vunpack.c.l.b16 %v855
        %v2351 = vunpack.c.h.b16 %v855
        %v2352 = vunpack.c.l.b16 %v856
        %v2353 = vunpack.c.h.b16 %v856
        %v2354 = vunpack.c.l.b16 %v857
        %v2355 = vunpack.c.h.b16 %v857
        %v2356 = vunpack.c.l.b16 %v858
        %v2357 = vunpack.c.h.b16 %v858
        %v2358 = vunpack.c.l.b16 %v859
        %v2359 = vunpack.c.h.b16 %v859
        %v2360 = vunpack.c.l.b16 %v860
        %v2361 = vunpack.c.h.b16 %v860
        %v2362 = vunpack.c.l.b16 %v861
        %v2363 = vunpack.c.h.b16 %v861
        %v2364 = vunpack.c.l.b16 %v862
        %v2365 = vunpack.c.h.b16 %v862
        %v2366 = vunpack.c.l.b16 %v863
        %v2367 = vunpack.c.h.b16 %v863
        %v2368 = vunpack.c.l.b16 %v864
        %v2369 = vunpack.c.h.b16 %v864
        %v2370 = vunpack.c.l.b16 %v865
        %v2371 = vunpack.c.h.b16 %v865
        %v2372 = vunpack.c.l.b16 %v866
        %v2373 = vunpack.c.h.b16 %v866
        %v2374 = vunpack.c.l.b16 %v867
        %v2375 = vunpack.c.h.b16 %v867
        %v2376 = vunpack.c.l.b16 %v868
        %v2377 = vunpack.c.h.b16 %v868
        %v2378 = vunpack.c.l.b16 %v869
        %v2379 = vunpack.c.h.b16 %v869
        %v2380 = vunpack.c.l.b16 %v870
        %v2381 = vunpack.c.h.b16 %v870
        %v2382 = vunpack.c.l.b16 %v871
        %v2383 = vunpack.c.h.b16 %v871
        %v2384 = vunpack.c.l.b16 %v872
        %v2385 = vunpack.c.h.b16 %v872
        %v2386 = vunpack.c.l.b16 %v873
        %v2387 = vunpack.c.h.b16 %v873
        %v2388 = vunpack.c.l.b16 %v874
        %v2389 = vunpack.c.h.b16 %v874
        %v2390 = vunpack.c.l.b16 %v875
        %v2391 = vunpack.c.h.b16 %v875
        %v2392 = vunpack.c.l.b16 %v876
        %v2393 = vunpack.c.h.b16 %v876
        %v2394 = vunpack.c.l.b16 %v877
        %v2395 = vunpack.c.h.b16 %v877
        %v2396 = vunpack.c.l.b16 %v878
        %v2397 = vunpack.c.h.b16 %v878
        %v2398 = vunpack.c.l.b16 %v879
        %v2399 = vunpack.c.h.b16 %v879
        %v2400 = vunpack.c.l.b16 %v880
        %v2401 = vunpack.c.h.b16 %v880
        %v2402 = vunpack.c.l.b16 %v881
        %v2403 = vunpack.c.h.b16 %v881
        %v2404 = vunpack.c.l.b16 %v882
        %v2405 = vunpack.c.h.b16 %v882
        %v2406 = vunpack.c.l.b16 %v883
        %v2407 = vunpack.c.h.b16 %v883
        %v2408 = vunpack.c.l.b16 %v884
        %v2409 = vunpack.c.h.b16 %v884
        %v2410 = vunpack.c.l.b16 %v885
        %v2411 = vunpack.c.h.b16 %v885
        %v2412 = vunpack.c.l.b16 %v886
        %v2413 = vunpack.c.h.b16 %v886
        %v2414 = vunpack.c.l.b16 %v887
        %v2415 = vunpack.c.h.b16 %v887
        %v2416 = vunpack.c.l.b16 %v888
        %v2417 = vunpack.c.h.b16 %v888
        %v2418 = vunpack.c.l.b16 %v889
        %v2419 = vunpack.c.h.b16 %v889
        %v2420 = vunpack.c.l.b16 %v890
        %v2421 = vunpack.c.h.b16 %v890
        %v2422 = vunpack.c.l.b16 %v891
        %v2423 = vunpack.c.h.b16 %v891
        %v2424 = vunpack.c.l.b16 %v892
        %v2425 = vunpack.c.h.b16 %v892
        %v2426 = vunpack.c.l.b16 %v893
        %v2427 = vunpack.c.h.b16 %v893
        %v2428 = vunpack.c.l.b16 %v894
        %v2429 = vunpack.c.h.b16 %v894
        %v2430 = vunpack.c.l.b16 %v895
        %v2431 = vunpack.c.h.b16 %v895
        %v2432 = vunpack.c.l.b16 %v896
        %v2433 = vunpack.c.h.b16 %v896
        %v2434 = vunpack.c.l.b16 %v897
        %v2435 = vunpack.c.h.b16 %v897
        %v2436 = vunpack.c.l.b16 %v898
        %v2437 = vunpack.c.h.b16 %v898
        %v2438 = vunpack.c.l.b16 %v899
        %v2439 = vunpack.c.h.b16 %v899
        %v2440 = vunpack.c.l.b16 %v900
        %v2441 = vunpack.c.h.b16 %v900
        %v2442 = vunpack.c.l.b16 %v901
        %v2443 = vunpack.c.h.b16 %v901
        %v2444 = vunpack.c.l.b16 %v902
        %v2445 = vunpack.c.h.b16 %v902
        %v2446 = vunpack.c.l.b16 %v903
        %v2447 = vunpack.c.h.b16 %v903
        %v2448 = vunpack.c.l.b16 %v904
        %v2449 = vunpack.c.h.b16 %v904
        %v2450 = vunpack.c.l.b16 %v905
        %v2451 = vunpack.c.h.b16 %v905
        %v2452 = vunpack.c.l.b16 %v906
        %v2453 = vunpack.c.h.b16 %v906
        %v2454 = vunpack.c.l.b16 %v907
        %v2455 = vunpack.c.h.b16 %v907
        %v2456 = vunpack.c.l.b16 %v908
        %v2457 = vunpack.c.h.b16 %v908
        %v2458 = vunpack.c.l.b16 %v909
        %v2459 = vunpack.c.h.b16 %v909
        %v2460 = vunpack.c.l.b16 %v910
        %v2461 = vunpack.c.h.b16 %v910
        %v2462 = vunpack.c.l.b16 %v911
        %v2463 = vunpack.c.h.b16 %v911
        %v2464 = vunpack.c.l.b16 %v912
        %v2465 = vunpack.c.h.b16 %v912
        %v2466 = vunpack.c.l.b16 %v913
        %v2467 = vunpack.c.h.b16 %v913
        %v2468 = vunpack.c.l.b16 %v914
        %v2469 = vunpack.c.h.b16 %v914
        %v2470 = vunpack.c.l.b16 %v915
        %v2471 = vunpack.c.h.b16 %v915
        %v2472 = vunpack.c.l.b16 %v916
        %v2473 = vunpack.c.h.b16 %v916
        %v2474 = vunpack.c.l.b16 %v917
        %v2475 = vunpack.c.h.b16 %v917
        %v2476 = vunpack.c.l.b16 %v918
        %v2477 = vunpack.c.h.b16 %v918
        %v2478 = vunpack.c.l.b16 %v919
        %v2479 = vunpack.c.h.b16 %v919
        %v2480 = vunpack.c.l.b16 %v920
        %v2481 = vunpack.c.h.b16 %v920
        %v2482 = vunpack.c.l.b16 %v921
        %v2483 = vunpack.c.h.b16 %v921
        %v2484 = vunpack.c.l.b16 %v922
        %v2485 = vunpack.c.h.b16 %v922
        %v2486 = vunpack.c.l.b16 %v923
        %v2487 = vunpack.c.h.b16 %v923
        %v2488 = vunpack.c.l.b16 %v924
        %v2489 = vunpack.c.h.b16 %v924
        %v2490 = vunpack.c.l.b16 %v925
        %v2491 = vunpack.c.h.b16 %v925
        %v2492 = vunpack.c.l.b16 %v926
        %v2493 = vunpack.c.h.b16 %v926
        %v2494 = vunpack.c.l.b16 %v927
        %v2495 = vunpack.c.h.b16 %v927
        %v2496 = vunpack.c.l.b16 %v928
        %v2497 = vunpack.c.h.b16 %v928
        %v2498 = vunpack.c.l.b16 %v929
        %v2499 = vunpack.c.h.b16 %v929
        %v2500 = vunpack.c.l.b16 %v930
        %v2501 = vunpack.c.h.b16 %v930
        %v2502 = vunpack.c.l.b16 %v931
        %v2503 = vunpack.c.h.b16 %v931
        %v2504 = vunpack.c.l.b16 %v932
        %v2505 = vunpack.c.h.b16 %v932
        %v2506 = vunpack.c.l.b16 %v933
        %v2507 = vunpack.c.h.b16 %v933
        %v2508 = vunpack.c.l.b16 %v934
        %v2509 = vunpack.c.h.b16 %v934
        %v2510 = vunpack.c.l.b16 %v935
        %v2511 = vunpack.c.h.b16 %v935
        %v2512 = vunpack.c.l.b16 %v936
        %v2513 = vunpack.c.h.b16 %v936
        %v2514 = vunpack.c.l.b16 %v937
        %v2515 = vunpack.c.h.b16 %v937
        %v2516 = vunpack.c.l.b16 %v938
        %v2517 = vunpack.c.h.b16 %v938
        %v2518 = vunpack.c.l.b16 %v939
        %v2519 = vunpack.c.h.b16 %v939
        %v2520 = vunpack.c.l.b16 %v940
        %v2521 = vunpack.c.h.b16 %v940
        %v2522 = vunpack.c.l.b16 %v941
        %v2523 = vunpack.c.h.b16 %v941
        %v2524 = vunpack.c.l.b16 %v942
        %v2525 = vunpack.c.h.b16 %v942
        %v2526 = vunpack.c.l.b16 %v943
        %v2527 = vunpack.c.h.b16 %v943
        %v2528 = vunpack.c.l.b16 %v944
        %v2529 = vunpack.c.h.b16 %v944
        %v2530 = vunpack.c.l.b16 %v945
        %v2531 = vunpack.c.h.b16 %v945
        %v2532 = vunpack.c.l.b16 %v946
        %v2533 = vunpack.c.h.b16 %v946
        %v2534 = vunpack.c.l.b16 %v947
        %v2535 = vunpack.c.h.b16 %v947
        %v2536 = vunpack.c.l.b16 %v948
        %v2537 = vunpack.c.h.b16 %v948
        %v2538 = vunpack.c.l.b16 %v949
        %v2539 = vunpack.c.h.b16 %v949
        %v2540 = vunpack.c.l.b16 %v950
        %v2541 = vunpack.c.h.b16 %v950
        %v2542 = vunpack.c.l.b16 %v951
        %v2543 = vunpack.c.h.b16 %v951
        %v2544 = vunpack.c.l.b16 %v952
        %v2545 = vunpack.c.h.b16 %v952
        %v2546 = vunpack.c.l.b16 %v953
        %v2547 = vunpack.c.h.b16 %v953
        %v2548 = vunpack.c.l.b16 %v954
        %v2549 = vunpack.c.h.b16 %v954
        %v2550 = vunpack.c.l.b16 %v955
        %v2551 = vunpack.c.h.b16 %v955
        %v2552 = vunpack.c.l.b16 %v956
        %v2553 = vunpack.c.h.b16 %v956
        %v2554 = vunpack.c.l.b16 %v957
        %v2555 = vunpack.c.h.b16 %v957
        %v2556 = vunpack.c.l.b16 %v958
        %v2557 = vunpack.c.h.b16 %v958
        %v2558 = vunpack.c.l.b16 %v959
        %v2559 = vunpack.c.h.b16 %v959
        %v2560 = vunpack.c.l.b16 %v960
        %v2561 = vunpack.c.h.b16 %v960
        %v2562 = vunpack.c.l.b16 %v961
        %v2563 = vunpack.c.h.b16 %v961
        %v2564 = vunpack.c.l.b16 %v962
        %v2565 = vunpack.c.h.b16 %v962
        %v2566 = vunpack.c.l.b16 %v963
        %v2567 = vunpack.c.h.b16 %v963
        %v2568 = vunpack.c.l.b16 %v964
        %v2569 = vunpack.c.h.b16 %v964
        %v2570 = vunpack.c.l.b16 %v965
        %v2571 = vunpack.c.h.b16 %v965
        %v2572 = vunpack.c.l.b16 %v966
        %v2573 = vunpack.c.h.b16 %v966
        %v2574 = vunpack.c.l.b16 %v967
        %v2575 = vunpack.c.h.b16 %v967
        %v2576 = vunpack.c.l.b16 %v968
        %v2577 = vunpack.c.h.b16 %v968
        %v2578 = vunpack.c.l.b16 %v969
        %v2579 = vunpack.c.h.b16 %v969
        %v2580 = vunpack.c.l.b16 %v970
        %v2581 = vunpack.c.h.b16 %v970
        %v2582 = vunpack.c.l.b16 %v971
        %v2583 = vunpack.c.h.b16 %v971
        %v2584 = vunpack.c.l.b16 %v972
        %v2585 = vunpack.c.h.b16 %v972
        %v2586 = vunpack.c.l.b16 %v973
        %v2587 = vunpack.c.h.b16 %v973
        %v2588 = vunpack.c.l.b16 %v974
        %v2589 = vunpack.c.h.b16 %v974
        %v2590 = vunpack.c.l.b16 %v975
        %v2591 = vunpack.c.h.b16 %v975
        %v2592 = vunpack.c.l.b16 %v976
        %v2593 = vunpack.c.h.b16 %v976
        %v2594 = vunpack.c.l.b16 %v977
        %v2595 = vunpack.c.h.b16 %v977
        %v2596 = vunpack.c.l.b16 %v978
        %v2597 = vunpack.c.h.b16 %v978
        %v2598 = vunpack.c.l.b16 %v979
        %v2599 = vunpack.c.h.b16 %v979
        %v2600 = vunpack.c.l.b16 %v980
        %v2601 = vunpack.c.h.b16 %v980
        %v2602 = vunpack.c.l.b16 %v981
        %v2603 = vunpack.c.h.b16 %v981
        %v2604 = vunpack.c.l.b16 %v982
        %v2605 = vunpack.c.h.b16 %v982
        %v2606 = vunpack.c.l.b16 %v983
        %v2607 = vunpack.c.h.b16 %v983
        %v2608 = vunpack.c.l.b16 %v984
        %v2609 = vunpack.c.h.b16 %v984
        %v2610 = vunpack.c.l.b16 %v985
        %v2611 = vunpack.c.h.b16 %v985
        %v2612 = vunpack.c.l.b16 %v986
        %v2613 = vunpack.c.h.b16 %v986
        %v2614 = vunpack.c.l.b16 %v987
        %v2615 = vunpack.c.h.b16 %v987
        %v2616 = vunpack.c.l.b16 %v988
        %v2617 = vunpack.c.h.b16 %v988
        %v2618 = vunpack.c.l.b16 %v989
        %v2619 = vunpack.c.h.b16 %v989
        %v2620 = vunpack.c.l.b16 %v990
        %v2621 = vunpack.c.h.b16 %v990
        %v2622 = vunpack.c.l.b16 %v991
        %v2623 = vunpack.c.h.b16 %v991
        %v2624 = vunpack.c.l.b16 %v992
        %v2625 = vunpack.c.h.b16 %v992
        %v2626 = vunpack.c.l.b16 %v993
        %v2627 = vunpack.c.h.b16 %v993
        %v2628 = vunpack.c.l.b16 %v994
        %v2629 = vunpack.c.h.b16 %v994
        %v2630 = vunpack.c.l.b16 %v995
        %v2631 = vunpack.c.h.b16 %v995
        %v2632 = vunpack.c.l.b16 %v996
        %v2633 = vunpack.c.h.b16 %v996
        %v2634 = vunpack.c.l.b16 %v997
        %v2635 = vunpack.c.h.b16 %v997
        %v2636 = vunpack.c.l.b16 %v998
        %v2637 = vunpack.c.h.b16 %v998
        %v2638 = vunpack.c.l.b16 %v999
        %v2639 = vunpack.c.h.b16 %v999
        %v2640 = vunpack.c.l.b16 %v1000
        %v2641 = vunpack.c.h.b16 %v1000
        %v2642 = vunpack.c.l.b16 %v1001
        %v2643 = vunpack.c.h.b16 %v1001
        %v2644 = vunpack.c.l.b16 %v1002
        %v2645 = vunpack.c.h.b16 %v1002
        %v2646 = vunpack.c.l.b16 %v1003
        %v2647 = vunpack.c.h.b16 %v1003
        %v2648 = vunpack.c.l.b16 %v1004
        %v2649 = vunpack.c.h.b16 %v1004
        %v2650 = vunpack.c.l.b16 %v1005
        %v2651 = vunpack.c.h.b16 %v1005
        %v2652 = vunpack.c.l.b16 %v1006
        %v2653 = vunpack.c.h.b16 %v1006
        %v2654 = vunpack.c.l.b16 %v1007
        %v2655 = vunpack.c.h.b16 %v1007
        %v2656 = vunpack.c.l.b16 %v1008
        %v2657 = vunpack.c.h.b16 %v1008
        %v2658 = vunpack.c.l.b16 %v1009
        %v2659 = vunpack.c.h.b16 %v1009
        %v2660 = vunpack.c.l.b16 %v1010
        %v2661 = vunpack.c.h.b16 %v1010
        %v2662 = vunpack.c.l.b16 %v1011
        %v2663 = vunpack.c.h.b16 %v1011
        %v2664 = vunpack.c.l.b16 %v1012
        %v2665 = vunpack.c.h.b16 %v1012
        %v2666 = vunpack.c.l.b16 %v1013
        %v2667 = vunpack.c.h.b16 %v1013
        %v2668 = vunpack.c.l.b16 %v1014
        %v2669 = vunpack.c.h.b16 %v1014
        %v2670 = vunpack.c.l.b16 %v1015
        %v2671 = vunpack.c.h.b16 %v1015
        %v2672 = vunpack.c.l.b16 %v1016
        %v2673 = vunpack.c.h.b16 %v1016
        %v2674 = vunpack.c.l.b16 %v1017
        %v2675 = vunpack.c.h.b16 %v1017
        %v2676 = vunpack.c.l.b16 %v1018
        %v2677 = vunpack.c.h.b16 %v1018
        %v2678 = vunpack.c.l.b16 %v1019
        %v2679 = vunpack.c.h.b16 %v1019
        %v2680 = vunpack.c.l.b16 %v1020
        %v2681 = vunpack.c.h.b16 %v1020
        %v2682 = vunpack.c.l.b16 %v1021
        %v2683 = vunpack.c.h.b16 %v1021
        %v2684 = vunpack.c.l.b16 %v1022
        %v2685 = vunpack.c.h.b16 %v1022
        %v2686 = vunpack.c.l.b16 %v1023
        %v2687 = vunpack.c.h.b16 %v1023
        %v2688 = vunpack.c.l.b16 %v1024
        %v2689 = vunpack.c.h.b16 %v1024
        %v2690 = vunpack.c.l.b16 %v1025
        %v2691 = vunpack.c.h.b16 %v1025
        %v2692 = vunpack.c.l.b16 %v1026
        %v2693 = vunpack.c.h.b16 %v1026
        %v2694 = vunpack.c.l.b16 %v1027
        %v2695 = vunpack.c.h.b16 %v1027
        %v2696 = vunpack.c.l.b16 %v1028
        %v2697 = vunpack.c.h.b16 %v1028
        %v2698 = vunpack.c.l.b16 %v1029
        %v2699 = vunpack.c.h.b16 %v1029
        %v2700 = vunpack.c.l.b16 %v1030
        %v2701 = vunpack.c.h.b16 %v1030
        %v2702 = vunpack.c.l.b16 %v1031
        %v2703 = vunpack.c.h.b16 %v1031
        %v2704 = vunpack.c.l.b16 %v1032
        %v2705 = vunpack.c.h.b16 %v1032
        %v2706 = vunpack.c.l.b16 %v1033
        %v2707 = vunpack.c.h.b16 %v1033
        %v2708 = vunpack.c.l.b16 %v1034
        %v2709 = vunpack.c.h.b16 %v1034
        %v2710 = vunpack.c.l.b16 %v1035
        %v2711 = vunpack.c.h.b16 %v1035
        %v2712 = vunpack.c.l.b16 %v1036
        %v2713 = vunpack.c.h.b16 %v1036
        %v2714 = vunpack.c.l.b16 %v1037
        %v2715 = vunpack.c.h.b16 %v1037
        %v2716 = vunpack.c.l.b16 %v1038
        %v2717 = vunpack.c.h.b16 %v1038
        %v2718 = vunpack.c.l.b16 %v1039
        %v2719 = vunpack.c.h.b16 %v1039
        %v2720 = vunpack.c.l.b16 %v1040
        %v2721 = vunpack.c.h.b16 %v1040
        %v2722 = vunpack.c.l.b16 %v1041
        %v2723 = vunpack.c.h.b16 %v1041
        %v2724 = vunpack.c.l.b16 %v1042
        %v2725 = vunpack.c.h.b16 %v1042
        %v2726 = vunpack.c.l.b16 %v1043
        %v2727 = vunpack.c.h.b16 %v1043
        %v2728 = vunpack.c.l.b16 %v1044
        %v2729 = vunpack.c.h.b16 %v1044
        %v2730 = vunpack.c.l.b16 %v1045
        %v2731 = vunpack.c.h.b16 %v1045
        %v2732 = vunpack.c.l.b16 %v1046
        %v2733 = vunpack.c.h.b16 %v1046
        %v2734 = vunpack.c.l.b16 %v1047
        %v2735 = vunpack.c.h.b16 %v1047
        %v2736 = vunpack.c.l.b16 %v1048
        %v2737 = vunpack.c.h.b16 %v1048
        %v2738 = vunpack.c.l.b16 %v1049
        %v2739 = vunpack.c.h.b16 %v1049
        %v2740 = vunpack.c.l.b16 %v1050
        %v2741 = vunpack.c.h.b16 %v1050
        %v2742 = vunpack.c.l.b16 %v1051
        %v2743 = vunpack.c.h.b16 %v1051
        %v2744 = vunpack.c.l.b16 %v1052
        %v2745 = vunpack.c.h.b16 %v1052
        %v2746 = vunpack.c.l.b16 %v1053
        %v2747 = vunpack.c.h.b16 %v1053
        %v2748 = vunpack.c.l.b16 %v1054
        %v2749 = vunpack.c.h.b16 %v1054
        %v2750 = vunpack.c.l.b16 %v1055
        %v2751 = vunpack.c.h.b16 %v1055
        %v2752 = vunpack.c.l.b16 %v1056
        %v2753 = vunpack.c.h.b16 %v1056
        %v2754 = vunpack.c.l.b16 %v1057
        %v2755 = vunpack.c.h.b16 %v1057
        %v2756 = vunpack.c.l.b16 %v1058
        %v2757 = vunpack.c.h.b16 %v1058
        %v2758 = vunpack.c.l.b16 %v1059
        %v2759 = vunpack.c.h.b16 %v1059
        %v2760 = vunpack.c.l.b16 %v1060
        %v2761 = vunpack.c.h.b16 %v1060
        %v2762 = vunpack.c.l.b16 %v1061
        %v2763 = vunpack.c.h.b16 %v1061
        %v2764 = vunpack.c.l.b16 %v1062
        %v2765 = vunpack.c.h.b16 %v1062
        %v2766 = vunpack.c.l.b16 %v1063
        %v2767 = vunpack.c.h.b16 %v1063
        %v2768 = vunpack.c.l.b16 %v1064
        %v2769 = vunpack.c.h.b16 %v1064
        %v2770 = vunpack.c.l.b16 %v1065
        %v2771 = vunpack.c.h.b16 %v1065
        %v2772 = vunpack.c.l.b16 %v1066
        %v2773 = vunpack.c.h.b16 %v1066
        %v2774 = vunpack.c.l.b16 %v1067
        %v2775 = vunpack.c.h.b16 %v1067
        %v2776 = vunpack.c.l.b16 %v1068
        %v2777 = vunpack.c.h.b16 %v1068
        %v2778 = vunpack.c.l.b16 %v1069
        %v2779 = vunpack.c.h.b16 %v1069
        %v2780 = vunpack.c.l.b16 %v1070
        %v2781 = vunpack.c.h.b16 %v1070
        %v2782 = vunpack.c.l.b16 %v1071
        %v2783 = vunpack.c.h.b16 %v1071
        %v2784 = vunpack.c.l.b16 %v1072
        %v2785 = vunpack.c.h.b16 %v1072
        %v2786 = vunpack.c.l.b16 %v1073
        %v2787 = vunpack.c.h.b16 %v1073
        %v2788 = vunpack.c.l.b16 %v1074
        %v2789 = vunpack.c.h.b16 %v1074
        %v2790 = vunpack.c.l.b16 %v1075
        %v2791 = vunpack.c.h.b16 %v1075
        %v2792 = vunpack.c.l.b16 %v1076
        %v2793 = vunpack.c.h.b16 %v1076
        %v2794 = vunpack.c.l.b16 %v1077
        %v2795 = vunpack.c.h.b16 %v1077
        %v2796 = vunpack.c.l.b16 %v1078
        %v2797 = vunpack.c.h.b16 %v1078
        %v2798 = vunpack.c.l.b16 %v1079
        %v2799 = vunpack.c.h.b16 %v1079
        %v2800 = vunpack.c.l.b16 %v1080
        %v2801 = vunpack.c.h.b16 %v1080
        %v2802 = vunpack.c.l.b16 %v1081
        %v2803 = vunpack.c.h.b16 %v1081
        %v2804 = vunpack.c.l.b16 %v1082
        %v2805 = vunpack.c.h.b16 %v1082
        %v2806 = vunpack.c.l.b16 %v1083
        %v2807 = vunpack.c.h.b16 %v1083
        %v2808 = vunpack.c.l.b16 %v1084
        %v2809 = vunpack.c.h.b16 %v1084
        %v2810 = vunpack.c.l.b16 %v1085
        %v2811 = vunpack.c.h.b16 %v1085
        %v2812 = vunpack.c.l.b16 %v1086
        %v2813 = vunpack.c.h.b16 %v1086
        %v2814 = vunpack.c.l.b16 %v1087
        %v2815 = vunpack.c.h.b16 %v1087
        %v2816 = vpack.c.b16 %v1672, %v1664
        %v2817 = vpack.c.b16 %v1673, %v1665
        %v2818 = vpack.c.b16 %v1674, %v1666
        %v2819 = vpack.c.b16 %v1675, %v1667
        %v2820 = vpack.c.b16 %v1676, %v1668
        %v2821 = vpack.c.b16 %v1677, %v1669
        %v2822 = vpack.c.b16 %v1678, %v1670
        %v2823 = vpack.c.b16 %v1679, %v1671
        %v2824 = vpack.c.b16 %v1688, %v1680
        %v2825 = vpack.c.b16 %v1689, %v1681
        %v2826 = vpack.c.b16 %v1690, %v1682
        %v2827 = vpack.c.b16 %v1691, %v1683
        %v2828 = vpack.c.b16 %v1692, %v1684
        %v2829 = vpack.c.b16 %v1693, %v1685
        %v2830 = vpack.c.b16 %v1694, %v1686
        %v2831 = vpack.c.b16 %v1695, %v1687
        %v2832 = vpack.c.b16 %v1704, %v1696
        %v2833 = vpack.c.b16 %v1705, %v1697
        %v2834 = vpack.c.b16 %v1706, %v1698
        %v2835 = vpack.c.b16 %v1707, %v1699
        %v2836 = vpack.c.b16 %v1708, %v1700
        %v2837 = vpack.c.b16 %v1709, %v1701
        %v2838 = vpack.c.b16 %v1710, %v1702
        %v2839 = vpack.c.b16 %v1711, %v1703
        %v2840 = vpack.c.b16 %v1720, %v1712
        %v2841 = vpack.c.b16 %v1721, %v1713
        %v2842 = vpack.c.b16 %v1722, %v1714
        %v2843 = vpack.c.b16 %v1723, %v1715
        %v2844 = vpack.c.b16 %v1724, %v1716
        %v2845 = vpack.c.b16 %v1725, %v1717
        %v2846 = vpack.c.b16 %v1726, %v1718
        %v2847 = vpack.c.b16 %v1727, %v1719
        %v2848 = vpack.c.b16 %v1736, %v1728
        %v2849 = vpack.c.b16 %v1737, %v1729
        %v2850 = vpack.c.b16 %v1738, %v1730
        %v2851 = vpack.c.b16 %v1739, %v1731
        %v2852 = vpack.c.b16 %v1740, %v1732
        %v2853 = vpack.c.b16 %v1741, %v1733
        %v2854 = vpack.c.b16 %v1742, %v1734
        %v2855 = vpack.c.b16 %v1743, %v1735
        %v2856 = vpack.c.b16 %v1752, %v1744
        %v2857 = vpack.c.b16 %v1753, %v1745
        %v2858 = vpack.c.b16 %v1754, %v1746
        %v2859 = vpack.c.b16 %v1755, %v1747
        %v2860 = vpack.c.b16 %v1756, %v1748
        %v2861 = vpack.c.b16 %v1757, %v1749
        %v2862 = vpack.c.b16 %v1758, %v1750
        %v2863 = vpack.c.b16 %v1759, %v1751
        %v2864 = vpack.c.b16 %v1768, %v1760
        %v2865 = vpack.c.b16 %v1769, %v1761
        %v2866 = vpack.c.b16 %v1770, %v1762
        %v2867 = vpack.c.b16 %v1771, %v1763
        %v2868 = vpack.c.b16 %v1772, %v1764
        %v2869 = vpack.c.b16 %v1773, %v1765
        %v2870 = vpack.c.b16 %v1774, %v1766
        %v2871 = vpack.c.b16 %v1775, %v1767
        %v2872 = vpack.c.b16 %v1784, %v1776
        %v2873 = vpack.c.b16 %v1785, %v1777
        %v2874 = vpack.c.b16 %v1786, %v1778
        %v2875 = vpack.c.b16 %v1787, %v1779
        %v2876 = vpack.c.b16 %v1788, %v1780
        %v2877 = vpack.c.b16 %v1789, %v1781
        %v2878 = vpack.c.b16 %v1790, %v1782
        %v2879 = vpack.c.b16 %v1791, %v1783
        %v2880 = vpack.c.b16 %v1800, %v1792
        %v2881 = vpack.c.b16 %v1801, %v1793
        %v2882 = vpack.c.b16 %v1802, %v1794
        %v2883 = vpack.c.b16 %v1803, %v1795
        %v2884 = vpack.c.b16 %v1804, %v1796
        %v2885 = vpack.c.b16 %v1805, %v1797
        %v2886 = vpack.c.b16 %v1806, %v1798
        %v2887 = vpack.c.b16 %v1807, %v1799
        %v2888 = vpack.c.b16 %v1816, %v1808
        %v2889 = vpack.c.b16 %v1817, %v1809
        %v2890 = vpack.c.b16 %v1818, %v1810
        %v2891 = vpack.c.b16 %v1819, %v1811
        %v2892 = vpack.c.b16 %v1820, %v1812
        %v2893 = vpack.c.b16 %v1821, %v1813
        %v2894 = vpack.c.b16 %v1822, %v1814
        %v2895 = vpack.c.b16 %v1823, %v1815
        %v2896 = vpack.c.b16 %v1832, %v1824
        %v2897 = vpack.c.b16 %v1833, %v1825
        %v2898 = vpack.c.b16 %v1834, %v1826
        %v2899 = vpack.c.b16 %v1835, %v1827
        %v2900 = vpack.c.b16 %v1836, %v1828
        %v2901 = vpack.c.b16 %v1837, %v1829
        %v2902 = vpack.c.b16 %v1838, %v1830
        %v2903 = vpack.c.b16 %v1839, %v1831
        %v2904 = vpack.c.b16 %v1848, %v1840
        %v2905 = vpack.c.b16 %v1849, %v1841
        %v2906 = vpack.c.b16 %v1850, %v1842
        %v2907 = vpack.c.b16 %v1851, %v1843
        %v2908 = vpack.c.b16 %v1852, %v1844
        %v2909 = vpack.c.b16 %v1853, %v1845
        %v2910 = vpack.c.b16 %v1854, %v1846
        %v2911 = vpack.c.b16 %v1855, %v1847
        %v2912 = vpack.c.b16 %v1864, %v1856
        %v2913 = vpack.c.b16 %v1865, %v1857
        %v2914 = vpack.c.b16 %v1866, %v1858
        %v2915 = vpack.c.b16 %v1867, %v1859
        %v2916 = vpack.c.b16 %v1868, %v1860
        %v2917 = vpack.c.b16 %v1869, %v1861
        %v2918 = vpack.c.b16 %v1870, %v1862
        %v2919 = vpack.c.b16 %v1871, %v1863
        %v2920 = vpack.c.b16 %v1880, %v1872
        %v2921 = vpack.c.b16 %v1881, %v1873
        %v2922 = vpack.c.b16 %v1882, %v1874
        %v2923 = vpack.c.b16 %v1883, %v1875
        %v2924 = vpack.c.b16 %v1884, %v1876
        %v2925 = vpack.c.b16 %v1885, %v1877
        %v2926 = vpack.c.b16 %v1886, %v1878
        %v2927 = vpack.c.b16 %v1887, %v1879
        %v2928 = vpack.c.b16 %v1896, %v1888
        %v2929 = vpack.c.b16 %v1897, %v1889
        %v2930 = vpack.c.b16 %v1898, %v1890
        %v2931 = vpack.c.b16 %v1899, %v1891
        %v2932 = vpack.c.b16 %v1900, %v1892
        %v2933 = vpack.c.b16 %v1901, %v1893
        %v2934 = vpack.c.b16 %v1902, %v1894
        %v2935 = vpack.c.b16 %v1903, %v1895
        %v2936 = vpack.c.b16 %v1912, %v1904
        %v2937 = vpack.c.b16 %v1913, %v1905
        %v2938 = vpack.c.b16 %v1914, %v1906
        %v2939 = vpack.c.b16 %v1915, %v1907
        %v2940 = vpack.c.b16 %v1916, %v1908
        %v2941 = vpack.c.b16 %v1917, %v1909
        %v2942 = vpack.c.b16 %v1918, %v1910
        %v2943 = vpack.c.b16 %v1919, %v1911
        %v2944 = vpack.c.b16 %v1928, %v1920
        %v2945 = vpack.c.b16 %v1929, %v1921
        %v2946 = vpack.c.b16 %v1930, %v1922
        %v2947 = vpack.c.b16 %v1931, %v1923
        %v2948 = vpack.c.b16 %v1932, %v1924
        %v2949 = vpack.c.b16 %v1933, %v1925
        %v2950 = vpack.c.b16 %v1934, %v1926
        %v2951 = vpack.c.b16 %v1935, %v1927
        %v2952 = vpack.c.b16 %v1944, %v1936
        %v2953 = vpack.c.b16 %v1945, %v1937
        %v2954 = vpack.c.b16 %v1946, %v1938
        %v2955 = vpack.c.b16 %v1947, %v1939
        %v2956 = vpack.c.b16 %v1948, %v1940
        %v2957 = vpack.c.b16 %v1949, %v1941
        %v2958 = vpack.c.b16 %v1950, %v1942
        %v2959 = vpack.c.b16 %v1951, %v1943
        %v2960 = vpack.c.b16 %v1960, %v1952
        %v2961 = vpack.c.b16 %v1961, %v1953
        %v2962 = vpack.c.b16 %v1962, %v1954
        %v2963 = vpack.c.b16 %v1963, %v1955
        %v2964 = vpack.c.b16 %v1964, %v1956
        %v2965 = vpack.c.b16 %v1965, %v1957
        %v2966 = vpack.c.b16 %v1966, %v1958
        %v2967 = vpack.c.b16 %v1967, %v1959
        %v2968 = vpack.c.b16 %v1976, %v1968
        %v2969 = vpack.c.b16 %v1977, %v1969
        %v2970 = vpack.c.b16 %v1978, %v1970
        %v2971 = vpack.c.b16 %v1979, %v1971
        %v2972 = vpack.c.b16 %v1980, %v1972
        %v2973 = vpack.c.b16 %v1981, %v1973
        %v2974 = vpack.c.b16 %v1982, %v1974
        %v2975 = vpack.c.b16 %v1983, %v1975
        %v2976 = vpack.c.b16 %v1992, %v1984
        %v2977 = vpack.c.b16 %v1993, %v1985
        %v2978 = vpack.c.b16 %v1994, %v1986
        %v2979 = vpack.c.b16 %v1995, %v1987
        %v2980 = vpack.c.b16 %v1996, %v1988
        %v2981 = vpack.c.b16 %v1997, %v1989
        %v2982 = vpack.c.b16 %v1998, %v1990
        %v2983 = vpack.c.b16 %v1999, %v1991
        %v2984 = vpack.c.b16 %v2008, %v2000
        %v2985 = vpack.c.b16 %v2009, %v2001
        %v2986 = vpack.c.b16 %v2010, %v2002
        %v2987 = vpack.c.b16 %v2011, %v2003
        %v2988 = vpack.c.b16 %v2012, %v2004
        %v2989 = vpack.c.b16 %v2013, %v2005
        %v2990 = vpack.c.b16 %v2014, %v2006
        %v2991 = vpack.c.b16 %v2015, %v2007
        %v2992 = vpack.c.b16 %v2024, %v2016
        %v2993 = vpack.c.b16 %v2025, %v2017
        %v2994 = vpack.c.b16 %v2026, %v2018
        %v2995 = vpack.c.b16 %v2027, %v2019
        %v2996 = vpack.c.b16 %v2028, %v2020
        %v2997 = vpack.c.b16 %v2029, %v2021
        %v2998 = vpack.c.b16 %v2030, %v2022
        %v2999 = vpack.c.b16 %v2031, %v2023
        %v3000 = vpack.c.b16 %v2040, %v2032
        %v3001 = vpack.c.b16 %v2041, %v2033
        %v3002 = vpack.c.b16 %v2042, %v2034
        %v3003 = vpack.c.b16 %v2043, %v2035
        %v3004 = vpack.c.b16 %v2044, %v2036
        %v3005 = vpack.c.b16 %v2045, %v2037
        %v3006 = vpack.c.b16 %v2046, %v2038
        %v3007 = vpack.c.b16 %v2047, %v2039
        %v3008 = vpack.c.b16 %v2056, %v2048
        %v3009 = vpack.c.b16 %v2057, %v2049
        %v3010 = vpack.c.b16 %v2058, %v2050
        %v3011 = vpack.c.b16 %v2059, %v2051
        %v3012 = vpack.c.b16 %v2060, %v2052
        %v3013 = vpack.c.b16 %v2061, %v2053
        %v3014 = vpack.c.b16 %v2062, %v2054
        %v3015 = vpack.c.b16 %v2063, %v2055
        %v3016 = vpack.c.b16 %v2072, %v2064
        %v3017 = vpack.c.b16 %v2073, %v2065
        %v3018 = vpack.c.b16 %v2074, %v2066
        %v3019 = vpack.c.b16 %v2075, %v2067
        %v3020 = vpack.c.b16 %v2076, %v2068
        %v3021 = vpack.c.b16 %v2077, %v2069
        %v3022 = vpack.c.b16 %v2078, %v2070
        %v3023 = vpack.c.b16 %v2079, %v2071
        %v3024 = vpack.c.b16 %v2088, %v2080
        %v3025 = vpack.c.b16 %v2089, %v2081
        %v3026 = vpack.c.b16 %v2090, %v2082
        %v3027 = vpack.c.b16 %v2091, %v2083
        %v3028 = vpack.c.b16 %v2092, %v2084
        %v3029 = vpack.c.b16 %v2093, %v2085
        %v3030 = vpack.c.b16 %v2094, %v2086
        %v3031 = vpack.c.b16 %v2095, %v2087
        %v3032 = vpack.c.b16 %v2104, %v2096
        %v3033 = vpack.c.b16 %v2105, %v2097
        %v3034 = vpack.c.b16 %v2106, %v2098
        %v3035 = vpack.c.b16 %v2107, %v2099
        %v3036 = vpack.c.b16 %v2108, %v2100
        %v3037 = vpack.c.b16 %v2109, %v2101
        %v3038 = vpack.c.b16 %v2110, %v2102
        %v3039 = vpack.c.b16 %v2111, %v2103
        %v3040 = vpack.c.b16 %v2120, %v2112
        %v3041 = vpack.c.b16 %v2121, %v2113
        %v3042 = vpack.c.b16 %v2122, %v2114
        %v3043 = vpack.c.b16 %v2123, %v2115
        %v3044 = vpack.c.b16 %v2124, %v2116
        %v3045 = vpack.c.b16 %v2125, %v2117
        %v3046 = vpack.c.b16 %v2126, %v2118
        %v3047 = vpack.c.b16 %v2127, %v2119
        %v3048 = vpack.c.b16 %v2136, %v2128
        %v3049 = vpack.c.b16 %v2137, %v2129
        %v3050 = vpack.c.b16 %v2138, %v2130
        %v3051 = vpack.c.b16 %v2139, %v2131
        %v3052 = vpack.c.b16 %v2140, %v2132
        %v3053 = vpack.c.b16 %v2141, %v2133
        %v3054 = vpack.c.b16 %v2142, %v2134
        %v3055 = vpack.c.b16 %v2143, %v2135
        %v3056 = vpack.c.b16 %v2152, %v2144
        %v3057 = vpack.c.b16 %v2153, %v2145
        %v3058 = vpack.c.b16 %v2154, %v2146
        %v3059 = vpack.c.b16 %v2155, %v2147
        %v3060 = vpack.c.b16 %v2156, %v2148
        %v3061 = vpack.c.b16 %v2157, %v2149
        %v3062 = vpack.c.b16 %v2158, %v2150
        %v3063 = vpack.c.b16 %v2159, %v2151
        %v3064 = vpack.c.b16 %v2168, %v2160
        %v3065 = vpack.c.b16 %v2169, %v2161
        %v3066 = vpack.c.b16 %v2170, %v2162
        %v3067 = vpack.c.b16 %v2171, %v2163
        %v3068 = vpack.c.b16 %v2172, %v2164
        %v3069 = vpack.c.b16 %v2173, %v2165
        %v3070 = vpack.c.b16 %v2174, %v2166
        %v3071 = vpack.c.b16 %v2175, %v2167
        %v3072 = vpack.c.b16 %v2184, %v2176
        %v3073 = vpack.c.b16 %v2185, %v2177
        %v3074 = vpack.c.b16 %v2186, %v2178
        %v3075 = vpack.c.b16 %v2187, %v2179
        %v3076 = vpack.c.b16 %v2188, %v2180
        %v3077 = vpack.c.b16 %v2189, %v2181
        %v3078 = vpack.c.b16 %v2190, %v2182
        %v3079 = vpack.c.b16 %v2191, %v2183
        %v3080 = vpack.c.b16 %v2200, %v2192
        %v3081 = vpack.c.b16 %v2201, %v2193
        %v3082 = vpack.c.b16 %v2202, %v2194
        %v3083 = vpack.c.b16 %v2203, %v2195
        %v3084 = vpack.c.b16 %v2204, %v2196
        %v3085 = vpack.c.b16 %v2205, %v2197
        %v3086 = vpack.c.b16 %v2206, %v2198
        %v3087 = vpack.c.b16 %v2207, %v2199
        %v3088 = vpack.c.b16 %v2216, %v2208
        %v3089 = vpack.c.b16 %v2217, %v2209
        %v3090 = vpack.c.b16 %v2218, %v2210
        %v3091 = vpack.c.b16 %v2219, %v2211
        %v3092 = vpack.c.b16 %v2220, %v2212
        %v3093 = vpack.c.b16 %v2221, %v2213
        %v3094 = vpack.c.b16 %v2222, %v2214
        %v3095 = vpack.c.b16 %v2223, %v2215
        %v3096 = vpack.c.b16 %v2232, %v2224
        %v3097 = vpack.c.b16 %v2233, %v2225
        %v3098 = vpack.c.b16 %v2234, %v2226
        %v3099 = vpack.c.b16 %v2235, %v2227
        %v3100 = vpack.c.b16 %v2236, %v2228
        %v3101 = vpack.c.b16 %v2237, %v2229
        %v3102 = vpack.c.b16 %v2238, %v2230
        %v3103 = vpack.c.b16 %v2239, %v2231
        %v3104 = vpack.c.b16 %v2248, %v2240
        %v3105 = vpack.c.b16 %v2249, %v2241
        %v3106 = vpack.c.b16 %v2250, %v2242
        %v3107 = vpack.c.b16 %v2251, %v2243
        %v3108 = vpack.c.b16 %v2252, %v2244
        %v3109 = vpack.c.b16 %v2253, %v2245
        %v3110 = vpack.c.b16 %v2254, %v2246
        %v3111 = vpack.c.b16 %v2255, %v2247
        %v3112 = vpack.c.b16 %v2264, %v2256
        %v3113 = vpack.c.b16 %v2265, %v2257
        %v3114 = vpack.c.b16 %v2266, %v2258
        %v3115 = vpack.c.b16 %v2267, %v2259
        %v3116 = vpack.c.b16 %v2268, %v2260
        %v3117 = vpack.c.b16 %v2269, %v2261
        %v3118 = vpack.c.b16 %v2270, %v2262
        %v3119 = vpack.c.b16 %v2271, %v2263
        %v3120 = vpack.c.b16 %v2280, %v2272
        %v3121 = vpack.c.b16 %v2281, %v2273
        %v3122 = vpack.c.b16 %v2282, %v2274
        %v3123 = vpack.c.b16 %v2283, %v2275
        %v3124 = vpack.c.b16 %v2284, %v2276
        %v3125 = vpack.c.b16 %v2285, %v2277
        %v3126 = vpack.c.b16 %v2286, %v2278
        %v3127 = vpack.c.b16 %v2287, %v2279
        %v3128 = vpack.c.b16 %v2296, %v2288
        %v3129 = vpack.c.b16 %v2297, %v2289
        %v3130 = vpack.c.b16 %v2298, %v2290
        %v3131 = vpack.c.b16 %v2299, %v2291
        %v3132 = vpack.c.b16 %v2300, %v2292
        %v3133 = vpack.c.b16 %v2301, %v2293
        %v3134 = vpack.c.b16 %v2302, %v2294
        %v3135 = vpack.c.b16 %v2303, %v2295
        %v3136 = vpack.c.b16 %v2312, %v2304
        %v3137 = vpack.c.b16 %v2313, %v2305
        %v3138 = vpack.c.b16 %v2314, %v2306
        %v3139 = vpack.c.b16 %v2315, %v2307
        %v3140 = vpack.c.b16 %v2316, %v2308
        %v3141 = vpack.c.b16 %v2317, %v2309
        %v3142 = vpack.c.b16 %v2318, %v2310
        %v3143 = vpack.c.b16 %v2319, %v2311
        %v3144 = vpack.c.b16 %v2328, %v2320
        %v3145 = vpack.c.b16 %v2329, %v2321
        %v3146 = vpack.c.b16 %v2330, %v2322
        %v3147 = vpack.c.b16 %v2331, %v2323
        %v3148 = vpack.c.b16 %v2332, %v2324
        %v3149 = vpack.c.b16 %v2333, %v2325
        %v3150 = vpack.c.b16 %v2334, %v2326
        %v3151 = vpack.c.b16 %v2335, %v2327
        %v3152 = vpack.c.b16 %v2344, %v2336
        %v3153 = vpack.c.b16 %v2345, %v2337
        %v3154 = vpack.c.b16 %v2346, %v2338
        %v3155 = vpack.c.b16 %v2347, %v2339
        %v3156 = vpack.c.b16 %v2348, %v2340
        %v3157 = vpack.c.b16 %v2349, %v2341
        %v3158 = vpack.c.b16 %v2350, %v2342
        %v3159 = vpack.c.b16 %v2351, %v2343
        %v3160 = vpack.c.b16 %v2360, %v2352
        %v3161 = vpack.c.b16 %v2361, %v2353
        %v3162 = vpack.c.b16 %v2362, %v2354
        %v3163 = vpack.c.b16 %v2363, %v2355
        %v3164 = vpack.c.b16 %v2364, %v2356
        %v3165 = vpack.c.b16 %v2365, %v2357
        %v3166 = vpack.c.b16 %v2366, %v2358
        %v3167 = vpack.c.b16 %v2367, %v2359
        %v3168 = vpack.c.b16 %v2376, %v2368
        %v3169 = vpack.c.b16 %v2377, %v2369
        %v3170 = vpack.c.b16 %v2378, %v2370
        %v3171 = vpack.c.b16 %v2379, %v2371
        %v3172 = vpack.c.b16 %v2380, %v2372
        %v3173 = vpack.c.b16 %v2381, %v2373
        %v3174 = vpack.c.b16 %v2382, %v2374
        %v3175 = vpack.c.b16 %v2383, %v2375
        %v3176 = vpack.c.b16 %v2392, %v2384
        %v3177 = vpack.c.b16 %v2393, %v2385
        %v3178 = vpack.c.b16 %v2394, %v2386
        %v3179 = vpack.c.b16 %v2395, %v2387
        %v3180 = vpack.c.b16 %v2396, %v2388
        %v3181 = vpack.c.b16 %v2397, %v2389
        %v3182 = vpack.c.b16 %v2398, %v2390
        %v3183 = vpack.c.b16 %v2399, %v2391
        %v3184 = vpack.c.b16 %v2408, %v2400
        %v3185 = vpack.c.b16 %v2409, %v2401
        %v3186 = vpack.c.b16 %v2410, %v2402
        %v3187 = vpack.c.b16 %v2411, %v2403
        %v3188 = vpack.c.b16 %v2412, %v2404
        %v3189 = vpack.c.b16 %v2413, %v2405
        %v3190 = vpack.c.b16 %v2414, %v2406
        %v3191 = vpack.c.b16 %v2415, %v2407
        %v3192 = vpack.c.b16 %v2424, %v2416
        %v3193 = vpack.c.b16 %v2425, %v2417
        %v3194 = vpack.c.b16 %v2426, %v2418
        %v3195 = vpack.c.b16 %v2427, %v2419
        %v3196 = vpack.c.b16 %v2428, %v2420
        %v3197 = vpack.c.b16 %v2429, %v2421
        %v3198 = vpack.c.b16 %v2430, %v2422
        %v3199 = vpack.c.b16 %v2431, %v2423
        %v3200 = vpack.c.b16 %v2440, %v2432
        %v3201 = vpack.c.b16 %v2441, %v2433
        %v3202 = vpack.c.b16 %v2442, %v2434
        %v3203 = vpack.c.b16 %v2443, %v2435
        %v3204 = vpack.c.b16 %v2444, %v2436
        %v3205 = vpack.c.b16 %v2445, %v2437
        %v3206 = vpack.c.b16 %v2446, %v2438
        %v3207 = vpack.c.b16 %v2447, %v2439
        %v3208 = vpack.c.b16 %v2456, %v2448
        %v3209 = vpack.c.b16 %v2457, %v2449
        %v3210 = vpack.c.b16 %v2458, %v2450
        %v3211 = vpack.c.b16 %v2459, %v2451
        %v3212 = vpack.c.b16 %v2460, %v2452
        %v3213 = vpack.c.b16 %v2461, %v2453
        %v3214 = vpack.c.b16 %v2462, %v2454
        %v3215 = vpack.c.b16 %v2463, %v2455
        %v3216 = vpack.c.b16 %v2472, %v2464
        %v3217 = vpack.c.b16 %v2473, %v2465
        %v3218 = vpack.c.b16 %v2474, %v2466
        %v3219 = vpack.c.b16 %v2475, %v2467
        %v3220 = vpack.c.b16 %v2476, %v2468
        %v3221 = vpack.c.b16 %v2477, %v2469
        %v3222 = vpack.c.b16 %v2478, %v2470
        %v3223 = vpack.c.b16 %v2479, %v2471
        %v3224 = vpack.c.b16 %v2488, %v2480
        %v3225 = vpack.c.b16 %v2489, %v2481
        %v3226 = vpack.c.b16 %v2490, %v2482
        %v3227 = vpack.c.b16 %v2491, %v2483
        %v3228 = vpack.c.b16 %v2492, %v2484
        %v3229 = vpack.c.b16 %v2493, %v2485
        %v3230 = vpack.c.b16 %v2494, %v2486
        %v3231 = vpack.c.b16 %v2495, %v2487
        %v3232 = vpack.c.b16 %v2504, %v2496
        %v3233 = vpack.c.b16 %v2505, %v2497
        %v3234 = vpack.c.b16 %v2506, %v2498
        %v3235 = vpack.c.b16 %v2507, %v2499
        %v3236 = vpack.c.b16 %v2508, %v2500
        %v3237 = vpack.c.b16 %v2509, %v2501
        %v3238 = vpack.c.b16 %v2510, %v2502
        %v3239 = vpack.c.b16 %v2511, %v2503
        %v3240 = vpack.c.b16 %v2520, %v2512
        %v3241 = vpack.c.b16 %v2521, %v2513
        %v3242 = vpack.c.b16 %v2522, %v2514
        %v3243 = vpack.c.b16 %v2523, %v2515
        %v3244 = vpack.c.b16 %v2524, %v2516
        %v3245 = vpack.c.b16 %v2525, %v2517
        %v3246 = vpack.c.b16 %v2526, %v2518
        %v3247 = vpack.c.b16 %v2527, %v2519
        %v3248 = vpack.c.b16 %v2536, %v2528
        %v3249 = vpack.c.b16 %v2537, %v2529
        %v3250 = vpack.c.b16 %v2538, %v2530
        %v3251 = vpack.c.b16 %v2539, %v2531
        %v3252 = vpack.c.b16 %v2540, %v2532
        %v3253 = vpack.c.b16 %v2541, %v2533
        %v3254 = vpack.c.b16 %v2542, %v2534
        %v3255 = vpack.c.b16 %v2543, %v2535
        %v3256 = vpack.c.b16 %v2552, %v2544
        %v3257 = vpack.c.b16 %v2553, %v2545
        %v3258 = vpack.c.b16 %v2554, %v2546
        %v3259 = vpack.c.b16 %v2555, %v2547
        %v3260 = vpack.c.b16 %v2556, %v2548
        %v3261 = vpack.c.b16 %v2557, %v2549
        %v3262 = vpack.c.b16 %v2558, %v2550
        %v3263 = vpack.c.b16 %v2559, %v2551
        %v3264 = vpack.c.b16 %v2568, %v2560
        %v3265 = vpack.c.b16 %v2569, %v2561
        %v3266 = vpack.c.b16 %v2570, %v2562
        %v3267 = vpack.c.b16 %v2571, %v2563
        %v3268 = vpack.c.b16 %v2572, %v2564
        %v3269 = vpack.c.b16 %v2573, %v2565
        %v3270 = vpack.c.b16 %v2574, %v2566
        %v3271 = vpack.c.b16 %v2575, %v2567
        %v3272 = vpack.c.b16 %v2584, %v2576
        %v3273 = vpack.c.b16 %v2585, %v2577
        %v3274 = vpack.c.b16 %v2586, %v2578
        %v3275 = vpack.c.b16 %v2587, %v2579
        %v3276 = vpack.c.b16 %v2588, %v2580
        %v3277 = vpack.c.b16 %v2589, %v2581
        %v3278 = vpack.c.b16 %v2590, %v2582
        %v3279 = vpack.c.b16 %v2591, %v2583
        %v3280 = vpack.c.b16 %v2600, %v2592
        %v3281 = vpack.c.b16 %v2601, %v2593
        %v3282 = vpack.c.b16 %v2602, %v2594
        %v3283 = vpack.c.b16 %v2603, %v2595
        %v3284 = vpack.c.b16 %v2604, %v2596
        %v3285 = vpack.c.b16 %v2605, %v2597
        %v3286 = vpack.c.b16 %v2606, %v2598
        %v3287 = vpack.c.b16 %v2607, %v2599
        %v3288 = vpack.c.b16 %v2616, %v2608
        %v3289 = vpack.c.b16 %v2617, %v2609
        %v3290 = vpack.c.b16 %v2618, %v2610
        %v3291 = vpack.c.b16 %v2619, %v2611
        %v3292 = vpack.c.b16 %v2620, %v2612
        %v3293 = vpack.c.b16 %v2621, %v2613
        %v3294 = vpack.c.b16 %v2622, %v2614
        %v3295 = vpack.c.b16 %v2623, %v2615
        %v3296 = vpack.c.b16 %v2632, %v2624
        %v3297 = vpack.c.b16 %v2633, %v2625
        %v3298 = vpack.c.b16 %v2634, %v2626
        %v3299 = vpack.c.b16 %v2635, %v2627
        %v3300 = vpack.c.b16 %v2636, %v2628
        %v3301 = vpack.c.b16 %v2637, %v2629
        %v3302 = vpack.c.b16 %v2638, %v2630
        %v3303 = vpack.c.b16 %v2639, %v2631
        %v3304 = vpack.c.b16 %v2648, %v2640
        %v3305 = vpack.c.b16 %v2649, %v2641
        %v3306 = vpack.c.b16 %v2650, %v2642
        %v3307 = vpack.c.b16 %v2651, %v2643
        %v3308 = vpack.c.b16 %v2652, %v2644
        %v3309 = vpack.c.b16 %v2653, %v2645
        %v3310 = vpack.c.b16 %v2654, %v2646
        %v3311 = vpack.c.b16 %v2655, %v2647
        %v3312 = vpack.c.b16 %v2664, %v2656
        %v3313 = vpack.c.b16 %v2665, %v2657
        %v3314 = vpack.c.b16 %v2666, %v2658
        %v3315 = vpack.c.b16 %v2667, %v2659
        %v3316 = vpack.c.b16 %v2668, %v2660
        %v3317 = vpack.c.b16 %v2669, %v2661
        %v3318 = vpack.c.b16 %v2670, %v2662
        %v3319 = vpack.c.b16 %v2671, %v2663
        %v3320 = vpack.c.b16 %v2680, %v2672
        %v3321 = vpack.c.b16 %v2681, %v2673
        %v3322 = vpack.c.b16 %v2682, %v2674
        %v3323 = vpack.c.b16 %v2683, %v2675
        %v3324 = vpack.c.b16 %v2684, %v2676
        %v3325 = vpack.c.b16 %v2685, %v2677
        %v3326 = vpack.c.b16 %v2686, %v2678
        %v3327 = vpack.c.b16 %v2687, %v2679
        %v3328 = vpack.c.b16 %v2696, %v2688
        %v3329 = vpack.c.b16 %v2697, %v2689
        %v3330 = vpack.c.b16 %v2698, %v2690
        %v3331 = vpack.c.b16 %v2699, %v2691
        %v3332 = vpack.c.b16 %v2700, %v2692
        %v3333 = vpack.c.b16 %v2701, %v2693
        %v3334 = vpack.c.b16 %v2702, %v2694
        %v3335 = vpack.c.b16 %v2703, %v2695
        %v3336 = vpack.c.b16 %v2712, %v2704
        %v3337 = vpack.c.b16 %v2713, %v2705
        %v3338 = vpack.c.b16 %v2714, %v2706
        %v3339 = vpack.c.b16 %v2715, %v2707
        %v3340 = vpack.c.b16 %v2716, %v2708
        %v3341 = vpack.c.b16 %v2717, %v2709
        %v3342 = vpack.c.b16 %v2718, %v2710
        %v3343 = vpack.c.b16 %v2719, %v2711
        %v3344 = vpack.c.b16 %v2728, %v2720
        %v3345 = vpack.c.b16 %v2729, %v2721
        %v3346 = vpack.c.b16 %v2730, %v2722
        %v3347 = vpack.c.b16 %v2731, %v2723
        %v3348 = vpack.c.b16 %v2732, %v2724
        %v3349 = vpack.c.b16 %v2733, %v2725
        %v3350 = vpack.c.b16 %v2734, %v2726
        %v3351 = vpack.c.b16 %v2735, %v2727
        %v3352 = vpack.c.b16 %v2744, %v2736
        %v3353 = vpack.c.b16 %v2745, %v2737
        %v3354 = vpack.c.b16 %v2746, %v2738
        %v3355 = vpack.c.b16 %v2747, %v2739
        %v3356 = vpack.c.b16 %v2748, %v2740
        %v3357 = vpack.c.b16 %v2749, %v2741
        %v3358 = vpack.c.b16 %v2750, %v2742
        %v3359 = vpack.c.b16 %v2751, %v2743
        %v3360 = vpack.c.b16 %v2760, %v2752
        %v3361 = vpack.c.b16 %v2761, %v2753
        %v3362 = vpack.c.b16 %v2762, %v2754
        %v3363 = vpack.c.b16 %v2763, %v2755
        %v3364 = vpack.c.b16 %v2764, %v2756
        %v3365 = vpack.c.b16 %v2765, %v2757
        %v3366 = vpack.c.b16 %v2766, %v2758
        %v3367 = vpack.c.b16 %v2767, %v2759
        %v3368 = vpack.c.b16 %v2776, %v2768
        %v3369 = vpack.c.b16 %v2777, %v2769
        %v3370 = vpack.c.b16 %v2778, %v2770
        %v3371 = vpack.c.b16 %v2779, %v2771
        %v3372 = vpack.c.b16 %v2780, %v2772
        %v3373 = vpack.c.b16 %v2781, %v2773
        %v3374 = vpack.c.b16 %v2782, %v2774
        %v3375 = vpack.c.b16 %v2783, %v2775
        %v3376 = vpack.c.b16 %v2792, %v2784
        %v3377 = vpack.c.b16 %v2793, %v2785
        %v3378 = vpack.c.b16 %v2794, %v2786
        %v3379 = vpack.c.b16 %v2795, %v2787
        %v3380 = vpack.c.b16 %v2796, %v2788
        %v3381 = vpack.c.b16 %v2797, %v2789
        %v3382 = vpack.c.b16 %v2798, %v2790
        %v3383 = vpack.c.b16 %v2799, %v2791
        %v3384 = vpack.c.b16 %v2808, %v2800
        %v3385 = vpack.c.b16 %v2809, %v2801
        %v3386 = vpack.c.b16 %v2810, %v2802
        %v3387 = vpack.c.b16 %v2811, %v2803
        %v3388 = vpack.c.b16 %v2812, %v2804
        %v3389 = vpack.c.b16 %v2813, %v2805
        %v3390 = vpack.c.b16 %v2814, %v2806
        %v3391 = vpack.c.b16 %v2815, %v2807
        %3968 = vmatprep.subr.bf16.mxu0 %v2817
        %3969 = vmatpush1.bf16.msra.mxu0 %v2816
        %3970 = vmatprep.subr.bf16.mxu0 %v2825
        %3971 = vmatpush1.bf16.msra.mxu0 %v2824
        %3972 = vmatprep.subr.bf16.mxu0 %v2833
        %3973 = vmatpush1.bf16.msra.mxu0 %v2832
        %3974 = vmatprep.subr.bf16.mxu0 %v2841
        %3975 = vmatpush1.bf16.msra.mxu0 %v2840
        %3976 = vmatprep.subr.bf16.mxu0 %v2849
        %3977 = vmatpush1.bf16.msra.mxu0 %v2848
        %3978 = vmatprep.subr.bf16.mxu0 %v2857
        %3979 = vmatpush1.bf16.msra.mxu0 %v2856
        %3980 = vmatprep.subr.bf16.mxu0 %v2865
        %3981 = vmatpush1.bf16.msra.mxu0 %v2864
        %3982 = vmatprep.subr.bf16.mxu0 %v2873
        %3983 = vmatpush1.bf16.msra.mxu0 %v2872
        %3984 = vmatprep.subr.bf16.mxu0 %v2881
        %3985 = vmatpush1.bf16.msra.mxu0 %v2880
        %3986 = vmatprep.subr.bf16.mxu0 %v2889
        %3987 = vmatpush1.bf16.msra.mxu0 %v2888
        %3988 = vmatprep.subr.bf16.mxu0 %v2897
        %3989 = vmatpush1.bf16.msra.mxu0 %v2896
        %3990 = vmatprep.subr.bf16.mxu0 %v2905
        %3991 = vmatpush1.bf16.msra.mxu0 %v2904
        %3992 = vmatprep.subr.bf16.mxu0 %v2913
        %3993 = vmatpush1.bf16.msra.mxu0 %v2912
        %3994 = vmatprep.subr.bf16.mxu0 %v2921
        %3995 = vmatpush1.bf16.msra.mxu0 %v2920
        %3996 = vmatprep.subr.bf16.mxu0 %v2929
        %3997 = vmatpush1.bf16.msra.mxu0 %v2928
        %3998 = vmatprep.subr.bf16.mxu0 %v2937
        %3999 = vmatpush1.bf16.msra.mxu0 %v2936
        %4000 = vmatprep.mubr.bf16.mxu0 %v504
        %4001 = vmatmul.mubr.bf16.gmra.mrb[0].mxu0 %v503
        %v4002 = vpop.f32.mrb[0].mxu0
        %v4003 = vadd.f32 0.0, %v4002
        %v4004 = vpop.f32.mrb[0].mxu0
        %v4005 = vadd.f32 0.0, %v4004
        %v4006 = vpop.f32.mrb[0].mxu0
        %v4007 = vpop.f32.mrb[0].mxu0
        %4008 = vdwg.mxu0
        %4009 = vmatprep.subr.bf16.mxu0 %v2945
        %4010 = vmatpush1.bf16.msra.mxu0 %v2944
        %4011 = vmatprep.subr.bf16.mxu0 %v2953
        %4012 = vmatpush1.bf16.msra.mxu0 %v2952
        %4013 = vmatprep.subr.bf16.mxu0 %v2961
        %4014 = vmatpush1.bf16.msra.mxu0 %v2960
        %4015 = vmatprep.subr.bf16.mxu0 %v2969
        %4016 = vmatpush1.bf16.msra.mxu0 %v2968
        %4017 = vmatprep.subr.bf16.mxu0 %v2977
        %4018 = vmatpush1.bf16.msra.mxu0 %v2976
        %4019 = vmatprep.subr.bf16.mxu0 %v2985
        %4020 = vmatpush1.bf16.msra.mxu0 %v2984
        %4021 = vmatprep.subr.bf16.mxu0 %v2993
        %4022 = vmatpush1.bf16.msra.mxu0 %v2992
        %4023 = vmatprep.subr.bf16.mxu0 %v3001
        %4024 = vmatpush1.bf16.msra.mxu0 %v3000
        %4025 = vmatprep.subr.bf16.mxu0 %v3009
        %4026 = vmatpush1.bf16.msra.mxu0 %v3008
        %4027 = vmatprep.subr.bf16.mxu0 %v3017
        %4028 = vmatpush1.bf16.msra.mxu0 %v3016
        %4029 = vmatprep.subr.bf16.mxu0 %v3025
        %4030 = vmatpush1.bf16.msra.mxu0 %v3024
        %4031 = vmatprep.subr.bf16.mxu0 %v3033
        %4032 = vmatpush1.bf16.msra.mxu0 %v3032
        %4033 = vmatprep.subr.bf16.mxu0 %v3041
        %4034 = vmatpush1.bf16.msra.mxu0 %v3040
        %4035 = vmatprep.subr.bf16.mxu0 %v3049
        %4036 = vmatpush1.bf16.msra.mxu0 %v3048
        %4037 = vmatprep.subr.bf16.mxu0 %v3057
        %4038 = vmatpush1.bf16.msra.mxu0 %v3056
        %4039 = vmatprep.subr.bf16.mxu0 %v3065
        %4040 = vmatpush1.bf16.msra.mxu0 %v3064
        %4041 = vmatprep.mubr.bf16.mxu0 %v506
        %4042 = vmatmul.mubr.bf16.gmra.mrb[0].mxu0 %v505
        %v4043 = vpop.f32.mrb[0].mxu0
        %v4044 = vadd.f32 %v4003, %v4043
        %v4045 = vpop.f32.mrb[0].mxu0
        %v4046 = vadd.f32 %v4005, %v4045
        %v4047 = vpop.f32.mrb[0].mxu0
        %v4048 = vpop.f32.mrb[0].mxu0
        %4049 = vdwg.mxu0
        %4050 = vmatprep.subr.bf16.mxu0 %v3073
        %4051 = vmatpush1.bf16.msra.mxu0 %v3072
        %4052 = vmatprep.subr.bf16.mxu0 %v3081
        %4053 = vmatpush1.bf16.msra.mxu0 %v3080
        %4054 = vmatprep.subr.bf16.mxu0 %v3089
        %4055 = vmatpush1.bf16.msra.mxu0 %v3088
        %4056 = vmatprep.subr.bf16.mxu0 %v3097
        %4057 = vmatpush1.bf16.msra.mxu0 %v3096
        %4058 = vmatprep.subr.bf16.mxu0 %v3105
        %4059 = vmatpush1.bf16.msra.mxu0 %v3104
        %4060 = vmatprep.subr.bf16.mxu0 %v3113
        %4061 = vmatpush1.bf16.msra.mxu0 %v3112
        %4062 = vmatprep.subr.bf16.mxu0 %v3121
        %4063 = vmatpush1.bf16.msra.mxu0 %v3120
        %4064 = vmatprep.subr.bf16.mxu0 %v3129
        %4065 = vmatpush1.bf16.msra.mxu0 %v3128
        %4066 = vmatprep.subr.bf16.mxu0 %v3137
        %4067 = vmatpush1.bf16.msra.mxu0 %v3136
        %4068 = vmatprep.subr.bf16.mxu0 %v3145
        %4069 = vmatpush1.bf16.msra.mxu0 %v3144
        %4070 = vmatprep.subr.bf16.mxu0 %v3153
        %4071 = vmatpush1.bf16.msra.mxu0 %v3152
        %4072 = vmatprep.subr.bf16.mxu0 %v3161
        %4073 = vmatpush1.bf16.msra.mxu0 %v3160
        %4074 = vmatprep.subr.bf16.mxu0 %v3169
        %4075 = vmatpush1.bf16.msra.mxu0 %v3168
        %4076 = vmatprep.subr.bf16.mxu0 %v3177
        %4077 = vmatpush1.bf16.msra.mxu0 %v3176
        %4078 = vmatprep.subr.bf16.mxu0 %v3185
        %4079 = vmatpush1.bf16.msra.mxu0 %v3184
        %4080 = vmatprep.subr.bf16.mxu0 %v3193
        %4081 = vmatpush1.bf16.msra.mxu0 %v3192
        %4082 = vmatprep.mubr.bf16.mxu0 %v508
        %4083 = vmatmul.mubr.bf16.gmra.mrb[0].mxu0 %v507
        %v4084 = vpop.f32.mrb[0].mxu0
        %v4085 = vadd.f32 %v4044, %v4084
        %v4086 = vpop.f32.mrb[0].mxu0
        %v4087 = vadd.f32 %v4046, %v4086
        %v4088 = vpop.f32.mrb[0].mxu0
        %v4089 = vpop.f32.mrb[0].mxu0
        %4090 = vdwg.mxu0
        %4091 = vmatprep.subr.bf16.mxu0 %v3201
        %4092 = vmatpush1.bf16.msra.mxu0 %v3200
        %4093 = vmatprep.subr.bf16.mxu0 %v3209
        %4094 = vmatpush1.bf16.msra.mxu0 %v3208
        %4095 = vmatprep.subr.bf16.mxu0 %v3217
        %4096 = vmatpush1.bf16.msra.mxu0 %v3216
        %4097 = vmatprep.subr.bf16.mxu0 %v3225
        %4098 = vmatpush1.bf16.msra.mxu0 %v3224
        %4099 = vmatprep.subr.bf16.mxu0 %v3233
        %4100 = vmatpush1.bf16.msra.mxu0 %v3232
        %4101 = vmatprep.subr.bf16.mxu0 %v3241
        %4102 = vmatpush1.bf16.msra.mxu0 %v3240
        %4103 = vmatprep.subr.bf16.mxu0 %v3249
        %4104 = vmatpush1.bf16.msra.mxu0 %v3248
        %4105 = vmatprep.subr.bf16.mxu0 %v3257
        %4106 = vmatpush1.bf16.msra.mxu0 %v3256
        %4107 = vmatprep.subr.bf16.mxu0 %v3265
        %4108 = vmatpush1.bf16.msra.mxu0 %v3264
        %4109 = vmatprep.subr.bf16.mxu0 %v3273
        %4110 = vmatpush1.bf16.msra.mxu0 %v3272
        %4111 = vmatprep.subr.bf16.mxu0 %v3281
        %4112 = vmatpush1.bf16.msra.mxu0 %v3280
        %4113 = vmatprep.subr.bf16.mxu0 %v3289
        %4114 = vmatpush1.bf16.msra.mxu0 %v3288
        %4115 = vmatprep.subr.bf16.mxu0 %v3297
        %4116 = vmatpush1.bf16.msra.mxu0 %v3296
        %4117 = vmatprep.subr.bf16.mxu0 %v3305
        %4118 = vmatpush1.bf16.msra.mxu0 %v3304
        %4119 = vmatprep.subr.bf16.mxu0 %v3313
        %4120 = vmatpush1.bf16.msra.mxu0 %v3312
        %4121 = vmatprep.subr.bf16.mxu0 %v3321
        %4122 = vmatpush1.bf16.msra.mxu0 %v3320
        %4123 = vmatprep.mubr.bf16.mxu0 %v510
        %4124 = vmatmul.mubr.bf16.gmra.mrb[0].mxu0 %v509
        %v4125 = vpop.f32.mrb[0].mxu0
        %v4126 = vadd.f32 %v4085, %v4125
        %v4127 = vpop.f32.mrb[0].mxu0
        %v4128 = vadd.f32 %v4087, %v4127
        %v4129 = vpop.f32.mrb[0].mxu0
        %v4130 = vpop.f32.mrb[0].mxu0
        %4131 = vdwg.mxu0
        %4132 = vmatprep.subr.bf16.mxu0 %v3329
        %4133 = vmatpush1.bf16.msra.mxu0 %v3328
        %4134 = vmatprep.subr.bf16.mxu0 %v3337
        %4135 = vmatpush1.bf16.msra.mxu0 %v3336
        %4136 = vmatprep.subr.bf16.mxu0 %v3345
        %4137 = vmatpush1.bf16.msra.mxu0 %v3344
        %4138 = vmatprep.subr.bf16.mxu0 %v3353
        %4139 = vmatpush1.bf16.msra.mxu0 %v3352
        %4140 = vmatprep.subr.bf16.mxu0 %v3361
        %4141 = vmatpush1.bf16.msra.mxu0 %v3360
        %4142 = vmatprep.subr.bf16.mxu0 %v3369
        %4143 = vmatpush1.bf16.msra.mxu0 %v3368
        %4144 = vmatprep.subr.bf16.mxu0 %v3377
        %4145 = vmatpush1.bf16.msra.mxu0 %v3376
        %4146 = vmatprep.subr.bf16.mxu0 %v3385
        %4147 = vmatpush1.bf16.msra.mxu0 %v3384
        %4148 = vmatprep.subr.bf16.mxu0 0
        %4149 = vmatpush1.bf16.msra.mxu0 0
        %4150 = vmatprep.subr.bf16.mxu0 0
        %4151 = vmatpush1.bf16.msra.mxu0 0
        %4152 = vmatprep.subr.bf16.mxu0 0
        %4153 = vmatpush1.bf16.msra.mxu0 0
        %4154 = vmatprep.subr.bf16.mxu0 0
        %4155 = vmatpush1.bf16.msra.mxu0 0
        %4156 = vmatprep.subr.bf16.mxu0 0
        %4157 = vmatpush1.bf16.msra.mxu0 0
        %4158 = vmatprep.subr.bf16.mxu0 0
        %4159 = vmatpush1.bf16.msra.mxu0 0
        %4160 = vmatprep.subr.bf16.mxu0 0
        %4161 = vmatpush1.bf16.msra.mxu0 0
        %4162 = vmatprep.subr.bf16.mxu0 0
        %4163 = vmatpush1.bf16.msra.mxu0 0
        %4164 = vmatprep.mubr.bf16.mxu0 0
        %4165 = vmatmul.mubr.bf16.gmra.mrb[0].mxu0 %v511
        %v4166 = vpop.f32.mrb[0].mxu0
        %v4167 = vadd.f32 %v4126, %v4166
        %v4168 = vpop.f32.mrb[0].mxu0
        %v4169 = vadd.f32 %v4128, %v4168
        %v4170 = vpop.f32.mrb[0].mxu0
        %v4171 = vpop.f32.mrb[0].mxu0
        %4172 = vdwg.mxu0
        %4173 = vmatprep.subr.bf16.mxu0 %v2819
        %4174 = vmatpush1.bf16.msra.mxu0 %v2818
        %4175 = vmatprep.subr.bf16.mxu0 %v2827
        %4176 = vmatpush1.bf16.msra.mxu0 %v2826
        %4177 = vmatprep.subr.bf16.mxu0 %v2835
        %4178 = vmatpush1.bf16.msra.mxu0 %v2834
        %4179 = vmatprep.subr.bf16.mxu0 %v2843
        %4180 = vmatpush1.bf16.msra.mxu0 %v2842
        %4181 = vmatprep.subr.bf16.mxu0 %v2851
        %4182 = vmatpush1.bf16.msra.mxu0 %v2850
        %4183 = vmatprep.subr.bf16.mxu0 %v2859
        %4184 = vmatpush1.bf16.msra.mxu0 %v2858
        %4185 = vmatprep.subr.bf16.mxu0 %v2867
        %4186 = vmatpush1.bf16.msra.mxu0 %v2866
        %4187 = vmatprep.subr.bf16.mxu0 %v2875
        %4188 = vmatpush1.bf16.msra.mxu0 %v2874
        %4189 = vmatprep.subr.bf16.mxu0 %v2883
        %4190 = vmatpush1.bf16.msra.mxu0 %v2882
        %4191 = vmatprep.subr.bf16.mxu0 %v2891
        %4192 = vmatpush1.bf16.msra.mxu0 %v2890
        %4193 = vmatprep.subr.bf16.mxu0 %v2899
        %4194 = vmatpush1.bf16.msra.mxu0 %v2898
        %4195 = vmatprep.subr.bf16.mxu0 %v2907
        %4196 = vmatpush1.bf16.msra.mxu0 %v2906
        %4197 = vmatprep.subr.bf16.mxu0 %v2915
        %4198 = vmatpush1.bf16.msra.mxu0 %v2914
        %4199 = vmatprep.subr.bf16.mxu0 %v2923
        %4200 = vmatpush1.bf16.msra.mxu0 %v2922
        %4201 = vmatprep.subr.bf16.mxu0 %v2931
        %4202 = vmatpush1.bf16.msra.mxu0 %v2930
        %4203 = vmatprep.subr.bf16.mxu0 %v2939
        %4204 = vmatpush1.bf16.msra.mxu0 %v2938
        %4205 = vmatprep.mubr.bf16.mxu0 %v504
        %4206 = vmatmul.mubr.bf16.gmra.mrb[0].mxu0 %v503
        %v4207 = vpop.f32.mrb[0].mxu0
        %v4208 = vadd.f32 0.0, %v4207
        %v4209 = vpop.f32.mrb[0].mxu0
        %v4210 = vadd.f32 0.0, %v4209
        %v4211 = vpop.f32.mrb[0].mxu0
        %v4212 = vpop.f32.mrb[0].mxu0
        %4213 = vdwg.mxu0
        %4214 = vmatprep.subr.bf16.mxu0 %v2947
        %4215 = vmatpush1.bf16.msra.mxu0 %v2946
        %4216 = vmatprep.subr.bf16.mxu0 %v2955
        %4217 = vmatpush1.bf16.msra.mxu0 %v2954
        %4218 = vmatprep.subr.bf16.mxu0 %v2963
        %4219 = vmatpush1.bf16.msra.mxu0 %v2962
        %4220 = vmatprep.subr.bf16.mxu0 %v2971
        %4221 = vmatpush1.bf16.msra.mxu0 %v2970
        %4222 = vmatprep.subr.bf16.mxu0 %v2979
        %4223 = vmatpush1.bf16.msra.mxu0 %v2978
        %4224 = vmatprep.subr.bf16.mxu0 %v2987
        %4225 = vmatpush1.bf16.msra.mxu0 %v2986
        %4226 = vmatprep.subr.bf16.mxu0 %v2995
        %4227 = vmatpush1.bf16.msra.mxu0 %v2994
        %4228 = vmatprep.subr.bf16.mxu0 %v3003
        %4229 = vmatpush1.bf16.msra.mxu0 %v3002
        %4230 = vmatprep.subr.bf16.mxu0 %v3011
        %4231 = vmatpush1.bf16.msra.mxu0 %v3010
        %4232 = vmatprep.subr.bf16.mxu0 %v3019
        %4233 = vmatpush1.bf16.msra.mxu0 %v3018
        %4234 = vmatprep.subr.bf16.mxu0 %v3027
        %4235 = vmatpush1.bf16.msra.mxu0 %v3026
        %4236 = vmatprep.subr.bf16.mxu0 %v3035
        %4237 = vmatpush1.bf16.msra.mxu0 %v3034
        %4238 = vmatprep.subr.bf16.mxu0 %v3043
        %4239 = vmatpush1.bf16.msra.mxu0 %v3042
        %4240 = vmatprep.subr.bf16.mxu0 %v3051
        %4241 = vmatpush1.bf16.msra.mxu0 %v3050
        %4242 = vmatprep.subr.bf16.mxu0 %v3059
        %4243 = vmatpush1.bf16.msra.mxu0 %v3058
        %4244 = vmatprep.subr.bf16.mxu0 %v3067
        %4245 = vmatpush1.bf16.msra.mxu0 %v3066
        %4246 = vmatprep.mubr.bf16.mxu0 %v506
        %4247 = vmatmul.mubr.bf16.gmra.mrb[0].mxu0 %v505
        %v4248 = vpop.f32.mrb[0].mxu0
        %v4249 = vadd.f32 %v4208, %v4248
        %v4250 = vpop.f32.mrb[0].mxu0
        %v4251 = vadd.f32 %v4210, %v4250
        %v4252 = vpop.f32.mrb[0].mxu0
        %v4253 = vpop.f32.mrb[0].mxu0
        %4254 = vdwg.mxu0
        %4255 = vmatprep.subr.bf16.mxu0 %v3075
        %4256 = vmatpush1.bf16.msra.mxu0 %v3074
        %4257 = vmatprep.subr.bf16.mxu0 %v3083
        %4258 = vmatpush1.bf16.msra.mxu0 %v3082
        %4259 = vmatprep.subr.bf16.mxu0 %v3091
        %4260 = vmatpush1.bf16.msra.mxu0 %v3090
        %4261 = vmatprep.subr.bf16.mxu0 %v3099
        %4262 = vmatpush1.bf16.msra.mxu0 %v3098
        %4263 = vmatprep.subr.bf16.mxu0 %v3107
        %4264 = vmatpush1.bf16.msra.mxu0 %v3106
        %4265 = vmatprep.subr.bf16.mxu0 %v3115
        %4266 = vmatpush1.bf16.msra.mxu0 %v3114
        %4267 = vmatprep.subr.bf16.mxu0 %v3123
        %4268 = vmatpush1.bf16.msra.mxu0 %v3122
        %4269 = vmatprep.subr.bf16.mxu0 %v3131
        %4270 = vmatpush1.bf16.msra.mxu0 %v3130
        %4271 = vmatprep.subr.bf16.mxu0 %v3139
        %4272 = vmatpush1.bf16.msra.mxu0 %v3138
        %4273 = vmatprep.subr.bf16.mxu0 %v3147
        %4274 = vmatpush1.bf16.msra.mxu0 %v3146
        %4275 = vmatprep.subr.bf16.mxu0 %v3155
        %4276 = vmatpush1.bf16.msra.mxu0 %v3154
        %4277 = vmatprep.subr.bf16.mxu0 %v3163
        %4278 = vmatpush1.bf16.msra.mxu0 %v3162
        %4279 = vmatprep.subr.bf16.mxu0 %v3171
        %4280 = vmatpush1.bf16.msra.mxu0 %v3170
        %4281 = vmatprep.subr.bf16.mxu0 %v3179
        %4282 = vmatpush1.bf16.msra.mxu0 %v3178
        %4283 = vmatprep.subr.bf16.mxu0 %v3187
        %4284 = vmatpush1.bf16.msra.mxu0 %v3186
        %4285 = vmatprep.subr.bf16.mxu0 %v3195
        %4286 = vmatpush1.bf16.msra.mxu0 %v3194
        %4287 = vmatprep.mubr.bf16.mxu0 %v508
        %4288 = vmatmul.mubr.bf16.gmra.mrb[0].mxu0 %v507
        %v4289 = vpop.f32.mrb[0].mxu0
        %v4290 = vadd.f32 %v4249, %v4289
        %v4291 = vpop.f32.mrb[0].mxu0
        %v4292 = vadd.f32 %v4251, %v4291
        %v4293 = vpop.f32.mrb[0].mxu0
        %v4294 = vpop.f32.mrb[0].mxu0
        %4295 = vdwg.mxu0
        %4296 = vmatprep.subr.bf16.mxu0 %v3203
        %4297 = vmatpush1.bf16.msra.mxu0 %v3202
        %4298 = vmatprep.subr.bf16.mxu0 %v3211
        %4299 = vmatpush1.bf16.msra.mxu0 %v3210
        %4300 = vmatprep.subr.bf16.mxu0 %v3219
        %4301 = vmatpush1.bf16.msra.mxu0 %v3218
        %4302 = vmatprep.subr.bf16.mxu0 %v3227
        %4303 = vmatpush1.bf16.msra.mxu0 %v3226
        %4304 = vmatprep.subr.bf16.mxu0 %v3235
        %4305 = vmatpush1.bf16.msra.mxu0 %v3234
        %4306 = vmatprep.subr.bf16.mxu0 %v3243
        %4307 = vmatpush1.bf16.msra.mxu0 %v3242
        %4308 = vmatprep.subr.bf16.mxu0 %v3251
        %4309 = vmatpush1.bf16.msra.mxu0 %v3250
        %4310 = vmatprep.subr.bf16.mxu0 %v3259
        %4311 = vmatpush1.bf16.msra.mxu0 %v3258
        %4312 = vmatprep.subr.bf16.mxu0 %v3267
        %4313 = vmatpush1.bf16.msra.mxu0 %v3266
        %4314 = vmatprep.subr.bf16.mxu0 %v3275
        %4315 = vmatpush1.bf16.msra.mxu0 %v3274
        %4316 = vmatprep.subr.bf16.mxu0 %v3283
        %4317 = vmatpush1.bf16.msra.mxu0 %v3282
        %4318 = vmatprep.subr.bf16.mxu0 %v3291
        %4319 = vmatpush1.bf16.msra.mxu0 %v3290
        %4320 = vmatprep.subr.bf16.mxu0 %v3299
        %4321 = vmatpush1.bf16.msra.mxu0 %v3298
        %4322 = vmatprep.subr.bf16.mxu0 %v3307
        %4323 = vmatpush1.bf16.msra.mxu0 %v3306
        %4324 = vmatprep.subr.bf16.mxu0 %v3315
        %4325 = vmatpush1.bf16.msra.mxu0 %v3314
        %4326 = vmatprep.subr.bf16.mxu0 %v3323
        %4327 = vmatpush1.bf16.msra.mxu0 %v3322
        %4328 = vmatprep.mubr.bf16.mxu0 %v510
        %4329 = vmatmul.mubr.bf16.gmra.mrb[0].mxu0 %v509
        %v4330 = vpop.f32.mrb[0].mxu0
        %v4331 = vadd.f32 %v4290, %v4330
        %v4332 = vpop.f32.mrb[0].mxu0
        %v4333 = vadd.f32 %v4292, %v4332
        %v4334 = vpop.f32.mrb[0].mxu0
        %v4335 = vpop.f32.mrb[0].mxu0
        %4336 = vdwg.mxu0
        %4337 = vmatprep.subr.bf16.mxu0 %v3331
        %4338 = vmatpush1.bf16.msra.mxu0 %v3330
        %4339 = vmatprep.subr.bf16.mxu0 %v3339
        %4340 = vmatpush1.bf16.msra.mxu0 %v3338
        %4341 = vmatprep.subr.bf16.mxu0 %v3347
        %4342 = vmatpush1.bf16.msra.mxu0 %v3346
        %4343 = vmatprep.subr.bf16.mxu0 %v3355
        %4344 = vmatpush1.bf16.msra.mxu0 %v3354
        %4345 = vmatprep.subr.bf16.mxu0 %v3363
        %4346 = vmatpush1.bf16.msra.mxu0 %v3362
        %4347 = vmatprep.subr.bf16.mxu0 %v3371
        %4348 = vmatpush1.bf16.msra.mxu0 %v3370
        %4349 = vmatprep.subr.bf16.mxu0 %v3379
        %4350 = vmatpush1.bf16.msra.mxu0 %v3378
        %4351 = vmatprep.subr.bf16.mxu0 %v3387
        %4352 = vmatpush1.bf16.msra.mxu0 %v3386
        %4353 = vmatprep.subr.bf16.mxu0 0
        %4354 = vmatpush1.bf16.msra.mxu0 0
        %4355 = vmatprep.subr.bf16.mxu0 0
        %4356 = vmatpush1.bf16.msra.mxu0 0
        %4357 = vmatprep.subr.bf16.mxu0 0
        %4358 = vmatpush1.bf16.msra.mxu0 0
        %4359 = vmatprep.subr.bf16.mxu0 0
        %4360 = vmatpush1.bf16.msra.mxu0 0
        %4361 = vmatprep.subr.bf16.mxu0 0
        %4362 = vmatpush1.bf16.msra.mxu0 0
        %4363 = vmatprep.subr.bf16.mxu0 0
        %4364 = vmatpush1.bf16.msra.mxu0 0
        %4365 = vmatprep.subr.bf16.mxu0 0
        %4366 = vmatpush1.bf16.msra.mxu0 0
        %4367 = vmatprep.subr.bf16.mxu0 0
        %4368 = vmatpush1.bf16.msra.mxu0 0
        %4369 = vmatprep.mubr.bf16.mxu0 0
        %4370 = vmatmul.mubr.bf16.gmra.mrb[0].mxu0 %v511
        %v4371 = vpop.f32.mrb[0].mxu0
        %v4372 = vadd.f32 %v4331, %v4371
        %v4373 = vpop.f32.mrb[0].mxu0
        %v4374 = vadd.f32 %v4333, %v4373
        %v4375 = vpop.f32.mrb[0].mxu0
        %v4376 = vpop.f32.mrb[0].mxu0
        %4377 = vdwg.mxu0
        %4378 = vmatprep.subr.bf16.mxu0 %v2821
        %4379 = vmatpush1.bf16.msra.mxu0 %v2820
        %4380 = vmatprep.subr.bf16.mxu0 %v2829
        %4381 = vmatpush1.bf16.msra.mxu0 %v2828
        %4382 = vmatprep.subr.bf16.mxu0 %v2837
        %4383 = vmatpush1.bf16.msra.mxu0 %v2836
        %4384 = vmatprep.subr.bf16.mxu0 %v2845
        %4385 = vmatpush1.bf16.msra.mxu0 %v2844
        %4386 = vmatprep.subr.bf16.mxu0 %v2853
        %4387 = vmatpush1.bf16.msra.mxu0 %v2852
        %4388 = vmatprep.subr.bf16.mxu0 %v2861
        %4389 = vmatpush1.bf16.msra.mxu0 %v2860
        %4390 = vmatprep.subr.bf16.mxu0 %v2869
        %4391 = vmatpush1.bf16.msra.mxu0 %v2868
        %4392 = vmatprep.subr.bf16.mxu0 %v2877
        %4393 = vmatpush1.bf16.msra.mxu0 %v2876
        %4394 = vmatprep.subr.bf16.mxu0 %v2885
        %4395 = vmatpush1.bf16.msra.mxu0 %v2884
        %4396 = vmatprep.subr.bf16.mxu0 %v2893
        %4397 = vmatpush1.bf16.msra.mxu0 %v2892
        %4398 = vmatprep.subr.bf16.mxu0 %v2901
        %4399 = vmatpush1.bf16.msra.mxu0 %v2900
        %4400 = vmatprep.subr.bf16.mxu0 %v2909
        %4401 = vmatpush1.bf16.msra.mxu0 %v2908
        %4402 = vmatprep.subr.bf16.mxu0 %v2917
        %4403 = vmatpush1.bf16.msra.mxu0 %v2916
        %4404 = vmatprep.subr.bf16.mxu0 %v2925
        %4405 = vmatpush1.bf16.msra.mxu0 %v2924
        %4406 = vmatprep.subr.bf16.mxu0 %v2933
        %4407 = vmatpush1.bf16.msra.mxu0 %v2932
        %4408 = vmatprep.subr.bf16.mxu0 %v2941
        %4409 = vmatpush1.bf16.msra.mxu0 %v2940
        %4410 = vmatprep.mubr.bf16.mxu0 %v504
        %4411 = vmatmul.mubr.bf16.gmra.mrb[0].mxu0 %v503
        %v4412 = vpop.f32.mrb[0].mxu0
        %v4413 = vadd.f32 0.0, %v4412
        %v4414 = vpop.f32.mrb[0].mxu0
        %v4415 = vadd.f32 0.0, %v4414
        %v4416 = vpop.f32.mrb[0].mxu0
        %v4417 = vpop.f32.mrb[0].mxu0
        %4418 = vdwg.mxu0
        %4419 = vmatprep.subr.bf16.mxu0 %v2949
        %4420 = vmatpush1.bf16.msra.mxu0 %v2948
        %4421 = vmatprep.subr.bf16.mxu0 %v2957
        %4422 = vmatpush1.bf16.msra.mxu0 %v2956
        %4423 = vmatprep.subr.bf16.mxu0 %v2965
        %4424 = vmatpush1.bf16.msra.mxu0 %v2964
        %4425 = vmatprep.subr.bf16.mxu0 %v2973
        %4426 = vmatpush1.bf16.msra.mxu0 %v2972
        %4427 = vmatprep.subr.bf16.mxu0 %v2981
        %4428 = vmatpush1.bf16.msra.mxu0 %v2980
        %4429 = vmatprep.subr.bf16.mxu0 %v2989
        %4430 = vmatpush1.bf16.msra.mxu0 %v2988
        %4431 = vmatprep.subr.bf16.mxu0 %v2997
        %4432 = vmatpush1.bf16.msra.mxu0 %v2996
        %4433 = vmatprep.subr.bf16.mxu0 %v3005
        %4434 = vmatpush1.bf16.msra.mxu0 %v3004
        %4435 = vmatprep.subr.bf16.mxu0 %v3013
        %4436 = vmatpush1.bf16.msra.mxu0 %v3012
        %4437 = vmatprep.subr.bf16.mxu0 %v3021
        %4438 = vmatpush1.bf16.msra.mxu0 %v3020
        %4439 = vmatprep.subr.bf16.mxu0 %v3029
        %4440 = vmatpush1.bf16.msra.mxu0 %v3028
        %4441 = vmatprep.subr.bf16.mxu0 %v3037
        %4442 = vmatpush1.bf16.msra.mxu0 %v3036
        %4443 = vmatprep.subr.bf16.mxu0 %v3045
        %4444 = vmatpush1.bf16.msra.mxu0 %v3044
        %4445 = vmatprep.subr.bf16.mxu0 %v3053
        %4446 = vmatpush1.bf16.msra.mxu0 %v3052
        %4447 = vmatprep.subr.bf16.mxu0 %v3061
        %4448 = vmatpush1.bf16.msra.mxu0 %v3060
        %4449 = vmatprep.subr.bf16.mxu0 %v3069
        %4450 = vmatpush1.bf16.msra.mxu0 %v3068
        %4451 = vmatprep.mubr.bf16.mxu0 %v506
        %4452 = vmatmul.mubr.bf16.gmra.mrb[0].mxu0 %v505
        %v4453 = vpop.f32.mrb[0].mxu0
        %v4454 = vadd.f32 %v4413, %v4453
        %v4455 = vpop.f32.mrb[0].mxu0
        %v4456 = vadd.f32 %v4415, %v4455
        %v4457 = vpop.f32.mrb[0].mxu0
        %v4458 = vpop.f32.mrb[0].mxu0
        %4459 = vdwg.mxu0
        %4460 = vmatprep.subr.bf16.mxu0 %v3077
        %4461 = vmatpush1.bf16.msra.mxu0 %v3076
        %4462 = vmatprep.subr.bf16.mxu0 %v3085
        %4463 = vmatpush1.bf16.msra.mxu0 %v3084
        %4464 = vmatprep.subr.bf16.mxu0 %v3093
        %4465 = vmatpush1.bf16.msra.mxu0 %v3092
        %4466 = vmatprep.subr.bf16.mxu0 %v3101
        %4467 = vmatpush1.bf16.msra.mxu0 %v3100
        %4468 = vmatprep.subr.bf16.mxu0 %v3109
        %4469 = vmatpush1.bf16.msra.mxu0 %v3108
        %4470 = vmatprep.subr.bf16.mxu0 %v3117
        %4471 = vmatpush1.bf16.msra.mxu0 %v3116
        %4472 = vmatprep.subr.bf16.mxu0 %v3125
        %4473 = vmatpush1.bf16.msra.mxu0 %v3124
        %4474 = vmatprep.subr.bf16.mxu0 %v3133
        %4475 = vmatpush1.bf16.msra.mxu0 %v3132
        %4476 = vmatprep.subr.bf16.mxu0 %v3141
        %4477 = vmatpush1.bf16.msra.mxu0 %v3140
        %4478 = vmatprep.subr.bf16.mxu0 %v3149
        %4479 = vmatpush1.bf16.msra.mxu0 %v3148
        %4480 = vmatprep.subr.bf16.mxu0 %v3157
        %4481 = vmatpush1.bf16.msra.mxu0 %v3156
        %4482 = vmatprep.subr.bf16.mxu0 %v3165
        %4483 = vmatpush1.bf16.msra.mxu0 %v3164
        %4484 = vmatprep.subr.bf16.mxu0 %v3173
        %4485 = vmatpush1.bf16.msra.mxu0 %v3172
        %4486 = vmatprep.subr.bf16.mxu0 %v3181
        %4487 = vmatpush1.bf16.msra.mxu0 %v3180
        %4488 = vmatprep.subr.bf16.mxu0 %v3189
        %4489 = vmatpush1.bf16.msra.mxu0 %v3188
        %4490 = vmatprep.subr.bf16.mxu0 %v3197
        %4491 = vmatpush1.bf16.msra.mxu0 %v3196
        %4492 = vmatprep.mubr.bf16.mxu0 %v508
        %4493 = vmatmul.mubr.bf16.gmra.mrb[0].mxu0 %v507
        %v4494 = vpop.f32.mrb[0].mxu0
        %v4495 = vadd.f32 %v4454, %v4494
        %v4496 = vpop.f32.mrb[0].mxu0
        %v4497 = vadd.f32 %v4456, %v4496
        %v4498 = vpop.f32.mrb[0].mxu0
        %v4499 = vpop.f32.mrb[0].mxu0
        %4500 = vdwg.mxu0
        %4501 = vmatprep.subr.bf16.mxu0 %v3205
        %4502 = vmatpush1.bf16.msra.mxu0 %v3204
        %4503 = vmatprep.subr.bf16.mxu0 %v3213
        %4504 = vmatpush1.bf16.msra.mxu0 %v3212
        %4505 = vmatprep.subr.bf16.mxu0 %v3221
        %4506 = vmatpush1.bf16.msra.mxu0 %v3220
        %4507 = vmatprep.subr.bf16.mxu0 %v3229
        %4508 = vmatpush1.bf16.msra.mxu0 %v3228
        %4509 = vmatprep.subr.bf16.mxu0 %v3237
        %4510 = vmatpush1.bf16.msra.mxu0 %v3236
        %4511 = vmatprep.subr.bf16.mxu0 %v3245
        %4512 = vmatpush1.bf16.msra.mxu0 %v3244
        %4513 = vmatprep.subr.bf16.mxu0 %v3253
        %4514 = vmatpush1.bf16.msra.mxu0 %v3252
        %4515 = vmatprep.subr.bf16.mxu0 %v3261
        %4516 = vmatpush1.bf16.msra.mxu0 %v3260
        %4517 = vmatprep.subr.bf16.mxu0 %v3269
        %4518 = vmatpush1.bf16.msra.mxu0 %v3268
        %4519 = vmatprep.subr.bf16.mxu0 %v3277
        %4520 = vmatpush1.bf16.msra.mxu0 %v3276
        %4521 = vmatprep.subr.bf16.mxu0 %v3285
        %4522 = vmatpush1.bf16.msra.mxu0 %v3284
        %4523 = vmatprep.subr.bf16.mxu0 %v3293
        %4524 = vmatpush1.bf16.msra.mxu0 %v3292
        %4525 = vmatprep.subr.bf16.mxu0 %v3301
        %4526 = vmatpush1.bf16.msra.mxu0 %v3300
        %4527 = vmatprep.subr.bf16.mxu0 %v3309
        %4528 = vmatpush1.bf16.msra.mxu0 %v3308
        %4529 = vmatprep.subr.bf16.mxu0 %v3317
        %4530 = vmatpush1.bf16.msra.mxu0 %v3316
        %4531 = vmatprep.subr.bf16.mxu0 %v3325
        %4532 = vmatpush1.bf16.msra.mxu0 %v3324
        %4533 = vmatprep.mubr.bf16.mxu0 %v510
        %4534 = vmatmul.mubr.bf16.gmra.mrb[0].mxu0 %v509
        %v4535 = vpop.f32.mrb[0].mxu0
        %v4536 = vadd.f32 %v4495, %v4535
        %v4537 = vpop.f32.mrb[0].mxu0
        %v4538 = vadd.f32 %v4497, %v4537
        %v4539 = vpop.f32.mrb[0].mxu0
        %v4540 = vpop.f32.mrb[0].mxu0
        %4541 = vdwg.mxu0
        %4542 = vmatprep.subr.bf16.mxu0 %v3333
        %4543 = vmatpush1.bf16.msra.mxu0 %v3332
        %4544 = vmatprep.subr.bf16.mxu0 %v3341
        %4545 = vmatpush1.bf16.msra.mxu0 %v3340
        %4546 = vmatprep.subr.bf16.mxu0 %v3349
        %4547 = vmatpush1.bf16.msra.mxu0 %v3348
        %4548 = vmatprep.subr.bf16.mxu0 %v3357
        %4549 = vmatpush1.bf16.msra.mxu0 %v3356
        %4550 = vmatprep.subr.bf16.mxu0 %v3365
        %4551 = vmatpush1.bf16.msra.mxu0 %v3364
        %4552 = vmatprep.subr.bf16.mxu0 %v3373
        %4553 = vmatpush1.bf16.msra.mxu0 %v3372
        %4554 = vmatprep.subr.bf16.mxu0 %v3381
        %4555 = vmatpush1.bf16.msra.mxu0 %v3380
        %4556 = vmatprep.subr.bf16.mxu0 %v3389
        %4557 = vmatpush1.bf16.msra.mxu0 %v3388
        %4558 = vmatprep.subr.bf16.mxu0 0
        %4559 = vmatpush1.bf16.msra.mxu0 0
        %4560 = vmatprep.subr.bf16.mxu0 0
        %4561 = vmatpush1.bf16.msra.mxu0 0
        %4562 = vmatprep.subr.bf16.mxu0 0
        %4563 = vmatpush1.bf16.msra.mxu0 0
        %4564 = vmatprep.subr.bf16.mxu0 0
        %4565 = vmatpush1.bf16.msra.mxu0 0
        %4566 = vmatprep.subr.bf16.mxu0 0
        %4567 = vmatpush1.bf16.msra.mxu0 0
        %4568 = vmatprep.subr.bf16.mxu0 0
        %4569 = vmatpush1.bf16.msra.mxu0 0
        %4570 = vmatprep.subr.bf16.mxu0 0
        %4571 = vmatpush1.bf16.msra.mxu0 0
        %4572 = vmatprep.subr.bf16.mxu0 0
        %4573 = vmatpush1.bf16.msra.mxu0 0
        %4574 = vmatprep.mubr.bf16.mxu0 0
        %4575 = vmatmul.mubr.bf16.gmra.mrb[0].mxu0 %v511
        %v4576 = vpop.f32.mrb[0].mxu0
        %v4577 = vadd.f32 %v4536, %v4576
        %v4578 = vpop.f32.mrb[0].mxu0
        %v4579 = vadd.f32 %v4538, %v4578
        %v4580 = vpop.f32.mrb[0].mxu0
        %v4581 = vpop.f32.mrb[0].mxu0
        %4582 = vdwg.mxu0
        %4583 = vmatprep.subr.bf16.mxu0 %v2823
        %4584 = vmatpush1.bf16.msra.mxu0 %v2822
        %4585 = vmatprep.subr.bf16.mxu0 %v2831
        %4586 = vmatpush1.bf16.msra.mxu0 %v2830
        %4587 = vmatprep.subr.bf16.mxu0 %v2839
        %4588 = vmatpush1.bf16.msra.mxu0 %v2838
        %4589 = vmatprep.subr.bf16.mxu0 %v2847
        %4590 = vmatpush1.bf16.msra.mxu0 %v2846
        %4591 = vmatprep.subr.bf16.mxu0 %v2855
        %4592 = vmatpush1.bf16.msra.mxu0 %v2854
        %4593 = vmatprep.subr.bf16.mxu0 %v2863
        %4594 = vmatpush1.bf16.msra.mxu0 %v2862
        %4595 = vmatprep.subr.bf16.mxu0 %v2871
        %4596 = vmatpush1.bf16.msra.mxu0 %v2870
        %4597 = vmatprep.subr.bf16.mxu0 %v2879
        %4598 = vmatpush1.bf16.msra.mxu0 %v2878
        %4599 = vmatprep.subr.bf16.mxu0 %v2887
        %4600 = vmatpush1.bf16.msra.mxu0 %v2886
        %4601 = vmatprep.subr.bf16.mxu0 %v2895
        %4602 = vmatpush1.bf16.msra.mxu0 %v2894
        %4603 = vmatprep.subr.bf16.mxu0 %v2903
        %4604 = vmatpush1.bf16.msra.mxu0 %v2902
        %4605 = vmatprep.subr.bf16.mxu0 %v2911
        %4606 = vmatpush1.bf16.msra.mxu0 %v2910
        %4607 = vmatprep.subr.bf16.mxu0 %v2919
        %4608 = vmatpush1.bf16.msra.mxu0 %v2918
        %4609 = vmatprep.subr.bf16.mxu0 %v2927
        %4610 = vmatpush1.bf16.msra.mxu0 %v2926
        %4611 = vmatprep.subr.bf16.mxu0 %v2935
        %4612 = vmatpush1.bf16.msra.mxu0 %v2934
        %4613 = vmatprep.subr.bf16.mxu0 %v2943
        %4614 = vmatpush1.bf16.msra.mxu0 %v2942
        %4615 = vmatprep.mubr.bf16.mxu0 %v504
        %4616 = vmatmul.mubr.bf16.gmra.mrb[0].mxu0 %v503
        %v4617 = vpop.f32.mrb[0].mxu0
        %v4618 = vadd.f32 0.0, %v4617
        %v4619 = vpop.f32.mrb[0].mxu0
        %v4620 = vadd.f32 0.0, %v4619
        %v4621 = vpop.f32.mrb[0].mxu0
        %v4622 = vpop.f32.mrb[0].mxu0
        %4623 = vdwg.mxu0
        %4624 = vmatprep.subr.bf16.mxu0 %v2951
        %4625 = vmatpush1.bf16.msra.mxu0 %v2950
        %4626 = vmatprep.subr.bf16.mxu0 %v2959
        %4627 = vmatpush1.bf16.msra.mxu0 %v2958
        %4628 = vmatprep.subr.bf16.mxu0 %v2967
        %4629 = vmatpush1.bf16.msra.mxu0 %v2966
        %4630 = vmatprep.subr.bf16.mxu0 %v2975
        %4631 = vmatpush1.bf16.msra.mxu0 %v2974
        %4632 = vmatprep.subr.bf16.mxu0 %v2983
        %4633 = vmatpush1.bf16.msra.mxu0 %v2982
        %4634 = vmatprep.subr.bf16.mxu0 %v2991
        %4635 = vmatpush1.bf16.msra.mxu0 %v2990
        %4636 = vmatprep.subr.bf16.mxu0 %v2999
        %4637 = vmatpush1.bf16.msra.mxu0 %v2998
        %4638 = vmatprep.subr.bf16.mxu0 %v3007
        %4639 = vmatpush1.bf16.msra.mxu0 %v3006
        %4640 = vmatprep.subr.bf16.mxu0 %v3015
        %4641 = vmatpush1.bf16.msra.mxu0 %v3014
        %4642 = vmatprep.subr.bf16.mxu0 %v3023
        %4643 = vmatpush1.bf16.msra.mxu0 %v3022
        %4644 = vmatprep.subr.bf16.mxu0 %v3031
        %4645 = vmatpush1.bf16.msra.mxu0 %v3030
        %4646 = vmatprep.subr.bf16.mxu0 %v3039
        %4647 = vmatpush1.bf16.msra.mxu0 %v3038
        %4648 = vmatprep.subr.bf16.mxu0 %v3047
        %4649 = vmatpush1.bf16.msra.mxu0 %v3046
        %4650 = vmatprep.subr.bf16.mxu0 %v3055
        %4651 = vmatpush1.bf16.msra.mxu0 %v3054
        %4652 = vmatprep.subr.bf16.mxu0 %v3063
        %4653 = vmatpush1.bf16.msra.mxu0 %v3062
        %4654 = vmatprep.subr.bf16.mxu0 %v3071
        %4655 = vmatpush1.bf16.msra.mxu0 %v3070
        %4656 = vmatprep.mubr.bf16.mxu0 %v506
        %4657 = vmatmul.mubr.bf16.gmra.mrb[0].mxu0 %v505
        %v4658 = vpop.f32.mrb[0].mxu0
        %v4659 = vadd.f32 %v4618, %v4658
        %v4660 = vpop.f32.mrb[0].mxu0
        %v4661 = vadd.f32 %v4620, %v4660
        %v4662 = vpop.f32.mrb[0].mxu0
        %v4663 = vpop.f32.mrb[0].mxu0
        %4664 = vdwg.mxu0
        %4665 = vmatprep.subr.bf16.mxu0 %v3079
        %4666 = vmatpush1.bf16.msra.mxu0 %v3078
        %4667 = vmatprep.subr.bf16.mxu0 %v3087
        %4668 = vmatpush1.bf16.msra.mxu0 %v3086
        %4669 = vmatprep.subr.bf16.mxu0 %v3095
        %4670 = vmatpush1.bf16.msra.mxu0 %v3094
        %4671 = vmatprep.subr.bf16.mxu0 %v3103
        %4672 = vmatpush1.bf16.msra.mxu0 %v3102
        %4673 = vmatprep.subr.bf16.mxu0 %v3111
        %4674 = vmatpush1.bf16.msra.mxu0 %v3110
        %4675 = vmatprep.subr.bf16.mxu0 %v3119
        %4676 = vmatpush1.bf16.msra.mxu0 %v3118
        %4677 = vmatprep.subr.bf16.mxu0 %v3127
        %4678 = vmatpush1.bf16.msra.mxu0 %v3126
        %4679 = vmatprep.subr.bf16.mxu0 %v3135
        %4680 = vmatpush1.bf16.msra.mxu0 %v3134
        %4681 = vmatprep.subr.bf16.mxu0 %v3143
        %4682 = vmatpush1.bf16.msra.mxu0 %v3142
        %4683 = vmatprep.subr.bf16.mxu0 %v3151
        %4684 = vmatpush1.bf16.msra.mxu0 %v3150
        %4685 = vmatprep.subr.bf16.mxu0 %v3159
        %4686 = vmatpush1.bf16.msra.mxu0 %v3158
        %4687 = vmatprep.subr.bf16.mxu0 %v3167
        %4688 = vmatpush1.bf16.msra.mxu0 %v3166
        %4689 = vmatprep.subr.bf16.mxu0 %v3175
        %4690 = vmatpush1.bf16.msra.mxu0 %v3174
        %4691 = vmatprep.subr.bf16.mxu0 %v3183
        %4692 = vmatpush1.bf16.msra.mxu0 %v3182
        %4693 = vmatprep.subr.bf16.mxu0 %v3191
        %4694 = vmatpush1.bf16.msra.mxu0 %v3190
        %4695 = vmatprep.subr.bf16.mxu0 %v3199
        %4696 = vmatpush1.bf16.msra.mxu0 %v3198
        %4697 = vmatprep.mubr.bf16.mxu0 %v508
        %4698 = vmatmul.mubr.bf16.gmra.mrb[0].mxu0 %v507
        %v4699 = vpop.f32.mrb[0].mxu0
        %v4700 = vadd.f32 %v4659, %v4699
        %v4701 = vpop.f32.mrb[0].mxu0
        %v4702 = vadd.f32 %v4661, %v4701
        %v4703 = vpop.f32.mrb[0].mxu0
        %v4704 = vpop.f32.mrb[0].mxu0
        %4705 = vdwg.mxu0
        %4706 = vmatprep.subr.bf16.mxu0 %v3207
        %4707 = vmatpush1.bf16.msra.mxu0 %v3206
        %4708 = vmatprep.subr.bf16.mxu0 %v3215
        %4709 = vmatpush1.bf16.msra.mxu0 %v3214
        %4710 = vmatprep.subr.bf16.mxu0 %v3223
        %4711 = vmatpush1.bf16.msra.mxu0 %v3222
        %4712 = vmatprep.subr.bf16.mxu0 %v3231
        %4713 = vmatpush1.bf16.msra.mxu0 %v3230
        %4714 = vmatprep.subr.bf16.mxu0 %v3239
        %4715 = vmatpush1.bf16.msra.mxu0 %v3238
        %4716 = vmatprep.subr.bf16.mxu0 %v3247
        %4717 = vmatpush1.bf16.msra.mxu0 %v3246
        %4718 = vmatprep.subr.bf16.mxu0 %v3255
        %4719 = vmatpush1.bf16.msra.mxu0 %v3254
        %4720 = vmatprep.subr.bf16.mxu0 %v3263
        %4721 = vmatpush1.bf16.msra.mxu0 %v3262
        %4722 = vmatprep.subr.bf16.mxu0 %v3271
        %4723 = vmatpush1.bf16.msra.mxu0 %v3270
        %4724 = vmatprep.subr.bf16.mxu0 %v3279
        %4725 = vmatpush1.bf16.msra.mxu0 %v3278
        %4726 = vmatprep.subr.bf16.mxu0 %v3287
        %4727 = vmatpush1.bf16.msra.mxu0 %v3286
        %4728 = vmatprep.subr.bf16.mxu0 %v3295
        %4729 = vmatpush1.bf16.msra.mxu0 %v3294
        %4730 = vmatprep.subr.bf16.mxu0 %v3303
        %4731 = vmatpush1.bf16.msra.mxu0 %v3302
        %4732 = vmatprep.subr.bf16.mxu0 %v3311
        %4733 = vmatpush1.bf16.msra.mxu0 %v3310
        %4734 = vmatprep.subr.bf16.mxu0 %v3319
        %4735 = vmatpush1.bf16.msra.mxu0 %v3318
        %4736 = vmatprep.subr.bf16.mxu0 %v3327
        %4737 = vmatpush1.bf16.msra.mxu0 %v3326
        %4738 = vmatprep.mubr.bf16.mxu0 %v510
        %4739 = vmatmul.mubr.bf16.gmra.mrb[0].mxu0 %v509
        %v4740 = vpop.f32.mrb[0].mxu0
        %v4741 = vadd.f32 %v4700, %v4740
        %v4742 = vpop.f32.mrb[0].mxu0
        %v4743 = vadd.f32 %v4702, %v4742
        %v4744 = vpop.f32.mrb[0].mxu0
        %v4745 = vpop.f32.mrb[0].mxu0
        %4746 = vdwg.mxu0
        %4747 = vmatprep.subr.bf16.mxu0 %v3335
        %4748 = vmatpush1.bf16.msra.mxu0 %v3334
        %4749 = vmatprep.subr.bf16.mxu0 %v3343
        %4750 = vmatpush1.bf16.msra.mxu0 %v3342
        %4751 = vmatprep.subr.bf16.mxu0 %v3351
        %4752 = vmatpush1.bf16.msra.mxu0 %v3350
        %4753 = vmatprep.subr.bf16.mxu0 %v3359
        %4754 = vmatpush1.bf16.msra.mxu0 %v3358
        %4755 = vmatprep.subr.bf16.mxu0 %v3367
        %4756 = vmatpush1.bf16.msra.mxu0 %v3366
        %4757 = vmatprep.subr.bf16.mxu0 %v3375
        %4758 = vmatpush1.bf16.msra.mxu0 %v3374
        %4759 = vmatprep.subr.bf16.mxu0 %v3383
        %4760 = vmatpush1.bf16.msra.mxu0 %v3382
        %4761 = vmatprep.subr.bf16.mxu0 %v3391
        %4762 = vmatpush1.bf16.msra.mxu0 %v3390
        %4763 = vmatprep.subr.bf16.mxu0 0
        %4764 = vmatpush1.bf16.msra.mxu0 0
        %4765 = vmatprep.subr.bf16.mxu0 0
        %4766 = vmatpush1.bf16.msra.mxu0 0
        %4767 = vmatprep.subr.bf16.mxu0 0
        %4768 = vmatpush1.bf16.msra.mxu0 0
        %4769 = vmatprep.subr.bf16.mxu0 0
        %4770 = vmatpush1.bf16.msra.mxu0 0
        %4771 = vmatprep.subr.bf16.mxu0 0
        %4772 = vmatpush1.bf16.msra.mxu0 0
        %4773 = vmatprep.subr.bf16.mxu0 0
        %4774 = vmatpush1.bf16.msra.mxu0 0
        %4775 = vmatprep.subr.bf16.mxu0 0
        %4776 = vmatpush1.bf16.msra.mxu0 0
        %4777 = vmatprep.subr.bf16.mxu0 0
        %4778 = vmatpush1.bf16.msra.mxu0 0
        %4779 = vmatprep.mubr.bf16.mxu0 0
        %4780 = vmatmul.mubr.bf16.gmra.mrb[0].mxu0 %v511
        %v4781 = vpop.f32.mrb[0].mxu0
        %v4782 = vadd.f32 %v4741, %v4781
        %v4783 = vpop.f32.mrb[0].mxu0
        %v4784 = vadd.f32 %v4743, %v4783
        %v4785 = vpop.f32.mrb[0].mxu0
        %v4786 = vpop.f32.mrb[0].mxu0
        %4787 = vdwg.mxu0
        %v4788 = vadd.f32 %v486, %v4167
        %v4789 = vadd.f32 %v487, %v4169
        %v4790 = vadd.f32 %v488, %v4372
        %v4791 = vadd.f32 %v489, %v4374
        %v4792 = vadd.f32 %v490, %v4577
        %v4793 = vadd.f32 %v491, %v4579
        %v4794 = vadd.f32 %v492, %v4782
        %v4795 = vadd.f32 %v493, %v4784
        %4796 = vst [vmem:[#allocation2] sm:$0xff] %v4788
        %4797 = vst [vmem:[#allocation2 + $0x8] sm:$0xff] %v4789
        %4798 = vst [vmem:[#allocation2 + $0x10] sm:$0xff] %v4790
        %4799 = vst [vmem:[#allocation2 + $0x18] sm:$0xff] %v4791
        %4800 = vst [vmem:[#allocation2 + $0x20] sm:$0xff] %v4792
        %4801 = vst [vmem:[#allocation2 + $0x28] sm:$0xff] %v4793
        %4802 = vst [vmem:[#allocation2 + $0x30] sm:$0xff] %v4794
        %4803 = vst [vmem:[#allocation2 + $0x38] sm:$0xff] %v4795
        %p4804 = scmp.eq.s32.totalorder %s30, 2
        // Predicated region
        $region97: #{mlp_forward.1} parent=55 // pred_check
          %p4805 = pneg %p4804
        $region98: #{mlp_forward.1} parent=55 // pred_check_branch
          %4807 = sbr.rel (%p4805) target = $region100
        $region99: #{mlp_forward.1} parent=55 // pred_region
          %v4808 = vld [vmem:[#allocation2] sm:$0xff]
          %v4809 = vld [vmem:[#allocation2 + $0x8] sm:$0xff]
          %v4810 = vld [vmem:[#allocation2 + $0x10] sm:$0xff]
          %v4811 = vld [vmem:[#allocation2 + $0x18] sm:$0xff]
          %v4812 = vld [vmem:[#allocation2 + $0x20] sm:$0xff]
          %v4813 = vld [vmem:[#allocation2 + $0x28] sm:$0xff]
          %v4814 = vld [vmem:[#allocation2 + $0x30] sm:$0xff]
          %v4815 = vld [vmem:[#allocation2 + $0x38] sm:$0xff]
          %v4816 = vld [vmem:[#allocation8] sm:$0xff]
          %v4818 = vlaneseq
          %v4819 = vshrl.u32 %v4818, 7
          %v4820 = vsub.s32 0, %v4819
          %v4821 = vrot.slane %v4816, %v4820
          %v4822 = vlaneseq
          %v4823 = vshrl.u32 %v4822, 7
          %v4824 = vsub.s32 1, %v4823
          %v4825 = vrot.slane %v4816, %v4824
          %v4826 = vlaneseq
          %v4827 = vshrl.u32 %v4826, 7
          %v4828 = vsub.s32 2, %v4827
          %v4829 = vrot.slane %v4816, %v4828
          %v4830 = vlaneseq
          %v4831 = vshrl.u32 %v4830, 7
          %v4832 = vsub.s32 3, %v4831
          %v4833 = vrot.slane %v4816, %v4832
          %v4834 = vlaneseq
          %v4835 = vshrl.u32 %v4834, 7
          %v4836 = vsub.s32 4, %v4835
          %v4837 = vrot.slane %v4816, %v4836
          %v4838 = vlaneseq
          %v4839 = vshrl.u32 %v4838, 7
          %v4840 = vsub.s32 5, %v4839
          %v4841 = vrot.slane %v4816, %v4840
          %v4842 = vlaneseq
          %v4843 = vshrl.u32 %v4842, 7
          %v4844 = vsub.s32 6, %v4843
          %v4845 = vrot.slane %v4816, %v4844
          %v4846 = vlaneseq
          %v4847 = vshrl.u32 %v4846, 7
          %v4848 = vsub.s32 7, %v4847
          %v4849 = vrot.slane %v4816, %v4848
          %v4858 = vadd.f32 %v4808, %v4821
          %v4859 = vadd.f32 %v4809, %v4825
          %v4860 = vadd.f32 %v4810, %v4829
          %v4861 = vadd.f32 %v4811, %v4833
          %v4862 = vadd.f32 %v4812, %v4837
          %v4863 = vadd.f32 %v4813, %v4841
          %v4864 = vadd.f32 %v4814, %v4845
          %v4865 = vadd.f32 %v4815, %v4849
          %v4866 = vmax.f32 %v4858, 0.0
          %v4867 = vmax.f32 %v4859, 0.0
          %v4868 = vmax.f32 %v4860, 0.0
          %v4869 = vmax.f32 %v4861, 0.0
          %v4870 = vmax.f32 %v4862, 0.0
          %v4871 = vmax.f32 %v4863, 0.0
          %v4872 = vmax.f32 %v4864, 0.0
          %v4873 = vmax.f32 %v4865, 0.0
          %v4874 = vpack.c.bf16 %v4866, %v4866
          %v4875 = vpack.c.bf16 %v4867, %v4867
          %v4876 = vpack.c.bf16 %v4868, %v4868
          %v4877 = vpack.c.bf16 %v4869, %v4869
          %v4878 = vpack.c.bf16 %v4870, %v4870
          %v4879 = vpack.c.bf16 %v4871, %v4871
          %v4880 = vpack.c.bf16 %v4872, %v4872
          %v4881 = vpack.c.bf16 %v4873, %v4873
          %v4882 = vld [vmem:[#allocation9] sm:$0xff]
          %v4883 = vld [vmem:[#allocation9 + $0x8] sm:$0xff]
          %v4884 = vld [vmem:[#allocation9 + $0x10] sm:$0xff]
          %v4885 = vld [vmem:[#allocation9 + $0x18] sm:$0xff]
          %v4886 = vld [vmem:[#allocation9 + $0x20] sm:$0xff]
          %v4887 = vld [vmem:[#allocation9 + $0x28] sm:$0xff]
          %v4888 = vld [vmem:[#allocation9 + $0x30] sm:$0xff]
          %v4889 = vld [vmem:[#allocation9 + $0x38] sm:$0xff]
          %v4890 = vld [vmem:[#allocation9 + $0x40] sm:$0xff]
          %v4891 = vld [vmem:[#allocation9 + $0x48] sm:$0xff]
          %v4892 = vld [vmem:[#allocation9 + $0x50] sm:$0xff]
          %v4893 = vld [vmem:[#allocation9 + $0x58] sm:$0xff]
          %v4894 = vld [vmem:[#allocation9 + $0x60] sm:$0xff]
          %v4895 = vld [vmem:[#allocation9 + $0x68] sm:$0xff]
          %v4896 = vld [vmem:[#allocation9 + $0x70] sm:$0xff]
          %v4897 = vld [vmem:[#allocation9 + $0x78] sm:$0xff]
          %v4898 = vld [vmem:[#allocation9 + $0x80] sm:$0xff]
          %v4899 = vld [vmem:[#allocation9 + $0x88] sm:$0xff]
          %v4900 = vld [vmem:[#allocation9 + $0x90] sm:$0xff]
          %v4901 = vld [vmem:[#allocation9 + $0x98] sm:$0xff]
          %v4902 = vld [vmem:[#allocation9 + $0xa0] sm:$0xff]
          %v4903 = vld [vmem:[#allocation9 + $0xa8] sm:$0xff]
          %v4904 = vld [vmem:[#allocation9 + $0xb0] sm:$0xff]
          %v4905 = vld [vmem:[#allocation9 + $0xb8] sm:$0xff]
          %v4906 = vld [vmem:[#allocation9 + $0xc0] sm:$0xff]
          %v4907 = vld [vmem:[#allocation9 + $0xc8] sm:$0xff]
          %v4908 = vld [vmem:[#allocation9 + $0xd0] sm:$0xff]
          %v4909 = vld [vmem:[#allocation9 + $0xd8] sm:$0xff]
          %v4910 = vld [vmem:[#allocation9 + $0xe0] sm:$0xff]
          %v4911 = vld [vmem:[#allocation9 + $0xe8] sm:$0xff]
          %v4912 = vld [vmem:[#allocation9 + $0xf0] sm:$0xff]
          %v4913 = vld [vmem:[#allocation9 + $0xf8] sm:$0xff]
          %v4914 = vld [vmem:[#allocation9 + $0x100] sm:$0xff]
          %v4915 = vld [vmem:[#allocation9 + $0x108] sm:$0xff]
          %v4916 = vld [vmem:[#allocation9 + $0x110] sm:$0xff]
          %v4917 = vld [vmem:[#allocation9 + $0x118] sm:$0xff]
          %v4918 = vld [vmem:[#allocation9 + $0x120] sm:$0xff]
          %v4919 = vld [vmem:[#allocation9 + $0x128] sm:$0xff]
          %v4920 = vld [vmem:[#allocation9 + $0x130] sm:$0xff]
          %v4921 = vld [vmem:[#allocation9 + $0x138] sm:$0xff]
          %v4922 = vld [vmem:[#allocation9 + $0x140] sm:$0xff]
          %v4923 = vld [vmem:[#allocation9 + $0x148] sm:$0xff]
          %v4924 = vld [vmem:[#allocation9 + $0x150] sm:$0xff]
          %v4925 = vld [vmem:[#allocation9 + $0x158] sm:$0xff]
          %v4926 = vld [vmem:[#allocation9 + $0x160] sm:$0xff]
          %v4927 = vld [vmem:[#allocation9 + $0x168] sm:$0xff]
          %v4928 = vld [vmem:[#allocation9 + $0x170] sm:$0xff]
          %v4929 = vld [vmem:[#allocation9 + $0x178] sm:$0xff]
          %v4930 = vld [vmem:[#allocation9 + $0x180] sm:$0xff]
          %v4931 = vld [vmem:[#allocation9 + $0x188] sm:$0xff]
          %v4932 = vld [vmem:[#allocation9 + $0x190] sm:$0xff]
          %v4933 = vld [vmem:[#allocation9 + $0x198] sm:$0xff]
          %v4934 = vld [vmem:[#allocation9 + $0x1a0] sm:$0xff]
          %v4935 = vld [vmem:[#allocation9 + $0x1a8] sm:$0xff]
          %v4936 = vld [vmem:[#allocation9 + $0x1b0] sm:$0xff]
          %v4937 = vld [vmem:[#allocation9 + $0x1b8] sm:$0xff]
          %v4938 = vld [vmem:[#allocation9 + $0x1c0] sm:$0xff]
          %v4939 = vld [vmem:[#allocation9 + $0x1c8] sm:$0xff]
          %v4940 = vld [vmem:[#allocation9 + $0x1d0] sm:$0xff]
          %v4941 = vld [vmem:[#allocation9 + $0x1d8] sm:$0xff]
          %v4942 = vld [vmem:[#allocation9 + $0x1e0] sm:$0xff]
          %v4943 = vld [vmem:[#allocation9 + $0x1e8] sm:$0xff]
          %v4944 = vld [vmem:[#allocation9 + $0x1f0] sm:$0xff]
          %v4945 = vld [vmem:[#allocation9 + $0x1f8] sm:$0xff]
          %v4946 = vld [vmem:[#allocation9 + $0x200] sm:$0xff]
          %v4947 = vld [vmem:[#allocation9 + $0x208] sm:$0xff]
          %v4948 = vld [vmem:[#allocation9 + $0x210] sm:$0xff]
          %v4949 = vld [vmem:[#allocation9 + $0x218] sm:$0xff]
          %v4950 = vld [vmem:[#allocation9 + $0x220] sm:$0xff]
          %v4951 = vld [vmem:[#allocation9 + $0x228] sm:$0xff]
          %v4952 = vld [vmem:[#allocation9 + $0x230] sm:$0xff]
          %v4953 = vld [vmem:[#allocation9 + $0x238] sm:$0xff]
          %v4954 = vld [vmem:[#allocation9 + $0x240] sm:$0xff]
          %v4955 = vld [vmem:[#allocation9 + $0x248] sm:$0xff]
          %v4956 = vld [vmem:[#allocation9 + $0x250] sm:$0xff]
          %v4957 = vld [vmem:[#allocation9 + $0x258] sm:$0xff]
          %v4958 = vld [vmem:[#allocation9 + $0x260] sm:$0xff]
          %v4959 = vld [vmem:[#allocation9 + $0x268] sm:$0xff]
          %v4960 = vld [vmem:[#allocation9 + $0x270] sm:$0xff]
          %v4961 = vld [vmem:[#allocation9 + $0x278] sm:$0xff]
          %v4962 = vld [vmem:[#allocation9 + $0x280] sm:$0xff]
          %v4963 = vld [vmem:[#allocation9 + $0x288] sm:$0xff]
          %v4964 = vld [vmem:[#allocation9 + $0x290] sm:$0xff]
          %v4965 = vld [vmem:[#allocation9 + $0x298] sm:$0xff]
          %v4966 = vld [vmem:[#allocation9 + $0x2a0] sm:$0xff]
          %v4967 = vld [vmem:[#allocation9 + $0x2a8] sm:$0xff]
          %v4968 = vld [vmem:[#allocation9 + $0x2b0] sm:$0xff]
          %v4969 = vld [vmem:[#allocation9 + $0x2b8] sm:$0xff]
          %v4970 = vld [vmem:[#allocation9 + $0x2c0] sm:$0xff]
          %v4971 = vld [vmem:[#allocation9 + $0x2c8] sm:$0xff]
          %v4972 = vld [vmem:[#allocation9 + $0x2d0] sm:$0xff]
          %v4973 = vld [vmem:[#allocation9 + $0x2d8] sm:$0xff]
          %v4974 = vld [vmem:[#allocation9 + $0x2e0] sm:$0xff]
          %v4975 = vld [vmem:[#allocation9 + $0x2e8] sm:$0xff]
          %v4976 = vld [vmem:[#allocation9 + $0x2f0] sm:$0xff]
          %v4977 = vld [vmem:[#allocation9 + $0x2f8] sm:$0xff]
          %v4978 = vld [vmem:[#allocation9 + $0x300] sm:$0xff]
          %v4979 = vld [vmem:[#allocation9 + $0x308] sm:$0xff]
          %v4980 = vld [vmem:[#allocation9 + $0x310] sm:$0xff]
          %v4981 = vld [vmem:[#allocation9 + $0x318] sm:$0xff]
          %v4982 = vld [vmem:[#allocation9 + $0x320] sm:$0xff]
          %v4983 = vld [vmem:[#allocation9 + $0x328] sm:$0xff]
          %v4984 = vld [vmem:[#allocation9 + $0x330] sm:$0xff]
          %v4985 = vld [vmem:[#allocation9 + $0x338] sm:$0xff]
          %v4986 = vld [vmem:[#allocation9 + $0x340] sm:$0xff]
          %v4987 = vld [vmem:[#allocation9 + $0x348] sm:$0xff]
          %v4988 = vld [vmem:[#allocation9 + $0x350] sm:$0xff]
          %v4989 = vld [vmem:[#allocation9 + $0x358] sm:$0xff]
          %v4990 = vld [vmem:[#allocation9 + $0x360] sm:$0xff]
          %v4991 = vld [vmem:[#allocation9 + $0x368] sm:$0xff]
          %v4992 = vld [vmem:[#allocation9 + $0x370] sm:$0xff]
          %v4993 = vld [vmem:[#allocation9 + $0x378] sm:$0xff]
          %v4994 = vld [vmem:[#allocation9 + $0x380] sm:$0xff]
          %v4995 = vld [vmem:[#allocation9 + $0x388] sm:$0xff]
          %v4996 = vld [vmem:[#allocation9 + $0x390] sm:$0xff]
          %v4997 = vld [vmem:[#allocation9 + $0x398] sm:$0xff]
          %v4998 = vld [vmem:[#allocation9 + $0x3a0] sm:$0xff]
          %v4999 = vld [vmem:[#allocation9 + $0x3a8] sm:$0xff]
          %v5000 = vld [vmem:[#allocation9 + $0x3b0] sm:$0xff]
          %v5001 = vld [vmem:[#allocation9 + $0x3b8] sm:$0xff]
          %v5002 = vld [vmem:[#allocation9 + $0x3c0] sm:$0xff]
          %v5003 = vld [vmem:[#allocation9 + $0x3c8] sm:$0xff]
          %v5004 = vld [vmem:[#allocation9 + $0x3d0] sm:$0xff]
          %v5005 = vld [vmem:[#allocation9 + $0x3d8] sm:$0xff]
          %v5006 = vld [vmem:[#allocation9 + $0x3e0] sm:$0xff]
          %v5007 = vld [vmem:[#allocation9 + $0x3e8] sm:$0xff]
          %v5008 = vld [vmem:[#allocation9 + $0x3f0] sm:$0xff]
          %v5009 = vld [vmem:[#allocation9 + $0x3f8] sm:$0xff]
          %v5010 = vld [vmem:[#allocation9 + $0x400] sm:$0xff]
          %v5011 = vld [vmem:[#allocation9 + $0x408] sm:$0xff]
          %v5012 = vld [vmem:[#allocation9 + $0x410] sm:$0xff]
          %v5013 = vld [vmem:[#allocation9 + $0x418] sm:$0xff]
          %v5014 = vld [vmem:[#allocation9 + $0x420] sm:$0xff]
          %v5015 = vld [vmem:[#allocation9 + $0x428] sm:$0xff]
          %v5016 = vld [vmem:[#allocation9 + $0x430] sm:$0xff]
          %v5017 = vld [vmem:[#allocation9 + $0x438] sm:$0xff]
          %v5018 = vld [vmem:[#allocation9 + $0x440] sm:$0xff]
          %v5019 = vld [vmem:[#allocation9 + $0x448] sm:$0xff]
          %v5020 = vld [vmem:[#allocation9 + $0x450] sm:$0xff]
          %v5021 = vld [vmem:[#allocation9 + $0x458] sm:$0xff]
          %v5022 = vld [vmem:[#allocation9 + $0x460] sm:$0xff]
          %v5023 = vld [vmem:[#allocation9 + $0x468] sm:$0xff]
          %v5024 = vld [vmem:[#allocation9 + $0x470] sm:$0xff]
          %v5025 = vld [vmem:[#allocation9 + $0x478] sm:$0xff]
          %v5026 = vld [vmem:[#allocation9 + $0x480] sm:$0xff]
          %v5027 = vld [vmem:[#allocation9 + $0x488] sm:$0xff]
          %v5028 = vld [vmem:[#allocation9 + $0x490] sm:$0xff]
          %v5029 = vld [vmem:[#allocation9 + $0x498] sm:$0xff]
          %v5030 = vld [vmem:[#allocation9 + $0x4a0] sm:$0xff]
          %v5031 = vld [vmem:[#allocation9 + $0x4a8] sm:$0xff]
          %v5032 = vld [vmem:[#allocation9 + $0x4b0] sm:$0xff]
          %v5033 = vld [vmem:[#allocation9 + $0x4b8] sm:$0xff]
          %v5034 = vld [vmem:[#allocation9 + $0x4c0] sm:$0xff]
          %v5035 = vld [vmem:[#allocation9 + $0x4c8] sm:$0xff]
          %v5036 = vld [vmem:[#allocation9 + $0x4d0] sm:$0xff]
          %v5037 = vld [vmem:[#allocation9 + $0x4d8] sm:$0xff]
          %v5038 = vld [vmem:[#allocation9 + $0x4e0] sm:$0xff]
          %v5039 = vld [vmem:[#allocation9 + $0x4e8] sm:$0xff]
          %v5040 = vld [vmem:[#allocation9 + $0x4f0] sm:$0xff]
          %v5041 = vld [vmem:[#allocation9 + $0x4f8] sm:$0xff]
          %v5042 = vld [vmem:[#allocation9 + $0x500] sm:$0xff]
          %v5043 = vld [vmem:[#allocation9 + $0x508] sm:$0xff]
          %v5044 = vld [vmem:[#allocation9 + $0x510] sm:$0xff]
          %v5045 = vld [vmem:[#allocation9 + $0x518] sm:$0xff]
          %v5046 = vld [vmem:[#allocation9 + $0x520] sm:$0xff]
          %v5047 = vld [vmem:[#allocation9 + $0x528] sm:$0xff]
          %v5048 = vld [vmem:[#allocation9 + $0x530] sm:$0xff]
          %v5049 = vld [vmem:[#allocation9 + $0x538] sm:$0xff]
          %v5050 = vld [vmem:[#allocation9 + $0x540] sm:$0xff]
          %v5051 = vld [vmem:[#allocation9 + $0x548] sm:$0xff]
          %v5052 = vld [vmem:[#allocation9 + $0x550] sm:$0xff]
          %v5053 = vld [vmem:[#allocation9 + $0x558] sm:$0xff]
          %v5054 = vld [vmem:[#allocation9 + $0x560] sm:$0xff]
          %v5055 = vld [vmem:[#allocation9 + $0x568] sm:$0xff]
          %v5056 = vld [vmem:[#allocation9 + $0x570] sm:$0xff]
          %v5057 = vld [vmem:[#allocation9 + $0x578] sm:$0xff]
          %v5058 = vld [vmem:[#allocation9 + $0x580] sm:$0xff]
          %v5059 = vld [vmem:[#allocation9 + $0x588] sm:$0xff]
          %v5060 = vld [vmem:[#allocation9 + $0x590] sm:$0xff]
          %v5061 = vld [vmem:[#allocation9 + $0x598] sm:$0xff]
          %v5062 = vld [vmem:[#allocation9 + $0x5a0] sm:$0xff]
          %v5063 = vld [vmem:[#allocation9 + $0x5a8] sm:$0xff]
          %v5064 = vld [vmem:[#allocation9 + $0x5b0] sm:$0xff]
          %v5065 = vld [vmem:[#allocation9 + $0x5b8] sm:$0xff]
          %v5066 = vld [vmem:[#allocation9 + $0x5c0] sm:$0xff]
          %v5067 = vld [vmem:[#allocation9 + $0x5c8] sm:$0xff]
          %v5068 = vld [vmem:[#allocation9 + $0x5d0] sm:$0xff]
          %v5069 = vld [vmem:[#allocation9 + $0x5d8] sm:$0xff]
          %v5070 = vld [vmem:[#allocation9 + $0x5e0] sm:$0xff]
          %v5071 = vld [vmem:[#allocation9 + $0x5e8] sm:$0xff]
          %v5072 = vld [vmem:[#allocation9 + $0x5f0] sm:$0xff]
          %v5073 = vld [vmem:[#allocation9 + $0x5f8] sm:$0xff]
          %v5074 = vld [vmem:[#allocation9 + $0x600] sm:$0xff]
          %v5075 = vld [vmem:[#allocation9 + $0x608] sm:$0xff]
          %v5076 = vld [vmem:[#allocation9 + $0x610] sm:$0xff]
          %v5077 = vld [vmem:[#allocation9 + $0x618] sm:$0xff]
          %v5078 = vld [vmem:[#allocation9 + $0x620] sm:$0xff]
          %v5079 = vld [vmem:[#allocation9 + $0x628] sm:$0xff]
          %v5080 = vld [vmem:[#allocation9 + $0x630] sm:$0xff]
          %v5081 = vld [vmem:[#allocation9 + $0x638] sm:$0xff]
          %v5082 = vld [vmem:[#allocation9 + $0x640] sm:$0xff]
          %v5083 = vld [vmem:[#allocation9 + $0x648] sm:$0xff]
          %v5084 = vld [vmem:[#allocation9 + $0x650] sm:$0xff]
          %v5085 = vld [vmem:[#allocation9 + $0x658] sm:$0xff]
          %v5086 = vld [vmem:[#allocation9 + $0x660] sm:$0xff]
          %v5087 = vld [vmem:[#allocation9 + $0x668] sm:$0xff]
          %v5088 = vld [vmem:[#allocation9 + $0x670] sm:$0xff]
          %v5089 = vld [vmem:[#allocation9 + $0x678] sm:$0xff]
          %v5090 = vld [vmem:[#allocation9 + $0x680] sm:$0xff]
          %v5091 = vld [vmem:[#allocation9 + $0x688] sm:$0xff]
          %v5092 = vld [vmem:[#allocation9 + $0x690] sm:$0xff]
          %v5093 = vld [vmem:[#allocation9 + $0x698] sm:$0xff]
          %v5094 = vld [vmem:[#allocation9 + $0x6a0] sm:$0xff]
          %v5095 = vld [vmem:[#allocation9 + $0x6a8] sm:$0xff]
          %v5096 = vld [vmem:[#allocation9 + $0x6b0] sm:$0xff]
          %v5097 = vld [vmem:[#allocation9 + $0x6b8] sm:$0xff]
          %v5098 = vld [vmem:[#allocation9 + $0x6c0] sm:$0xff]
          %v5099 = vld [vmem:[#allocation9 + $0x6c8] sm:$0xff]
          %v5100 = vld [vmem:[#allocation9 + $0x6d0] sm:$0xff]
          %v5101 = vld [vmem:[#allocation9 + $0x6d8] sm:$0xff]
          %v5102 = vld [vmem:[#allocation9 + $0x6e0] sm:$0xff]
          %v5103 = vld [vmem:[#allocation9 + $0x6e8] sm:$0xff]
          %v5104 = vld [vmem:[#allocation9 + $0x6f0] sm:$0xff]
          %v5105 = vld [vmem:[#allocation9 + $0x6f8] sm:$0xff]
          %v5106 = vld [vmem:[#allocation9 + $0x700] sm:$0xff]
          %v5107 = vld [vmem:[#allocation9 + $0x708] sm:$0xff]
          %v5108 = vld [vmem:[#allocation9 + $0x710] sm:$0xff]
          %v5109 = vld [vmem:[#allocation9 + $0x718] sm:$0xff]
          %v5110 = vld [vmem:[#allocation9 + $0x720] sm:$0xff]
          %v5111 = vld [vmem:[#allocation9 + $0x728] sm:$0xff]
          %v5112 = vld [vmem:[#allocation9 + $0x730] sm:$0xff]
          %v5113 = vld [vmem:[#allocation9 + $0x738] sm:$0xff]
          %v5114 = vld [vmem:[#allocation9 + $0x740] sm:$0xff]
          %v5115 = vld [vmem:[#allocation9 + $0x748] sm:$0xff]
          %v5116 = vld [vmem:[#allocation9 + $0x750] sm:$0xff]
          %v5117 = vld [vmem:[#allocation9 + $0x758] sm:$0xff]
          %v5118 = vld [vmem:[#allocation9 + $0x760] sm:$0xff]
          %v5119 = vld [vmem:[#allocation9 + $0x768] sm:$0xff]
          %v5120 = vld [vmem:[#allocation9 + $0x770] sm:$0xff]
          %v5121 = vld [vmem:[#allocation9 + $0x778] sm:$0xff]
          %v5122 = vld [vmem:[#allocation9 + $0x780] sm:$0xff]
          %v5123 = vld [vmem:[#allocation9 + $0x788] sm:$0xff]
          %v5124 = vld [vmem:[#allocation9 + $0x790] sm:$0xff]
          %v5125 = vld [vmem:[#allocation9 + $0x798] sm:$0xff]
          %v5126 = vld [vmem:[#allocation9 + $0x7a0] sm:$0xff]
          %v5127 = vld [vmem:[#allocation9 + $0x7a8] sm:$0xff]
          %v5128 = vld [vmem:[#allocation9 + $0x7b0] sm:$0xff]
          %v5129 = vld [vmem:[#allocation9 + $0x7b8] sm:$0xff]
          %v5130 = vld [vmem:[#allocation9 + $0x7c0] sm:$0xff]
          %v5131 = vld [vmem:[#allocation9 + $0x7c8] sm:$0xff]
          %v5132 = vld [vmem:[#allocation9 + $0x7d0] sm:$0xff]
          %v5133 = vld [vmem:[#allocation9 + $0x7d8] sm:$0xff]
          %v5134 = vld [vmem:[#allocation9 + $0x7e0] sm:$0xff]
          %v5135 = vld [vmem:[#allocation9 + $0x7e8] sm:$0xff]
          %v5136 = vld [vmem:[#allocation9 + $0x7f0] sm:$0xff]
          %v5137 = vld [vmem:[#allocation9 + $0x7f8] sm:$0xff]
          %v5138 = vld [vmem:[#allocation9 + $0x800] sm:$0xff]
          %v5139 = vld [vmem:[#allocation9 + $0x808] sm:$0xff]
          %v5140 = vld [vmem:[#allocation9 + $0x810] sm:$0xff]
          %v5141 = vld [vmem:[#allocation9 + $0x818] sm:$0xff]
          %v5142 = vld [vmem:[#allocation9 + $0x820] sm:$0xff]
          %v5143 = vld [vmem:[#allocation9 + $0x828] sm:$0xff]
          %v5144 = vld [vmem:[#allocation9 + $0x830] sm:$0xff]
          %v5145 = vld [vmem:[#allocation9 + $0x838] sm:$0xff]
          %v5146 = vld [vmem:[#allocation9 + $0x840] sm:$0xff]
          %v5147 = vld [vmem:[#allocation9 + $0x848] sm:$0xff]
          %v5148 = vld [vmem:[#allocation9 + $0x850] sm:$0xff]
          %v5149 = vld [vmem:[#allocation9 + $0x858] sm:$0xff]
          %v5150 = vld [vmem:[#allocation9 + $0x860] sm:$0xff]
          %v5151 = vld [vmem:[#allocation9 + $0x868] sm:$0xff]
          %v5152 = vld [vmem:[#allocation9 + $0x870] sm:$0xff]
          %v5153 = vld [vmem:[#allocation9 + $0x878] sm:$0xff]
          %v5154 = vld [vmem:[#allocation9 + $0x880] sm:$0xff]
          %v5155 = vld [vmem:[#allocation9 + $0x888] sm:$0xff]
          %v5156 = vld [vmem:[#allocation9 + $0x890] sm:$0xff]
          %v5157 = vld [vmem:[#allocation9 + $0x898] sm:$0xff]
          %v5158 = vld [vmem:[#allocation9 + $0x8a0] sm:$0xff]
          %v5159 = vld [vmem:[#allocation9 + $0x8a8] sm:$0xff]
          %v5160 = vld [vmem:[#allocation9 + $0x8b0] sm:$0xff]
          %v5161 = vld [vmem:[#allocation9 + $0x8b8] sm:$0xff]
          %v5162 = vld [vmem:[#allocation9 + $0x8c0] sm:$0xff]
          %v5163 = vld [vmem:[#allocation9 + $0x8c8] sm:$0xff]
          %v5164 = vld [vmem:[#allocation9 + $0x8d0] sm:$0xff]
          %v5165 = vld [vmem:[#allocation9 + $0x8d8] sm:$0xff]
          %v5166 = vld [vmem:[#allocation9 + $0x8e0] sm:$0xff]
          %v5167 = vld [vmem:[#allocation9 + $0x8e8] sm:$0xff]
          %v5168 = vld [vmem:[#allocation9 + $0x8f0] sm:$0xff]
          %v5169 = vld [vmem:[#allocation9 + $0x8f8] sm:$0xff]
          %v5170 = vld [vmem:[#allocation9 + $0x900] sm:$0xff]
          %v5171 = vld [vmem:[#allocation9 + $0x908] sm:$0xff]
          %v5172 = vld [vmem:[#allocation9 + $0x910] sm:$0xff]
          %v5173 = vld [vmem:[#allocation9 + $0x918] sm:$0xff]
          %v5174 = vld [vmem:[#allocation9 + $0x920] sm:$0xff]
          %v5175 = vld [vmem:[#allocation9 + $0x928] sm:$0xff]
          %v5176 = vld [vmem:[#allocation9 + $0x930] sm:$0xff]
          %v5177 = vld [vmem:[#allocation9 + $0x938] sm:$0xff]
          %v5178 = vld [vmem:[#allocation9 + $0x940] sm:$0xff]
          %v5179 = vld [vmem:[#allocation9 + $0x948] sm:$0xff]
          %v5180 = vld [vmem:[#allocation9 + $0x950] sm:$0xff]
          %v5181 = vld [vmem:[#allocation9 + $0x958] sm:$0xff]
          %v5182 = vld [vmem:[#allocation9 + $0x960] sm:$0xff]
          %v5183 = vld [vmem:[#allocation9 + $0x968] sm:$0xff]
          %v5184 = vld [vmem:[#allocation9 + $0x970] sm:$0xff]
          %v5185 = vld [vmem:[#allocation9 + $0x978] sm:$0xff]
          %v5186 = vld [vmem:[#allocation9 + $0x980] sm:$0xff]
          %v5187 = vld [vmem:[#allocation9 + $0x988] sm:$0xff]
          %v5188 = vld [vmem:[#allocation9 + $0x990] sm:$0xff]
          %v5189 = vld [vmem:[#allocation9 + $0x998] sm:$0xff]
          %v5190 = vld [vmem:[#allocation9 + $0x9a0] sm:$0xff]
          %v5191 = vld [vmem:[#allocation9 + $0x9a8] sm:$0xff]
          %v5192 = vld [vmem:[#allocation9 + $0x9b0] sm:$0xff]
          %v5193 = vld [vmem:[#allocation9 + $0x9b8] sm:$0xff]
          %v5194 = vld [vmem:[#allocation9 + $0x9c0] sm:$0xff]
          %v5195 = vld [vmem:[#allocation9 + $0x9c8] sm:$0xff]
          %v5196 = vld [vmem:[#allocation9 + $0x9d0] sm:$0xff]
          %v5197 = vld [vmem:[#allocation9 + $0x9d8] sm:$0xff]
          %v5198 = vld [vmem:[#allocation9 + $0x9e0] sm:$0xff]
          %v5199 = vld [vmem:[#allocation9 + $0x9e8] sm:$0xff]
          %v5200 = vld [vmem:[#allocation9 + $0x9f0] sm:$0xff]
          %v5201 = vld [vmem:[#allocation9 + $0x9f8] sm:$0xff]
          %v5202 = vld [vmem:[#allocation9 + $0xa00] sm:$0xff]
          %v5203 = vld [vmem:[#allocation9 + $0xa08] sm:$0xff]
          %v5204 = vld [vmem:[#allocation9 + $0xa10] sm:$0xff]
          %v5205 = vld [vmem:[#allocation9 + $0xa18] sm:$0xff]
          %v5206 = vld [vmem:[#allocation9 + $0xa20] sm:$0xff]
          %v5207 = vld [vmem:[#allocation9 + $0xa28] sm:$0xff]
          %v5208 = vld [vmem:[#allocation9 + $0xa30] sm:$0xff]
          %v5209 = vld [vmem:[#allocation9 + $0xa38] sm:$0xff]
          %v5210 = vld [vmem:[#allocation9 + $0xa40] sm:$0xff]
          %v5211 = vld [vmem:[#allocation9 + $0xa48] sm:$0xff]
          %v5212 = vld [vmem:[#allocation9 + $0xa50] sm:$0xff]
          %v5213 = vld [vmem:[#allocation9 + $0xa58] sm:$0xff]
          %v5214 = vld [vmem:[#allocation9 + $0xa60] sm:$0xff]
          %v5215 = vld [vmem:[#allocation9 + $0xa68] sm:$0xff]
          %v5216 = vld [vmem:[#allocation9 + $0xa70] sm:$0xff]
          %v5217 = vld [vmem:[#allocation9 + $0xa78] sm:$0xff]
          %v5218 = vld [vmem:[#allocation9 + $0xa80] sm:$0xff]
          %v5219 = vld [vmem:[#allocation9 + $0xa88] sm:$0xff]
          %v5220 = vld [vmem:[#allocation9 + $0xa90] sm:$0xff]
          %v5221 = vld [vmem:[#allocation9 + $0xa98] sm:$0xff]
          %v5222 = vld [vmem:[#allocation9 + $0xaa0] sm:$0xff]
          %v5223 = vld [vmem:[#allocation9 + $0xaa8] sm:$0xff]
          %v5224 = vld [vmem:[#allocation9 + $0xab0] sm:$0xff]
          %v5225 = vld [vmem:[#allocation9 + $0xab8] sm:$0xff]
          %v5226 = vld [vmem:[#allocation9 + $0xac0] sm:$0xff]
          %v5227 = vld [vmem:[#allocation9 + $0xac8] sm:$0xff]
          %v5228 = vld [vmem:[#allocation9 + $0xad0] sm:$0xff]
          %v5229 = vld [vmem:[#allocation9 + $0xad8] sm:$0xff]
          %v5230 = vld [vmem:[#allocation9 + $0xae0] sm:$0xff]
          %v5231 = vld [vmem:[#allocation9 + $0xae8] sm:$0xff]
          %v5232 = vld [vmem:[#allocation9 + $0xaf0] sm:$0xff]
          %v5233 = vld [vmem:[#allocation9 + $0xaf8] sm:$0xff]
          %v5234 = vld [vmem:[#allocation9 + $0xb00] sm:$0xff]
          %v5235 = vld [vmem:[#allocation9 + $0xb08] sm:$0xff]
          %v5236 = vld [vmem:[#allocation9 + $0xb10] sm:$0xff]
          %v5237 = vld [vmem:[#allocation9 + $0xb18] sm:$0xff]
          %v5238 = vld [vmem:[#allocation9 + $0xb20] sm:$0xff]
          %v5239 = vld [vmem:[#allocation9 + $0xb28] sm:$0xff]
          %v5240 = vld [vmem:[#allocation9 + $0xb30] sm:$0xff]
          %v5241 = vld [vmem:[#allocation9 + $0xb38] sm:$0xff]
          %v5242 = vld [vmem:[#allocation9 + $0xb40] sm:$0xff]
          %v5243 = vld [vmem:[#allocation9 + $0xb48] sm:$0xff]
          %v5244 = vld [vmem:[#allocation9 + $0xb50] sm:$0xff]
          %v5245 = vld [vmem:[#allocation9 + $0xb58] sm:$0xff]
          %v5246 = vld [vmem:[#allocation9 + $0xb60] sm:$0xff]
          %v5247 = vld [vmem:[#allocation9 + $0xb68] sm:$0xff]
          %v5248 = vld [vmem:[#allocation9 + $0xb70] sm:$0xff]
          %v5249 = vld [vmem:[#allocation9 + $0xb78] sm:$0xff]
          %v5250 = vld [vmem:[#allocation9 + $0xb80] sm:$0xff]
          %v5251 = vld [vmem:[#allocation9 + $0xb88] sm:$0xff]
          %v5252 = vld [vmem:[#allocation9 + $0xb90] sm:$0xff]
          %v5253 = vld [vmem:[#allocation9 + $0xb98] sm:$0xff]
          %v5254 = vld [vmem:[#allocation9 + $0xba0] sm:$0xff]
          %v5255 = vld [vmem:[#allocation9 + $0xba8] sm:$0xff]
          %v5256 = vld [vmem:[#allocation9 + $0xbb0] sm:$0xff]
          %v5257 = vld [vmem:[#allocation9 + $0xbb8] sm:$0xff]
          %v5258 = vld [vmem:[#allocation9 + $0xbc0] sm:$0xff]
          %v5259 = vld [vmem:[#allocation9 + $0xbc8] sm:$0xff]
          %v5260 = vld [vmem:[#allocation9 + $0xbd0] sm:$0xff]
          %v5261 = vld [vmem:[#allocation9 + $0xbd8] sm:$0xff]
          %v5262 = vld [vmem:[#allocation9 + $0xbe0] sm:$0xff]
          %v5263 = vld [vmem:[#allocation9 + $0xbe8] sm:$0xff]
          %v5264 = vld [vmem:[#allocation9 + $0xbf0] sm:$0xff]
          %v5265 = vld [vmem:[#allocation9 + $0xbf8] sm:$0xff]
          %v5266 = vld [vmem:[#allocation9 + $0xc00] sm:$0xff]
          %v5267 = vld [vmem:[#allocation9 + $0xc08] sm:$0xff]
          %v5268 = vld [vmem:[#allocation9 + $0xc10] sm:$0xff]
          %v5269 = vld [vmem:[#allocation9 + $0xc18] sm:$0xff]
          %v5270 = vld [vmem:[#allocation9 + $0xc20] sm:$0xff]
          %v5271 = vld [vmem:[#allocation9 + $0xc28] sm:$0xff]
          %v5272 = vld [vmem:[#allocation9 + $0xc30] sm:$0xff]
          %v5273 = vld [vmem:[#allocation9 + $0xc38] sm:$0xff]
          %v5274 = vld [vmem:[#allocation9 + $0xc40] sm:$0xff]
          %v5275 = vld [vmem:[#allocation9 + $0xc48] sm:$0xff]
          %v5276 = vld [vmem:[#allocation9 + $0xc50] sm:$0xff]
          %v5277 = vld [vmem:[#allocation9 + $0xc58] sm:$0xff]
          %v5278 = vld [vmem:[#allocation9 + $0xc60] sm:$0xff]
          %v5279 = vld [vmem:[#allocation9 + $0xc68] sm:$0xff]
          %v5280 = vld [vmem:[#allocation9 + $0xc70] sm:$0xff]
          %v5281 = vld [vmem:[#allocation9 + $0xc78] sm:$0xff]
          %v5282 = vld [vmem:[#allocation9 + $0xc80] sm:$0xff]
          %v5283 = vld [vmem:[#allocation9 + $0xc88] sm:$0xff]
          %v5284 = vld [vmem:[#allocation9 + $0xc90] sm:$0xff]
          %v5285 = vld [vmem:[#allocation9 + $0xc98] sm:$0xff]
          %v5286 = vld [vmem:[#allocation9 + $0xca0] sm:$0xff]
          %v5287 = vld [vmem:[#allocation9 + $0xca8] sm:$0xff]
          %v5288 = vld [vmem:[#allocation9 + $0xcb0] sm:$0xff]
          %v5289 = vld [vmem:[#allocation9 + $0xcb8] sm:$0xff]
          %v5290 = vld [vmem:[#allocation9 + $0xcc0] sm:$0xff]
          %v5291 = vld [vmem:[#allocation9 + $0xcc8] sm:$0xff]
          %v5292 = vld [vmem:[#allocation9 + $0xcd0] sm:$0xff]
          %v5293 = vld [vmem:[#allocation9 + $0xcd8] sm:$0xff]
          %v5294 = vld [vmem:[#allocation9 + $0xce0] sm:$0xff]
          %v5295 = vld [vmem:[#allocation9 + $0xce8] sm:$0xff]
          %v5296 = vld [vmem:[#allocation9 + $0xcf0] sm:$0xff]
          %v5297 = vld [vmem:[#allocation9 + $0xcf8] sm:$0xff]
          %v5298 = vld [vmem:[#allocation9 + $0xd00] sm:$0xff]
          %v5299 = vld [vmem:[#allocation9 + $0xd08] sm:$0xff]
          %v5300 = vld [vmem:[#allocation9 + $0xd10] sm:$0xff]
          %v5301 = vld [vmem:[#allocation9 + $0xd18] sm:$0xff]
          %v5302 = vld [vmem:[#allocation9 + $0xd20] sm:$0xff]
          %v5303 = vld [vmem:[#allocation9 + $0xd28] sm:$0xff]
          %v5304 = vld [vmem:[#allocation9 + $0xd30] sm:$0xff]
          %v5305 = vld [vmem:[#allocation9 + $0xd38] sm:$0xff]
          %v5306 = vld [vmem:[#allocation9 + $0xd40] sm:$0xff]
          %v5307 = vld [vmem:[#allocation9 + $0xd48] sm:$0xff]
          %v5308 = vld [vmem:[#allocation9 + $0xd50] sm:$0xff]
          %v5309 = vld [vmem:[#allocation9 + $0xd58] sm:$0xff]
          %v5310 = vld [vmem:[#allocation9 + $0xd60] sm:$0xff]
          %v5311 = vld [vmem:[#allocation9 + $0xd68] sm:$0xff]
          %v5312 = vld [vmem:[#allocation9 + $0xd70] sm:$0xff]
          %v5313 = vld [vmem:[#allocation9 + $0xd78] sm:$0xff]
          %v5314 = vld [vmem:[#allocation9 + $0xd80] sm:$0xff]
          %v5315 = vld [vmem:[#allocation9 + $0xd88] sm:$0xff]
          %v5316 = vld [vmem:[#allocation9 + $0xd90] sm:$0xff]
          %v5317 = vld [vmem:[#allocation9 + $0xd98] sm:$0xff]
          %v5318 = vld [vmem:[#allocation9 + $0xda0] sm:$0xff]
          %v5319 = vld [vmem:[#allocation9 + $0xda8] sm:$0xff]
          %v5320 = vld [vmem:[#allocation9 + $0xdb0] sm:$0xff]
          %v5321 = vld [vmem:[#allocation9 + $0xdb8] sm:$0xff]
          %v5322 = vld [vmem:[#allocation9 + $0xdc0] sm:$0xff]
          %v5323 = vld [vmem:[#allocation9 + $0xdc8] sm:$0xff]
          %v5324 = vld [vmem:[#allocation9 + $0xdd0] sm:$0xff]
          %v5325 = vld [vmem:[#allocation9 + $0xdd8] sm:$0xff]
          %v5326 = vld [vmem:[#allocation9 + $0xde0] sm:$0xff]
          %v5327 = vld [vmem:[#allocation9 + $0xde8] sm:$0xff]
          %v5328 = vld [vmem:[#allocation9 + $0xdf0] sm:$0xff]
          %v5329 = vld [vmem:[#allocation9 + $0xdf8] sm:$0xff]
          %v5330 = vld [vmem:[#allocation9 + $0xe00] sm:$0xff]
          %v5331 = vld [vmem:[#allocation9 + $0xe08] sm:$0xff]
          %v5332 = vld [vmem:[#allocation9 + $0xe10] sm:$0xff]
          %v5333 = vld [vmem:[#allocation9 + $0xe18] sm:$0xff]
          %v5334 = vld [vmem:[#allocation9 + $0xe20] sm:$0xff]
          %v5335 = vld [vmem:[#allocation9 + $0xe28] sm:$0xff]
          %v5336 = vld [vmem:[#allocation9 + $0xe30] sm:$0xff]
          %v5337 = vld [vmem:[#allocation9 + $0xe38] sm:$0xff]
          %v5338 = vld [vmem:[#allocation9 + $0xe40] sm:$0xff]
          %v5339 = vld [vmem:[#allocation9 + $0xe48] sm:$0xff]
          %v5340 = vld [vmem:[#allocation9 + $0xe50] sm:$0xff]
          %v5341 = vld [vmem:[#allocation9 + $0xe58] sm:$0xff]
          %v5342 = vld [vmem:[#allocation9 + $0xe60] sm:$0xff]
          %v5343 = vld [vmem:[#allocation9 + $0xe68] sm:$0xff]
          %v5344 = vld [vmem:[#allocation9 + $0xe70] sm:$0xff]
          %v5345 = vld [vmem:[#allocation9 + $0xe78] sm:$0xff]
          %v5346 = vld [vmem:[#allocation9 + $0xe80] sm:$0xff]
          %v5347 = vld [vmem:[#allocation9 + $0xe88] sm:$0xff]
          %v5348 = vld [vmem:[#allocation9 + $0xe90] sm:$0xff]
          %v5349 = vld [vmem:[#allocation9 + $0xe98] sm:$0xff]
          %v5350 = vld [vmem:[#allocation9 + $0xea0] sm:$0xff]
          %v5351 = vld [vmem:[#allocation9 + $0xea8] sm:$0xff]
          %v5352 = vld [vmem:[#allocation9 + $0xeb0] sm:$0xff]
          %v5353 = vld [vmem:[#allocation9 + $0xeb8] sm:$0xff]
          %v5354 = vld [vmem:[#allocation9 + $0xec0] sm:$0xff]
          %v5355 = vld [vmem:[#allocation9 + $0xec8] sm:$0xff]
          %v5356 = vld [vmem:[#allocation9 + $0xed0] sm:$0xff]
          %v5357 = vld [vmem:[#allocation9 + $0xed8] sm:$0xff]
          %v5358 = vld [vmem:[#allocation9 + $0xee0] sm:$0xff]
          %v5359 = vld [vmem:[#allocation9 + $0xee8] sm:$0xff]
          %v5360 = vld [vmem:[#allocation9 + $0xef0] sm:$0xff]
          %v5361 = vld [vmem:[#allocation9 + $0xef8] sm:$0xff]
          %v5362 = vld [vmem:[#allocation9 + $0xf00] sm:$0xff]
          %v5363 = vld [vmem:[#allocation9 + $0xf08] sm:$0xff]
          %v5364 = vld [vmem:[#allocation9 + $0xf10] sm:$0xff]
          %v5365 = vld [vmem:[#allocation9 + $0xf18] sm:$0xff]
          %v5366 = vld [vmem:[#allocation9 + $0xf20] sm:$0xff]
          %v5367 = vld [vmem:[#allocation9 + $0xf28] sm:$0xff]
          %v5368 = vld [vmem:[#allocation9 + $0xf30] sm:$0xff]
          %v5369 = vld [vmem:[#allocation9 + $0xf38] sm:$0xff]
          %v5370 = vld [vmem:[#allocation9 + $0xf40] sm:$0xff]
          %v5371 = vld [vmem:[#allocation9 + $0xf48] sm:$0xff]
          %v5372 = vld [vmem:[#allocation9 + $0xf50] sm:$0xff]
          %v5373 = vld [vmem:[#allocation9 + $0xf58] sm:$0xff]
          %v5374 = vld [vmem:[#allocation9 + $0xf60] sm:$0xff]
          %v5375 = vld [vmem:[#allocation9 + $0xf68] sm:$0xff]
          %v5376 = vld [vmem:[#allocation9 + $0xf70] sm:$0xff]
          %v5377 = vld [vmem:[#allocation9 + $0xf78] sm:$0xff]
          %v5378 = vld [vmem:[#allocation9 + $0xf80] sm:$0xff]
          %v5379 = vld [vmem:[#allocation9 + $0xf88] sm:$0xff]
          %v5380 = vld [vmem:[#allocation9 + $0xf90] sm:$0xff]
          %v5381 = vld [vmem:[#allocation9 + $0xf98] sm:$0xff]
          %v5382 = vld [vmem:[#allocation9 + $0xfa0] sm:$0xff]
          %v5383 = vld [vmem:[#allocation9 + $0xfa8] sm:$0xff]
          %v5384 = vld [vmem:[#allocation9 + $0xfb0] sm:$0xff]
          %v5385 = vld [vmem:[#allocation9 + $0xfb8] sm:$0xff]
          %v5386 = vld [vmem:[#allocation9 + $0xfc0] sm:$0xff]
          %v5387 = vld [vmem:[#allocation9 + $0xfc8] sm:$0xff]
          %v5388 = vld [vmem:[#allocation9 + $0xfd0] sm:$0xff]
          %v5389 = vld [vmem:[#allocation9 + $0xfd8] sm:$0xff]
          %v5390 = vld [vmem:[#allocation9 + $0xfe0] sm:$0xff]
          %v5391 = vld [vmem:[#allocation9 + $0xfe8] sm:$0xff]
          %v5392 = vld [vmem:[#allocation9 + $0xff0] sm:$0xff]
          %v5393 = vld [vmem:[#allocation9 + $0xff8] sm:$0xff]
          %v5394 = vld [vmem:[#allocation11] sm:$0xff]
          %v5396 = vlaneseq
          %v5397 = vshrl.u32 %v5396, 7
          %v5398 = vsub.s32 0, %v5397
          %v5399 = vrot.slane %v5394, %v5398
          %v5400 = vlaneseq
          %v5401 = vshrl.u32 %v5400, 7
          %v5402 = vsub.s32 1, %v5401
          %v5403 = vrot.slane %v5394, %v5402
          %v5404 = vlaneseq
          %v5405 = vshrl.u32 %v5404, 7
          %v5406 = vsub.s32 2, %v5405
          %v5407 = vrot.slane %v5394, %v5406
          %v5408 = vlaneseq
          %v5409 = vshrl.u32 %v5408, 7
          %v5410 = vsub.s32 3, %v5409
          %v5411 = vrot.slane %v5394, %v5410
          %v5412 = vlaneseq
          %v5413 = vshrl.u32 %v5412, 7
          %v5414 = vsub.s32 4, %v5413
          %v5415 = vrot.slane %v5394, %v5414
          %v5416 = vlaneseq
          %v5417 = vshrl.u32 %v5416, 7
          %v5418 = vsub.s32 5, %v5417
          %v5419 = vrot.slane %v5394, %v5418
          %v5420 = vlaneseq
          %v5421 = vshrl.u32 %v5420, 7
          %v5422 = vsub.s32 6, %v5421
          %v5423 = vrot.slane %v5394, %v5422
          %v5424 = vlaneseq
          %v5425 = vshrl.u32 %v5424, 7
          %v5426 = vsub.s32 7, %v5425
          %v5427 = vrot.slane %v5394, %v5426
          %v5948 = vunpack.c.l.b16 %v4882
          %v5949 = vunpack.c.h.b16 %v4882
          %v5950 = vunpack.c.l.b16 %v4883
          %v5951 = vunpack.c.h.b16 %v4883
          %v5952 = vunpack.c.l.b16 %v4884
          %v5953 = vunpack.c.h.b16 %v4884
          %v5954 = vunpack.c.l.b16 %v4885
          %v5955 = vunpack.c.h.b16 %v4885
          %v5956 = vunpack.c.l.b16 %v4886
          %v5957 = vunpack.c.h.b16 %v4886
          %v5958 = vunpack.c.l.b16 %v4887
          %v5959 = vunpack.c.h.b16 %v4887
          %v5960 = vunpack.c.l.b16 %v4888
          %v5961 = vunpack.c.h.b16 %v4888
          %v5962 = vunpack.c.l.b16 %v4889
          %v5963 = vunpack.c.h.b16 %v4889
          %v5964 = vunpack.c.l.b16 %v4890
          %v5965 = vunpack.c.h.b16 %v4890
          %v5966 = vunpack.c.l.b16 %v4891
          %v5967 = vunpack.c.h.b16 %v4891
          %v5968 = vunpack.c.l.b16 %v4892
          %v5969 = vunpack.c.h.b16 %v4892
          %v5970 = vunpack.c.l.b16 %v4893
          %v5971 = vunpack.c.h.b16 %v4893
          %v5972 = vunpack.c.l.b16 %v4894
          %v5973 = vunpack.c.h.b16 %v4894
          %v5974 = vunpack.c.l.b16 %v4895
          %v5975 = vunpack.c.h.b16 %v4895
          %v5976 = vunpack.c.l.b16 %v4896
          %v5977 = vunpack.c.h.b16 %v4896
          %v5978 = vunpack.c.l.b16 %v4897
          %v5979 = vunpack.c.h.b16 %v4897
          %v5980 = vunpack.c.l.b16 %v4898
          %v5981 = vunpack.c.h.b16 %v4898
          %v5982 = vunpack.c.l.b16 %v4899
          %v5983 = vunpack.c.h.b16 %v4899
          %v5984 = vunpack.c.l.b16 %v4900
          %v5985 = vunpack.c.h.b16 %v4900
          %v5986 = vunpack.c.l.b16 %v4901
          %v5987 = vunpack.c.h.b16 %v4901
          %v5988 = vunpack.c.l.b16 %v4902
          %v5989 = vunpack.c.h.b16 %v4902
          %v5990 = vunpack.c.l.b16 %v4903
          %v5991 = vunpack.c.h.b16 %v4903
          %v5992 = vunpack.c.l.b16 %v4904
          %v5993 = vunpack.c.h.b16 %v4904
          %v5994 = vunpack.c.l.b16 %v4905
          %v5995 = vunpack.c.h.b16 %v4905
          %v5996 = vunpack.c.l.b16 %v4906
          %v5997 = vunpack.c.h.b16 %v4906
          %v5998 = vunpack.c.l.b16 %v4907
          %v5999 = vunpack.c.h.b16 %v4907
          %v6000 = vunpack.c.l.b16 %v4908
          %v6001 = vunpack.c.h.b16 %v4908
          %v6002 = vunpack.c.l.b16 %v4909
          %v6003 = vunpack.c.h.b16 %v4909
          %v6004 = vunpack.c.l.b16 %v4910
          %v6005 = vunpack.c.h.b16 %v4910
          %v6006 = vunpack.c.l.b16 %v4911
          %v6007 = vunpack.c.h.b16 %v4911
          %v6008 = vunpack.c.l.b16 %v4912
          %v6009 = vunpack.c.h.b16 %v4912
          %v6010 = vunpack.c.l.b16 %v4913
          %v6011 = vunpack.c.h.b16 %v4913
          %v6012 = vunpack.c.l.b16 %v4914
          %v6013 = vunpack.c.h.b16 %v4914
          %v6014 = vunpack.c.l.b16 %v4915
          %v6015 = vunpack.c.h.b16 %v4915
          %v6016 = vunpack.c.l.b16 %v4916
          %v6017 = vunpack.c.h.b16 %v4916
          %v6018 = vunpack.c.l.b16 %v4917
          %v6019 = vunpack.c.h.b16 %v4917
          %v6020 = vunpack.c.l.b16 %v4918
          %v6021 = vunpack.c.h.b16 %v4918
          %v6022 = vunpack.c.l.b16 %v4919
          %v6023 = vunpack.c.h.b16 %v4919
          %v6024 = vunpack.c.l.b16 %v4920
          %v6025 = vunpack.c.h.b16 %v4920
          %v6026 = vunpack.c.l.b16 %v4921
          %v6027 = vunpack.c.h.b16 %v4921
          %v6028 = vunpack.c.l.b16 %v4922
          %v6029 = vunpack.c.h.b16 %v4922
          %v6030 = vunpack.c.l.b16 %v4923
          %v6031 = vunpack.c.h.b16 %v4923
          %v6032 = vunpack.c.l.b16 %v4924
          %v6033 = vunpack.c.h.b16 %v4924
          %v6034 = vunpack.c.l.b16 %v4925
          %v6035 = vunpack.c.h.b16 %v4925
          %v6036 = vunpack.c.l.b16 %v4926
          %v6037 = vunpack.c.h.b16 %v4926
          %v6038 = vunpack.c.l.b16 %v4927
          %v6039 = vunpack.c.h.b16 %v4927
          %v6040 = vunpack.c.l.b16 %v4928
          %v6041 = vunpack.c.h.b16 %v4928
          %v6042 = vunpack.c.l.b16 %v4929
          %v6043 = vunpack.c.h.b16 %v4929
          %v6044 = vunpack.c.l.b16 %v4930
          %v6045 = vunpack.c.h.b16 %v4930
          %v6046 = vunpack.c.l.b16 %v4931
          %v6047 = vunpack.c.h.b16 %v4931
          %v6048 = vunpack.c.l.b16 %v4932
          %v6049 = vunpack.c.h.b16 %v4932
          %v6050 = vunpack.c.l.b16 %v4933
          %v6051 = vunpack.c.h.b16 %v4933
          %v6052 = vunpack.c.l.b16 %v4934
          %v6053 = vunpack.c.h.b16 %v4934
          %v6054 = vunpack.c.l.b16 %v4935
          %v6055 = vunpack.c.h.b16 %v4935
          %v6056 = vunpack.c.l.b16 %v4936
          %v6057 = vunpack.c.h.b16 %v4936
          %v6058 = vunpack.c.l.b16 %v4937
          %v6059 = vunpack.c.h.b16 %v4937
          %v6060 = vunpack.c.l.b16 %v4938
          %v6061 = vunpack.c.h.b16 %v4938
          %v6062 = vunpack.c.l.b16 %v4939
          %v6063 = vunpack.c.h.b16 %v4939
          %v6064 = vunpack.c.l.b16 %v4940
          %v6065 = vunpack.c.h.b16 %v4940
          %v6066 = vunpack.c.l.b16 %v4941
          %v6067 = vunpack.c.h.b16 %v4941
          %v6068 = vunpack.c.l.b16 %v4942
          %v6069 = vunpack.c.h.b16 %v4942
          %v6070 = vunpack.c.l.b16 %v4943
          %v6071 = vunpack.c.h.b16 %v4943
          %v6072 = vunpack.c.l.b16 %v4944
          %v6073 = vunpack.c.h.b16 %v4944
          %v6074 = vunpack.c.l.b16 %v4945
          %v6075 = vunpack.c.h.b16 %v4945
          %v6076 = vunpack.c.l.b16 %v4946
          %v6077 = vunpack.c.h.b16 %v4946
          %v6078 = vunpack.c.l.b16 %v4947
          %v6079 = vunpack.c.h.b16 %v4947
          %v6080 = vunpack.c.l.b16 %v4948
          %v6081 = vunpack.c.h.b16 %v4948
          %v6082 = vunpack.c.l.b16 %v4949
          %v6083 = vunpack.c.h.b16 %v4949
          %v6084 = vunpack.c.l.b16 %v4950
          %v6085 = vunpack.c.h.b16 %v4950
          %v6086 = vunpack.c.l.b16 %v4951
          %v6087 = vunpack.c.h.b16 %v4951
          %v6088 = vunpack.c.l.b16 %v4952
          %v6089 = vunpack.c.h.b16 %v4952
          %v6090 = vunpack.c.l.b16 %v4953
          %v6091 = vunpack.c.h.b16 %v4953
          %v6092 = vunpack.c.l.b16 %v4954
          %v6093 = vunpack.c.h.b16 %v4954
          %v6094 = vunpack.c.l.b16 %v4955
          %v6095 = vunpack.c.h.b16 %v4955
          %v6096 = vunpack.c.l.b16 %v4956
          %v6097 = vunpack.c.h.b16 %v4956
          %v6098 = vunpack.c.l.b16 %v4957
          %v6099 = vunpack.c.h.b16 %v4957
          %v6100 = vunpack.c.l.b16 %v4958
          %v6101 = vunpack.c.h.b16 %v4958
          %v6102 = vunpack.c.l.b16 %v4959
          %v6103 = vunpack.c.h.b16 %v4959
          %v6104 = vunpack.c.l.b16 %v4960
          %v6105 = vunpack.c.h.b16 %v4960
          %v6106 = vunpack.c.l.b16 %v4961
          %v6107 = vunpack.c.h.b16 %v4961
          %v6108 = vunpack.c.l.b16 %v4962
          %v6109 = vunpack.c.h.b16 %v4962
          %v6110 = vunpack.c.l.b16 %v4963
          %v6111 = vunpack.c.h.b16 %v4963
          %v6112 = vunpack.c.l.b16 %v4964
          %v6113 = vunpack.c.h.b16 %v4964
          %v6114 = vunpack.c.l.b16 %v4965
          %v6115 = vunpack.c.h.b16 %v4965
          %v6116 = vunpack.c.l.b16 %v4966
          %v6117 = vunpack.c.h.b16 %v4966
          %v6118 = vunpack.c.l.b16 %v4967
          %v6119 = vunpack.c.h.b16 %v4967
          %v6120 = vunpack.c.l.b16 %v4968
          %v6121 = vunpack.c.h.b16 %v4968
          %v6122 = vunpack.c.l.b16 %v4969
          %v6123 = vunpack.c.h.b16 %v4969
          %v6124 = vunpack.c.l.b16 %v4970
          %v6125 = vunpack.c.h.b16 %v4970
          %v6126 = vunpack.c.l.b16 %v4971
          %v6127 = vunpack.c.h.b16 %v4971
          %v6128 = vunpack.c.l.b16 %v4972
          %v6129 = vunpack.c.h.b16 %v4972
          %v6130 = vunpack.c.l.b16 %v4973
          %v6131 = vunpack.c.h.b16 %v4973
          %v6132 = vunpack.c.l.b16 %v4974
          %v6133 = vunpack.c.h.b16 %v4974
          %v6134 = vunpack.c.l.b16 %v4975
          %v6135 = vunpack.c.h.b16 %v4975
          %v6136 = vunpack.c.l.b16 %v4976
          %v6137 = vunpack.c.h.b16 %v4976
          %v6138 = vunpack.c.l.b16 %v4977
          %v6139 = vunpack.c.h.b16 %v4977
          %v6140 = vunpack.c.l.b16 %v4978
          %v6141 = vunpack.c.h.b16 %v4978
          %v6142 = vunpack.c.l.b16 %v4979
          %v6143 = vunpack.c.h.b16 %v4979
          %v6144 = vunpack.c.l.b16 %v4980
          %v6145 = vunpack.c.h.b16 %v4980
          %v6146 = vunpack.c.l.b16 %v4981
          %v6147 = vunpack.c.h.b16 %v4981
          %v6148 = vunpack.c.l.b16 %v4982
          %v6149 = vunpack.c.h.b16 %v4982
          %v6150 = vunpack.c.l.b16 %v4983
          %v6151 = vunpack.c.h.b16 %v4983
          %v6152 = vunpack.c.l.b16 %v4984
          %v6153 = vunpack.c.h.b16 %v4984
          %v6154 = vunpack.c.l.b16 %v4985
          %v6155 = vunpack.c.h.b16 %v4985
          %v6156 = vunpack.c.l.b16 %v4986
          %v6157 = vunpack.c.h.b16 %v4986
          %v6158 = vunpack.c.l.b16 %v4987
          %v6159 = vunpack.c.h.b16 %v4987
          %v6160 = vunpack.c.l.b16 %v4988
          %v6161 = vunpack.c.h.b16 %v4988
          %v6162 = vunpack.c.l.b16 %v4989
          %v6163 = vunpack.c.h.b16 %v4989
          %v6164 = vunpack.c.l.b16 %v4990
          %v6165 = vunpack.c.h.b16 %v4990
          %v6166 = vunpack.c.l.b16 %v4991
          %v6167 = vunpack.c.h.b16 %v4991
          %v6168 = vunpack.c.l.b16 %v4992
          %v6169 = vunpack.c.h.b16 %v4992
          %v6170 = vunpack.c.l.b16 %v4993
          %v6171 = vunpack.c.h.b16 %v4993
          %v6172 = vunpack.c.l.b16 %v4994
          %v6173 = vunpack.c.h.b16 %v4994
          %v6174 = vunpack.c.l.b16 %v4995
          %v6175 = vunpack.c.h.b16 %v4995
          %v6176 = vunpack.c.l.b16 %v4996
          %v6177 = vunpack.c.h.b16 %v4996
          %v6178 = vunpack.c.l.b16 %v4997
          %v6179 = vunpack.c.h.b16 %v4997
          %v6180 = vunpack.c.l.b16 %v4998
          %v6181 = vunpack.c.h.b16 %v4998
          %v6182 = vunpack.c.l.b16 %v4999
          %v6183 = vunpack.c.h.b16 %v4999
          %v6184 = vunpack.c.l.b16 %v5000
          %v6185 = vunpack.c.h.b16 %v5000
          %v6186 = vunpack.c.l.b16 %v5001
          %v6187 = vunpack.c.h.b16 %v5001
          %v6188 = vunpack.c.l.b16 %v5002
          %v6189 = vunpack.c.h.b16 %v5002
          %v6190 = vunpack.c.l.b16 %v5003
          %v6191 = vunpack.c.h.b16 %v5003
          %v6192 = vunpack.c.l.b16 %v5004
          %v6193 = vunpack.c.h.b16 %v5004
          %v6194 = vunpack.c.l.b16 %v5005
          %v6195 = vunpack.c.h.b16 %v5005
          %v6196 = vunpack.c.l.b16 %v5006
          %v6197 = vunpack.c.h.b16 %v5006
          %v6198 = vunpack.c.l.b16 %v5007
          %v6199 = vunpack.c.h.b16 %v5007
          %v6200 = vunpack.c.l.b16 %v5008
          %v6201 = vunpack.c.h.b16 %v5008
          %v6202 = vunpack.c.l.b16 %v5009
          %v6203 = vunpack.c.h.b16 %v5009
          %v6204 = vunpack.c.l.b16 %v5010
          %v6205 = vunpack.c.h.b16 %v5010
          %v6206 = vunpack.c.l.b16 %v5011
          %v6207 = vunpack.c.h.b16 %v5011
          %v6208 = vunpack.c.l.b16 %v5012
          %v6209 = vunpack.c.h.b16 %v5012
          %v6210 = vunpack.c.l.b16 %v5013
          %v6211 = vunpack.c.h.b16 %v5013
          %v6212 = vunpack.c.l.b16 %v5014
          %v6213 = vunpack.c.h.b16 %v5014
          %v6214 = vunpack.c.l.b16 %v5015
          %v6215 = vunpack.c.h.b16 %v5015
          %v6216 = vunpack.c.l.b16 %v5016
          %v6217 = vunpack.c.h.b16 %v5016
          %v6218 = vunpack.c.l.b16 %v5017
          %v6219 = vunpack.c.h.b16 %v5017
          %v6220 = vunpack.c.l.b16 %v5018
          %v6221 = vunpack.c.h.b16 %v5018
          %v6222 = vunpack.c.l.b16 %v5019
          %v6223 = vunpack.c.h.b16 %v5019
          %v6224 = vunpack.c.l.b16 %v5020
          %v6225 = vunpack.c.h.b16 %v5020
          %v6226 = vunpack.c.l.b16 %v5021
          %v6227 = vunpack.c.h.b16 %v5021
          %v6228 = vunpack.c.l.b16 %v5022
          %v6229 = vunpack.c.h.b16 %v5022
          %v6230 = vunpack.c.l.b16 %v5023
          %v6231 = vunpack.c.h.b16 %v5023
          %v6232 = vunpack.c.l.b16 %v5024
          %v6233 = vunpack.c.h.b16 %v5024
          %v6234 = vunpack.c.l.b16 %v5025
          %v6235 = vunpack.c.h.b16 %v5025
          %v6236 = vunpack.c.l.b16 %v5026
          %v6237 = vunpack.c.h.b16 %v5026
          %v6238 = vunpack.c.l.b16 %v5027
          %v6239 = vunpack.c.h.b16 %v5027
          %v6240 = vunpack.c.l.b16 %v5028
          %v6241 = vunpack.c.h.b16 %v5028
          %v6242 = vunpack.c.l.b16 %v5029
          %v6243 = vunpack.c.h.b16 %v5029
          %v6244 = vunpack.c.l.b16 %v5030
          %v6245 = vunpack.c.h.b16 %v5030
          %v6246 = vunpack.c.l.b16 %v5031
          %v6247 = vunpack.c.h.b16 %v5031
          %v6248 = vunpack.c.l.b16 %v5032
          %v6249 = vunpack.c.h.b16 %v5032
          %v6250 = vunpack.c.l.b16 %v5033
          %v6251 = vunpack.c.h.b16 %v5033
          %v6252 = vunpack.c.l.b16 %v5034
          %v6253 = vunpack.c.h.b16 %v5034
          %v6254 = vunpack.c.l.b16 %v5035
          %v6255 = vunpack.c.h.b16 %v5035
          %v6256 = vunpack.c.l.b16 %v5036
          %v6257 = vunpack.c.h.b16 %v5036
          %v6258 = vunpack.c.l.b16 %v5037
          %v6259 = vunpack.c.h.b16 %v5037
          %v6260 = vunpack.c.l.b16 %v5038
          %v6261 = vunpack.c.h.b16 %v5038
          %v6262 = vunpack.c.l.b16 %v5039
          %v6263 = vunpack.c.h.b16 %v5039
          %v6264 = vunpack.c.l.b16 %v5040
          %v6265 = vunpack.c.h.b16 %v5040
          %v6266 = vunpack.c.l.b16 %v5041
          %v6267 = vunpack.c.h.b16 %v5041
          %v6268 = vunpack.c.l.b16 %v5042
          %v6269 = vunpack.c.h.b16 %v5042
          %v6270 = vunpack.c.l.b16 %v5043
          %v6271 = vunpack.c.h.b16 %v5043
          %v6272 = vunpack.c.l.b16 %v5044
          %v6273 = vunpack.c.h.b16 %v5044
          %v6274 = vunpack.c.l.b16 %v5045
          %v6275 = vunpack.c.h.b16 %v5045
          %v6276 = vunpack.c.l.b16 %v5046
          %v6277 = vunpack.c.h.b16 %v5046
          %v6278 = vunpack.c.l.b16 %v5047
          %v6279 = vunpack.c.h.b16 %v5047
          %v6280 = vunpack.c.l.b16 %v5048
          %v6281 = vunpack.c.h.b16 %v5048
          %v6282 = vunpack.c.l.b16 %v5049
          %v6283 = vunpack.c.h.b16 %v5049
          %v6284 = vunpack.c.l.b16 %v5050
          %v6285 = vunpack.c.h.b16 %v5050
          %v6286 = vunpack.c.l.b16 %v5051
          %v6287 = vunpack.c.h.b16 %v5051
          %v6288 = vunpack.c.l.b16 %v5052
          %v6289 = vunpack.c.h.b16 %v5052
          %v6290 = vunpack.c.l.b16 %v5053
          %v6291 = vunpack.c.h.b16 %v5053
          %v6292 = vunpack.c.l.b16 %v5054
          %v6293 = vunpack.c.h.b16 %v5054
          %v6294 = vunpack.c.l.b16 %v5055
          %v6295 = vunpack.c.h.b16 %v5055
          %v6296 = vunpack.c.l.b16 %v5056
          %v6297 = vunpack.c.h.b16 %v5056
          %v6298 = vunpack.c.l.b16 %v5057
          %v6299 = vunpack.c.h.b16 %v5057
          %v6300 = vunpack.c.l.b16 %v5058
          %v6301 = vunpack.c.h.b16 %v5058
          %v6302 = vunpack.c.l.b16 %v5059
          %v6303 = vunpack.c.h.b16 %v5059
          %v6304 = vunpack.c.l.b16 %v5060
          %v6305 = vunpack.c.h.b16 %v5060
          %v6306 = vunpack.c.l.b16 %v5061
          %v6307 = vunpack.c.h.b16 %v5061
          %v6308 = vunpack.c.l.b16 %v5062
          %v6309 = vunpack.c.h.b16 %v5062
          %v6310 = vunpack.c.l.b16 %v5063
          %v6311 = vunpack.c.h.b16 %v5063
          %v6312 = vunpack.c.l.b16 %v5064
          %v6313 = vunpack.c.h.b16 %v5064
          %v6314 = vunpack.c.l.b16 %v5065
          %v6315 = vunpack.c.h.b16 %v5065
          %v6316 = vunpack.c.l.b16 %v5066
          %v6317 = vunpack.c.h.b16 %v5066
          %v6318 = vunpack.c.l.b16 %v5067
          %v6319 = vunpack.c.h.b16 %v5067
          %v6320 = vunpack.c.l.b16 %v5068
          %v6321 = vunpack.c.h.b16 %v5068
          %v6322 = vunpack.c.l.b16 %v5069
          %v6323 = vunpack.c.h.b16 %v5069
          %v6324 = vunpack.c.l.b16 %v5070
          %v6325 = vunpack.c.h.b16 %v5070
          %v6326 = vunpack.c.l.b16 %v5071
          %v6327 = vunpack.c.h.b16 %v5071
          %v6328 = vunpack.c.l.b16 %v5072
          %v6329 = vunpack.c.h.b16 %v5072
          %v6330 = vunpack.c.l.b16 %v5073
          %v6331 = vunpack.c.h.b16 %v5073
          %v6332 = vunpack.c.l.b16 %v5074
          %v6333 = vunpack.c.h.b16 %v5074
          %v6334 = vunpack.c.l.b16 %v5075
          %v6335 = vunpack.c.h.b16 %v5075
          %v6336 = vunpack.c.l.b16 %v5076
          %v6337 = vunpack.c.h.b16 %v5076
          %v6338 = vunpack.c.l.b16 %v5077
          %v6339 = vunpack.c.h.b16 %v5077
          %v6340 = vunpack.c.l.b16 %v5078
          %v6341 = vunpack.c.h.b16 %v5078
          %v6342 = vunpack.c.l.b16 %v5079
          %v6343 = vunpack.c.h.b16 %v5079
          %v6344 = vunpack.c.l.b16 %v5080
          %v6345 = vunpack.c.h.b16 %v5080
          %v6346 = vunpack.c.l.b16 %v5081
          %v6347 = vunpack.c.h.b16 %v5081
          %v6348 = vunpack.c.l.b16 %v5082
          %v6349 = vunpack.c.h.b16 %v5082
          %v6350 = vunpack.c.l.b16 %v5083
          %v6351 = vunpack.c.h.b16 %v5083
          %v6352 = vunpack.c.l.b16 %v5084
          %v6353 = vunpack.c.h.b16 %v5084
          %v6354 = vunpack.c.l.b16 %v5085
          %v6355 = vunpack.c.h.b16 %v5085
          %v6356 = vunpack.c.l.b16 %v5086
          %v6357 = vunpack.c.h.b16 %v5086
          %v6358 = vunpack.c.l.b16 %v5087
          %v6359 = vunpack.c.h.b16 %v5087
          %v6360 = vunpack.c.l.b16 %v5088
          %v6361 = vunpack.c.h.b16 %v5088
          %v6362 = vunpack.c.l.b16 %v5089
          %v6363 = vunpack.c.h.b16 %v5089
          %v6364 = vunpack.c.l.b16 %v5090
          %v6365 = vunpack.c.h.b16 %v5090
          %v6366 = vunpack.c.l.b16 %v5091
          %v6367 = vunpack.c.h.b16 %v5091
          %v6368 = vunpack.c.l.b16 %v5092
          %v6369 = vunpack.c.h.b16 %v5092
          %v6370 = vunpack.c.l.b16 %v5093
          %v6371 = vunpack.c.h.b16 %v5093
          %v6372 = vunpack.c.l.b16 %v5094
          %v6373 = vunpack.c.h.b16 %v5094
          %v6374 = vunpack.c.l.b16 %v5095
          %v6375 = vunpack.c.h.b16 %v5095
          %v6376 = vunpack.c.l.b16 %v5096
          %v6377 = vunpack.c.h.b16 %v5096
          %v6378 = vunpack.c.l.b16 %v5097
          %v6379 = vunpack.c.h.b16 %v5097
          %v6380 = vunpack.c.l.b16 %v5098
          %v6381 = vunpack.c.h.b16 %v5098
          %v6382 = vunpack.c.l.b16 %v5099
          %v6383 = vunpack.c.h.b16 %v5099
          %v6384 = vunpack.c.l.b16 %v5100
          %v6385 = vunpack.c.h.b16 %v5100
          %v6386 = vunpack.c.l.b16 %v5101
          %v6387 = vunpack.c.h.b16 %v5101
          %v6388 = vunpack.c.l.b16 %v5102
          %v6389 = vunpack.c.h.b16 %v5102
          %v6390 = vunpack.c.l.b16 %v5103
          %v6391 = vunpack.c.h.b16 %v5103
          %v6392 = vunpack.c.l.b16 %v5104
          %v6393 = vunpack.c.h.b16 %v5104
          %v6394 = vunpack.c.l.b16 %v5105
          %v6395 = vunpack.c.h.b16 %v5105
          %v6396 = vunpack.c.l.b16 %v5106
          %v6397 = vunpack.c.h.b16 %v5106
          %v6398 = vunpack.c.l.b16 %v5107
          %v6399 = vunpack.c.h.b16 %v5107
          %v6400 = vunpack.c.l.b16 %v5108
          %v6401 = vunpack.c.h.b16 %v5108
          %v6402 = vunpack.c.l.b16 %v5109
          %v6403 = vunpack.c.h.b16 %v5109
          %v6404 = vunpack.c.l.b16 %v5110
          %v6405 = vunpack.c.h.b16 %v5110
          %v6406 = vunpack.c.l.b16 %v5111
          %v6407 = vunpack.c.h.b16 %v5111
          %v6408 = vunpack.c.l.b16 %v5112
          %v6409 = vunpack.c.h.b16 %v5112
          %v6410 = vunpack.c.l.b16 %v5113
          %v6411 = vunpack.c.h.b16 %v5113
          %v6412 = vunpack.c.l.b16 %v5114
          %v6413 = vunpack.c.h.b16 %v5114
          %v6414 = vunpack.c.l.b16 %v5115
          %v6415 = vunpack.c.h.b16 %v5115
          %v6416 = vunpack.c.l.b16 %v5116
          %v6417 = vunpack.c.h.b16 %v5116
          %v6418 = vunpack.c.l.b16 %v5117
          %v6419 = vunpack.c.h.b16 %v5117
          %v6420 = vunpack.c.l.b16 %v5118
          %v6421 = vunpack.c.h.b16 %v5118
          %v6422 = vunpack.c.l.b16 %v5119
          %v6423 = vunpack.c.h.b16 %v5119
          %v6424 = vunpack.c.l.b16 %v5120
          %v6425 = vunpack.c.h.b16 %v5120
          %v6426 = vunpack.c.l.b16 %v5121
          %v6427 = vunpack.c.h.b16 %v5121
          %v6428 = vunpack.c.l.b16 %v5122
          %v6429 = vunpack.c.h.b16 %v5122
          %v6430 = vunpack.c.l.b16 %v5123
          %v6431 = vunpack.c.h.b16 %v5123
          %v6432 = vunpack.c.l.b16 %v5124
          %v6433 = vunpack.c.h.b16 %v5124
          %v6434 = vunpack.c.l.b16 %v5125
          %v6435 = vunpack.c.h.b16 %v5125
          %v6436 = vunpack.c.l.b16 %v5126
          %v6437 = vunpack.c.h.b16 %v5126
          %v6438 = vunpack.c.l.b16 %v5127
          %v6439 = vunpack.c.h.b16 %v5127
          %v6440 = vunpack.c.l.b16 %v5128
          %v6441 = vunpack.c.h.b16 %v5128
          %v6442 = vunpack.c.l.b16 %v5129
          %v6443 = vunpack.c.h.b16 %v5129
          %v6444 = vunpack.c.l.b16 %v5130
          %v6445 = vunpack.c.h.b16 %v5130
          %v6446 = vunpack.c.l.b16 %v5131
          %v6447 = vunpack.c.h.b16 %v5131
          %v6448 = vunpack.c.l.b16 %v5132
          %v6449 = vunpack.c.h.b16 %v5132
          %v6450 = vunpack.c.l.b16 %v5133
          %v6451 = vunpack.c.h.b16 %v5133
          %v6452 = vunpack.c.l.b16 %v5134
          %v6453 = vunpack.c.h.b16 %v5134
          %v6454 = vunpack.c.l.b16 %v5135
          %v6455 = vunpack.c.h.b16 %v5135
          %v6456 = vunpack.c.l.b16 %v5136
          %v6457 = vunpack.c.h.b16 %v5136
          %v6458 = vunpack.c.l.b16 %v5137
          %v6459 = vunpack.c.h.b16 %v5137
          %v6460 = vunpack.c.l.b16 %v5138
          %v6461 = vunpack.c.h.b16 %v5138
          %v6462 = vunpack.c.l.b16 %v5139
          %v6463 = vunpack.c.h.b16 %v5139
          %v6464 = vunpack.c.l.b16 %v5140
          %v6465 = vunpack.c.h.b16 %v5140
          %v6466 = vunpack.c.l.b16 %v5141
          %v6467 = vunpack.c.h.b16 %v5141
          %v6468 = vunpack.c.l.b16 %v5142
          %v6469 = vunpack.c.h.b16 %v5142
          %v6470 = vunpack.c.l.b16 %v5143
          %v6471 = vunpack.c.h.b16 %v5143
          %v6472 = vunpack.c.l.b16 %v5144
          %v6473 = vunpack.c.h.b16 %v5144
          %v6474 = vunpack.c.l.b16 %v5145
          %v6475 = vunpack.c.h.b16 %v5145
          %v6476 = vunpack.c.l.b16 %v5146
          %v6477 = vunpack.c.h.b16 %v5146
          %v6478 = vunpack.c.l.b16 %v5147
          %v6479 = vunpack.c.h.b16 %v5147
          %v6480 = vunpack.c.l.b16 %v5148
          %v6481 = vunpack.c.h.b16 %v5148
          %v6482 = vunpack.c.l.b16 %v5149
          %v6483 = vunpack.c.h.b16 %v5149
          %v6484 = vunpack.c.l.b16 %v5150
          %v6485 = vunpack.c.h.b16 %v5150
          %v6486 = vunpack.c.l.b16 %v5151
          %v6487 = vunpack.c.h.b16 %v5151
          %v6488 = vunpack.c.l.b16 %v5152
          %v6489 = vunpack.c.h.b16 %v5152
          %v6490 = vunpack.c.l.b16 %v5153
          %v6491 = vunpack.c.h.b16 %v5153
          %v6492 = vunpack.c.l.b16 %v5154
          %v6493 = vunpack.c.h.b16 %v5154
          %v6494 = vunpack.c.l.b16 %v5155
          %v6495 = vunpack.c.h.b16 %v5155
          %v6496 = vunpack.c.l.b16 %v5156
          %v6497 = vunpack.c.h.b16 %v5156
          %v6498 = vunpack.c.l.b16 %v5157
          %v6499 = vunpack.c.h.b16 %v5157
          %v6500 = vunpack.c.l.b16 %v5158
          %v6501 = vunpack.c.h.b16 %v5158
          %v6502 = vunpack.c.l.b16 %v5159
          %v6503 = vunpack.c.h.b16 %v5159
          %v6504 = vunpack.c.l.b16 %v5160
          %v6505 = vunpack.c.h.b16 %v5160
          %v6506 = vunpack.c.l.b16 %v5161
          %v6507 = vunpack.c.h.b16 %v5161
          %v6508 = vunpack.c.l.b16 %v5162
          %v6509 = vunpack.c.h.b16 %v5162
          %v6510 = vunpack.c.l.b16 %v5163
          %v6511 = vunpack.c.h.b16 %v5163
          %v6512 = vunpack.c.l.b16 %v5164
          %v6513 = vunpack.c.h.b16 %v5164
          %v6514 = vunpack.c.l.b16 %v5165
          %v6515 = vunpack.c.h.b16 %v5165
          %v6516 = vunpack.c.l.b16 %v5166
          %v6517 = vunpack.c.h.b16 %v5166
          %v6518 = vunpack.c.l.b16 %v5167
          %v6519 = vunpack.c.h.b16 %v5167
          %v6520 = vunpack.c.l.b16 %v5168
          %v6521 = vunpack.c.h.b16 %v5168
          %v6522 = vunpack.c.l.b16 %v5169
          %v6523 = vunpack.c.h.b16 %v5169
          %v6524 = vunpack.c.l.b16 %v5170
          %v6525 = vunpack.c.h.b16 %v5170
          %v6526 = vunpack.c.l.b16 %v5171
          %v6527 = vunpack.c.h.b16 %v5171
          %v6528 = vunpack.c.l.b16 %v5172
          %v6529 = vunpack.c.h.b16 %v5172
          %v6530 = vunpack.c.l.b16 %v5173
          %v6531 = vunpack.c.h.b16 %v5173
          %v6532 = vunpack.c.l.b16 %v5174
          %v6533 = vunpack.c.h.b16 %v5174
          %v6534 = vunpack.c.l.b16 %v5175
          %v6535 = vunpack.c.h.b16 %v5175
          %v6536 = vunpack.c.l.b16 %v5176
          %v6537 = vunpack.c.h.b16 %v5176
          %v6538 = vunpack.c.l.b16 %v5177
          %v6539 = vunpack.c.h.b16 %v5177
          %v6540 = vunpack.c.l.b16 %v5178
          %v6541 = vunpack.c.h.b16 %v5178
          %v6542 = vunpack.c.l.b16 %v5179
          %v6543 = vunpack.c.h.b16 %v5179
          %v6544 = vunpack.c.l.b16 %v5180
          %v6545 = vunpack.c.h.b16 %v5180
          %v6546 = vunpack.c.l.b16 %v5181
          %v6547 = vunpack.c.h.b16 %v5181
          %v6548 = vunpack.c.l.b16 %v5182
          %v6549 = vunpack.c.h.b16 %v5182
          %v6550 = vunpack.c.l.b16 %v5183
          %v6551 = vunpack.c.h.b16 %v5183
          %v6552 = vunpack.c.l.b16 %v5184
          %v6553 = vunpack.c.h.b16 %v5184
          %v6554 = vunpack.c.l.b16 %v5185
          %v6555 = vunpack.c.h.b16 %v5185
          %v6556 = vunpack.c.l.b16 %v5186
          %v6557 = vunpack.c.h.b16 %v5186
          %v6558 = vunpack.c.l.b16 %v5187
          %v6559 = vunpack.c.h.b16 %v5187
          %v6560 = vunpack.c.l.b16 %v5188
          %v6561 = vunpack.c.h.b16 %v5188
          %v6562 = vunpack.c.l.b16 %v5189
          %v6563 = vunpack.c.h.b16 %v5189
          %v6564 = vunpack.c.l.b16 %v5190
          %v6565 = vunpack.c.h.b16 %v5190
          %v6566 = vunpack.c.l.b16 %v5191
          %v6567 = vunpack.c.h.b16 %v5191
          %v6568 = vunpack.c.l.b16 %v5192
          %v6569 = vunpack.c.h.b16 %v5192
          %v6570 = vunpack.c.l.b16 %v5193
          %v6571 = vunpack.c.h.b16 %v5193
          %v6572 = vunpack.c.l.b16 %v5194
          %v6573 = vunpack.c.h.b16 %v5194
          %v6574 = vunpack.c.l.b16 %v5195
          %v6575 = vunpack.c.h.b16 %v5195
          %v6576 = vunpack.c.l.b16 %v5196
          %v6577 = vunpack.c.h.b16 %v5196
          %v6578 = vunpack.c.l.b16 %v5197
          %v6579 = vunpack.c.h.b16 %v5197
          %v6580 = vunpack.c.l.b16 %v5198
          %v6581 = vunpack.c.h.b16 %v5198
          %v6582 = vunpack.c.l.b16 %v5199
          %v6583 = vunpack.c.h.b16 %v5199
          %v6584 = vunpack.c.l.b16 %v5200
          %v6585 = vunpack.c.h.b16 %v5200
          %v6586 = vunpack.c.l.b16 %v5201
          %v6587 = vunpack.c.h.b16 %v5201
          %v6588 = vunpack.c.l.b16 %v5202
          %v6589 = vunpack.c.h.b16 %v5202
          %v6590 = vunpack.c.l.b16 %v5203
          %v6591 = vunpack.c.h.b16 %v5203
          %v6592 = vunpack.c.l.b16 %v5204
          %v6593 = vunpack.c.h.b16 %v5204
          %v6594 = vunpack.c.l.b16 %v5205
          %v6595 = vunpack.c.h.b16 %v5205
          %v6596 = vunpack.c.l.b16 %v5206
          %v6597 = vunpack.c.h.b16 %v5206
          %v6598 = vunpack.c.l.b16 %v5207
          %v6599 = vunpack.c.h.b16 %v5207
          %v6600 = vunpack.c.l.b16 %v5208
          %v6601 = vunpack.c.h.b16 %v5208
          %v6602 = vunpack.c.l.b16 %v5209
          %v6603 = vunpack.c.h.b16 %v5209
          %v6604 = vunpack.c.l.b16 %v5210
          %v6605 = vunpack.c.h.b16 %v5210
          %v6606 = vunpack.c.l.b16 %v5211
          %v6607 = vunpack.c.h.b16 %v5211
          %v6608 = vunpack.c.l.b16 %v5212
          %v6609 = vunpack.c.h.b16 %v5212
          %v6610 = vunpack.c.l.b16 %v5213
          %v6611 = vunpack.c.h.b16 %v5213
          %v6612 = vunpack.c.l.b16 %v5214
          %v6613 = vunpack.c.h.b16 %v5214
          %v6614 = vunpack.c.l.b16 %v5215
          %v6615 = vunpack.c.h.b16 %v5215
          %v6616 = vunpack.c.l.b16 %v5216
          %v6617 = vunpack.c.h.b16 %v5216
          %v6618 = vunpack.c.l.b16 %v5217
          %v6619 = vunpack.c.h.b16 %v5217
          %v6620 = vunpack.c.l.b16 %v5218
          %v6621 = vunpack.c.h.b16 %v5218
          %v6622 = vunpack.c.l.b16 %v5219
          %v6623 = vunpack.c.h.b16 %v5219
          %v6624 = vunpack.c.l.b16 %v5220
          %v6625 = vunpack.c.h.b16 %v5220
          %v6626 = vunpack.c.l.b16 %v5221
          %v6627 = vunpack.c.h.b16 %v5221
          %v6628 = vunpack.c.l.b16 %v5222
          %v6629 = vunpack.c.h.b16 %v5222
          %v6630 = vunpack.c.l.b16 %v5223
          %v6631 = vunpack.c.h.b16 %v5223
          %v6632 = vunpack.c.l.b16 %v5224
          %v6633 = vunpack.c.h.b16 %v5224
          %v6634 = vunpack.c.l.b16 %v5225
          %v6635 = vunpack.c.h.b16 %v5225
          %v6636 = vunpack.c.l.b16 %v5226
          %v6637 = vunpack.c.h.b16 %v5226
          %v6638 = vunpack.c.l.b16 %v5227
          %v6639 = vunpack.c.h.b16 %v5227
          %v6640 = vunpack.c.l.b16 %v5228
          %v6641 = vunpack.c.h.b16 %v5228
          %v6642 = vunpack.c.l.b16 %v5229
          %v6643 = vunpack.c.h.b16 %v5229
          %v6644 = vunpack.c.l.b16 %v5230
          %v6645 = vunpack.c.h.b16 %v5230
          %v6646 = vunpack.c.l.b16 %v5231
          %v6647 = vunpack.c.h.b16 %v5231
          %v6648 = vunpack.c.l.b16 %v5232
          %v6649 = vunpack.c.h.b16 %v5232
          %v6650 = vunpack.c.l.b16 %v5233
          %v6651 = vunpack.c.h.b16 %v5233
          %v6652 = vunpack.c.l.b16 %v5234
          %v6653 = vunpack.c.h.b16 %v5234
          %v6654 = vunpack.c.l.b16 %v5235
          %v6655 = vunpack.c.h.b16 %v5235
          %v6656 = vunpack.c.l.b16 %v5236
          %v6657 = vunpack.c.h.b16 %v5236
          %v6658 = vunpack.c.l.b16 %v5237
          %v6659 = vunpack.c.h.b16 %v5237
          %v6660 = vunpack.c.l.b16 %v5238
          %v6661 = vunpack.c.h.b16 %v5238
          %v6662 = vunpack.c.l.b16 %v5239
          %v6663 = vunpack.c.h.b16 %v5239
          %v6664 = vunpack.c.l.b16 %v5240
          %v6665 = vunpack.c.h.b16 %v5240
          %v6666 = vunpack.c.l.b16 %v5241
          %v6667 = vunpack.c.h.b16 %v5241
          %v6668 = vunpack.c.l.b16 %v5242
          %v6669 = vunpack.c.h.b16 %v5242
          %v6670 = vunpack.c.l.b16 %v5243
          %v6671 = vunpack.c.h.b16 %v5243
          %v6672 = vunpack.c.l.b16 %v5244
          %v6673 = vunpack.c.h.b16 %v5244
          %v6674 = vunpack.c.l.b16 %v5245
          %v6675 = vunpack.c.h.b16 %v5245
          %v6676 = vunpack.c.l.b16 %v5246
          %v6677 = vunpack.c.h.b16 %v5246
          %v6678 = vunpack.c.l.b16 %v5247
          %v6679 = vunpack.c.h.b16 %v5247
          %v6680 = vunpack.c.l.b16 %v5248
          %v6681 = vunpack.c.h.b16 %v5248
          %v6682 = vunpack.c.l.b16 %v5249
          %v6683 = vunpack.c.h.b16 %v5249
          %v6684 = vunpack.c.l.b16 %v5250
          %v6685 = vunpack.c.h.b16 %v5250
          %v6686 = vunpack.c.l.b16 %v5251
          %v6687 = vunpack.c.h.b16 %v5251
          %v6688 = vunpack.c.l.b16 %v5252
          %v6689 = vunpack.c.h.b16 %v5252
          %v6690 = vunpack.c.l.b16 %v5253
          %v6691 = vunpack.c.h.b16 %v5253
          %v6692 = vunpack.c.l.b16 %v5254
          %v6693 = vunpack.c.h.b16 %v5254
          %v6694 = vunpack.c.l.b16 %v5255
          %v6695 = vunpack.c.h.b16 %v5255
          %v6696 = vunpack.c.l.b16 %v5256
          %v6697 = vunpack.c.h.b16 %v5256
          %v6698 = vunpack.c.l.b16 %v5257
          %v6699 = vunpack.c.h.b16 %v5257
          %v6700 = vunpack.c.l.b16 %v5258
          %v6701 = vunpack.c.h.b16 %v5258
          %v6702 = vunpack.c.l.b16 %v5259
          %v6703 = vunpack.c.h.b16 %v5259
          %v6704 = vunpack.c.l.b16 %v5260
          %v6705 = vunpack.c.h.b16 %v5260
          %v6706 = vunpack.c.l.b16 %v5261
          %v6707 = vunpack.c.h.b16 %v5261
          %v6708 = vunpack.c.l.b16 %v5262
          %v6709 = vunpack.c.h.b16 %v5262
          %v6710 = vunpack.c.l.b16 %v5263
          %v6711 = vunpack.c.h.b16 %v5263
          %v6712 = vunpack.c.l.b16 %v5264
          %v6713 = vunpack.c.h.b16 %v5264
          %v6714 = vunpack.c.l.b16 %v5265
          %v6715 = vunpack.c.h.b16 %v5265
          %v6716 = vunpack.c.l.b16 %v5266
          %v6717 = vunpack.c.h.b16 %v5266
          %v6718 = vunpack.c.l.b16 %v5267
          %v6719 = vunpack.c.h.b16 %v5267
          %v6720 = vunpack.c.l.b16 %v5268
          %v6721 = vunpack.c.h.b16 %v5268
          %v6722 = vunpack.c.l.b16 %v5269
          %v6723 = vunpack.c.h.b16 %v5269
          %v6724 = vunpack.c.l.b16 %v5270
          %v6725 = vunpack.c.h.b16 %v5270
          %v6726 = vunpack.c.l.b16 %v5271
          %v6727 = vunpack.c.h.b16 %v5271
          %v6728 = vunpack.c.l.b16 %v5272
          %v6729 = vunpack.c.h.b16 %v5272
          %v6730 = vunpack.c.l.b16 %v5273
          %v6731 = vunpack.c.h.b16 %v5273
          %v6732 = vunpack.c.l.b16 %v5274
          %v6733 = vunpack.c.h.b16 %v5274
          %v6734 = vunpack.c.l.b16 %v5275
          %v6735 = vunpack.c.h.b16 %v5275
          %v6736 = vunpack.c.l.b16 %v5276
          %v6737 = vunpack.c.h.b16 %v5276
          %v6738 = vunpack.c.l.b16 %v5277
          %v6739 = vunpack.c.h.b16 %v5277
          %v6740 = vunpack.c.l.b16 %v5278
          %v6741 = vunpack.c.h.b16 %v5278
          %v6742 = vunpack.c.l.b16 %v5279
          %v6743 = vunpack.c.h.b16 %v5279
          %v6744 = vunpack.c.l.b16 %v5280
          %v6745 = vunpack.c.h.b16 %v5280
          %v6746 = vunpack.c.l.b16 %v5281
          %v6747 = vunpack.c.h.b16 %v5281
          %v6748 = vunpack.c.l.b16 %v5282
          %v6749 = vunpack.c.h.b16 %v5282
          %v6750 = vunpack.c.l.b16 %v5283
          %v6751 = vunpack.c.h.b16 %v5283
          %v6752 = vunpack.c.l.b16 %v5284
          %v6753 = vunpack.c.h.b16 %v5284
          %v6754 = vunpack.c.l.b16 %v5285
          %v6755 = vunpack.c.h.b16 %v5285
          %v6756 = vunpack.c.l.b16 %v5286
          %v6757 = vunpack.c.h.b16 %v5286
          %v6758 = vunpack.c.l.b16 %v5287
          %v6759 = vunpack.c.h.b16 %v5287
          %v6760 = vunpack.c.l.b16 %v5288
          %v6761 = vunpack.c.h.b16 %v5288
          %v6762 = vunpack.c.l.b16 %v5289
          %v6763 = vunpack.c.h.b16 %v5289
          %v6764 = vunpack.c.l.b16 %v5290
          %v6765 = vunpack.c.h.b16 %v5290
          %v6766 = vunpack.c.l.b16 %v5291
          %v6767 = vunpack.c.h.b16 %v5291
          %v6768 = vunpack.c.l.b16 %v5292
          %v6769 = vunpack.c.h.b16 %v5292
          %v6770 = vunpack.c.l.b16 %v5293
          %v6771 = vunpack.c.h.b16 %v5293
          %v6772 = vunpack.c.l.b16 %v5294
          %v6773 = vunpack.c.h.b16 %v5294
          %v6774 = vunpack.c.l.b16 %v5295
          %v6775 = vunpack.c.h.b16 %v5295
          %v6776 = vunpack.c.l.b16 %v5296
          %v6777 = vunpack.c.h.b16 %v5296
          %v6778 = vunpack.c.l.b16 %v5297
          %v6779 = vunpack.c.h.b16 %v5297
          %v6780 = vunpack.c.l.b16 %v5298
          %v6781 = vunpack.c.h.b16 %v5298
          %v6782 = vunpack.c.l.b16 %v5299
          %v6783 = vunpack.c.h.b16 %v5299
          %v6784 = vunpack.c.l.b16 %v5300
          %v6785 = vunpack.c.h.b16 %v5300
          %v6786 = vunpack.c.l.b16 %v5301
          %v6787 = vunpack.c.h.b16 %v5301
          %v6788 = vunpack.c.l.b16 %v5302
          %v6789 = vunpack.c.h.b16 %v5302
          %v6790 = vunpack.c.l.b16 %v5303
          %v6791 = vunpack.c.h.b16 %v5303
          %v6792 = vunpack.c.l.b16 %v5304
          %v6793 = vunpack.c.h.b16 %v5304
          %v6794 = vunpack.c.l.b16 %v5305
          %v6795 = vunpack.c.h.b16 %v5305
          %v6796 = vunpack.c.l.b16 %v5306
          %v6797 = vunpack.c.h.b16 %v5306
          %v6798 = vunpack.c.l.b16 %v5307
          %v6799 = vunpack.c.h.b16 %v5307
          %v6800 = vunpack.c.l.b16 %v5308
          %v6801 = vunpack.c.h.b16 %v5308
          %v6802 = vunpack.c.l.b16 %v5309
          %v6803 = vunpack.c.h.b16 %v5309
          %v6804 = vunpack.c.l.b16 %v5310
          %v6805 = vunpack.c.h.b16 %v5310
          %v6806 = vunpack.c.l.b16 %v5311
          %v6807 = vunpack.c.h.b16 %v5311
          %v6808 = vunpack.c.l.b16 %v5312
          %v6809 = vunpack.c.h.b16 %v5312
          %v6810 = vunpack.c.l.b16 %v5313
          %v6811 = vunpack.c.h.b16 %v5313
          %v6812 = vunpack.c.l.b16 %v5314
          %v6813 = vunpack.c.h.b16 %v5314
          %v6814 = vunpack.c.l.b16 %v5315
          %v6815 = vunpack.c.h.b16 %v5315
          %v6816 = vunpack.c.l.b16 %v5316
          %v6817 = vunpack.c.h.b16 %v5316
          %v6818 = vunpack.c.l.b16 %v5317
          %v6819 = vunpack.c.h.b16 %v5317
          %v6820 = vunpack.c.l.b16 %v5318
          %v6821 = vunpack.c.h.b16 %v5318
          %v6822 = vunpack.c.l.b16 %v5319
          %v6823 = vunpack.c.h.b16 %v5319
          %v6824 = vunpack.c.l.b16 %v5320
          %v6825 = vunpack.c.h.b16 %v5320
          %v6826 = vunpack.c.l.b16 %v5321
          %v6827 = vunpack.c.h.b16 %v5321
          %v6828 = vunpack.c.l.b16 %v5322
          %v6829 = vunpack.c.h.b16 %v5322
          %v6830 = vunpack.c.l.b16 %v5323
          %v6831 = vunpack.c.h.b16 %v5323
          %v6832 = vunpack.c.l.b16 %v5324
          %v6833 = vunpack.c.h.b16 %v5324
          %v6834 = vunpack.c.l.b16 %v5325
          %v6835 = vunpack.c.h.b16 %v5325
          %v6836 = vunpack.c.l.b16 %v5326
          %v6837 = vunpack.c.h.b16 %v5326
          %v6838 = vunpack.c.l.b16 %v5327
          %v6839 = vunpack.c.h.b16 %v5327
          %v6840 = vunpack.c.l.b16 %v5328
          %v6841 = vunpack.c.h.b16 %v5328
          %v6842 = vunpack.c.l.b16 %v5329
          %v6843 = vunpack.c.h.b16 %v5329
          %v6844 = vunpack.c.l.b16 %v5330
          %v6845 = vunpack.c.h.b16 %v5330
          %v6846 = vunpack.c.l.b16 %v5331
          %v6847 = vunpack.c.h.b16 %v5331
          %v6848 = vunpack.c.l.b16 %v5332
          %v6849 = vunpack.c.h.b16 %v5332
          %v6850 = vunpack.c.l.b16 %v5333
          %v6851 = vunpack.c.h.b16 %v5333
          %v6852 = vunpack.c.l.b16 %v5334
          %v6853 = vunpack.c.h.b16 %v5334
          %v6854 = vunpack.c.l.b16 %v5335
          %v6855 = vunpack.c.h.b16 %v5335
          %v6856 = vunpack.c.l.b16 %v5336
          %v6857 = vunpack.c.h.b16 %v5336
          %v6858 = vunpack.c.l.b16 %v5337
          %v6859 = vunpack.c.h.b16 %v5337
          %v6860 = vunpack.c.l.b16 %v5338
          %v6861 = vunpack.c.h.b16 %v5338
          %v6862 = vunpack.c.l.b16 %v5339
          %v6863 = vunpack.c.h.b16 %v5339
          %v6864 = vunpack.c.l.b16 %v5340
          %v6865 = vunpack.c.h.b16 %v5340
          %v6866 = vunpack.c.l.b16 %v5341
          %v6867 = vunpack.c.h.b16 %v5341
          %v6868 = vunpack.c.l.b16 %v5342
          %v6869 = vunpack.c.h.b16 %v5342
          %v6870 = vunpack.c.l.b16 %v5343
          %v6871 = vunpack.c.h.b16 %v5343
          %v6872 = vunpack.c.l.b16 %v5344
          %v6873 = vunpack.c.h.b16 %v5344
          %v6874 = vunpack.c.l.b16 %v5345
          %v6875 = vunpack.c.h.b16 %v5345
          %v6876 = vunpack.c.l.b16 %v5346
          %v6877 = vunpack.c.h.b16 %v5346
          %v6878 = vunpack.c.l.b16 %v5347
          %v6879 = vunpack.c.h.b16 %v5347
          %v6880 = vunpack.c.l.b16 %v5348
          %v6881 = vunpack.c.h.b16 %v5348
          %v6882 = vunpack.c.l.b16 %v5349
          %v6883 = vunpack.c.h.b16 %v5349
          %v6884 = vunpack.c.l.b16 %v5350
          %v6885 = vunpack.c.h.b16 %v5350
          %v6886 = vunpack.c.l.b16 %v5351
          %v6887 = vunpack.c.h.b16 %v5351
          %v6888 = vunpack.c.l.b16 %v5352
          %v6889 = vunpack.c.h.b16 %v5352
          %v6890 = vunpack.c.l.b16 %v5353
          %v6891 = vunpack.c.h.b16 %v5353
          %v6892 = vunpack.c.l.b16 %v5354
          %v6893 = vunpack.c.h.b16 %v5354
          %v6894 = vunpack.c.l.b16 %v5355
          %v6895 = vunpack.c.h.b16 %v5355
          %v6896 = vunpack.c.l.b16 %v5356
          %v6897 = vunpack.c.h.b16 %v5356
          %v6898 = vunpack.c.l.b16 %v5357
          %v6899 = vunpack.c.h.b16 %v5357
          %v6900 = vunpack.c.l.b16 %v5358
          %v6901 = vunpack.c.h.b16 %v5358
          %v6902 = vunpack.c.l.b16 %v5359
          %v6903 = vunpack.c.h.b16 %v5359
          %v6904 = vunpack.c.l.b16 %v5360
          %v6905 = vunpack.c.h.b16 %v5360
          %v6906 = vunpack.c.l.b16 %v5361
          %v6907 = vunpack.c.h.b16 %v5361
          %v6908 = vunpack.c.l.b16 %v5362
          %v6909 = vunpack.c.h.b16 %v5362
          %v6910 = vunpack.c.l.b16 %v5363
          %v6911 = vunpack.c.h.b16 %v5363
          %v6912 = vunpack.c.l.b16 %v5364
          %v6913 = vunpack.c.h.b16 %v5364
          %v6914 = vunpack.c.l.b16 %v5365
          %v6915 = vunpack.c.h.b16 %v5365
          %v6916 = vunpack.c.l.b16 %v5366
          %v6917 = vunpack.c.h.b16 %v5366
          %v6918 = vunpack.c.l.b16 %v5367
          %v6919 = vunpack.c.h.b16 %v5367
          %v6920 = vunpack.c.l.b16 %v5368
          %v6921 = vunpack.c.h.b16 %v5368
          %v6922 = vunpack.c.l.b16 %v5369
          %v6923 = vunpack.c.h.b16 %v5369
          %v6924 = vunpack.c.l.b16 %v5370
          %v6925 = vunpack.c.h.b16 %v5370
          %v6926 = vunpack.c.l.b16 %v5371
          %v6927 = vunpack.c.h.b16 %v5371
          %v6928 = vunpack.c.l.b16 %v5372
          %v6929 = vunpack.c.h.b16 %v5372
          %v6930 = vunpack.c.l.b16 %v5373
          %v6931 = vunpack.c.h.b16 %v5373
          %v6932 = vunpack.c.l.b16 %v5374
          %v6933 = vunpack.c.h.b16 %v5374
          %v6934 = vunpack.c.l.b16 %v5375
          %v6935 = vunpack.c.h.b16 %v5375
          %v6936 = vunpack.c.l.b16 %v5376
          %v6937 = vunpack.c.h.b16 %v5376
          %v6938 = vunpack.c.l.b16 %v5377
          %v6939 = vunpack.c.h.b16 %v5377
          %v6940 = vunpack.c.l.b16 %v5378
          %v6941 = vunpack.c.h.b16 %v5378
          %v6942 = vunpack.c.l.b16 %v5379
          %v6943 = vunpack.c.h.b16 %v5379
          %v6944 = vunpack.c.l.b16 %v5380
          %v6945 = vunpack.c.h.b16 %v5380
          %v6946 = vunpack.c.l.b16 %v5381
          %v6947 = vunpack.c.h.b16 %v5381
          %v6948 = vunpack.c.l.b16 %v5382
          %v6949 = vunpack.c.h.b16 %v5382
          %v6950 = vunpack.c.l.b16 %v5383
          %v6951 = vunpack.c.h.b16 %v5383
          %v6952 = vunpack.c.l.b16 %v5384
          %v6953 = vunpack.c.h.b16 %v5384
          %v6954 = vunpack.c.l.b16 %v5385
          %v6955 = vunpack.c.h.b16 %v5385
          %v6956 = vunpack.c.l.b16 %v5386
          %v6957 = vunpack.c.h.b16 %v5386
          %v6958 = vunpack.c.l.b16 %v5387
          %v6959 = vunpack.c.h.b16 %v5387
          %v6960 = vunpack.c.l.b16 %v5388
          %v6961 = vunpack.c.h.b16 %v5388
          %v6962 = vunpack.c.l.b16 %v5389
          %v6963 = vunpack.c.h.b16 %v5389
          %v6964 = vunpack.c.l.b16 %v5390
          %v6965 = vunpack.c.h.b16 %v5390
          %v6966 = vunpack.c.l.b16 %v5391
          %v6967 = vunpack.c.h.b16 %v5391
          %v6968 = vunpack.c.l.b16 %v5392
          %v6969 = vunpack.c.h.b16 %v5392
          %v6970 = vunpack.c.l.b16 %v5393
          %v6971 = vunpack.c.h.b16 %v5393
          %v6972 = vpack.c.b16 %v5956, %v5948
          %v6973 = vpack.c.b16 %v5957, %v5949
          %v6974 = vpack.c.b16 %v5958, %v5950
          %v6975 = vpack.c.b16 %v5959, %v5951
          %v6976 = vpack.c.b16 %v5960, %v5952
          %v6977 = vpack.c.b16 %v5961, %v5953
          %v6978 = vpack.c.b16 %v5962, %v5954
          %v6979 = vpack.c.b16 %v5963, %v5955
          %v6980 = vpack.c.b16 %v5972, %v5964
          %v6981 = vpack.c.b16 %v5973, %v5965
          %v6982 = vpack.c.b16 %v5974, %v5966
          %v6983 = vpack.c.b16 %v5975, %v5967
          %v6984 = vpack.c.b16 %v5976, %v5968
          %v6985 = vpack.c.b16 %v5977, %v5969
          %v6986 = vpack.c.b16 %v5978, %v5970
          %v6987 = vpack.c.b16 %v5979, %v5971
          %v6988 = vpack.c.b16 %v5988, %v5980
          %v6989 = vpack.c.b16 %v5989, %v5981
          %v6990 = vpack.c.b16 %v5990, %v5982
          %v6991 = vpack.c.b16 %v5991, %v5983
          %v6992 = vpack.c.b16 %v5992, %v5984
          %v6993 = vpack.c.b16 %v5993, %v5985
          %v6994 = vpack.c.b16 %v5994, %v5986
          %v6995 = vpack.c.b16 %v5995, %v5987
          %v6996 = vpack.c.b16 %v6004, %v5996
          %v6997 = vpack.c.b16 %v6005, %v5997
          %v6998 = vpack.c.b16 %v6006, %v5998
          %v6999 = vpack.c.b16 %v6007, %v5999
          %v7000 = vpack.c.b16 %v6008, %v6000
          %v7001 = vpack.c.b16 %v6009, %v6001
          %v7002 = vpack.c.b16 %v6010, %v6002
          %v7003 = vpack.c.b16 %v6011, %v6003
          %v7004 = vpack.c.b16 %v6020, %v6012
          %v7005 = vpack.c.b16 %v6021, %v6013
          %v7006 = vpack.c.b16 %v6022, %v6014
          %v7007 = vpack.c.b16 %v6023, %v6015
          %v7008 = vpack.c.b16 %v6024, %v6016
          %v7009 = vpack.c.b16 %v6025, %v6017
          %v7010 = vpack.c.b16 %v6026, %v6018
          %v7011 = vpack.c.b16 %v6027, %v6019
          %v7012 = vpack.c.b16 %v6036, %v6028
          %v7013 = vpack.c.b16 %v6037, %v6029
          %v7014 = vpack.c.b16 %v6038, %v6030
          %v7015 = vpack.c.b16 %v6039, %v6031
          %v7016 = vpack.c.b16 %v6040, %v6032
          %v7017 = vpack.c.b16 %v6041, %v6033
          %v7018 = vpack.c.b16 %v6042, %v6034
          %v7019 = vpack.c.b16 %v6043, %v6035
          %v7020 = vpack.c.b16 %v6052, %v6044
          %v7021 = vpack.c.b16 %v6053, %v6045
          %v7022 = vpack.c.b16 %v6054, %v6046
          %v7023 = vpack.c.b16 %v6055, %v6047
          %v7024 = vpack.c.b16 %v6056, %v6048
          %v7025 = vpack.c.b16 %v6057, %v6049
          %v7026 = vpack.c.b16 %v6058, %v6050
          %v7027 = vpack.c.b16 %v6059, %v6051
          %v7028 = vpack.c.b16 %v6068, %v6060
          %v7029 = vpack.c.b16 %v6069, %v6061
          %v7030 = vpack.c.b16 %v6070, %v6062
          %v7031 = vpack.c.b16 %v6071, %v6063
          %v7032 = vpack.c.b16 %v6072, %v6064
          %v7033 = vpack.c.b16 %v6073, %v6065
          %v7034 = vpack.c.b16 %v6074, %v6066
          %v7035 = vpack.c.b16 %v6075, %v6067
          %v7036 = vpack.c.b16 %v6084, %v6076
          %v7037 = vpack.c.b16 %v6085, %v6077
          %v7038 = vpack.c.b16 %v6086, %v6078
          %v7039 = vpack.c.b16 %v6087, %v6079
          %v7040 = vpack.c.b16 %v6088, %v6080
          %v7041 = vpack.c.b16 %v6089, %v6081
          %v7042 = vpack.c.b16 %v6090, %v6082
          %v7043 = vpack.c.b16 %v6091, %v6083
          %v7044 = vpack.c.b16 %v6100, %v6092
          %v7045 = vpack.c.b16 %v6101, %v6093
          %v7046 = vpack.c.b16 %v6102, %v6094
          %v7047 = vpack.c.b16 %v6103, %v6095
          %v7048 = vpack.c.b16 %v6104, %v6096
          %v7049 = vpack.c.b16 %v6105, %v6097
          %v7050 = vpack.c.b16 %v6106, %v6098
          %v7051 = vpack.c.b16 %v6107, %v6099
          %v7052 = vpack.c.b16 %v6116, %v6108
          %v7053 = vpack.c.b16 %v6117, %v6109
          %v7054 = vpack.c.b16 %v6118, %v6110
          %v7055 = vpack.c.b16 %v6119, %v6111
          %v7056 = vpack.c.b16 %v6120, %v6112
          %v7057 = vpack.c.b16 %v6121, %v6113
          %v7058 = vpack.c.b16 %v6122, %v6114
          %v7059 = vpack.c.b16 %v6123, %v6115
          %v7060 = vpack.c.b16 %v6132, %v6124
          %v7061 = vpack.c.b16 %v6133, %v6125
          %v7062 = vpack.c.b16 %v6134, %v6126
          %v7063 = vpack.c.b16 %v6135, %v6127
          %v7064 = vpack.c.b16 %v6136, %v6128
          %v7065 = vpack.c.b16 %v6137, %v6129
          %v7066 = vpack.c.b16 %v6138, %v6130
          %v7067 = vpack.c.b16 %v6139, %v6131
          %v7068 = vpack.c.b16 %v6148, %v6140
          %v7069 = vpack.c.b16 %v6149, %v6141
          %v7070 = vpack.c.b16 %v6150, %v6142
          %v7071 = vpack.c.b16 %v6151, %v6143
          %v7072 = vpack.c.b16 %v6152, %v6144
          %v7073 = vpack.c.b16 %v6153, %v6145
          %v7074 = vpack.c.b16 %v6154, %v6146
          %v7075 = vpack.c.b16 %v6155, %v6147
          %v7076 = vpack.c.b16 %v6164, %v6156
          %v7077 = vpack.c.b16 %v6165, %v6157
          %v7078 = vpack.c.b16 %v6166, %v6158
          %v7079 = vpack.c.b16 %v6167, %v6159
          %v7080 = vpack.c.b16 %v6168, %v6160
          %v7081 = vpack.c.b16 %v6169, %v6161
          %v7082 = vpack.c.b16 %v6170, %v6162
          %v7083 = vpack.c.b16 %v6171, %v6163
          %v7084 = vpack.c.b16 %v6180, %v6172
          %v7085 = vpack.c.b16 %v6181, %v6173
          %v7086 = vpack.c.b16 %v6182, %v6174
          %v7087 = vpack.c.b16 %v6183, %v6175
          %v7088 = vpack.c.b16 %v6184, %v6176
          %v7089 = vpack.c.b16 %v6185, %v6177
          %v7090 = vpack.c.b16 %v6186, %v6178
          %v7091 = vpack.c.b16 %v6187, %v6179
          %v7092 = vpack.c.b16 %v6196, %v6188
          %v7093 = vpack.c.b16 %v6197, %v6189
          %v7094 = vpack.c.b16 %v6198, %v6190
          %v7095 = vpack.c.b16 %v6199, %v6191
          %v7096 = vpack.c.b16 %v6200, %v6192
          %v7097 = vpack.c.b16 %v6201, %v6193
          %v7098 = vpack.c.b16 %v6202, %v6194
          %v7099 = vpack.c.b16 %v6203, %v6195
          %v7100 = vpack.c.b16 %v6212, %v6204
          %v7101 = vpack.c.b16 %v6213, %v6205
          %v7102 = vpack.c.b16 %v6214, %v6206
          %v7103 = vpack.c.b16 %v6215, %v6207
          %v7104 = vpack.c.b16 %v6216, %v6208
          %v7105 = vpack.c.b16 %v6217, %v6209
          %v7106 = vpack.c.b16 %v6218, %v6210
          %v7107 = vpack.c.b16 %v6219, %v6211
          %v7108 = vpack.c.b16 %v6228, %v6220
          %v7109 = vpack.c.b16 %v6229, %v6221
          %v7110 = vpack.c.b16 %v6230, %v6222
          %v7111 = vpack.c.b16 %v6231, %v6223
          %v7112 = vpack.c.b16 %v6232, %v6224
          %v7113 = vpack.c.b16 %v6233, %v6225
          %v7114 = vpack.c.b16 %v6234, %v6226
          %v7115 = vpack.c.b16 %v6235, %v6227
          %v7116 = vpack.c.b16 %v6244, %v6236
          %v7117 = vpack.c.b16 %v6245, %v6237
          %v7118 = vpack.c.b16 %v6246, %v6238
          %v7119 = vpack.c.b16 %v6247, %v6239
          %v7120 = vpack.c.b16 %v6248, %v6240
          %v7121 = vpack.c.b16 %v6249, %v6241
          %v7122 = vpack.c.b16 %v6250, %v6242
          %v7123 = vpack.c.b16 %v6251, %v6243
          %v7124 = vpack.c.b16 %v6260, %v6252
          %v7125 = vpack.c.b16 %v6261, %v6253
          %v7126 = vpack.c.b16 %v6262, %v6254
          %v7127 = vpack.c.b16 %v6263, %v6255
          %v7128 = vpack.c.b16 %v6264, %v6256
          %v7129 = vpack.c.b16 %v6265, %v6257
          %v7130 = vpack.c.b16 %v6266, %v6258
          %v7131 = vpack.c.b16 %v6267, %v6259
          %v7132 = vpack.c.b16 %v6276, %v6268
          %v7133 = vpack.c.b16 %v6277, %v6269
          %v7134 = vpack.c.b16 %v6278, %v6270
          %v7135 = vpack.c.b16 %v6279, %v6271
          %v7136 = vpack.c.b16 %v6280, %v6272
          %v7137 = vpack.c.b16 %v6281, %v6273
          %v7138 = vpack.c.b16 %v6282, %v6274
          %v7139 = vpack.c.b16 %v6283, %v6275
          %v7140 = vpack.c.b16 %v6292, %v6284
          %v7141 = vpack.c.b16 %v6293, %v6285
          %v7142 = vpack.c.b16 %v6294, %v6286
          %v7143 = vpack.c.b16 %v6295, %v6287
          %v7144 = vpack.c.b16 %v6296, %v6288
          %v7145 = vpack.c.b16 %v6297, %v6289
          %v7146 = vpack.c.b16 %v6298, %v6290
          %v7147 = vpack.c.b16 %v6299, %v6291
          %v7148 = vpack.c.b16 %v6308, %v6300
          %v7149 = vpack.c.b16 %v6309, %v6301
          %v7150 = vpack.c.b16 %v6310, %v6302
          %v7151 = vpack.c.b16 %v6311, %v6303
          %v7152 = vpack.c.b16 %v6312, %v6304
          %v7153 = vpack.c.b16 %v6313, %v6305
          %v7154 = vpack.c.b16 %v6314, %v6306
          %v7155 = vpack.c.b16 %v6315, %v6307
          %v7156 = vpack.c.b16 %v6324, %v6316
          %v7157 = vpack.c.b16 %v6325, %v6317
          %v7158 = vpack.c.b16 %v6326, %v6318
          %v7159 = vpack.c.b16 %v6327, %v6319
          %v7160 = vpack.c.b16 %v6328, %v6320
          %v7161 = vpack.c.b16 %v6329, %v6321
          %v7162 = vpack.c.b16 %v6330, %v6322
          %v7163 = vpack.c.b16 %v6331, %v6323
          %v7164 = vpack.c.b16 %v6340, %v6332
          %v7165 = vpack.c.b16 %v6341, %v6333
          %v7166 = vpack.c.b16 %v6342, %v6334
          %v7167 = vpack.c.b16 %v6343, %v6335
          %v7168 = vpack.c.b16 %v6344, %v6336
          %v7169 = vpack.c.b16 %v6345, %v6337
          %v7170 = vpack.c.b16 %v6346, %v6338
          %v7171 = vpack.c.b16 %v6347, %v6339
          %v7172 = vpack.c.b16 %v6356, %v6348
          %v7173 = vpack.c.b16 %v6357, %v6349
          %v7174 = vpack.c.b16 %v6358, %v6350
          %v7175 = vpack.c.b16 %v6359, %v6351
          %v7176 = vpack.c.b16 %v6360, %v6352
          %v7177 = vpack.c.b16 %v6361, %v6353
          %v7178 = vpack.c.b16 %v6362, %v6354
          %v7179 = vpack.c.b16 %v6363, %v6355
          %v7180 = vpack.c.b16 %v6372, %v6364
          %v7181 = vpack.c.b16 %v6373, %v6365
          %v7182 = vpack.c.b16 %v6374, %v6366
          %v7183 = vpack.c.b16 %v6375, %v6367
          %v7184 = vpack.c.b16 %v6376, %v6368
          %v7185 = vpack.c.b16 %v6377, %v6369
          %v7186 = vpack.c.b16 %v6378, %v6370
          %v7187 = vpack.c.b16 %v6379, %v6371
          %v7188 = vpack.c.b16 %v6388, %v6380
          %v7189 = vpack.c.b16 %v6389, %v6381
          %v7190 = vpack.c.b16 %v6390, %v6382
          %v7191 = vpack.c.b16 %v6391, %v6383
          %v7192 = vpack.c.b16 %v6392, %v6384
          %v7193 = vpack.c.b16 %v6393, %v6385
          %v7194 = vpack.c.b16 %v6394, %v6386
          %v7195 = vpack.c.b16 %v6395, %v6387
          %v7196 = vpack.c.b16 %v6404, %v6396
          %v7197 = vpack.c.b16 %v6405, %v6397
          %v7198 = vpack.c.b16 %v6406, %v6398
          %v7199 = vpack.c.b16 %v6407, %v6399
          %v7200 = vpack.c.b16 %v6408, %v6400
          %v7201 = vpack.c.b16 %v6409, %v6401
          %v7202 = vpack.c.b16 %v6410, %v6402
          %v7203 = vpack.c.b16 %v6411, %v6403
          %v7204 = vpack.c.b16 %v6420, %v6412
          %v7205 = vpack.c.b16 %v6421, %v6413
          %v7206 = vpack.c.b16 %v6422, %v6414
          %v7207 = vpack.c.b16 %v6423, %v6415
          %v7208 = vpack.c.b16 %v6424, %v6416
          %v7209 = vpack.c.b16 %v6425, %v6417
          %v7210 = vpack.c.b16 %v6426, %v6418
          %v7211 = vpack.c.b16 %v6427, %v6419
          %v7212 = vpack.c.b16 %v6436, %v6428
          %v7213 = vpack.c.b16 %v6437, %v6429
          %v7214 = vpack.c.b16 %v6438, %v6430
          %v7215 = vpack.c.b16 %v6439, %v6431
          %v7216 = vpack.c.b16 %v6440, %v6432
          %v7217 = vpack.c.b16 %v6441, %v6433
          %v7218 = vpack.c.b16 %v6442, %v6434
          %v7219 = vpack.c.b16 %v6443, %v6435
          %v7220 = vpack.c.b16 %v6452, %v6444
          %v7221 = vpack.c.b16 %v6453, %v6445
          %v7222 = vpack.c.b16 %v6454, %v6446
          %v7223 = vpack.c.b16 %v6455, %v6447
          %v7224 = vpack.c.b16 %v6456, %v6448
          %v7225 = vpack.c.b16 %v6457, %v6449
          %v7226 = vpack.c.b16 %v6458, %v6450
          %v7227 = vpack.c.b16 %v6459, %v6451
          %v7228 = vpack.c.b16 %v6468, %v6460
          %v7229 = vpack.c.b16 %v6469, %v6461
          %v7230 = vpack.c.b16 %v6470, %v6462
          %v7231 = vpack.c.b16 %v6471, %v6463
          %v7232 = vpack.c.b16 %v6472, %v6464
          %v7233 = vpack.c.b16 %v6473, %v6465
          %v7234 = vpack.c.b16 %v6474, %v6466
          %v7235 = vpack.c.b16 %v6475, %v6467
          %v7236 = vpack.c.b16 %v6484, %v6476
          %v7237 = vpack.c.b16 %v6485, %v6477
          %v7238 = vpack.c.b16 %v6486, %v6478
          %v7239 = vpack.c.b16 %v6487, %v6479
          %v7240 = vpack.c.b16 %v6488, %v6480
          %v7241 = vpack.c.b16 %v6489, %v6481
          %v7242 = vpack.c.b16 %v6490, %v6482
          %v7243 = vpack.c.b16 %v6491, %v6483
          %v7244 = vpack.c.b16 %v6500, %v6492
          %v7245 = vpack.c.b16 %v6501, %v6493
          %v7246 = vpack.c.b16 %v6502, %v6494
          %v7247 = vpack.c.b16 %v6503, %v6495
          %v7248 = vpack.c.b16 %v6504, %v6496
          %v7249 = vpack.c.b16 %v6505, %v6497
          %v7250 = vpack.c.b16 %v6506, %v6498
          %v7251 = vpack.c.b16 %v6507, %v6499
          %v7252 = vpack.c.b16 %v6516, %v6508
          %v7253 = vpack.c.b16 %v6517, %v6509
          %v7254 = vpack.c.b16 %v6518, %v6510
          %v7255 = vpack.c.b16 %v6519, %v6511
          %v7256 = vpack.c.b16 %v6520, %v6512
          %v7257 = vpack.c.b16 %v6521, %v6513
          %v7258 = vpack.c.b16 %v6522, %v6514
          %v7259 = vpack.c.b16 %v6523, %v6515
          %v7260 = vpack.c.b16 %v6532, %v6524
          %v7261 = vpack.c.b16 %v6533, %v6525
          %v7262 = vpack.c.b16 %v6534, %v6526
          %v7263 = vpack.c.b16 %v6535, %v6527
          %v7264 = vpack.c.b16 %v6536, %v6528
          %v7265 = vpack.c.b16 %v6537, %v6529
          %v7266 = vpack.c.b16 %v6538, %v6530
          %v7267 = vpack.c.b16 %v6539, %v6531
          %v7268 = vpack.c.b16 %v6548, %v6540
          %v7269 = vpack.c.b16 %v6549, %v6541
          %v7270 = vpack.c.b16 %v6550, %v6542
          %v7271 = vpack.c.b16 %v6551, %v6543
          %v7272 = vpack.c.b16 %v6552, %v6544
          %v7273 = vpack.c.b16 %v6553, %v6545
          %v7274 = vpack.c.b16 %v6554, %v6546
          %v7275 = vpack.c.b16 %v6555, %v6547
          %v7276 = vpack.c.b16 %v6564, %v6556
          %v7277 = vpack.c.b16 %v6565, %v6557
          %v7278 = vpack.c.b16 %v6566, %v6558
          %v7279 = vpack.c.b16 %v6567, %v6559
          %v7280 = vpack.c.b16 %v6568, %v6560
          %v7281 = vpack.c.b16 %v6569, %v6561
          %v7282 = vpack.c.b16 %v6570, %v6562
          %v7283 = vpack.c.b16 %v6571, %v6563
          %v7284 = vpack.c.b16 %v6580, %v6572
          %v7285 = vpack.c.b16 %v6581, %v6573
          %v7286 = vpack.c.b16 %v6582, %v6574
          %v7287 = vpack.c.b16 %v6583, %v6575
          %v7288 = vpack.c.b16 %v6584, %v6576
          %v7289 = vpack.c.b16 %v6585, %v6577
          %v7290 = vpack.c.b16 %v6586, %v6578
          %v7291 = vpack.c.b16 %v6587, %v6579
          %v7292 = vpack.c.b16 %v6596, %v6588
          %v7293 = vpack.c.b16 %v6597, %v6589
          %v7294 = vpack.c.b16 %v6598, %v6590
          %v7295 = vpack.c.b16 %v6599, %v6591
          %v7296 = vpack.c.b16 %v6600, %v6592
          %v7297 = vpack.c.b16 %v6601, %v6593
          %v7298 = vpack.c.b16 %v6602, %v6594
          %v7299 = vpack.c.b16 %v6603, %v6595
          %v7300 = vpack.c.b16 %v6612, %v6604
          %v7301 = vpack.c.b16 %v6613, %v6605
          %v7302 = vpack.c.b16 %v6614, %v6606
          %v7303 = vpack.c.b16 %v6615, %v6607
          %v7304 = vpack.c.b16 %v6616, %v6608
          %v7305 = vpack.c.b16 %v6617, %v6609
          %v7306 = vpack.c.b16 %v6618, %v6610
          %v7307 = vpack.c.b16 %v6619, %v6611
          %v7308 = vpack.c.b16 %v6628, %v6620
          %v7309 = vpack.c.b16 %v6629, %v6621
          %v7310 = vpack.c.b16 %v6630, %v6622
          %v7311 = vpack.c.b16 %v6631, %v6623
          %v7312 = vpack.c.b16 %v6632, %v6624
          %v7313 = vpack.c.b16 %v6633, %v6625
          %v7314 = vpack.c.b16 %v6634, %v6626
          %v7315 = vpack.c.b16 %v6635, %v6627
          %v7316 = vpack.c.b16 %v6644, %v6636
          %v7317 = vpack.c.b16 %v6645, %v6637
          %v7318 = vpack.c.b16 %v6646, %v6638
          %v7319 = vpack.c.b16 %v6647, %v6639
          %v7320 = vpack.c.b16 %v6648, %v6640
          %v7321 = vpack.c.b16 %v6649, %v6641
          %v7322 = vpack.c.b16 %v6650, %v6642
          %v7323 = vpack.c.b16 %v6651, %v6643
          %v7324 = vpack.c.b16 %v6660, %v6652
          %v7325 = vpack.c.b16 %v6661, %v6653
          %v7326 = vpack.c.b16 %v6662, %v6654
          %v7327 = vpack.c.b16 %v6663, %v6655
          %v7328 = vpack.c.b16 %v6664, %v6656
          %v7329 = vpack.c.b16 %v6665, %v6657
          %v7330 = vpack.c.b16 %v6666, %v6658
          %v7331 = vpack.c.b16 %v6667, %v6659
          %v7332 = vpack.c.b16 %v6676, %v6668
          %v7333 = vpack.c.b16 %v6677, %v6669
          %v7334 = vpack.c.b16 %v6678, %v6670
          %v7335 = vpack.c.b16 %v6679, %v6671
          %v7336 = vpack.c.b16 %v6680, %v6672
          %v7337 = vpack.c.b16 %v6681, %v6673
          %v7338 = vpack.c.b16 %v6682, %v6674
          %v7339 = vpack.c.b16 %v6683, %v6675
          %v7340 = vpack.c.b16 %v6692, %v6684
          %v7341 = vpack.c.b16 %v6693, %v6685
          %v7342 = vpack.c.b16 %v6694, %v6686
          %v7343 = vpack.c.b16 %v6695, %v6687
          %v7344 = vpack.c.b16 %v6696, %v6688
          %v7345 = vpack.c.b16 %v6697, %v6689
          %v7346 = vpack.c.b16 %v6698, %v6690
          %v7347 = vpack.c.b16 %v6699, %v6691
          %v7348 = vpack.c.b16 %v6708, %v6700
          %v7349 = vpack.c.b16 %v6709, %v6701
          %v7350 = vpack.c.b16 %v6710, %v6702
          %v7351 = vpack.c.b16 %v6711, %v6703
          %v7352 = vpack.c.b16 %v6712, %v6704
          %v7353 = vpack.c.b16 %v6713, %v6705
          %v7354 = vpack.c.b16 %v6714, %v6706
          %v7355 = vpack.c.b16 %v6715, %v6707
          %v7356 = vpack.c.b16 %v6724, %v6716
          %v7357 = vpack.c.b16 %v6725, %v6717
          %v7358 = vpack.c.b16 %v6726, %v6718
          %v7359 = vpack.c.b16 %v6727, %v6719
          %v7360 = vpack.c.b16 %v6728, %v6720
          %v7361 = vpack.c.b16 %v6729, %v6721
          %v7362 = vpack.c.b16 %v6730, %v6722
          %v7363 = vpack.c.b16 %v6731, %v6723
          %v7364 = vpack.c.b16 %v6740, %v6732
          %v7365 = vpack.c.b16 %v6741, %v6733
          %v7366 = vpack.c.b16 %v6742, %v6734
          %v7367 = vpack.c.b16 %v6743, %v6735
          %v7368 = vpack.c.b16 %v6744, %v6736
          %v7369 = vpack.c.b16 %v6745, %v6737
          %v7370 = vpack.c.b16 %v6746, %v6738
          %v7371 = vpack.c.b16 %v6747, %v6739
          %v7372 = vpack.c.b16 %v6756, %v6748
          %v7373 = vpack.c.b16 %v6757, %v6749
          %v7374 = vpack.c.b16 %v6758, %v6750
          %v7375 = vpack.c.b16 %v6759, %v6751
          %v7376 = vpack.c.b16 %v6760, %v6752
          %v7377 = vpack.c.b16 %v6761, %v6753
          %v7378 = vpack.c.b16 %v6762, %v6754
          %v7379 = vpack.c.b16 %v6763, %v6755
          %v7380 = vpack.c.b16 %v6772, %v6764
          %v7381 = vpack.c.b16 %v6773, %v6765
          %v7382 = vpack.c.b16 %v6774, %v6766
          %v7383 = vpack.c.b16 %v6775, %v6767
          %v7384 = vpack.c.b16 %v6776, %v6768
          %v7385 = vpack.c.b16 %v6777, %v6769
          %v7386 = vpack.c.b16 %v6778, %v6770
          %v7387 = vpack.c.b16 %v6779, %v6771
          %v7388 = vpack.c.b16 %v6788, %v6780
          %v7389 = vpack.c.b16 %v6789, %v6781
          %v7390 = vpack.c.b16 %v6790, %v6782
          %v7391 = vpack.c.b16 %v6791, %v6783
          %v7392 = vpack.c.b16 %v6792, %v6784
          %v7393 = vpack.c.b16 %v6793, %v6785
          %v7394 = vpack.c.b16 %v6794, %v6786
          %v7395 = vpack.c.b16 %v6795, %v6787
          %v7396 = vpack.c.b16 %v6804, %v6796
          %v7397 = vpack.c.b16 %v6805, %v6797
          %v7398 = vpack.c.b16 %v6806, %v6798
          %v7399 = vpack.c.b16 %v6807, %v6799
          %v7400 = vpack.c.b16 %v6808, %v6800
          %v7401 = vpack.c.b16 %v6809, %v6801
          %v7402 = vpack.c.b16 %v6810, %v6802
          %v7403 = vpack.c.b16 %v6811, %v6803
          %v7404 = vpack.c.b16 %v6820, %v6812
          %v7405 = vpack.c.b16 %v6821, %v6813
          %v7406 = vpack.c.b16 %v6822, %v6814
          %v7407 = vpack.c.b16 %v6823, %v6815
          %v7408 = vpack.c.b16 %v6824, %v6816
          %v7409 = vpack.c.b16 %v6825, %v6817
          %v7410 = vpack.c.b16 %v6826, %v6818
          %v7411 = vpack.c.b16 %v6827, %v6819
          %v7412 = vpack.c.b16 %v6836, %v6828
          %v7413 = vpack.c.b16 %v6837, %v6829
          %v7414 = vpack.c.b16 %v6838, %v6830
          %v7415 = vpack.c.b16 %v6839, %v6831
          %v7416 = vpack.c.b16 %v6840, %v6832
          %v7417 = vpack.c.b16 %v6841, %v6833
          %v7418 = vpack.c.b16 %v6842, %v6834
          %v7419 = vpack.c.b16 %v6843, %v6835
          %v7420 = vpack.c.b16 %v6852, %v6844
          %v7421 = vpack.c.b16 %v6853, %v6845
          %v7422 = vpack.c.b16 %v6854, %v6846
          %v7423 = vpack.c.b16 %v6855, %v6847
          %v7424 = vpack.c.b16 %v6856, %v6848
          %v7425 = vpack.c.b16 %v6857, %v6849
          %v7426 = vpack.c.b16 %v6858, %v6850
          %v7427 = vpack.c.b16 %v6859, %v6851
          %v7428 = vpack.c.b16 %v6868, %v6860
          %v7429 = vpack.c.b16 %v6869, %v6861
          %v7430 = vpack.c.b16 %v6870, %v6862
          %v7431 = vpack.c.b16 %v6871, %v6863
          %v7432 = vpack.c.b16 %v6872, %v6864
          %v7433 = vpack.c.b16 %v6873, %v6865
          %v7434 = vpack.c.b16 %v6874, %v6866
          %v7435 = vpack.c.b16 %v6875, %v6867
          %v7436 = vpack.c.b16 %v6884, %v6876
          %v7437 = vpack.c.b16 %v6885, %v6877
          %v7438 = vpack.c.b16 %v6886, %v6878
          %v7439 = vpack.c.b16 %v6887, %v6879
          %v7440 = vpack.c.b16 %v6888, %v6880
          %v7441 = vpack.c.b16 %v6889, %v6881
          %v7442 = vpack.c.b16 %v6890, %v6882
          %v7443 = vpack.c.b16 %v6891, %v6883
          %v7444 = vpack.c.b16 %v6900, %v6892
          %v7445 = vpack.c.b16 %v6901, %v6893
          %v7446 = vpack.c.b16 %v6902, %v6894
          %v7447 = vpack.c.b16 %v6903, %v6895
          %v7448 = vpack.c.b16 %v6904, %v6896
          %v7449 = vpack.c.b16 %v6905, %v6897
          %v7450 = vpack.c.b16 %v6906, %v6898
          %v7451 = vpack.c.b16 %v6907, %v6899
          %v7452 = vpack.c.b16 %v6916, %v6908
          %v7453 = vpack.c.b16 %v6917, %v6909
          %v7454 = vpack.c.b16 %v6918, %v6910
          %v7455 = vpack.c.b16 %v6919, %v6911
          %v7456 = vpack.c.b16 %v6920, %v6912
          %v7457 = vpack.c.b16 %v6921, %v6913
          %v7458 = vpack.c.b16 %v6922, %v6914
          %v7459 = vpack.c.b16 %v6923, %v6915
          %v7460 = vpack.c.b16 %v6932, %v6924
          %v7461 = vpack.c.b16 %v6933, %v6925
          %v7462 = vpack.c.b16 %v6934, %v6926
          %v7463 = vpack.c.b16 %v6935, %v6927
          %v7464 = vpack.c.b16 %v6936, %v6928
          %v7465 = vpack.c.b16 %v6937, %v6929
          %v7466 = vpack.c.b16 %v6938, %v6930
          %v7467 = vpack.c.b16 %v6939, %v6931
          %v7468 = vpack.c.b16 %v6948, %v6940
          %v7469 = vpack.c.b16 %v6949, %v6941
          %v7470 = vpack.c.b16 %v6950, %v6942
          %v7471 = vpack.c.b16 %v6951, %v6943
          %v7472 = vpack.c.b16 %v6952, %v6944
          %v7473 = vpack.c.b16 %v6953, %v6945
          %v7474 = vpack.c.b16 %v6954, %v6946
          %v7475 = vpack.c.b16 %v6955, %v6947
          %v7476 = vpack.c.b16 %v6964, %v6956
          %v7477 = vpack.c.b16 %v6965, %v6957
          %v7478 = vpack.c.b16 %v6966, %v6958
          %v7479 = vpack.c.b16 %v6967, %v6959
          %v7480 = vpack.c.b16 %v6968, %v6960
          %v7481 = vpack.c.b16 %v6969, %v6961
          %v7482 = vpack.c.b16 %v6970, %v6962
          %v7483 = vpack.c.b16 %v6971, %v6963
          %7996 = vmatprep.subr.bf16.mxu0 %v6973
          %7997 = vmatpush1.bf16.msra.mxu0 %v6972
          %7998 = vmatprep.subr.bf16.mxu0 %v6981
          %7999 = vmatpush1.bf16.msra.mxu0 %v6980
          %8000 = vmatprep.subr.bf16.mxu0 %v6989
          %8001 = vmatpush1.bf16.msra.mxu0 %v6988
          %8002 = vmatprep.subr.bf16.mxu0 %v6997
          %8003 = vmatpush1.bf16.msra.mxu0 %v6996
          %8004 = vmatprep.subr.bf16.mxu0 %v7005
          %8005 = vmatpush1.bf16.msra.mxu0 %v7004
          %8006 = vmatprep.subr.bf16.mxu0 %v7013
          %8007 = vmatpush1.bf16.msra.mxu0 %v7012
          %8008 = vmatprep.subr.bf16.mxu0 %v7021
          %8009 = vmatpush1.bf16.msra.mxu0 %v7020
          %8010 = vmatprep.subr.bf16.mxu0 %v7029
          %8011 = vmatpush1.bf16.msra.mxu0 %v7028
          %8012 = vmatprep.subr.bf16.mxu0 %v7037
          %8013 = vmatpush1.bf16.msra.mxu0 %v7036
          %8014 = vmatprep.subr.bf16.mxu0 %v7045
          %8015 = vmatpush1.bf16.msra.mxu0 %v7044
          %8016 = vmatprep.subr.bf16.mxu0 %v7053
          %8017 = vmatpush1.bf16.msra.mxu0 %v7052
          %8018 = vmatprep.subr.bf16.mxu0 %v7061
          %8019 = vmatpush1.bf16.msra.mxu0 %v7060
          %8020 = vmatprep.subr.bf16.mxu0 %v7069
          %8021 = vmatpush1.bf16.msra.mxu0 %v7068
          %8022 = vmatprep.subr.bf16.mxu0 %v7077
          %8023 = vmatpush1.bf16.msra.mxu0 %v7076
          %8024 = vmatprep.subr.bf16.mxu0 %v7085
          %8025 = vmatpush1.bf16.msra.mxu0 %v7084
          %8026 = vmatprep.subr.bf16.mxu0 %v7093
          %8027 = vmatpush1.bf16.msra.mxu0 %v7092
          %8028 = vmatprep.mubr.bf16.mxu0 %v4875
          %8029 = vmatmul.mubr.bf16.gmra.mrb[0].mxu0 %v4874
          %v8030 = vpop.f32.mrb[0].mxu0
          %v8031 = vadd.f32 %v5399, %v8030
          %v8032 = vpop.f32.mrb[0].mxu0
          %v8033 = vadd.f32 %v5403, %v8032
          %v8034 = vpop.f32.mrb[0].mxu0
          %v8035 = vpop.f32.mrb[0].mxu0
          %8036 = vdwg.mxu0
          %8037 = vmatprep.subr.bf16.mxu0 %v7101
          %8038 = vmatpush1.bf16.msra.mxu0 %v7100
          %8039 = vmatprep.subr.bf16.mxu0 %v7109
          %8040 = vmatpush1.bf16.msra.mxu0 %v7108
          %8041 = vmatprep.subr.bf16.mxu0 %v7117
          %8042 = vmatpush1.bf16.msra.mxu0 %v7116
          %8043 = vmatprep.subr.bf16.mxu0 %v7125
          %8044 = vmatpush1.bf16.msra.mxu0 %v7124
          %8045 = vmatprep.subr.bf16.mxu0 %v7133
          %8046 = vmatpush1.bf16.msra.mxu0 %v7132
          %8047 = vmatprep.subr.bf16.mxu0 %v7141
          %8048 = vmatpush1.bf16.msra.mxu0 %v7140
          %8049 = vmatprep.subr.bf16.mxu0 %v7149
          %8050 = vmatpush1.bf16.msra.mxu0 %v7148
          %8051 = vmatprep.subr.bf16.mxu0 %v7157
          %8052 = vmatpush1.bf16.msra.mxu0 %v7156
          %8053 = vmatprep.subr.bf16.mxu0 %v7165
          %8054 = vmatpush1.bf16.msra.mxu0 %v7164
          %8055 = vmatprep.subr.bf16.mxu0 %v7173
          %8056 = vmatpush1.bf16.msra.mxu0 %v7172
          %8057 = vmatprep.subr.bf16.mxu0 %v7181
          %8058 = vmatpush1.bf16.msra.mxu0 %v7180
          %8059 = vmatprep.subr.bf16.mxu0 %v7189
          %8060 = vmatpush1.bf16.msra.mxu0 %v7188
          %8061 = vmatprep.subr.bf16.mxu0 %v7197
          %8062 = vmatpush1.bf16.msra.mxu0 %v7196
          %8063 = vmatprep.subr.bf16.mxu0 %v7205
          %8064 = vmatpush1.bf16.msra.mxu0 %v7204
          %8065 = vmatprep.subr.bf16.mxu0 %v7213
          %8066 = vmatpush1.bf16.msra.mxu0 %v7212
          %8067 = vmatprep.subr.bf16.mxu0 %v7221
          %8068 = vmatpush1.bf16.msra.mxu0 %v7220
          %8069 = vmatprep.mubr.bf16.mxu0 %v4877
          %8070 = vmatmul.mubr.bf16.gmra.mrb[0].mxu0 %v4876
          %v8071 = vpop.f32.mrb[0].mxu0
          %v8072 = vadd.f32 %v8031, %v8071
          %v8073 = vpop.f32.mrb[0].mxu0
          %v8074 = vadd.f32 %v8033, %v8073
          %v8075 = vpop.f32.mrb[0].mxu0
          %v8076 = vpop.f32.mrb[0].mxu0
          %8077 = vdwg.mxu0
          %8078 = vmatprep.subr.bf16.mxu0 %v7229
          %8079 = vmatpush1.bf16.msra.mxu0 %v7228
          %8080 = vmatprep.subr.bf16.mxu0 %v7237
          %8081 = vmatpush1.bf16.msra.mxu0 %v7236
          %8082 = vmatprep.subr.bf16.mxu0 %v7245
          %8083 = vmatpush1.bf16.msra.mxu0 %v7244
          %8084 = vmatprep.subr.bf16.mxu0 %v7253
          %8085 = vmatpush1.bf16.msra.mxu0 %v7252
          %8086 = vmatprep.subr.bf16.mxu0 %v7261
          %8087 = vmatpush1.bf16.msra.mxu0 %v7260
          %8088 = vmatprep.subr.bf16.mxu0 %v7269
          %8089 = vmatpush1.bf16.msra.mxu0 %v7268
          %8090 = vmatprep.subr.bf16.mxu0 %v7277
          %8091 = vmatpush1.bf16.msra.mxu0 %v7276
          %8092 = vmatprep.subr.bf16.mxu0 %v7285
          %8093 = vmatpush1.bf16.msra.mxu0 %v7284
          %8094 = vmatprep.subr.bf16.mxu0 %v7293
          %8095 = vmatpush1.bf16.msra.mxu0 %v7292
          %8096 = vmatprep.subr.bf16.mxu0 %v7301
          %8097 = vmatpush1.bf16.msra.mxu0 %v7300
          %8098 = vmatprep.subr.bf16.mxu0 %v7309
          %8099 = vmatpush1.bf16.msra.mxu0 %v7308
          %8100 = vmatprep.subr.bf16.mxu0 %v7317
          %8101 = vmatpush1.bf16.msra.mxu0 %v7316
          %8102 = vmatprep.subr.bf16.mxu0 %v7325
          %8103 = vmatpush1.bf16.msra.mxu0 %v7324
          %8104 = vmatprep.subr.bf16.mxu0 %v7333
          %8105 = vmatpush1.bf16.msra.mxu0 %v7332
          %8106 = vmatprep.subr.bf16.mxu0 %v7341
          %8107 = vmatpush1.bf16.msra.mxu0 %v7340
          %8108 = vmatprep.subr.bf16.mxu0 %v7349
          %8109 = vmatpush1.bf16.msra.mxu0 %v7348
          %8110 = vmatprep.mubr.bf16.mxu0 %v4879
          %8111 = vmatmul.mubr.bf16.gmra.mrb[0].mxu0 %v4878
          %v8112 = vpop.f32.mrb[0].mxu0
          %v8113 = vadd.f32 %v8072, %v8112
          %v8114 = vpop.f32.mrb[0].mxu0
          %v8115 = vadd.f32 %v8074, %v8114
          %v8116 = vpop.f32.mrb[0].mxu0
          %v8117 = vpop.f32.mrb[0].mxu0
          %8118 = vdwg.mxu0
          %8119 = vmatprep.subr.bf16.mxu0 %v7357
          %8120 = vmatpush1.bf16.msra.mxu0 %v7356
          %8121 = vmatprep.subr.bf16.mxu0 %v7365
          %8122 = vmatpush1.bf16.msra.mxu0 %v7364
          %8123 = vmatprep.subr.bf16.mxu0 %v7373
          %8124 = vmatpush1.bf16.msra.mxu0 %v7372
          %8125 = vmatprep.subr.bf16.mxu0 %v7381
          %8126 = vmatpush1.bf16.msra.mxu0 %v7380
          %8127 = vmatprep.subr.bf16.mxu0 %v7389
          %8128 = vmatpush1.bf16.msra.mxu0 %v7388
          %8129 = vmatprep.subr.bf16.mxu0 %v7397
          %8130 = vmatpush1.bf16.msra.mxu0 %v7396
          %8131 = vmatprep.subr.bf16.mxu0 %v7405
          %8132 = vmatpush1.bf16.msra.mxu0 %v7404
          %8133 = vmatprep.subr.bf16.mxu0 %v7413
          %8134 = vmatpush1.bf16.msra.mxu0 %v7412
          %8135 = vmatprep.subr.bf16.mxu0 %v7421
          %8136 = vmatpush1.bf16.msra.mxu0 %v7420
          %8137 = vmatprep.subr.bf16.mxu0 %v7429
          %8138 = vmatpush1.bf16.msra.mxu0 %v7428
          %8139 = vmatprep.subr.bf16.mxu0 %v7437
          %8140 = vmatpush1.bf16.msra.mxu0 %v7436
          %8141 = vmatprep.subr.bf16.mxu0 %v7445
          %8142 = vmatpush1.bf16.msra.mxu0 %v7444
          %8143 = vmatprep.subr.bf16.mxu0 %v7453
          %8144 = vmatpush1.bf16.msra.mxu0 %v7452
          %8145 = vmatprep.subr.bf16.mxu0 %v7461
          %8146 = vmatpush1.bf16.msra.mxu0 %v7460
          %8147 = vmatprep.subr.bf16.mxu0 %v7469
          %8148 = vmatpush1.bf16.msra.mxu0 %v7468
          %8149 = vmatprep.subr.bf16.mxu0 %v7477
          %8150 = vmatpush1.bf16.msra.mxu0 %v7476
          %8151 = vmatprep.mubr.bf16.mxu0 %v4881
          %8152 = vmatmul.mubr.bf16.gmra.mrb[0].mxu0 %v4880
          %v8153 = vpop.f32.mrb[0].mxu0
          %v8154 = vadd.f32 %v8113, %v8153
          %v8155 = vpop.f32.mrb[0].mxu0
          %v8156 = vadd.f32 %v8115, %v8155
          %v8157 = vpop.f32.mrb[0].mxu0
          %v8158 = vpop.f32.mrb[0].mxu0
          %8159 = vdwg.mxu0
          %8160 = vmatprep.subr.bf16.mxu0 %v6975
          %8161 = vmatpush1.bf16.msra.mxu0 %v6974
          %8162 = vmatprep.subr.bf16.mxu0 %v6983
          %8163 = vmatpush1.bf16.msra.mxu0 %v6982
          %8164 = vmatprep.subr.bf16.mxu0 %v6991
          %8165 = vmatpush1.bf16.msra.mxu0 %v6990
          %8166 = vmatprep.subr.bf16.mxu0 %v6999
          %8167 = vmatpush1.bf16.msra.mxu0 %v6998
          %8168 = vmatprep.subr.bf16.mxu0 %v7007
          %8169 = vmatpush1.bf16.msra.mxu0 %v7006
          %8170 = vmatprep.subr.bf16.mxu0 %v7015
          %8171 = vmatpush1.bf16.msra.mxu0 %v7014
          %8172 = vmatprep.subr.bf16.mxu0 %v7023
          %8173 = vmatpush1.bf16.msra.mxu0 %v7022
          %8174 = vmatprep.subr.bf16.mxu0 %v7031
          %8175 = vmatpush1.bf16.msra.mxu0 %v7030
          %8176 = vmatprep.subr.bf16.mxu0 %v7039
          %8177 = vmatpush1.bf16.msra.mxu0 %v7038
          %8178 = vmatprep.subr.bf16.mxu0 %v7047
          %8179 = vmatpush1.bf16.msra.mxu0 %v7046
          %8180 = vmatprep.subr.bf16.mxu0 %v7055
          %8181 = vmatpush1.bf16.msra.mxu0 %v7054
          %8182 = vmatprep.subr.bf16.mxu0 %v7063
          %8183 = vmatpush1.bf16.msra.mxu0 %v7062
          %8184 = vmatprep.subr.bf16.mxu0 %v7071
          %8185 = vmatpush1.bf16.msra.mxu0 %v7070
          %8186 = vmatprep.subr.bf16.mxu0 %v7079
          %8187 = vmatpush1.bf16.msra.mxu0 %v7078
          %8188 = vmatprep.subr.bf16.mxu0 %v7087
          %8189 = vmatpush1.bf16.msra.mxu0 %v7086
          %8190 = vmatprep.subr.bf16.mxu0 %v7095
          %8191 = vmatpush1.bf16.msra.mxu0 %v7094
          %8192 = vmatprep.mubr.bf16.mxu0 %v4875
          %8193 = vmatmul.mubr.bf16.gmra.mrb[0].mxu0 %v4874
          %v8194 = vpop.f32.mrb[0].mxu0
          %v8195 = vadd.f32 %v5407, %v8194
          %v8196 = vpop.f32.mrb[0].mxu0
          %v8197 = vadd.f32 %v5411, %v8196
          %v8198 = vpop.f32.mrb[0].mxu0
          %v8199 = vpop.f32.mrb[0].mxu0
          %8200 = vdwg.mxu0
          %8201 = vmatprep.subr.bf16.mxu0 %v7103
          %8202 = vmatpush1.bf16.msra.mxu0 %v7102
          %8203 = vmatprep.subr.bf16.mxu0 %v7111
          %8204 = vmatpush1.bf16.msra.mxu0 %v7110
          %8205 = vmatprep.subr.bf16.mxu0 %v7119
          %8206 = vmatpush1.bf16.msra.mxu0 %v7118
          %8207 = vmatprep.subr.bf16.mxu0 %v7127
          %8208 = vmatpush1.bf16.msra.mxu0 %v7126
          %8209 = vmatprep.subr.bf16.mxu0 %v7135
          %8210 = vmatpush1.bf16.msra.mxu0 %v7134
          %8211 = vmatprep.subr.bf16.mxu0 %v7143
          %8212 = vmatpush1.bf16.msra.mxu0 %v7142
          %8213 = vmatprep.subr.bf16.mxu0 %v7151
          %8214 = vmatpush1.bf16.msra.mxu0 %v7150
          %8215 = vmatprep.subr.bf16.mxu0 %v7159
          %8216 = vmatpush1.bf16.msra.mxu0 %v7158
          %8217 = vmatprep.subr.bf16.mxu0 %v7167
          %8218 = vmatpush1.bf16.msra.mxu0 %v7166
          %8219 = vmatprep.subr.bf16.mxu0 %v7175
          %8220 = vmatpush1.bf16.msra.mxu0 %v7174
          %8221 = vmatprep.subr.bf16.mxu0 %v7183
          %8222 = vmatpush1.bf16.msra.mxu0 %v7182
          %8223 = vmatprep.subr.bf16.mxu0 %v7191
          %8224 = vmatpush1.bf16.msra.mxu0 %v7190
          %8225 = vmatprep.subr.bf16.mxu0 %v7199
          %8226 = vmatpush1.bf16.msra.mxu0 %v7198
          %8227 = vmatprep.subr.bf16.mxu0 %v7207
          %8228 = vmatpush1.bf16.msra.mxu0 %v7206
          %8229 = vmatprep.subr.bf16.mxu0 %v7215
          %8230 = vmatpush1.bf16.msra.mxu0 %v7214
          %8231 = vmatprep.subr.bf16.mxu0 %v7223
          %8232 = vmatpush1.bf16.msra.mxu0 %v7222
          %8233 = vmatprep.mubr.bf16.mxu0 %v4877
          %8234 = vmatmul.mubr.bf16.gmra.mrb[0].mxu0 %v4876
          %v8235 = vpop.f32.mrb[0].mxu0
          %v8236 = vadd.f32 %v8195, %v8235
          %v8237 = vpop.f32.mrb[0].mxu0
          %v8238 = vadd.f32 %v8197, %v8237
          %v8239 = vpop.f32.mrb[0].mxu0
          %v8240 = vpop.f32.mrb[0].mxu0
          %8241 = vdwg.mxu0
          %8242 = vmatprep.subr.bf16.mxu0 %v7231
          %8243 = vmatpush1.bf16.msra.mxu0 %v7230
          %8244 = vmatprep.subr.bf16.mxu0 %v7239
          %8245 = vmatpush1.bf16.msra.mxu0 %v7238
          %8246 = vmatprep.subr.bf16.mxu0 %v7247
          %8247 = vmatpush1.bf16.msra.mxu0 %v7246
          %8248 = vmatprep.subr.bf16.mxu0 %v7255
          %8249 = vmatpush1.bf16.msra.mxu0 %v7254
          %8250 = vmatprep.subr.bf16.mxu0 %v7263
          %8251 = vmatpush1.bf16.msra.mxu0 %v7262
          %8252 = vmatprep.subr.bf16.mxu0 %v7271
          %8253 = vmatpush1.bf16.msra.mxu0 %v7270
          %8254 = vmatprep.subr.bf16.mxu0 %v7279
          %8255 = vmatpush1.bf16.msra.mxu0 %v7278
          %8256 = vmatprep.subr.bf16.mxu0 %v7287
          %8257 = vmatpush1.bf16.msra.mxu0 %v7286
          %8258 = vmatprep.subr.bf16.mxu0 %v7295
          %8259 = vmatpush1.bf16.msra.mxu0 %v7294
          %8260 = vmatprep.subr.bf16.mxu0 %v7303
          %8261 = vmatpush1.bf16.msra.mxu0 %v7302
          %8262 = vmatprep.subr.bf16.mxu0 %v7311
          %8263 = vmatpush1.bf16.msra.mxu0 %v7310
          %8264 = vmatprep.subr.bf16.mxu0 %v7319
          %8265 = vmatpush1.bf16.msra.mxu0 %v7318
          %8266 = vmatprep.subr.bf16.mxu0 %v7327
          %8267 = vmatpush1.bf16.msra.mxu0 %v7326
          %8268 = vmatprep.subr.bf16.mxu0 %v7335
          %8269 = vmatpush1.bf16.msra.mxu0 %v7334
          %8270 = vmatprep.subr.bf16.mxu0 %v7343
          %8271 = vmatpush1.bf16.msra.mxu0 %v7342
          %8272 = vmatprep.subr.bf16.mxu0 %v7351
          %8273 = vmatpush1.bf16.msra.mxu0 %v7350
          %8274 = vmatprep.mubr.bf16.mxu0 %v4879
          %8275 = vmatmul.mubr.bf16.gmra.mrb[0].mxu0 %v4878
          %v8276 = vpop.f32.mrb[0].mxu0
          %v8277 = vadd.f32 %v8236, %v8276
          %v8278 = vpop.f32.mrb[0].mxu0
          %v8279 = vadd.f32 %v8238, %v8278
          %v8280 = vpop.f32.mrb[0].mxu0
          %v8281 = vpop.f32.mrb[0].mxu0
          %8282 = vdwg.mxu0
          %8283 = vmatprep.subr.bf16.mxu0 %v7359
          %8284 = vmatpush1.bf16.msra.mxu0 %v7358
          %8285 = vmatprep.subr.bf16.mxu0 %v7367
          %8286 = vmatpush1.bf16.msra.mxu0 %v7366
          %8287 = vmatprep.subr.bf16.mxu0 %v7375
          %8288 = vmatpush1.bf16.msra.mxu0 %v7374
          %8289 = vmatprep.subr.bf16.mxu0 %v7383
          %8290 = vmatpush1.bf16.msra.mxu0 %v7382
          %8291 = vmatprep.subr.bf16.mxu0 %v7391
          %8292 = vmatpush1.bf16.msra.mxu0 %v7390
          %8293 = vmatprep.subr.bf16.mxu0 %v7399
          %8294 = vmatpush1.bf16.msra.mxu0 %v7398
          %8295 = vmatprep.subr.bf16.mxu0 %v7407
          %8296 = vmatpush1.bf16.msra.mxu0 %v7406
          %8297 = vmatprep.subr.bf16.mxu0 %v7415
          %8298 = vmatpush1.bf16.msra.mxu0 %v7414
          %8299 = vmatprep.subr.bf16.mxu0 %v7423
          %8300 = vmatpush1.bf16.msra.mxu0 %v7422
          %8301 = vmatprep.subr.bf16.mxu0 %v7431
          %8302 = vmatpush1.bf16.msra.mxu0 %v7430
          %8303 = vmatprep.subr.bf16.mxu0 %v7439
          %8304 = vmatpush1.bf16.msra.mxu0 %v7438
          %8305 = vmatprep.subr.bf16.mxu0 %v7447
          %8306 = vmatpush1.bf16.msra.mxu0 %v7446
          %8307 = vmatprep.subr.bf16.mxu0 %v7455
          %8308 = vmatpush1.bf16.msra.mxu0 %v7454
          %8309 = vmatprep.subr.bf16.mxu0 %v7463
          %8310 = vmatpush1.bf16.msra.mxu0 %v7462
          %8311 = vmatprep.subr.bf16.mxu0 %v7471
          %8312 = vmatpush1.bf16.msra.mxu0 %v7470
          %8313 = vmatprep.subr.bf16.mxu0 %v7479
          %8314 = vmatpush1.bf16.msra.mxu0 %v7478
          %8315 = vmatprep.mubr.bf16.mxu0 %v4881
          %8316 = vmatmul.mubr.bf16.gmra.mrb[0].mxu0 %v4880
          %v8317 = vpop.f32.mrb[0].mxu0
          %v8318 = vadd.f32 %v8277, %v8317
          %v8319 = vpop.f32.mrb[0].mxu0
          %v8320 = vadd.f32 %v8279, %v8319
          %v8321 = vpop.f32.mrb[0].mxu0
          %v8322 = vpop.f32.mrb[0].mxu0
          %8323 = vdwg.mxu0
          %8324 = vmatprep.subr.bf16.mxu0 %v6977
          %8325 = vmatpush1.bf16.msra.mxu0 %v6976
          %8326 = vmatprep.subr.bf16.mxu0 %v6985
          %8327 = vmatpush1.bf16.msra.mxu0 %v6984
          %8328 = vmatprep.subr.bf16.mxu0 %v6993
          %8329 = vmatpush1.bf16.msra.mxu0 %v6992
          %8330 = vmatprep.subr.bf16.mxu0 %v7001
          %8331 = vmatpush1.bf16.msra.mxu0 %v7000
          %8332 = vmatprep.subr.bf16.mxu0 %v7009
          %8333 = vmatpush1.bf16.msra.mxu0 %v7008
          %8334 = vmatprep.subr.bf16.mxu0 %v7017
          %8335 = vmatpush1.bf16.msra.mxu0 %v7016
          %8336 = vmatprep.subr.bf16.mxu0 %v7025
          %8337 = vmatpush1.bf16.msra.mxu0 %v7024
          %8338 = vmatprep.subr.bf16.mxu0 %v7033
          %8339 = vmatpush1.bf16.msra.mxu0 %v7032
          %8340 = vmatprep.subr.bf16.mxu0 %v7041
          %8341 = vmatpush1.bf16.msra.mxu0 %v7040
          %8342 = vmatprep.subr.bf16.mxu0 %v7049
          %8343 = vmatpush1.bf16.msra.mxu0 %v7048
          %8344 = vmatprep.subr.bf16.mxu0 %v7057
          %8345 = vmatpush1.bf16.msra.mxu0 %v7056
          %8346 = vmatprep.subr.bf16.mxu0 %v7065
          %8347 = vmatpush1.bf16.msra.mxu0 %v7064
          %8348 = vmatprep.subr.bf16.mxu0 %v7073
          %8349 = vmatpush1.bf16.msra.mxu0 %v7072
          %8350 = vmatprep.subr.bf16.mxu0 %v7081
          %8351 = vmatpush1.bf16.msra.mxu0 %v7080
          %8352 = vmatprep.subr.bf16.mxu0 %v7089
          %8353 = vmatpush1.bf16.msra.mxu0 %v7088
          %8354 = vmatprep.subr.bf16.mxu0 %v7097
          %8355 = vmatpush1.bf16.msra.mxu0 %v7096
          %8356 = vmatprep.mubr.bf16.mxu0 %v4875
          %8357 = vmatmul.mubr.bf16.gmra.mrb[0].mxu0 %v4874
          %v8358 = vpop.f32.mrb[0].mxu0
          %v8359 = vadd.f32 %v5415, %v8358
          %v8360 = vpop.f32.mrb[0].mxu0
          %v8361 = vadd.f32 %v5419, %v8360
          %v8362 = vpop.f32.mrb[0].mxu0
          %v8363 = vpop.f32.mrb[0].mxu0
          %8364 = vdwg.mxu0
          %8365 = vmatprep.subr.bf16.mxu0 %v7105
          %8366 = vmatpush1.bf16.msra.mxu0 %v7104
          %8367 = vmatprep.subr.bf16.mxu0 %v7113
          %8368 = vmatpush1.bf16.msra.mxu0 %v7112
          %8369 = vmatprep.subr.bf16.mxu0 %v7121
          %8370 = vmatpush1.bf16.msra.mxu0 %v7120
          %8371 = vmatprep.subr.bf16.mxu0 %v7129
          %8372 = vmatpush1.bf16.msra.mxu0 %v7128
          %8373 = vmatprep.subr.bf16.mxu0 %v7137
          %8374 = vmatpush1.bf16.msra.mxu0 %v7136
          %8375 = vmatprep.subr.bf16.mxu0 %v7145
          %8376 = vmatpush1.bf16.msra.mxu0 %v7144
          %8377 = vmatprep.subr.bf16.mxu0 %v7153
          %8378 = vmatpush1.bf16.msra.mxu0 %v7152
          %8379 = vmatprep.subr.bf16.mxu0 %v7161
          %8380 = vmatpush1.bf16.msra.mxu0 %v7160
          %8381 = vmatprep.subr.bf16.mxu0 %v7169
          %8382 = vmatpush1.bf16.msra.mxu0 %v7168
          %8383 = vmatprep.subr.bf16.mxu0 %v7177
          %8384 = vmatpush1.bf16.msra.mxu0 %v7176
          %8385 = vmatprep.subr.bf16.mxu0 %v7185
          %8386 = vmatpush1.bf16.msra.mxu0 %v7184
          %8387 = vmatprep.subr.bf16.mxu0 %v7193
          %8388 = vmatpush1.bf16.msra.mxu0 %v7192
          %8389 = vmatprep.subr.bf16.mxu0 %v7201
          %8390 = vmatpush1.bf16.msra.mxu0 %v7200
          %8391 = vmatprep.subr.bf16.mxu0 %v7209
          %8392 = vmatpush1.bf16.msra.mxu0 %v7208
          %8393 = vmatprep.subr.bf16.mxu0 %v7217
          %8394 = vmatpush1.bf16.msra.mxu0 %v7216
          %8395 = vmatprep.subr.bf16.mxu0 %v7225
          %8396 = vmatpush1.bf16.msra.mxu0 %v7224
          %8397 = vmatprep.mubr.bf16.mxu0 %v4877
          %8398 = vmatmul.mubr.bf16.gmra.mrb[0].mxu0 %v4876
          %v8399 = vpop.f32.mrb[0].mxu0
          %v8400 = vadd.f32 %v8359, %v8399
          %v8401 = vpop.f32.mrb[0].mxu0
          %v8402 = vadd.f32 %v8361, %v8401
          %v8403 = vpop.f32.mrb[0].mxu0
          %v8404 = vpop.f32.mrb[0].mxu0
          %8405 = vdwg.mxu0
          %8406 = vmatprep.subr.bf16.mxu0 %v7233
          %8407 = vmatpush1.bf16.msra.mxu0 %v7232
          %8408 = vmatprep.subr.bf16.mxu0 %v7241
          %8409 = vmatpush1.bf16.msra.mxu0 %v7240
          %8410 = vmatprep.subr.bf16.mxu0 %v7249
          %8411 = vmatpush1.bf16.msra.mxu0 %v7248
          %8412 = vmatprep.subr.bf16.mxu0 %v7257
          %8413 = vmatpush1.bf16.msra.mxu0 %v7256
          %8414 = vmatprep.subr.bf16.mxu0 %v7265
          %8415 = vmatpush1.bf16.msra.mxu0 %v7264
          %8416 = vmatprep.subr.bf16.mxu0 %v7273
          %8417 = vmatpush1.bf16.msra.mxu0 %v7272
          %8418 = vmatprep.subr.bf16.mxu0 %v7281
          %8419 = vmatpush1.bf16.msra.mxu0 %v7280
          %8420 = vmatprep.subr.bf16.mxu0 %v7289
          %8421 = vmatpush1.bf16.msra.mxu0 %v7288
          %8422 = vmatprep.subr.bf16.mxu0 %v7297
          %8423 = vmatpush1.bf16.msra.mxu0 %v7296
          %8424 = vmatprep.subr.bf16.mxu0 %v7305
          %8425 = vmatpush1.bf16.msra.mxu0 %v7304
          %8426 = vmatprep.subr.bf16.mxu0 %v7313
          %8427 = vmatpush1.bf16.msra.mxu0 %v7312
          %8428 = vmatprep.subr.bf16.mxu0 %v7321
          %8429 = vmatpush1.bf16.msra.mxu0 %v7320
          %8430 = vmatprep.subr.bf16.mxu0 %v7329
          %8431 = vmatpush1.bf16.msra.mxu0 %v7328
          %8432 = vmatprep.subr.bf16.mxu0 %v7337
          %8433 = vmatpush1.bf16.msra.mxu0 %v7336
          %8434 = vmatprep.subr.bf16.mxu0 %v7345
          %8435 = vmatpush1.bf16.msra.mxu0 %v7344
          %8436 = vmatprep.subr.bf16.mxu0 %v7353
          %8437 = vmatpush1.bf16.msra.mxu0 %v7352
          %8438 = vmatprep.mubr.bf16.mxu0 %v4879
          %8439 = vmatmul.mubr.bf16.gmra.mrb[0].mxu0 %v4878
          %v8440 = vpop.f32.mrb[0].mxu0
          %v8441 = vadd.f32 %v8400, %v8440
          %v8442 = vpop.f32.mrb[0].mxu0
          %v8443 = vadd.f32 %v8402, %v8442
          %v8444 = vpop.f32.mrb[0].mxu0
          %v8445 = vpop.f32.mrb[0].mxu0
          %8446 = vdwg.mxu0
          %8447 = vmatprep.subr.bf16.mxu0 %v7361
          %8448 = vmatpush1.bf16.msra.mxu0 %v7360
          %8449 = vmatprep.subr.bf16.mxu0 %v7369
          %8450 = vmatpush1.bf16.msra.mxu0 %v7368
          %8451 = vmatprep.subr.bf16.mxu0 %v7377
          %8452 = vmatpush1.bf16.msra.mxu0 %v7376
          %8453 = vmatprep.subr.bf16.mxu0 %v7385
          %8454 = vmatpush1.bf16.msra.mxu0 %v7384
          %8455 = vmatprep.subr.bf16.mxu0 %v7393
          %8456 = vmatpush1.bf16.msra.mxu0 %v7392
          %8457 = vmatprep.subr.bf16.mxu0 %v7401
          %8458 = vmatpush1.bf16.msra.mxu0 %v7400
          %8459 = vmatprep.subr.bf16.mxu0 %v7409
          %8460 = vmatpush1.bf16.msra.mxu0 %v7408
          %8461 = vmatprep.subr.bf16.mxu0 %v7417
          %8462 = vmatpush1.bf16.msra.mxu0 %v7416
          %8463 = vmatprep.subr.bf16.mxu0 %v7425
          %8464 = vmatpush1.bf16.msra.mxu0 %v7424
          %8465 = vmatprep.subr.bf16.mxu0 %v7433
          %8466 = vmatpush1.bf16.msra.mxu0 %v7432
          %8467 = vmatprep.subr.bf16.mxu0 %v7441
          %8468 = vmatpush1.bf16.msra.mxu0 %v7440
          %8469 = vmatprep.subr.bf16.mxu0 %v7449
          %8470 = vmatpush1.bf16.msra.mxu0 %v7448
          %8471 = vmatprep.subr.bf16.mxu0 %v7457
          %8472 = vmatpush1.bf16.msra.mxu0 %v7456
          %8473 = vmatprep.subr.bf16.mxu0 %v7465
          %8474 = vmatpush1.bf16.msra.mxu0 %v7464
          %8475 = vmatprep.subr.bf16.mxu0 %v7473
          %8476 = vmatpush1.bf16.msra.mxu0 %v7472
          %8477 = vmatprep.subr.bf16.mxu0 %v7481
          %8478 = vmatpush1.bf16.msra.mxu0 %v7480
          %8479 = vmatprep.mubr.bf16.mxu0 %v4881
          %8480 = vmatmul.mubr.bf16.gmra.mrb[0].mxu0 %v4880
          %v8481 = vpop.f32.mrb[0].mxu0
          %v8482 = vadd.f32 %v8441, %v8481
          %v8483 = vpop.f32.mrb[0].mxu0
          %v8484 = vadd.f32 %v8443, %v8483
          %v8485 = vpop.f32.mrb[0].mxu0
          %v8486 = vpop.f32.mrb[0].mxu0
          %8487 = vdwg.mxu0
          %8488 = vmatprep.subr.bf16.mxu0 %v6979
          %8489 = vmatpush1.bf16.msra.mxu0 %v6978
          %8490 = vmatprep.subr.bf16.mxu0 %v6987
          %8491 = vmatpush1.bf16.msra.mxu0 %v6986
          %8492 = vmatprep.subr.bf16.mxu0 %v6995
          %8493 = vmatpush1.bf16.msra.mxu0 %v6994
          %8494 = vmatprep.subr.bf16.mxu0 %v7003
          %8495 = vmatpush1.bf16.msra.mxu0 %v7002
          %8496 = vmatprep.subr.bf16.mxu0 %v7011
          %8497 = vmatpush1.bf16.msra.mxu0 %v7010
          %8498 = vmatprep.subr.bf16.mxu0 %v7019
          %8499 = vmatpush1.bf16.msra.mxu0 %v7018
          %8500 = vmatprep.subr.bf16.mxu0 %v7027
          %8501 = vmatpush1.bf16.msra.mxu0 %v7026
          %8502 = vmatprep.subr.bf16.mxu0 %v7035
          %8503 = vmatpush1.bf16.msra.mxu0 %v7034
          %8504 = vmatprep.subr.bf16.mxu0 %v7043
          %8505 = vmatpush1.bf16.msra.mxu0 %v7042
          %8506 = vmatprep.subr.bf16.mxu0 %v7051
          %8507 = vmatpush1.bf16.msra.mxu0 %v7050
          %8508 = vmatprep.subr.bf16.mxu0 %v7059
          %8509 = vmatpush1.bf16.msra.mxu0 %v7058
          %8510 = vmatprep.subr.bf16.mxu0 %v7067
          %8511 = vmatpush1.bf16.msra.mxu0 %v7066
          %8512 = vmatprep.subr.bf16.mxu0 %v7075
          %8513 = vmatpush1.bf16.msra.mxu0 %v7074
          %8514 = vmatprep.subr.bf16.mxu0 %v7083
          %8515 = vmatpush1.bf16.msra.mxu0 %v7082
          %8516 = vmatprep.subr.bf16.mxu0 %v7091
          %8517 = vmatpush1.bf16.msra.mxu0 %v7090
          %8518 = vmatprep.subr.bf16.mxu0 %v7099
          %8519 = vmatpush1.bf16.msra.mxu0 %v7098
          %8520 = vmatprep.mubr.bf16.mxu0 %v4875
          %8521 = vmatmul.mubr.bf16.gmra.mrb[0].mxu0 %v4874
          %v8522 = vpop.f32.mrb[0].mxu0
          %v8523 = vadd.f32 %v5423, %v8522
          %v8524 = vpop.f32.mrb[0].mxu0
          %v8525 = vadd.f32 %v5427, %v8524
          %v8526 = vpop.f32.mrb[0].mxu0
          %v8527 = vpop.f32.mrb[0].mxu0
          %8528 = vdwg.mxu0
          %8529 = vmatprep.subr.bf16.mxu0 %v7107
          %8530 = vmatpush1.bf16.msra.mxu0 %v7106
          %8531 = vmatprep.subr.bf16.mxu0 %v7115
          %8532 = vmatpush1.bf16.msra.mxu0 %v7114
          %8533 = vmatprep.subr.bf16.mxu0 %v7123
          %8534 = vmatpush1.bf16.msra.mxu0 %v7122
          %8535 = vmatprep.subr.bf16.mxu0 %v7131
          %8536 = vmatpush1.bf16.msra.mxu0 %v7130
          %8537 = vmatprep.subr.bf16.mxu0 %v7139
          %8538 = vmatpush1.bf16.msra.mxu0 %v7138
          %8539 = vmatprep.subr.bf16.mxu0 %v7147
          %8540 = vmatpush1.bf16.msra.mxu0 %v7146
          %8541 = vmatprep.subr.bf16.mxu0 %v7155
          %8542 = vmatpush1.bf16.msra.mxu0 %v7154
          %8543 = vmatprep.subr.bf16.mxu0 %v7163
          %8544 = vmatpush1.bf16.msra.mxu0 %v7162
          %8545 = vmatprep.subr.bf16.mxu0 %v7171
          %8546 = vmatpush1.bf16.msra.mxu0 %v7170
          %8547 = vmatprep.subr.bf16.mxu0 %v7179
          %8548 = vmatpush1.bf16.msra.mxu0 %v7178
          %8549 = vmatprep.subr.bf16.mxu0 %v7187
          %8550 = vmatpush1.bf16.msra.mxu0 %v7186
          %8551 = vmatprep.subr.bf16.mxu0 %v7195
          %8552 = vmatpush1.bf16.msra.mxu0 %v7194
          %8553 = vmatprep.subr.bf16.mxu0 %v7203
          %8554 = vmatpush1.bf16.msra.mxu0 %v7202
          %8555 = vmatprep.subr.bf16.mxu0 %v7211
          %8556 = vmatpush1.bf16.msra.mxu0 %v7210
          %8557 = vmatprep.subr.bf16.mxu0 %v7219
          %8558 = vmatpush1.bf16.msra.mxu0 %v7218
          %8559 = vmatprep.subr.bf16.mxu0 %v7227
          %8560 = vmatpush1.bf16.msra.mxu0 %v7226
          %8561 = vmatprep.mubr.bf16.mxu0 %v4877
          %8562 = vmatmul.mubr.bf16.gmra.mrb[0].mxu0 %v4876
          %v8563 = vpop.f32.mrb[0].mxu0
          %v8564 = vadd.f32 %v8523, %v8563
          %v8565 = vpop.f32.mrb[0].mxu0
          %v8566 = vadd.f32 %v8525, %v8565
          %v8567 = vpop.f32.mrb[0].mxu0
          %v8568 = vpop.f32.mrb[0].mxu0
          %8569 = vdwg.mxu0
          %8570 = vmatprep.subr.bf16.mxu0 %v7235
          %8571 = vmatpush1.bf16.msra.mxu0 %v7234
          %8572 = vmatprep.subr.bf16.mxu0 %v7243
          %8573 = vmatpush1.bf16.msra.mxu0 %v7242
          %8574 = vmatprep.subr.bf16.mxu0 %v7251
          %8575 = vmatpush1.bf16.msra.mxu0 %v7250
          %8576 = vmatprep.subr.bf16.mxu0 %v7259
          %8577 = vmatpush1.bf16.msra.mxu0 %v7258
          %8578 = vmatprep.subr.bf16.mxu0 %v7267
          %8579 = vmatpush1.bf16.msra.mxu0 %v7266
          %8580 = vmatprep.subr.bf16.mxu0 %v7275
          %8581 = vmatpush1.bf16.msra.mxu0 %v7274
          %8582 = vmatprep.subr.bf16.mxu0 %v7283
          %8583 = vmatpush1.bf16.msra.mxu0 %v7282
          %8584 = vmatprep.subr.bf16.mxu0 %v7291
          %8585 = vmatpush1.bf16.msra.mxu0 %v7290
          %8586 = vmatprep.subr.bf16.mxu0 %v7299
          %8587 = vmatpush1.bf16.msra.mxu0 %v7298
          %8588 = vmatprep.subr.bf16.mxu0 %v7307
          %8589 = vmatpush1.bf16.msra.mxu0 %v7306
          %8590 = vmatprep.subr.bf16.mxu0 %v7315
          %8591 = vmatpush1.bf16.msra.mxu0 %v7314
          %8592 = vmatprep.subr.bf16.mxu0 %v7323
          %8593 = vmatpush1.bf16.msra.mxu0 %v7322
          %8594 = vmatprep.subr.bf16.mxu0 %v7331
          %8595 = vmatpush1.bf16.msra.mxu0 %v7330
          %8596 = vmatprep.subr.bf16.mxu0 %v7339
          %8597 = vmatpush1.bf16.msra.mxu0 %v7338
          %8598 = vmatprep.subr.bf16.mxu0 %v7347
          %8599 = vmatpush1.bf16.msra.mxu0 %v7346
          %8600 = vmatprep.subr.bf16.mxu0 %v7355
          %8601 = vmatpush1.bf16.msra.mxu0 %v7354
          %8602 = vmatprep.mubr.bf16.mxu0 %v4879
          %8603 = vmatmul.mubr.bf16.gmra.mrb[0].mxu0 %v4878
          %v8604 = vpop.f32.mrb[0].mxu0
          %v8605 = vadd.f32 %v8564, %v8604
          %v8606 = vpop.f32.mrb[0].mxu0
          %v8607 = vadd.f32 %v8566, %v8606
          %v8608 = vpop.f32.mrb[0].mxu0
          %v8609 = vpop.f32.mrb[0].mxu0
          %8610 = vdwg.mxu0
          %8611 = vmatprep.subr.bf16.mxu0 %v7363
          %8612 = vmatpush1.bf16.msra.mxu0 %v7362
          %8613 = vmatprep.subr.bf16.mxu0 %v7371
          %8614 = vmatpush1.bf16.msra.mxu0 %v7370
          %8615 = vmatprep.subr.bf16.mxu0 %v7379
          %8616 = vmatpush1.bf16.msra.mxu0 %v7378
          %8617 = vmatprep.subr.bf16.mxu0 %v7387
          %8618 = vmatpush1.bf16.msra.mxu0 %v7386
          %8619 = vmatprep.subr.bf16.mxu0 %v7395
          %8620 = vmatpush1.bf16.msra.mxu0 %v7394
          %8621 = vmatprep.subr.bf16.mxu0 %v7403
          %8622 = vmatpush1.bf16.msra.mxu0 %v7402
          %8623 = vmatprep.subr.bf16.mxu0 %v7411
          %8624 = vmatpush1.bf16.msra.mxu0 %v7410
          %8625 = vmatprep.subr.bf16.mxu0 %v7419
          %8626 = vmatpush1.bf16.msra.mxu0 %v7418
          %8627 = vmatprep.subr.bf16.mxu0 %v7427
          %8628 = vmatpush1.bf16.msra.mxu0 %v7426
          %8629 = vmatprep.subr.bf16.mxu0 %v7435
          %8630 = vmatpush1.bf16.msra.mxu0 %v7434
          %8631 = vmatprep.subr.bf16.mxu0 %v7443
          %8632 = vmatpush1.bf16.msra.mxu0 %v7442
          %8633 = vmatprep.subr.bf16.mxu0 %v7451
          %8634 = vmatpush1.bf16.msra.mxu0 %v7450
          %8635 = vmatprep.subr.bf16.mxu0 %v7459
          %8636 = vmatpush1.bf16.msra.mxu0 %v7458
          %8637 = vmatprep.subr.bf16.mxu0 %v7467
          %8638 = vmatpush1.bf16.msra.mxu0 %v7466
          %8639 = vmatprep.subr.bf16.mxu0 %v7475
          %8640 = vmatpush1.bf16.msra.mxu0 %v7474
          %8641 = vmatprep.subr.bf16.mxu0 %v7483
          %8642 = vmatpush1.bf16.msra.mxu0 %v7482
          %8643 = vmatprep.mubr.bf16.mxu0 %v4881
          %8644 = vmatmul.mubr.bf16.gmra.mrb[0].mxu0 %v4880
          %v8645 = vpop.f32.mrb[0].mxu0
          %v8646 = vadd.f32 %v8605, %v8645
          %v8647 = vpop.f32.mrb[0].mxu0
          %v8648 = vadd.f32 %v8607, %v8647
          %v8649 = vpop.f32.mrb[0].mxu0
          %v8650 = vpop.f32.mrb[0].mxu0
          %8651 = vdwg.mxu0
          %v8652 = vmax.f32 %v8154, 0.0
          %v8653 = vmax.f32 %v8156, 0.0
          %v8654 = vmax.f32 %v8318, 0.0
          %v8655 = vmax.f32 %v8320, 0.0
          %v8656 = vmax.f32 %v8482, 0.0
          %v8657 = vmax.f32 %v8484, 0.0
          %v8658 = vmax.f32 %v8646, 0.0
          %v8659 = vmax.f32 %v8648, 0.0
          %v8660 = vpack.c.bf16 %v8652, %v8652
          %v8661 = vpack.c.bf16 %v8653, %v8653
          %v8662 = vpack.c.bf16 %v8654, %v8654
          %v8663 = vpack.c.bf16 %v8655, %v8655
          %v8664 = vpack.c.bf16 %v8656, %v8656
          %v8665 = vpack.c.bf16 %v8657, %v8657
          %v8666 = vpack.c.bf16 %v8658, %v8658
          %v8667 = vpack.c.bf16 %v8659, %v8659
          %v8668 = vld [vmem:[#allocation12] sm:$0xff]
          %v8669 = vld [vmem:[#allocation12 + $0x8] sm:$0xff]
          %v8670 = vld [vmem:[#allocation12 + $0x10] sm:$0xff]
          %v8671 = vld [vmem:[#allocation12 + $0x18] sm:$0xff]
          %v8672 = vld [vmem:[#allocation12 + $0x20] sm:$0xff]
          %v8673 = vld [vmem:[#allocation12 + $0x28] sm:$0xff]
          %v8674 = vld [vmem:[#allocation12 + $0x30] sm:$0xff]
          %v8675 = vld [vmem:[#allocation12 + $0x38] sm:$0xff]
          %v8676 = vld [vmem:[#allocation12 + $0x40] sm:$0xff]
          %v8677 = vld [vmem:[#allocation12 + $0x48] sm:$0xff]
          %v8678 = vld [vmem:[#allocation12 + $0x50] sm:$0xff]
          %v8679 = vld [vmem:[#allocation12 + $0x58] sm:$0xff]
          %v8680 = vld [vmem:[#allocation12 + $0x60] sm:$0xff]
          %v8681 = vld [vmem:[#allocation12 + $0x68] sm:$0xff]
          %v8682 = vld [vmem:[#allocation12 + $0x70] sm:$0xff]
          %v8683 = vld [vmem:[#allocation12 + $0x78] sm:$0xff]
          %v8684 = vld [vmem:[#allocation12 + $0x80] sm:$0xff]
          %v8685 = vld [vmem:[#allocation12 + $0x88] sm:$0xff]
          %v8686 = vld [vmem:[#allocation12 + $0x90] sm:$0xff]
          %v8687 = vld [vmem:[#allocation12 + $0x98] sm:$0xff]
          %v8688 = vld [vmem:[#allocation12 + $0xa0] sm:$0xff]
          %v8689 = vld [vmem:[#allocation12 + $0xa8] sm:$0xff]
          %v8690 = vld [vmem:[#allocation12 + $0xb0] sm:$0xff]
          %v8691 = vld [vmem:[#allocation12 + $0xb8] sm:$0xff]
          %v8692 = vld [vmem:[#allocation12 + $0xc0] sm:$0xff]
          %v8693 = vld [vmem:[#allocation12 + $0xc8] sm:$0xff]
          %v8694 = vld [vmem:[#allocation12 + $0xd0] sm:$0xff]
          %v8695 = vld [vmem:[#allocation12 + $0xd8] sm:$0xff]
          %v8696 = vld [vmem:[#allocation12 + $0xe0] sm:$0xff]
          %v8697 = vld [vmem:[#allocation12 + $0xe8] sm:$0xff]
          %v8698 = vld [vmem:[#allocation12 + $0xf0] sm:$0xff]
          %v8699 = vld [vmem:[#allocation12 + $0xf8] sm:$0xff]
          %v8700 = vld [vmem:[#allocation12 + $0x100] sm:$0xff]
          %v8701 = vld [vmem:[#allocation12 + $0x108] sm:$0xff]
          %v8702 = vld [vmem:[#allocation12 + $0x110] sm:$0xff]
          %v8703 = vld [vmem:[#allocation12 + $0x118] sm:$0xff]
          %v8704 = vld [vmem:[#allocation12 + $0x120] sm:$0xff]
          %v8705 = vld [vmem:[#allocation12 + $0x128] sm:$0xff]
          %v8706 = vld [vmem:[#allocation12 + $0x130] sm:$0xff]
          %v8707 = vld [vmem:[#allocation12 + $0x138] sm:$0xff]
          %v8708 = vld [vmem:[#allocation12 + $0x140] sm:$0xff]
          %v8709 = vld [vmem:[#allocation12 + $0x148] sm:$0xff]
          %v8710 = vld [vmem:[#allocation12 + $0x150] sm:$0xff]
          %v8711 = vld [vmem:[#allocation12 + $0x158] sm:$0xff]
          %v8712 = vld [vmem:[#allocation12 + $0x160] sm:$0xff]
          %v8713 = vld [vmem:[#allocation12 + $0x168] sm:$0xff]
          %v8714 = vld [vmem:[#allocation12 + $0x170] sm:$0xff]
          %v8715 = vld [vmem:[#allocation12 + $0x178] sm:$0xff]
          %v8716 = vld [vmem:[#allocation12 + $0x180] sm:$0xff]
          %v8717 = vld [vmem:[#allocation12 + $0x188] sm:$0xff]
          %v8718 = vld [vmem:[#allocation12 + $0x190] sm:$0xff]
          %v8719 = vld [vmem:[#allocation12 + $0x198] sm:$0xff]
          %v8720 = vld [vmem:[#allocation12 + $0x1a0] sm:$0xff]
          %v8721 = vld [vmem:[#allocation12 + $0x1a8] sm:$0xff]
          %v8722 = vld [vmem:[#allocation12 + $0x1b0] sm:$0xff]
          %v8723 = vld [vmem:[#allocation12 + $0x1b8] sm:$0xff]
          %v8724 = vld [vmem:[#allocation12 + $0x1c0] sm:$0xff]
          %v8725 = vld [vmem:[#allocation12 + $0x1c8] sm:$0xff]
          %v8726 = vld [vmem:[#allocation12 + $0x1d0] sm:$0xff]
          %v8727 = vld [vmem:[#allocation12 + $0x1d8] sm:$0xff]
          %v8728 = vld [vmem:[#allocation12 + $0x1e0] sm:$0xff]
          %v8729 = vld [vmem:[#allocation12 + $0x1e8] sm:$0xff]
          %v8730 = vld [vmem:[#allocation12 + $0x1f0] sm:$0xff]
          %v8731 = vld [vmem:[#allocation12 + $0x1f8] sm:$0xff]
          %v8732 = vld [vmem:[#allocation12 + $0x200] sm:$0xff]
          %v8733 = vld [vmem:[#allocation12 + $0x208] sm:$0xff]
          %v8734 = vld [vmem:[#allocation12 + $0x210] sm:$0xff]
          %v8735 = vld [vmem:[#allocation12 + $0x218] sm:$0xff]
          %v8736 = vld [vmem:[#allocation12 + $0x220] sm:$0xff]
          %v8737 = vld [vmem:[#allocation12 + $0x228] sm:$0xff]
          %v8738 = vld [vmem:[#allocation12 + $0x230] sm:$0xff]
          %v8739 = vld [vmem:[#allocation12 + $0x238] sm:$0xff]
          %v8740 = vld [vmem:[#allocation12 + $0x240] sm:$0xff]
          %v8741 = vld [vmem:[#allocation12 + $0x248] sm:$0xff]
          %v8742 = vld [vmem:[#allocation12 + $0x250] sm:$0xff]
          %v8743 = vld [vmem:[#allocation12 + $0x258] sm:$0xff]
          %v8744 = vld [vmem:[#allocation12 + $0x260] sm:$0xff]
          %v8745 = vld [vmem:[#allocation12 + $0x268] sm:$0xff]
          %v8746 = vld [vmem:[#allocation12 + $0x270] sm:$0xff]
          %v8747 = vld [vmem:[#allocation12 + $0x278] sm:$0xff]
          %v8748 = vld [vmem:[#allocation12 + $0x280] sm:$0xff]
          %v8749 = vld [vmem:[#allocation12 + $0x288] sm:$0xff]
          %v8750 = vld [vmem:[#allocation12 + $0x290] sm:$0xff]
          %v8751 = vld [vmem:[#allocation12 + $0x298] sm:$0xff]
          %v8752 = vld [vmem:[#allocation12 + $0x2a0] sm:$0xff]
          %v8753 = vld [vmem:[#allocation12 + $0x2a8] sm:$0xff]
          %v8754 = vld [vmem:[#allocation12 + $0x2b0] sm:$0xff]
          %v8755 = vld [vmem:[#allocation12 + $0x2b8] sm:$0xff]
          %v8756 = vld [vmem:[#allocation12 + $0x2c0] sm:$0xff]
          %v8757 = vld [vmem:[#allocation12 + $0x2c8] sm:$0xff]
          %v8758 = vld [vmem:[#allocation12 + $0x2d0] sm:$0xff]
          %v8759 = vld [vmem:[#allocation12 + $0x2d8] sm:$0xff]
          %v8760 = vld [vmem:[#allocation12 + $0x2e0] sm:$0xff]
          %v8761 = vld [vmem:[#allocation12 + $0x2e8] sm:$0xff]
          %v8762 = vld [vmem:[#allocation12 + $0x2f0] sm:$0xff]
          %v8763 = vld [vmem:[#allocation12 + $0x2f8] sm:$0xff]
          %v8764 = vld [vmem:[#allocation12 + $0x300] sm:$0xff]
          %v8765 = vld [vmem:[#allocation12 + $0x308] sm:$0xff]
          %v8766 = vld [vmem:[#allocation12 + $0x310] sm:$0xff]
          %v8767 = vld [vmem:[#allocation12 + $0x318] sm:$0xff]
          %v8768 = vld [vmem:[#allocation12 + $0x320] sm:$0xff]
          %v8769 = vld [vmem:[#allocation12 + $0x328] sm:$0xff]
          %v8770 = vld [vmem:[#allocation12 + $0x330] sm:$0xff]
          %v8771 = vld [vmem:[#allocation12 + $0x338] sm:$0xff]
          %v8772 = vld [vmem:[#allocation12 + $0x340] sm:$0xff]
          %v8773 = vld [vmem:[#allocation12 + $0x348] sm:$0xff]
          %v8774 = vld [vmem:[#allocation12 + $0x350] sm:$0xff]
          %v8775 = vld [vmem:[#allocation12 + $0x358] sm:$0xff]
          %v8776 = vld [vmem:[#allocation12 + $0x360] sm:$0xff]
          %v8777 = vld [vmem:[#allocation12 + $0x368] sm:$0xff]
          %v8778 = vld [vmem:[#allocation12 + $0x370] sm:$0xff]
          %v8779 = vld [vmem:[#allocation12 + $0x378] sm:$0xff]
          %v8780 = vld [vmem:[#allocation12 + $0x380] sm:$0xff]
          %v8781 = vld [vmem:[#allocation12 + $0x388] sm:$0xff]
          %v8782 = vld [vmem:[#allocation12 + $0x390] sm:$0xff]
          %v8783 = vld [vmem:[#allocation12 + $0x398] sm:$0xff]
          %v8784 = vld [vmem:[#allocation12 + $0x3a0] sm:$0xff]
          %v8785 = vld [vmem:[#allocation12 + $0x3a8] sm:$0xff]
          %v8786 = vld [vmem:[#allocation12 + $0x3b0] sm:$0xff]
          %v8787 = vld [vmem:[#allocation12 + $0x3b8] sm:$0xff]
          %v8788 = vld [vmem:[#allocation12 + $0x3c0] sm:$0xff]
          %v8789 = vld [vmem:[#allocation12 + $0x3c8] sm:$0xff]
          %v8790 = vld [vmem:[#allocation12 + $0x3d0] sm:$0xff]
          %v8791 = vld [vmem:[#allocation12 + $0x3d8] sm:$0xff]
          %v8792 = vld [vmem:[#allocation12 + $0x3e0] sm:$0xff]
          %v8793 = vld [vmem:[#allocation12 + $0x3e8] sm:$0xff]
          %v8794 = vld [vmem:[#allocation12 + $0x3f0] sm:$0xff]
          %v8795 = vld [vmem:[#allocation12 + $0x3f8] sm:$0xff]
          %v8796 = vld [vmem:[#allocation12 + $0x400] sm:$0xff]
          %v8797 = vld [vmem:[#allocation12 + $0x408] sm:$0xff]
          %v8798 = vld [vmem:[#allocation12 + $0x410] sm:$0xff]
          %v8799 = vld [vmem:[#allocation12 + $0x418] sm:$0xff]
          %v8800 = vld [vmem:[#allocation12 + $0x420] sm:$0xff]
          %v8801 = vld [vmem:[#allocation12 + $0x428] sm:$0xff]
          %v8802 = vld [vmem:[#allocation12 + $0x430] sm:$0xff]
          %v8803 = vld [vmem:[#allocation12 + $0x438] sm:$0xff]
          %v8804 = vld [vmem:[#allocation12 + $0x440] sm:$0xff]
          %v8805 = vld [vmem:[#allocation12 + $0x448] sm:$0xff]
          %v8806 = vld [vmem:[#allocation12 + $0x450] sm:$0xff]
          %v8807 = vld [vmem:[#allocation12 + $0x458] sm:$0xff]
          %v8808 = vld [vmem:[#allocation12 + $0x460] sm:$0xff]
          %v8809 = vld [vmem:[#allocation12 + $0x468] sm:$0xff]
          %v8810 = vld [vmem:[#allocation12 + $0x470] sm:$0xff]
          %v8811 = vld [vmem:[#allocation12 + $0x478] sm:$0xff]
          %v8812 = vld [vmem:[#allocation12 + $0x480] sm:$0xff]
          %v8813 = vld [vmem:[#allocation12 + $0x488] sm:$0xff]
          %v8814 = vld [vmem:[#allocation12 + $0x490] sm:$0xff]
          %v8815 = vld [vmem:[#allocation12 + $0x498] sm:$0xff]
          %v8816 = vld [vmem:[#allocation12 + $0x4a0] sm:$0xff]
          %v8817 = vld [vmem:[#allocation12 + $0x4a8] sm:$0xff]
          %v8818 = vld [vmem:[#allocation12 + $0x4b0] sm:$0xff]
          %v8819 = vld [vmem:[#allocation12 + $0x4b8] sm:$0xff]
          %v8820 = vld [vmem:[#allocation12 + $0x4c0] sm:$0xff]
          %v8821 = vld [vmem:[#allocation12 + $0x4c8] sm:$0xff]
          %v8822 = vld [vmem:[#allocation12 + $0x4d0] sm:$0xff]
          %v8823 = vld [vmem:[#allocation12 + $0x4d8] sm:$0xff]
          %v8824 = vld [vmem:[#allocation12 + $0x4e0] sm:$0xff]
          %v8825 = vld [vmem:[#allocation12 + $0x4e8] sm:$0xff]
          %v8826 = vld [vmem:[#allocation12 + $0x4f0] sm:$0xff]
          %v8827 = vld [vmem:[#allocation12 + $0x4f8] sm:$0xff]
          %v8828 = vld [vmem:[#allocation12 + $0x500] sm:$0xff]
          %v8829 = vld [vmem:[#allocation12 + $0x508] sm:$0xff]
          %v8830 = vld [vmem:[#allocation12 + $0x510] sm:$0xff]
          %v8831 = vld [vmem:[#allocation12 + $0x518] sm:$0xff]
          %v8832 = vld [vmem:[#allocation12 + $0x520] sm:$0xff]
          %v8833 = vld [vmem:[#allocation12 + $0x528] sm:$0xff]
          %v8834 = vld [vmem:[#allocation12 + $0x530] sm:$0xff]
          %v8835 = vld [vmem:[#allocation12 + $0x538] sm:$0xff]
          %v8836 = vld [vmem:[#allocation12 + $0x540] sm:$0xff]
          %v8837 = vld [vmem:[#allocation12 + $0x548] sm:$0xff]
          %v8838 = vld [vmem:[#allocation12 + $0x550] sm:$0xff]
          %v8839 = vld [vmem:[#allocation12 + $0x558] sm:$0xff]
          %v8840 = vld [vmem:[#allocation12 + $0x560] sm:$0xff]
          %v8841 = vld [vmem:[#allocation12 + $0x568] sm:$0xff]
          %v8842 = vld [vmem:[#allocation12 + $0x570] sm:$0xff]
          %v8843 = vld [vmem:[#allocation12 + $0x578] sm:$0xff]
          %v8844 = vld [vmem:[#allocation12 + $0x580] sm:$0xff]
          %v8845 = vld [vmem:[#allocation12 + $0x588] sm:$0xff]
          %v8846 = vld [vmem:[#allocation12 + $0x590] sm:$0xff]
          %v8847 = vld [vmem:[#allocation12 + $0x598] sm:$0xff]
          %v8848 = vld [vmem:[#allocation12 + $0x5a0] sm:$0xff]
          %v8849 = vld [vmem:[#allocation12 + $0x5a8] sm:$0xff]
          %v8850 = vld [vmem:[#allocation12 + $0x5b0] sm:$0xff]
          %v8851 = vld [vmem:[#allocation12 + $0x5b8] sm:$0xff]
          %v8852 = vld [vmem:[#allocation12 + $0x5c0] sm:$0xff]
          %v8853 = vld [vmem:[#allocation12 + $0x5c8] sm:$0xff]
          %v8854 = vld [vmem:[#allocation12 + $0x5d0] sm:$0xff]
          %v8855 = vld [vmem:[#allocation12 + $0x5d8] sm:$0xff]
          %v8856 = vld [vmem:[#allocation12 + $0x5e0] sm:$0xff]
          %v8857 = vld [vmem:[#allocation12 + $0x5e8] sm:$0xff]
          %v8858 = vld [vmem:[#allocation12 + $0x5f0] sm:$0xff]
          %v8859 = vld [vmem:[#allocation12 + $0x5f8] sm:$0xff]
          %v8860 = vld [vmem:[#allocation12 + $0x600] sm:$0xff]
          %v8861 = vld [vmem:[#allocation12 + $0x608] sm:$0xff]
          %v8862 = vld [vmem:[#allocation12 + $0x610] sm:$0xff]
          %v8863 = vld [vmem:[#allocation12 + $0x618] sm:$0xff]
          %v8864 = vld [vmem:[#allocation12 + $0x620] sm:$0xff]
          %v8865 = vld [vmem:[#allocation12 + $0x628] sm:$0xff]
          %v8866 = vld [vmem:[#allocation12 + $0x630] sm:$0xff]
          %v8867 = vld [vmem:[#allocation12 + $0x638] sm:$0xff]
          %v8868 = vld [vmem:[#allocation12 + $0x640] sm:$0xff]
          %v8869 = vld [vmem:[#allocation12 + $0x648] sm:$0xff]
          %v8870 = vld [vmem:[#allocation12 + $0x650] sm:$0xff]
          %v8871 = vld [vmem:[#allocation12 + $0x658] sm:$0xff]
          %v8872 = vld [vmem:[#allocation12 + $0x660] sm:$0xff]
          %v8873 = vld [vmem:[#allocation12 + $0x668] sm:$0xff]
          %v8874 = vld [vmem:[#allocation12 + $0x670] sm:$0xff]
          %v8875 = vld [vmem:[#allocation12 + $0x678] sm:$0xff]
          %v8876 = vld [vmem:[#allocation12 + $0x680] sm:$0xff]
          %v8877 = vld [vmem:[#allocation12 + $0x688] sm:$0xff]
          %v8878 = vld [vmem:[#allocation12 + $0x690] sm:$0xff]
          %v8879 = vld [vmem:[#allocation12 + $0x698] sm:$0xff]
          %v8880 = vld [vmem:[#allocation12 + $0x6a0] sm:$0xff]
          %v8881 = vld [vmem:[#allocation12 + $0x6a8] sm:$0xff]
          %v8882 = vld [vmem:[#allocation12 + $0x6b0] sm:$0xff]
          %v8883 = vld [vmem:[#allocation12 + $0x6b8] sm:$0xff]
          %v8884 = vld [vmem:[#allocation12 + $0x6c0] sm:$0xff]
          %v8885 = vld [vmem:[#allocation12 + $0x6c8] sm:$0xff]
          %v8886 = vld [vmem:[#allocation12 + $0x6d0] sm:$0xff]
          %v8887 = vld [vmem:[#allocation12 + $0x6d8] sm:$0xff]
          %v8888 = vld [vmem:[#allocation12 + $0x6e0] sm:$0xff]
          %v8889 = vld [vmem:[#allocation12 + $0x6e8] sm:$0xff]
          %v8890 = vld [vmem:[#allocation12 + $0x6f0] sm:$0xff]
          %v8891 = vld [vmem:[#allocation12 + $0x6f8] sm:$0xff]
          %v8892 = vld [vmem:[#allocation12 + $0x700] sm:$0xff]
          %v8893 = vld [vmem:[#allocation12 + $0x708] sm:$0xff]
          %v8894 = vld [vmem:[#allocation12 + $0x710] sm:$0xff]
          %v8895 = vld [vmem:[#allocation12 + $0x718] sm:$0xff]
          %v8896 = vld [vmem:[#allocation12 + $0x720] sm:$0xff]
          %v8897 = vld [vmem:[#allocation12 + $0x728] sm:$0xff]
          %v8898 = vld [vmem:[#allocation12 + $0x730] sm:$0xff]
          %v8899 = vld [vmem:[#allocation12 + $0x738] sm:$0xff]
          %v8900 = vld [vmem:[#allocation12 + $0x740] sm:$0xff]
          %v8901 = vld [vmem:[#allocation12 + $0x748] sm:$0xff]
          %v8902 = vld [vmem:[#allocation12 + $0x750] sm:$0xff]
          %v8903 = vld [vmem:[#allocation12 + $0x758] sm:$0xff]
          %v8904 = vld [vmem:[#allocation12 + $0x760] sm:$0xff]
          %v8905 = vld [vmem:[#allocation12 + $0x768] sm:$0xff]
          %v8906 = vld [vmem:[#allocation12 + $0x770] sm:$0xff]
          %v8907 = vld [vmem:[#allocation12 + $0x778] sm:$0xff]
          %v8908 = vld [vmem:[#allocation12 + $0x780] sm:$0xff]
          %v8909 = vld [vmem:[#allocation12 + $0x788] sm:$0xff]
          %v8910 = vld [vmem:[#allocation12 + $0x790] sm:$0xff]
          %v8911 = vld [vmem:[#allocation12 + $0x798] sm:$0xff]
          %v8912 = vld [vmem:[#allocation12 + $0x7a0] sm:$0xff]
          %v8913 = vld [vmem:[#allocation12 + $0x7a8] sm:$0xff]
          %v8914 = vld [vmem:[#allocation12 + $0x7b0] sm:$0xff]
          %v8915 = vld [vmem:[#allocation12 + $0x7b8] sm:$0xff]
          %v8916 = vld [vmem:[#allocation12 + $0x7c0] sm:$0xff]
          %v8917 = vld [vmem:[#allocation12 + $0x7c8] sm:$0xff]
          %v8918 = vld [vmem:[#allocation12 + $0x7d0] sm:$0xff]
          %v8919 = vld [vmem:[#allocation12 + $0x7d8] sm:$0xff]
          %v8920 = vld [vmem:[#allocation12 + $0x7e0] sm:$0xff]
          %v8921 = vld [vmem:[#allocation12 + $0x7e8] sm:$0xff]
          %v8922 = vld [vmem:[#allocation12 + $0x7f0] sm:$0xff]
          %v8923 = vld [vmem:[#allocation12 + $0x7f8] sm:$0xff]
          %v8924 = vld [vmem:[#allocation12 + $0x800] sm:$0xff]
          %v8925 = vld [vmem:[#allocation12 + $0x808] sm:$0xff]
          %v8926 = vld [vmem:[#allocation12 + $0x810] sm:$0xff]
          %v8927 = vld [vmem:[#allocation12 + $0x818] sm:$0xff]
          %v8928 = vld [vmem:[#allocation12 + $0x820] sm:$0xff]
          %v8929 = vld [vmem:[#allocation12 + $0x828] sm:$0xff]
          %v8930 = vld [vmem:[#allocation12 + $0x830] sm:$0xff]
          %v8931 = vld [vmem:[#allocation12 + $0x838] sm:$0xff]
          %v8932 = vld [vmem:[#allocation12 + $0x840] sm:$0xff]
          %v8933 = vld [vmem:[#allocation12 + $0x848] sm:$0xff]
          %v8934 = vld [vmem:[#allocation12 + $0x850] sm:$0xff]
          %v8935 = vld [vmem:[#allocation12 + $0x858] sm:$0xff]
          %v8936 = vld [vmem:[#allocation12 + $0x860] sm:$0xff]
          %v8937 = vld [vmem:[#allocation12 + $0x868] sm:$0xff]
          %v8938 = vld [vmem:[#allocation12 + $0x870] sm:$0xff]
          %v8939 = vld [vmem:[#allocation12 + $0x878] sm:$0xff]
          %v8940 = vld [vmem:[#allocation12 + $0x880] sm:$0xff]
          %v8941 = vld [vmem:[#allocation12 + $0x888] sm:$0xff]
          %v8942 = vld [vmem:[#allocation12 + $0x890] sm:$0xff]
          %v8943 = vld [vmem:[#allocation12 + $0x898] sm:$0xff]
          %v8944 = vld [vmem:[#allocation12 + $0x8a0] sm:$0xff]
          %v8945 = vld [vmem:[#allocation12 + $0x8a8] sm:$0xff]
          %v8946 = vld [vmem:[#allocation12 + $0x8b0] sm:$0xff]
          %v8947 = vld [vmem:[#allocation12 + $0x8b8] sm:$0xff]
          %v8948 = vld [vmem:[#allocation12 + $0x8c0] sm:$0xff]
          %v8949 = vld [vmem:[#allocation12 + $0x8c8] sm:$0xff]
          %v8950 = vld [vmem:[#allocation12 + $0x8d0] sm:$0xff]
          %v8951 = vld [vmem:[#allocation12 + $0x8d8] sm:$0xff]
          %v8952 = vld [vmem:[#allocation12 + $0x8e0] sm:$0xff]
          %v8953 = vld [vmem:[#allocation12 + $0x8e8] sm:$0xff]
          %v8954 = vld [vmem:[#allocation12 + $0x8f0] sm:$0xff]
          %v8955 = vld [vmem:[#allocation12 + $0x8f8] sm:$0xff]
          %v8956 = vld [vmem:[#allocation12 + $0x900] sm:$0xff]
          %v8957 = vld [vmem:[#allocation12 + $0x908] sm:$0xff]
          %v8958 = vld [vmem:[#allocation12 + $0x910] sm:$0xff]
          %v8959 = vld [vmem:[#allocation12 + $0x918] sm:$0xff]
          %v8960 = vld [vmem:[#allocation12 + $0x920] sm:$0xff]
          %v8961 = vld [vmem:[#allocation12 + $0x928] sm:$0xff]
          %v8962 = vld [vmem:[#allocation12 + $0x930] sm:$0xff]
          %v8963 = vld [vmem:[#allocation12 + $0x938] sm:$0xff]
          %v8964 = vld [vmem:[#allocation12 + $0x940] sm:$0xff]
          %v8965 = vld [vmem:[#allocation12 + $0x948] sm:$0xff]
          %v8966 = vld [vmem:[#allocation12 + $0x950] sm:$0xff]
          %v8967 = vld [vmem:[#allocation12 + $0x958] sm:$0xff]
          %v8968 = vld [vmem:[#allocation12 + $0x960] sm:$0xff]
          %v8969 = vld [vmem:[#allocation12 + $0x968] sm:$0xff]
          %v8970 = vld [vmem:[#allocation12 + $0x970] sm:$0xff]
          %v8971 = vld [vmem:[#allocation12 + $0x978] sm:$0xff]
          %v8972 = vld [vmem:[#allocation12 + $0x980] sm:$0xff]
          %v8973 = vld [vmem:[#allocation12 + $0x988] sm:$0xff]
          %v8974 = vld [vmem:[#allocation12 + $0x990] sm:$0xff]
          %v8975 = vld [vmem:[#allocation12 + $0x998] sm:$0xff]
          %v8976 = vld [vmem:[#allocation12 + $0x9a0] sm:$0xff]
          %v8977 = vld [vmem:[#allocation12 + $0x9a8] sm:$0xff]
          %v8978 = vld [vmem:[#allocation12 + $0x9b0] sm:$0xff]
          %v8979 = vld [vmem:[#allocation12 + $0x9b8] sm:$0xff]
          %v8980 = vld [vmem:[#allocation12 + $0x9c0] sm:$0xff]
          %v8981 = vld [vmem:[#allocation12 + $0x9c8] sm:$0xff]
          %v8982 = vld [vmem:[#allocation12 + $0x9d0] sm:$0xff]
          %v8983 = vld [vmem:[#allocation12 + $0x9d8] sm:$0xff]
          %v8984 = vld [vmem:[#allocation12 + $0x9e0] sm:$0xff]
          %v8985 = vld [vmem:[#allocation12 + $0x9e8] sm:$0xff]
          %v8986 = vld [vmem:[#allocation12 + $0x9f0] sm:$0xff]
          %v8987 = vld [vmem:[#allocation12 + $0x9f8] sm:$0xff]
          %v8988 = vld [vmem:[#allocation12 + $0xa00] sm:$0xff]
          %v8989 = vld [vmem:[#allocation12 + $0xa08] sm:$0xff]
          %v8990 = vld [vmem:[#allocation12 + $0xa10] sm:$0xff]
          %v8991 = vld [vmem:[#allocation12 + $0xa18] sm:$0xff]
          %v8992 = vld [vmem:[#allocation12 + $0xa20] sm:$0xff]
          %v8993 = vld [vmem:[#allocation12 + $0xa28] sm:$0xff]
          %v8994 = vld [vmem:[#allocation12 + $0xa30] sm:$0xff]
          %v8995 = vld [vmem:[#allocation12 + $0xa38] sm:$0xff]
          %v8996 = vld [vmem:[#allocation12 + $0xa40] sm:$0xff]
          %v8997 = vld [vmem:[#allocation12 + $0xa48] sm:$0xff]
          %v8998 = vld [vmem:[#allocation12 + $0xa50] sm:$0xff]
          %v8999 = vld [vmem:[#allocation12 + $0xa58] sm:$0xff]
          %v9000 = vld [vmem:[#allocation12 + $0xa60] sm:$0xff]
          %v9001 = vld [vmem:[#allocation12 + $0xa68] sm:$0xff]
          %v9002 = vld [vmem:[#allocation12 + $0xa70] sm:$0xff]
          %v9003 = vld [vmem:[#allocation12 + $0xa78] sm:$0xff]
          %v9004 = vld [vmem:[#allocation12 + $0xa80] sm:$0xff]
          %v9005 = vld [vmem:[#allocation12 + $0xa88] sm:$0xff]
          %v9006 = vld [vmem:[#allocation12 + $0xa90] sm:$0xff]
          %v9007 = vld [vmem:[#allocation12 + $0xa98] sm:$0xff]
          %v9008 = vld [vmem:[#allocation12 + $0xaa0] sm:$0xff]
          %v9009 = vld [vmem:[#allocation12 + $0xaa8] sm:$0xff]
          %v9010 = vld [vmem:[#allocation12 + $0xab0] sm:$0xff]
          %v9011 = vld [vmem:[#allocation12 + $0xab8] sm:$0xff]
          %v9012 = vld [vmem:[#allocation12 + $0xac0] sm:$0xff]
          %v9013 = vld [vmem:[#allocation12 + $0xac8] sm:$0xff]
          %v9014 = vld [vmem:[#allocation12 + $0xad0] sm:$0xff]
          %v9015 = vld [vmem:[#allocation12 + $0xad8] sm:$0xff]
          %v9016 = vld [vmem:[#allocation12 + $0xae0] sm:$0xff]
          %v9017 = vld [vmem:[#allocation12 + $0xae8] sm:$0xff]
          %v9018 = vld [vmem:[#allocation12 + $0xaf0] sm:$0xff]
          %v9019 = vld [vmem:[#allocation12 + $0xaf8] sm:$0xff]
          %v9020 = vld [vmem:[#allocation12 + $0xb00] sm:$0xff]
          %v9021 = vld [vmem:[#allocation12 + $0xb08] sm:$0xff]
          %v9022 = vld [vmem:[#allocation12 + $0xb10] sm:$0xff]
          %v9023 = vld [vmem:[#allocation12 + $0xb18] sm:$0xff]
          %v9024 = vld [vmem:[#allocation12 + $0xb20] sm:$0xff]
          %v9025 = vld [vmem:[#allocation12 + $0xb28] sm:$0xff]
          %v9026 = vld [vmem:[#allocation12 + $0xb30] sm:$0xff]
          %v9027 = vld [vmem:[#allocation12 + $0xb38] sm:$0xff]
          %v9028 = vld [vmem:[#allocation12 + $0xb40] sm:$0xff]
          %v9029 = vld [vmem:[#allocation12 + $0xb48] sm:$0xff]
          %v9030 = vld [vmem:[#allocation12 + $0xb50] sm:$0xff]
          %v9031 = vld [vmem:[#allocation12 + $0xb58] sm:$0xff]
          %v9032 = vld [vmem:[#allocation12 + $0xb60] sm:$0xff]
          %v9033 = vld [vmem:[#allocation12 + $0xb68] sm:$0xff]
          %v9034 = vld [vmem:[#allocation12 + $0xb70] sm:$0xff]
          %v9035 = vld [vmem:[#allocation12 + $0xb78] sm:$0xff]
          %v9036 = vld [vmem:[#allocation12 + $0xb80] sm:$0xff]
          %v9037 = vld [vmem:[#allocation12 + $0xb88] sm:$0xff]
          %v9038 = vld [vmem:[#allocation12 + $0xb90] sm:$0xff]
          %v9039 = vld [vmem:[#allocation12 + $0xb98] sm:$0xff]
          %v9040 = vld [vmem:[#allocation12 + $0xba0] sm:$0xff]
          %v9041 = vld [vmem:[#allocation12 + $0xba8] sm:$0xff]
          %v9042 = vld [vmem:[#allocation12 + $0xbb0] sm:$0xff]
          %v9043 = vld [vmem:[#allocation12 + $0xbb8] sm:$0xff]
          %v9044 = vld [vmem:[#allocation12 + $0xbc0] sm:$0xff]
          %v9045 = vld [vmem:[#allocation12 + $0xbc8] sm:$0xff]
          %v9046 = vld [vmem:[#allocation12 + $0xbd0] sm:$0xff]
          %v9047 = vld [vmem:[#allocation12 + $0xbd8] sm:$0xff]
          %v9048 = vld [vmem:[#allocation12 + $0xbe0] sm:$0xff]
          %v9049 = vld [vmem:[#allocation12 + $0xbe8] sm:$0xff]
          %v9050 = vld [vmem:[#allocation12 + $0xbf0] sm:$0xff]
          %v9051 = vld [vmem:[#allocation12 + $0xbf8] sm:$0xff]
          %v9052 = vld [vmem:[#allocation12 + $0xc00] sm:$0xff]
          %v9053 = vld [vmem:[#allocation12 + $0xc08] sm:$0xff]
          %v9054 = vld [vmem:[#allocation12 + $0xc10] sm:$0xff]
          %v9055 = vld [vmem:[#allocation12 + $0xc18] sm:$0xff]
          %v9056 = vld [vmem:[#allocation12 + $0xc20] sm:$0xff]
          %v9057 = vld [vmem:[#allocation12 + $0xc28] sm:$0xff]
          %v9058 = vld [vmem:[#allocation12 + $0xc30] sm:$0xff]
          %v9059 = vld [vmem:[#allocation12 + $0xc38] sm:$0xff]
          %v9060 = vld [vmem:[#allocation12 + $0xc40] sm:$0xff]
          %v9061 = vld [vmem:[#allocation12 + $0xc48] sm:$0xff]
          %v9062 = vld [vmem:[#allocation12 + $0xc50] sm:$0xff]
          %v9063 = vld [vmem:[#allocation12 + $0xc58] sm:$0xff]
          %v9064 = vld [vmem:[#allocation12 + $0xc60] sm:$0xff]
          %v9065 = vld [vmem:[#allocation12 + $0xc68] sm:$0xff]
          %v9066 = vld [vmem:[#allocation12 + $0xc70] sm:$0xff]
          %v9067 = vld [vmem:[#allocation12 + $0xc78] sm:$0xff]
          %v9068 = vld [vmem:[#allocation12 + $0xc80] sm:$0xff]
          %v9069 = vld [vmem:[#allocation12 + $0xc88] sm:$0xff]
          %v9070 = vld [vmem:[#allocation12 + $0xc90] sm:$0xff]
          %v9071 = vld [vmem:[#allocation12 + $0xc98] sm:$0xff]
          %v9072 = vld [vmem:[#allocation12 + $0xca0] sm:$0xff]
          %v9073 = vld [vmem:[#allocation12 + $0xca8] sm:$0xff]
          %v9074 = vld [vmem:[#allocation12 + $0xcb0] sm:$0xff]
          %v9075 = vld [vmem:[#allocation12 + $0xcb8] sm:$0xff]
          %v9076 = vld [vmem:[#allocation12 + $0xcc0] sm:$0xff]
          %v9077 = vld [vmem:[#allocation12 + $0xcc8] sm:$0xff]
          %v9078 = vld [vmem:[#allocation12 + $0xcd0] sm:$0xff]
          %v9079 = vld [vmem:[#allocation12 + $0xcd8] sm:$0xff]
          %v9080 = vld [vmem:[#allocation12 + $0xce0] sm:$0xff]
          %v9081 = vld [vmem:[#allocation12 + $0xce8] sm:$0xff]
          %v9082 = vld [vmem:[#allocation12 + $0xcf0] sm:$0xff]
          %v9083 = vld [vmem:[#allocation12 + $0xcf8] sm:$0xff]
          %v9084 = vld [vmem:[#allocation12 + $0xd00] sm:$0xff]
          %v9085 = vld [vmem:[#allocation12 + $0xd08] sm:$0xff]
          %v9086 = vld [vmem:[#allocation12 + $0xd10] sm:$0xff]
          %v9087 = vld [vmem:[#allocation12 + $0xd18] sm:$0xff]
          %v9088 = vld [vmem:[#allocation12 + $0xd20] sm:$0xff]
          %v9089 = vld [vmem:[#allocation12 + $0xd28] sm:$0xff]
          %v9090 = vld [vmem:[#allocation12 + $0xd30] sm:$0xff]
          %v9091 = vld [vmem:[#allocation12 + $0xd38] sm:$0xff]
          %v9092 = vld [vmem:[#allocation12 + $0xd40] sm:$0xff]
          %v9093 = vld [vmem:[#allocation12 + $0xd48] sm:$0xff]
          %v9094 = vld [vmem:[#allocation12 + $0xd50] sm:$0xff]
          %v9095 = vld [vmem:[#allocation12 + $0xd58] sm:$0xff]
          %v9096 = vld [vmem:[#allocation12 + $0xd60] sm:$0xff]
          %v9097 = vld [vmem:[#allocation12 + $0xd68] sm:$0xff]
          %v9098 = vld [vmem:[#allocation12 + $0xd70] sm:$0xff]
          %v9099 = vld [vmem:[#allocation12 + $0xd78] sm:$0xff]
          %v9100 = vld [vmem:[#allocation12 + $0xd80] sm:$0xff]
          %v9101 = vld [vmem:[#allocation12 + $0xd88] sm:$0xff]
          %v9102 = vld [vmem:[#allocation12 + $0xd90] sm:$0xff]
          %v9103 = vld [vmem:[#allocation12 + $0xd98] sm:$0xff]
          %v9104 = vld [vmem:[#allocation12 + $0xda0] sm:$0xff]
          %v9105 = vld [vmem:[#allocation12 + $0xda8] sm:$0xff]
          %v9106 = vld [vmem:[#allocation12 + $0xdb0] sm:$0xff]
          %v9107 = vld [vmem:[#allocation12 + $0xdb8] sm:$0xff]
          %v9108 = vld [vmem:[#allocation12 + $0xdc0] sm:$0xff]
          %v9109 = vld [vmem:[#allocation12 + $0xdc8] sm:$0xff]
          %v9110 = vld [vmem:[#allocation12 + $0xdd0] sm:$0xff]
          %v9111 = vld [vmem:[#allocation12 + $0xdd8] sm:$0xff]
          %v9112 = vld [vmem:[#allocation12 + $0xde0] sm:$0xff]
          %v9113 = vld [vmem:[#allocation12 + $0xde8] sm:$0xff]
          %v9114 = vld [vmem:[#allocation12 + $0xdf0] sm:$0xff]
          %v9115 = vld [vmem:[#allocation12 + $0xdf8] sm:$0xff]
          %v9116 = vld [vmem:[#allocation12 + $0xe00] sm:$0xff]
          %v9117 = vld [vmem:[#allocation12 + $0xe08] sm:$0xff]
          %v9118 = vld [vmem:[#allocation12 + $0xe10] sm:$0xff]
          %v9119 = vld [vmem:[#allocation12 + $0xe18] sm:$0xff]
          %v9120 = vld [vmem:[#allocation12 + $0xe20] sm:$0xff]
          %v9121 = vld [vmem:[#allocation12 + $0xe28] sm:$0xff]
          %v9122 = vld [vmem:[#allocation12 + $0xe30] sm:$0xff]
          %v9123 = vld [vmem:[#allocation12 + $0xe38] sm:$0xff]
          %v9124 = vld [vmem:[#allocation12 + $0xe40] sm:$0xff]
          %v9125 = vld [vmem:[#allocation12 + $0xe48] sm:$0xff]
          %v9126 = vld [vmem:[#allocation12 + $0xe50] sm:$0xff]
          %v9127 = vld [vmem:[#allocation12 + $0xe58] sm:$0xff]
          %v9128 = vld [vmem:[#allocation12 + $0xe60] sm:$0xff]
          %v9129 = vld [vmem:[#allocation12 + $0xe68] sm:$0xff]
          %v9130 = vld [vmem:[#allocation12 + $0xe70] sm:$0xff]
          %v9131 = vld [vmem:[#allocation12 + $0xe78] sm:$0xff]
          %v9132 = vld [vmem:[#allocation12 + $0xe80] sm:$0xff]
          %v9133 = vld [vmem:[#allocation12 + $0xe88] sm:$0xff]
          %v9134 = vld [vmem:[#allocation12 + $0xe90] sm:$0xff]
          %v9135 = vld [vmem:[#allocation12 + $0xe98] sm:$0xff]
          %v9136 = vld [vmem:[#allocation12 + $0xea0] sm:$0xff]
          %v9137 = vld [vmem:[#allocation12 + $0xea8] sm:$0xff]
          %v9138 = vld [vmem:[#allocation12 + $0xeb0] sm:$0xff]
          %v9139 = vld [vmem:[#allocation12 + $0xeb8] sm:$0xff]
          %v9140 = vld [vmem:[#allocation12 + $0xec0] sm:$0xff]
          %v9141 = vld [vmem:[#allocation12 + $0xec8] sm:$0xff]
          %v9142 = vld [vmem:[#allocation12 + $0xed0] sm:$0xff]
          %v9143 = vld [vmem:[#allocation12 + $0xed8] sm:$0xff]
          %v9144 = vld [vmem:[#allocation12 + $0xee0] sm:$0xff]
          %v9145 = vld [vmem:[#allocation12 + $0xee8] sm:$0xff]
          %v9146 = vld [vmem:[#allocation12 + $0xef0] sm:$0xff]
          %v9147 = vld [vmem:[#allocation12 + $0xef8] sm:$0xff]
          %v9148 = vld [vmem:[#allocation12 + $0xf00] sm:$0xff]
          %v9149 = vld [vmem:[#allocation12 + $0xf08] sm:$0xff]
          %v9150 = vld [vmem:[#allocation12 + $0xf10] sm:$0xff]
          %v9151 = vld [vmem:[#allocation12 + $0xf18] sm:$0xff]
          %v9152 = vld [vmem:[#allocation12 + $0xf20] sm:$0xff]
          %v9153 = vld [vmem:[#allocation12 + $0xf28] sm:$0xff]
          %v9154 = vld [vmem:[#allocation12 + $0xf30] sm:$0xff]
          %v9155 = vld [vmem:[#allocation12 + $0xf38] sm:$0xff]
          %v9156 = vld [vmem:[#allocation12 + $0xf40] sm:$0xff]
          %v9157 = vld [vmem:[#allocation12 + $0xf48] sm:$0xff]
          %v9158 = vld [vmem:[#allocation12 + $0xf50] sm:$0xff]
          %v9159 = vld [vmem:[#allocation12 + $0xf58] sm:$0xff]
          %v9160 = vld [vmem:[#allocation12 + $0xf60] sm:$0xff]
          %v9161 = vld [vmem:[#allocation12 + $0xf68] sm:$0xff]
          %v9162 = vld [vmem:[#allocation12 + $0xf70] sm:$0xff]
          %v9163 = vld [vmem:[#allocation12 + $0xf78] sm:$0xff]
          %v9164 = vld [vmem:[#allocation12 + $0xf80] sm:$0xff]
          %v9165 = vld [vmem:[#allocation12 + $0xf88] sm:$0xff]
          %v9166 = vld [vmem:[#allocation12 + $0xf90] sm:$0xff]
          %v9167 = vld [vmem:[#allocation12 + $0xf98] sm:$0xff]
          %v9168 = vld [vmem:[#allocation12 + $0xfa0] sm:$0xff]
          %v9169 = vld [vmem:[#allocation12 + $0xfa8] sm:$0xff]
          %v9170 = vld [vmem:[#allocation12 + $0xfb0] sm:$0xff]
          %v9171 = vld [vmem:[#allocation12 + $0xfb8] sm:$0xff]
          %v9172 = vld [vmem:[#allocation12 + $0xfc0] sm:$0xff]
          %v9173 = vld [vmem:[#allocation12 + $0xfc8] sm:$0xff]
          %v9174 = vld [vmem:[#allocation12 + $0xfd0] sm:$0xff]
          %v9175 = vld [vmem:[#allocation12 + $0xfd8] sm:$0xff]
          %v9176 = vld [vmem:[#allocation12 + $0xfe0] sm:$0xff]
          %v9177 = vld [vmem:[#allocation12 + $0xfe8] sm:$0xff]
          %v9178 = vld [vmem:[#allocation12 + $0xff0] sm:$0xff]
          %v9179 = vld [vmem:[#allocation12 + $0xff8] sm:$0xff]
          %v9180 = vld [vmem:[#allocation14] sm:$0xff]
          %v9182 = vlaneseq
          %v9183 = vshrl.u32 %v9182, 7
          %v9184 = vsub.s32 0, %v9183
          %v9185 = vrot.slane %v9180, %v9184
          %v9186 = vlaneseq
          %v9187 = vshrl.u32 %v9186, 7
          %v9188 = vsub.s32 1, %v9187
          %v9189 = vrot.slane %v9180, %v9188
          %v9190 = vlaneseq
          %v9191 = vshrl.u32 %v9190, 7
          %v9192 = vsub.s32 2, %v9191
          %v9193 = vrot.slane %v9180, %v9192
          %v9194 = vlaneseq
          %v9195 = vshrl.u32 %v9194, 7
          %v9196 = vsub.s32 3, %v9195
          %v9197 = vrot.slane %v9180, %v9196
          %v9198 = vlaneseq
          %v9199 = vshrl.u32 %v9198, 7
          %v9200 = vsub.s32 4, %v9199
          %v9201 = vrot.slane %v9180, %v9200
          %v9202 = vlaneseq
          %v9203 = vshrl.u32 %v9202, 7
          %v9204 = vsub.s32 5, %v9203
          %v9205 = vrot.slane %v9180, %v9204
          %v9206 = vlaneseq
          %v9207 = vshrl.u32 %v9206, 7
          %v9208 = vsub.s32 6, %v9207
          %v9209 = vrot.slane %v9180, %v9208
          %v9210 = vlaneseq
          %v9211 = vshrl.u32 %v9210, 7
          %v9212 = vsub.s32 7, %v9211
          %v9213 = vrot.slane %v9180, %v9212
          %v9734 = vunpack.c.l.b16 %v8668
          %v9735 = vunpack.c.h.b16 %v8668
          %v9736 = vunpack.c.l.b16 %v8669
          %v9737 = vunpack.c.h.b16 %v8669
          %v9738 = vunpack.c.l.b16 %v8670
          %v9739 = vunpack.c.h.b16 %v8670
          %v9740 = vunpack.c.l.b16 %v8671
          %v9741 = vunpack.c.h.b16 %v8671
          %v9742 = vunpack.c.l.b16 %v8672
          %v9743 = vunpack.c.h.b16 %v8672
          %v9744 = vunpack.c.l.b16 %v8673
          %v9745 = vunpack.c.h.b16 %v8673
          %v9746 = vunpack.c.l.b16 %v8674
          %v9747 = vunpack.c.h.b16 %v8674
          %v9748 = vunpack.c.l.b16 %v8675
          %v9749 = vunpack.c.h.b16 %v8675
          %v9750 = vunpack.c.l.b16 %v8676
          %v9751 = vunpack.c.h.b16 %v8676
          %v9752 = vunpack.c.l.b16 %v8677
          %v9753 = vunpack.c.h.b16 %v8677
          %v9754 = vunpack.c.l.b16 %v8678
          %v9755 = vunpack.c.h.b16 %v8678
          %v9756 = vunpack.c.l.b16 %v8679
          %v9757 = vunpack.c.h.b16 %v8679
          %v9758 = vunpack.c.l.b16 %v8680
          %v9759 = vunpack.c.h.b16 %v8680
          %v9760 = vunpack.c.l.b16 %v8681
          %v9761 = vunpack.c.h.b16 %v8681
          %v9762 = vunpack.c.l.b16 %v8682
          %v9763 = vunpack.c.h.b16 %v8682
          %v9764 = vunpack.c.l.b16 %v8683
          %v9765 = vunpack.c.h.b16 %v8683
          %v9766 = vunpack.c.l.b16 %v8684
          %v9767 = vunpack.c.h.b16 %v8684
          %v9768 = vunpack.c.l.b16 %v8685
          %v9769 = vunpack.c.h.b16 %v8685
          %v9770 = vunpack.c.l.b16 %v8686
          %v9771 = vunpack.c.h.b16 %v8686
          %v9772 = vunpack.c.l.b16 %v8687
          %v9773 = vunpack.c.h.b16 %v8687
          %v9774 = vunpack.c.l.b16 %v8688
          %v9775 = vunpack.c.h.b16 %v8688
          %v9776 = vunpack.c.l.b16 %v8689
          %v9777 = vunpack.c.h.b16 %v8689
          %v9778 = vunpack.c.l.b16 %v8690
          %v9779 = vunpack.c.h.b16 %v8690
          %v9780 = vunpack.c.l.b16 %v8691
          %v9781 = vunpack.c.h.b16 %v8691
          %v9782 = vunpack.c.l.b16 %v8692
          %v9783 = vunpack.c.h.b16 %v8692
          %v9784 = vunpack.c.l.b16 %v8693
          %v9785 = vunpack.c.h.b16 %v8693
          %v9786 = vunpack.c.l.b16 %v8694
          %v9787 = vunpack.c.h.b16 %v8694
          %v9788 = vunpack.c.l.b16 %v8695
          %v9789 = vunpack.c.h.b16 %v8695
          %v9790 = vunpack.c.l.b16 %v8696
          %v9791 = vunpack.c.h.b16 %v8696
          %v9792 = vunpack.c.l.b16 %v8697
          %v9793 = vunpack.c.h.b16 %v8697
          %v9794 = vunpack.c.l.b16 %v8698
          %v9795 = vunpack.c.h.b16 %v8698
          %v9796 = vunpack.c.l.b16 %v8699
          %v9797 = vunpack.c.h.b16 %v8699
          %v9798 = vunpack.c.l.b16 %v8700
          %v9799 = vunpack.c.h.b16 %v8700
          %v9800 = vunpack.c.l.b16 %v8701
          %v9801 = vunpack.c.h.b16 %v8701
          %v9802 = vunpack.c.l.b16 %v8702
          %v9803 = vunpack.c.h.b16 %v8702
          %v9804 = vunpack.c.l.b16 %v8703
          %v9805 = vunpack.c.h.b16 %v8703
          %v9806 = vunpack.c.l.b16 %v8704
          %v9807 = vunpack.c.h.b16 %v8704
          %v9808 = vunpack.c.l.b16 %v8705
          %v9809 = vunpack.c.h.b16 %v8705
          %v9810 = vunpack.c.l.b16 %v8706
          %v9811 = vunpack.c.h.b16 %v8706
          %v9812 = vunpack.c.l.b16 %v8707
          %v9813 = vunpack.c.h.b16 %v8707
          %v9814 = vunpack.c.l.b16 %v8708
          %v9815 = vunpack.c.h.b16 %v8708
          %v9816 = vunpack.c.l.b16 %v8709
          %v9817 = vunpack.c.h.b16 %v8709
          %v9818 = vunpack.c.l.b16 %v8710
          %v9819 = vunpack.c.h.b16 %v8710
          %v9820 = vunpack.c.l.b16 %v8711
          %v9821 = vunpack.c.h.b16 %v8711
          %v9822 = vunpack.c.l.b16 %v8712
          %v9823 = vunpack.c.h.b16 %v8712
          %v9824 = vunpack.c.l.b16 %v8713
          %v9825 = vunpack.c.h.b16 %v8713
          %v9826 = vunpack.c.l.b16 %v8714
          %v9827 = vunpack.c.h.b16 %v8714
          %v9828 = vunpack.c.l.b16 %v8715
          %v9829 = vunpack.c.h.b16 %v8715
          %v9830 = vunpack.c.l.b16 %v8716
          %v9831 = vunpack.c.h.b16 %v8716
          %v9832 = vunpack.c.l.b16 %v8717
          %v9833 = vunpack.c.h.b16 %v8717
          %v9834 = vunpack.c.l.b16 %v8718
          %v9835 = vunpack.c.h.b16 %v8718
          %v9836 = vunpack.c.l.b16 %v8719
          %v9837 = vunpack.c.h.b16 %v8719
          %v9838 = vunpack.c.l.b16 %v8720
          %v9839 = vunpack.c.h.b16 %v8720
          %v9840 = vunpack.c.l.b16 %v8721
          %v9841 = vunpack.c.h.b16 %v8721
          %v9842 = vunpack.c.l.b16 %v8722
          %v9843 = vunpack.c.h.b16 %v8722
          %v9844 = vunpack.c.l.b16 %v8723
          %v9845 = vunpack.c.h.b16 %v8723
          %v9846 = vunpack.c.l.b16 %v8724
          %v9847 = vunpack.c.h.b16 %v8724
          %v9848 = vunpack.c.l.b16 %v8725
          %v9849 = vunpack.c.h.b16 %v8725
          %v9850 = vunpack.c.l.b16 %v8726
          %v9851 = vunpack.c.h.b16 %v8726
          %v9852 = vunpack.c.l.b16 %v8727
          %v9853 = vunpack.c.h.b16 %v8727
          %v9854 = vunpack.c.l.b16 %v8728
          %v9855 = vunpack.c.h.b16 %v8728
          %v9856 = vunpack.c.l.b16 %v8729
          %v9857 = vunpack.c.h.b16 %v8729
          %v9858 = vunpack.c.l.b16 %v8730
          %v9859 = vunpack.c.h.b16 %v8730
          %v9860 = vunpack.c.l.b16 %v8731
          %v9861 = vunpack.c.h.b16 %v8731
          %v9862 = vunpack.c.l.b16 %v8732
          %v9863 = vunpack.c.h.b16 %v8732
          %v9864 = vunpack.c.l.b16 %v8733
          %v9865 = vunpack.c.h.b16 %v8733
          %v9866 = vunpack.c.l.b16 %v8734
          %v9867 = vunpack.c.h.b16 %v8734
          %v9868 = vunpack.c.l.b16 %v8735
          %v9869 = vunpack.c.h.b16 %v8735
          %v9870 = vunpack.c.l.b16 %v8736
          %v9871 = vunpack.c.h.b16 %v8736
          %v9872 = vunpack.c.l.b16 %v8737
          %v9873 = vunpack.c.h.b16 %v8737
          %v9874 = vunpack.c.l.b16 %v8738
          %v9875 = vunpack.c.h.b16 %v8738
          %v9876 = vunpack.c.l.b16 %v8739
          %v9877 = vunpack.c.h.b16 %v8739
          %v9878 = vunpack.c.l.b16 %v8740
          %v9879 = vunpack.c.h.b16 %v8740
          %v9880 = vunpack.c.l.b16 %v8741
          %v9881 = vunpack.c.h.b16 %v8741
          %v9882 = vunpack.c.l.b16 %v8742
          %v9883 = vunpack.c.h.b16 %v8742
          %v9884 = vunpack.c.l.b16 %v8743
          %v9885 = vunpack.c.h.b16 %v8743
          %v9886 = vunpack.c.l.b16 %v8744
          %v9887 = vunpack.c.h.b16 %v8744
          %v9888 = vunpack.c.l.b16 %v8745
          %v9889 = vunpack.c.h.b16 %v8745
          %v9890 = vunpack.c.l.b16 %v8746
          %v9891 = vunpack.c.h.b16 %v8746
          %v9892 = vunpack.c.l.b16 %v8747
          %v9893 = vunpack.c.h.b16 %v8747
          %v9894 = vunpack.c.l.b16 %v8748
          %v9895 = vunpack.c.h.b16 %v8748
          %v9896 = vunpack.c.l.b16 %v8749
          %v9897 = vunpack.c.h.b16 %v8749
          %v9898 = vunpack.c.l.b16 %v8750
          %v9899 = vunpack.c.h.b16 %v8750
          %v9900 = vunpack.c.l.b16 %v8751
          %v9901 = vunpack.c.h.b16 %v8751
          %v9902 = vunpack.c.l.b16 %v8752
          %v9903 = vunpack.c.h.b16 %v8752
          %v9904 = vunpack.c.l.b16 %v8753
          %v9905 = vunpack.c.h.b16 %v8753
          %v9906 = vunpack.c.l.b16 %v8754
          %v9907 = vunpack.c.h.b16 %v8754
          %v9908 = vunpack.c.l.b16 %v8755
          %v9909 = vunpack.c.h.b16 %v8755
          %v9910 = vunpack.c.l.b16 %v8756
          %v9911 = vunpack.c.h.b16 %v8756
          %v9912 = vunpack.c.l.b16 %v8757
          %v9913 = vunpack.c.h.b16 %v8757
          %v9914 = vunpack.c.l.b16 %v8758
          %v9915 = vunpack.c.h.b16 %v8758
          %v9916 = vunpack.c.l.b16 %v8759
          %v9917 = vunpack.c.h.b16 %v8759
          %v9918 = vunpack.c.l.b16 %v8760
          %v9919 = vunpack.c.h.b16 %v8760
          %v9920 = vunpack.c.l.b16 %v8761
          %v9921 = vunpack.c.h.b16 %v8761
          %v9922 = vunpack.c.l.b16 %v8762
          %v9923 = vunpack.c.h.b16 %v8762
          %v9924 = vunpack.c.l.b16 %v8763
          %v9925 = vunpack.c.h.b16 %v8763
          %v9926 = vunpack.c.l.b16 %v8764
          %v9927 = vunpack.c.h.b16 %v8764
          %v9928 = vunpack.c.l.b16 %v8765
          %v9929 = vunpack.c.h.b16 %v8765
          %v9930 = vunpack.c.l.b16 %v8766
          %v9931 = vunpack.c.h.b16 %v8766
          %v9932 = vunpack.c.l.b16 %v8767
          %v9933 = vunpack.c.h.b16 %v8767
          %v9934 = vunpack.c.l.b16 %v8768
          %v9935 = vunpack.c.h.b16 %v8768
          %v9936 = vunpack.c.l.b16 %v8769
          %v9937 = vunpack.c.h.b16 %v8769
          %v9938 = vunpack.c.l.b16 %v8770
          %v9939 = vunpack.c.h.b16 %v8770
          %v9940 = vunpack.c.l.b16 %v8771
          %v9941 = vunpack.c.h.b16 %v8771
          %v9942 = vunpack.c.l.b16 %v8772
          %v9943 = vunpack.c.h.b16 %v8772
          %v9944 = vunpack.c.l.b16 %v8773
          %v9945 = vunpack.c.h.b16 %v8773
          %v9946 = vunpack.c.l.b16 %v8774
          %v9947 = vunpack.c.h.b16 %v8774
          %v9948 = vunpack.c.l.b16 %v8775
          %v9949 = vunpack.c.h.b16 %v8775
          %v9950 = vunpack.c.l.b16 %v8776
          %v9951 = vunpack.c.h.b16 %v8776
          %v9952 = vunpack.c.l.b16 %v8777
          %v9953 = vunpack.c.h.b16 %v8777
          %v9954 = vunpack.c.l.b16 %v8778
          %v9955 = vunpack.c.h.b16 %v8778
          %v9956 = vunpack.c.l.b16 %v8779
          %v9957 = vunpack.c.h.b16 %v8779
          %v9958 = vunpack.c.l.b16 %v8780
          %v9959 = vunpack.c.h.b16 %v8780
          %v9960 = vunpack.c.l.b16 %v8781
          %v9961 = vunpack.c.h.b16 %v8781
          %v9962 = vunpack.c.l.b16 %v8782
          %v9963 = vunpack.c.h.b16 %v8782
          %v9964 = vunpack.c.l.b16 %v8783
          %v9965 = vunpack.c.h.b16 %v8783
          %v9966 = vunpack.c.l.b16 %v8784
          %v9967 = vunpack.c.h.b16 %v8784
          %v9968 = vunpack.c.l.b16 %v8785
          %v9969 = vunpack.c.h.b16 %v8785
          %v9970 = vunpack.c.l.b16 %v8786
          %v9971 = vunpack.c.h.b16 %v8786
          %v9972 = vunpack.c.l.b16 %v8787
          %v9973 = vunpack.c.h.b16 %v8787
          %v9974 = vunpack.c.l.b16 %v8788
          %v9975 = vunpack.c.h.b16 %v8788
          %v9976 = vunpack.c.l.b16 %v8789
          %v9977 = vunpack.c.h.b16 %v8789
          %v9978 = vunpack.c.l.b16 %v8790
          %v9979 = vunpack.c.h.b16 %v8790
          %v9980 = vunpack.c.l.b16 %v8791
          %v9981 = vunpack.c.h.b16 %v8791
          %v9982 = vunpack.c.l.b16 %v8792
          %v9983 = vunpack.c.h.b16 %v8792
          %v9984 = vunpack.c.l.b16 %v8793
          %v9985 = vunpack.c.h.b16 %v8793
          %v9986 = vunpack.c.l.b16 %v8794
          %v9987 = vunpack.c.h.b16 %v8794
          %v9988 = vunpack.c.l.b16 %v8795
          %v9989 = vunpack.c.h.b16 %v8795
          %v9990 = vunpack.c.l.b16 %v8796
          %v9991 = vunpack.c.h.b16 %v8796
          %v9992 = vunpack.c.l.b16 %v8797
          %v9993 = vunpack.c.h.b16 %v8797
          %v9994 = vunpack.c.l.b16 %v8798
          %v9995 = vunpack.c.h.b16 %v8798
          %v9996 = vunpack.c.l.b16 %v8799
          %v9997 = vunpack.c.h.b16 %v8799
          %v9998 = vunpack.c.l.b16 %v8800
          %v9999 = vunpack.c.h.b16 %v8800
          %v10000 = vunpack.c.l.b16 %v8801
          %v10001 = vunpack.c.h.b16 %v8801
          %v10002 = vunpack.c.l.b16 %v8802
          %v10003 = vunpack.c.h.b16 %v8802
          %v10004 = vunpack.c.l.b16 %v8803
          %v10005 = vunpack.c.h.b16 %v8803
          %v10006 = vunpack.c.l.b16 %v8804
          %v10007 = vunpack.c.h.b16 %v8804
          %v10008 = vunpack.c.l.b16 %v8805
          %v10009 = vunpack.c.h.b16 %v8805
          %v10010 = vunpack.c.l.b16 %v8806
          %v10011 = vunpack.c.h.b16 %v8806
          %v10012 = vunpack.c.l.b16 %v8807
          %v10013 = vunpack.c.h.b16 %v8807
          %v10014 = vunpack.c.l.b16 %v8808
          %v10015 = vunpack.c.h.b16 %v8808
          %v10016 = vunpack.c.l.b16 %v8809
          %v10017 = vunpack.c.h.b16 %v8809
          %v10018 = vunpack.c.l.b16 %v8810
          %v10019 = vunpack.c.h.b16 %v8810
          %v10020 = vunpack.c.l.b16 %v8811
          %v10021 = vunpack.c.h.b16 %v8811
          %v10022 = vunpack.c.l.b16 %v8812
          %v10023 = vunpack.c.h.b16 %v8812
          %v10024 = vunpack.c.l.b16 %v8813
          %v10025 = vunpack.c.h.b16 %v8813
          %v10026 = vunpack.c.l.b16 %v8814
          %v10027 = vunpack.c.h.b16 %v8814
          %v10028 = vunpack.c.l.b16 %v8815
          %v10029 = vunpack.c.h.b16 %v8815
          %v10030 = vunpack.c.l.b16 %v8816
          %v10031 = vunpack.c.h.b16 %v8816
          %v10032 = vunpack.c.l.b16 %v8817
          %v10033 = vunpack.c.h.b16 %v8817
          %v10034 = vunpack.c.l.b16 %v8818
          %v10035 = vunpack.c.h.b16 %v8818
          %v10036 = vunpack.c.l.b16 %v8819
          %v10037 = vunpack.c.h.b16 %v8819
          %v10038 = vunpack.c.l.b16 %v8820
          %v10039 = vunpack.c.h.b16 %v8820
          %v10040 = vunpack.c.l.b16 %v8821
          %v10041 = vunpack.c.h.b16 %v8821
          %v10042 = vunpack.c.l.b16 %v8822
          %v10043 = vunpack.c.h.b16 %v8822
          %v10044 = vunpack.c.l.b16 %v8823
          %v10045 = vunpack.c.h.b16 %v8823
          %v10046 = vunpack.c.l.b16 %v8824
          %v10047 = vunpack.c.h.b16 %v8824
          %v10048 = vunpack.c.l.b16 %v8825
          %v10049 = vunpack.c.h.b16 %v8825
          %v10050 = vunpack.c.l.b16 %v8826
          %v10051 = vunpack.c.h.b16 %v8826
          %v10052 = vunpack.c.l.b16 %v8827
          %v10053 = vunpack.c.h.b16 %v8827
          %v10054 = vunpack.c.l.b16 %v8828
          %v10055 = vunpack.c.h.b16 %v8828
          %v10056 = vunpack.c.l.b16 %v8829
          %v10057 = vunpack.c.h.b16 %v8829
          %v10058 = vunpack.c.l.b16 %v8830
          %v10059 = vunpack.c.h.b16 %v8830
          %v10060 = vunpack.c.l.b16 %v8831
          %v10061 = vunpack.c.h.b16 %v8831
          %v10062 = vunpack.c.l.b16 %v8832
          %v10063 = vunpack.c.h.b16 %v8832
          %v10064 = vunpack.c.l.b16 %v8833
          %v10065 = vunpack.c.h.b16 %v8833
          %v10066 = vunpack.c.l.b16 %v8834
          %v10067 = vunpack.c.h.b16 %v8834
          %v10068 = vunpack.c.l.b16 %v8835
          %v10069 = vunpack.c.h.b16 %v8835
          %v10070 = vunpack.c.l.b16 %v8836
          %v10071 = vunpack.c.h.b16 %v8836
          %v10072 = vunpack.c.l.b16 %v8837
          %v10073 = vunpack.c.h.b16 %v8837
          %v10074 = vunpack.c.l.b16 %v8838
          %v10075 = vunpack.c.h.b16 %v8838
          %v10076 = vunpack.c.l.b16 %v8839
          %v10077 = vunpack.c.h.b16 %v8839
          %v10078 = vunpack.c.l.b16 %v8840
          %v10079 = vunpack.c.h.b16 %v8840
          %v10080 = vunpack.c.l.b16 %v8841
          %v10081 = vunpack.c.h.b16 %v8841
          %v10082 = vunpack.c.l.b16 %v8842
          %v10083 = vunpack.c.h.b16 %v8842
          %v10084 = vunpack.c.l.b16 %v8843
          %v10085 = vunpack.c.h.b16 %v8843
          %v10086 = vunpack.c.l.b16 %v8844
          %v10087 = vunpack.c.h.b16 %v8844
          %v10088 = vunpack.c.l.b16 %v8845
          %v10089 = vunpack.c.h.b16 %v8845
          %v10090 = vunpack.c.l.b16 %v8846
          %v10091 = vunpack.c.h.b16 %v8846
          %v10092 = vunpack.c.l.b16 %v8847
          %v10093 = vunpack.c.h.b16 %v8847
          %v10094 = vunpack.c.l.b16 %v8848
          %v10095 = vunpack.c.h.b16 %v8848
          %v10096 = vunpack.c.l.b16 %v8849
          %v10097 = vunpack.c.h.b16 %v8849
          %v10098 = vunpack.c.l.b16 %v8850
          %v10099 = vunpack.c.h.b16 %v8850
          %v10100 = vunpack.c.l.b16 %v8851
          %v10101 = vunpack.c.h.b16 %v8851
          %v10102 = vunpack.c.l.b16 %v8852
          %v10103 = vunpack.c.h.b16 %v8852
          %v10104 = vunpack.c.l.b16 %v8853
          %v10105 = vunpack.c.h.b16 %v8853
          %v10106 = vunpack.c.l.b16 %v8854
          %v10107 = vunpack.c.h.b16 %v8854
          %v10108 = vunpack.c.l.b16 %v8855
          %v10109 = vunpack.c.h.b16 %v8855
          %v10110 = vunpack.c.l.b16 %v8856
          %v10111 = vunpack.c.h.b16 %v8856
          %v10112 = vunpack.c.l.b16 %v8857
          %v10113 = vunpack.c.h.b16 %v8857
          %v10114 = vunpack.c.l.b16 %v8858
          %v10115 = vunpack.c.h.b16 %v8858
          %v10116 = vunpack.c.l.b16 %v8859
          %v10117 = vunpack.c.h.b16 %v8859
          %v10118 = vunpack.c.l.b16 %v8860
          %v10119 = vunpack.c.h.b16 %v8860
          %v10120 = vunpack.c.l.b16 %v8861
          %v10121 = vunpack.c.h.b16 %v8861
          %v10122 = vunpack.c.l.b16 %v8862
          %v10123 = vunpack.c.h.b16 %v8862
          %v10124 = vunpack.c.l.b16 %v8863
          %v10125 = vunpack.c.h.b16 %v8863
          %v10126 = vunpack.c.l.b16 %v8864
          %v10127 = vunpack.c.h.b16 %v8864
          %v10128 = vunpack.c.l.b16 %v8865
          %v10129 = vunpack.c.h.b16 %v8865
          %v10130 = vunpack.c.l.b16 %v8866
          %v10131 = vunpack.c.h.b16 %v8866
          %v10132 = vunpack.c.l.b16 %v8867
          %v10133 = vunpack.c.h.b16 %v8867
          %v10134 = vunpack.c.l.b16 %v8868
          %v10135 = vunpack.c.h.b16 %v8868
          %v10136 = vunpack.c.l.b16 %v8869
          %v10137 = vunpack.c.h.b16 %v8869
          %v10138 = vunpack.c.l.b16 %v8870
          %v10139 = vunpack.c.h.b16 %v8870
          %v10140 = vunpack.c.l.b16 %v8871
          %v10141 = vunpack.c.h.b16 %v8871
          %v10142 = vunpack.c.l.b16 %v8872
          %v10143 = vunpack.c.h.b16 %v8872
          %v10144 = vunpack.c.l.b16 %v8873
          %v10145 = vunpack.c.h.b16 %v8873
          %v10146 = vunpack.c.l.b16 %v8874
          %v10147 = vunpack.c.h.b16 %v8874
          %v10148 = vunpack.c.l.b16 %v8875
          %v10149 = vunpack.c.h.b16 %v8875
          %v10150 = vunpack.c.l.b16 %v8876
          %v10151 = vunpack.c.h.b16 %v8876
          %v10152 = vunpack.c.l.b16 %v8877
          %v10153 = vunpack.c.h.b16 %v8877
          %v10154 = vunpack.c.l.b16 %v8878
          %v10155 = vunpack.c.h.b16 %v8878
          %v10156 = vunpack.c.l.b16 %v8879
          %v10157 = vunpack.c.h.b16 %v8879
          %v10158 = vunpack.c.l.b16 %v8880
          %v10159 = vunpack.c.h.b16 %v8880
          %v10160 = vunpack.c.l.b16 %v8881
          %v10161 = vunpack.c.h.b16 %v8881
          %v10162 = vunpack.c.l.b16 %v8882
          %v10163 = vunpack.c.h.b16 %v8882
          %v10164 = vunpack.c.l.b16 %v8883
          %v10165 = vunpack.c.h.b16 %v8883
          %v10166 = vunpack.c.l.b16 %v8884
          %v10167 = vunpack.c.h.b16 %v8884
          %v10168 = vunpack.c.l.b16 %v8885
          %v10169 = vunpack.c.h.b16 %v8885
          %v10170 = vunpack.c.l.b16 %v8886
          %v10171 = vunpack.c.h.b16 %v8886
          %v10172 = vunpack.c.l.b16 %v8887
          %v10173 = vunpack.c.h.b16 %v8887
          %v10174 = vunpack.c.l.b16 %v8888
          %v10175 = vunpack.c.h.b16 %v8888
          %v10176 = vunpack.c.l.b16 %v8889
          %v10177 = vunpack.c.h.b16 %v8889
          %v10178 = vunpack.c.l.b16 %v8890
          %v10179 = vunpack.c.h.b16 %v8890
          %v10180 = vunpack.c.l.b16 %v8891
          %v10181 = vunpack.c.h.b16 %v8891
          %v10182 = vunpack.c.l.b16 %v8892
          %v10183 = vunpack.c.h.b16 %v8892
          %v10184 = vunpack.c.l.b16 %v8893
          %v10185 = vunpack.c.h.b16 %v8893
          %v10186 = vunpack.c.l.b16 %v8894
          %v10187 = vunpack.c.h.b16 %v8894
          %v10188 = vunpack.c.l.b16 %v8895
          %v10189 = vunpack.c.h.b16 %v8895
          %v10190 = vunpack.c.l.b16 %v8896
          %v10191 = vunpack.c.h.b16 %v8896
          %v10192 = vunpack.c.l.b16 %v8897
          %v10193 = vunpack.c.h.b16 %v8897
          %v10194 = vunpack.c.l.b16 %v8898
          %v10195 = vunpack.c.h.b16 %v8898
          %v10196 = vunpack.c.l.b16 %v8899
          %v10197 = vunpack.c.h.b16 %v8899
          %v10198 = vunpack.c.l.b16 %v8900
          %v10199 = vunpack.c.h.b16 %v8900
          %v10200 = vunpack.c.l.b16 %v8901
          %v10201 = vunpack.c.h.b16 %v8901
          %v10202 = vunpack.c.l.b16 %v8902
          %v10203 = vunpack.c.h.b16 %v8902
          %v10204 = vunpack.c.l.b16 %v8903
          %v10205 = vunpack.c.h.b16 %v8903
          %v10206 = vunpack.c.l.b16 %v8904
          %v10207 = vunpack.c.h.b16 %v8904
          %v10208 = vunpack.c.l.b16 %v8905
          %v10209 = vunpack.c.h.b16 %v8905
          %v10210 = vunpack.c.l.b16 %v8906
          %v10211 = vunpack.c.h.b16 %v8906
          %v10212 = vunpack.c.l.b16 %v8907
          %v10213 = vunpack.c.h.b16 %v8907
          %v10214 = vunpack.c.l.b16 %v8908
          %v10215 = vunpack.c.h.b16 %v8908
          %v10216 = vunpack.c.l.b16 %v8909
          %v10217 = vunpack.c.h.b16 %v8909
          %v10218 = vunpack.c.l.b16 %v8910
          %v10219 = vunpack.c.h.b16 %v8910
          %v10220 = vunpack.c.l.b16 %v8911
          %v10221 = vunpack.c.h.b16 %v8911
          %v10222 = vunpack.c.l.b16 %v8912
          %v10223 = vunpack.c.h.b16 %v8912
          %v10224 = vunpack.c.l.b16 %v8913
          %v10225 = vunpack.c.h.b16 %v8913
          %v10226 = vunpack.c.l.b16 %v8914
          %v10227 = vunpack.c.h.b16 %v8914
          %v10228 = vunpack.c.l.b16 %v8915
          %v10229 = vunpack.c.h.b16 %v8915
          %v10230 = vunpack.c.l.b16 %v8916
          %v10231 = vunpack.c.h.b16 %v8916
          %v10232 = vunpack.c.l.b16 %v8917
          %v10233 = vunpack.c.h.b16 %v8917
          %v10234 = vunpack.c.l.b16 %v8918
          %v10235 = vunpack.c.h.b16 %v8918
          %v10236 = vunpack.c.l.b16 %v8919
          %v10237 = vunpack.c.h.b16 %v8919
          %v10238 = vunpack.c.l.b16 %v8920
          %v10239 = vunpack.c.h.b16 %v8920
          %v10240 = vunpack.c.l.b16 %v8921
          %v10241 = vunpack.c.h.b16 %v8921
          %v10242 = vunpack.c.l.b16 %v8922
          %v10243 = vunpack.c.h.b16 %v8922
          %v10244 = vunpack.c.l.b16 %v8923
          %v10245 = vunpack.c.h.b16 %v8923
          %v10246 = vunpack.c.l.b16 %v8924
          %v10247 = vunpack.c.h.b16 %v8924
          %v10248 = vunpack.c.l.b16 %v8925
          %v10249 = vunpack.c.h.b16 %v8925
          %v10250 = vunpack.c.l.b16 %v8926
          %v10251 = vunpack.c.h.b16 %v8926
          %v10252 = vunpack.c.l.b16 %v8927
          %v10253 = vunpack.c.h.b16 %v8927
          %v10254 = vunpack.c.l.b16 %v8928
          %v10255 = vunpack.c.h.b16 %v8928
          %v10256 = vunpack.c.l.b16 %v8929
          %v10257 = vunpack.c.h.b16 %v8929
          %v10258 = vunpack.c.l.b16 %v8930
          %v10259 = vunpack.c.h.b16 %v8930
          %v10260 = vunpack.c.l.b16 %v8931
          %v10261 = vunpack.c.h.b16 %v8931
          %v10262 = vunpack.c.l.b16 %v8932
          %v10263 = vunpack.c.h.b16 %v8932
          %v10264 = vunpack.c.l.b16 %v8933
          %v10265 = vunpack.c.h.b16 %v8933
          %v10266 = vunpack.c.l.b16 %v8934
          %v10267 = vunpack.c.h.b16 %v8934
          %v10268 = vunpack.c.l.b16 %v8935
          %v10269 = vunpack.c.h.b16 %v8935
          %v10270 = vunpack.c.l.b16 %v8936
          %v10271 = vunpack.c.h.b16 %v8936
          %v10272 = vunpack.c.l.b16 %v8937
          %v10273 = vunpack.c.h.b16 %v8937
          %v10274 = vunpack.c.l.b16 %v8938
          %v10275 = vunpack.c.h.b16 %v8938
          %v10276 = vunpack.c.l.b16 %v8939
          %v10277 = vunpack.c.h.b16 %v8939
          %v10278 = vunpack.c.l.b16 %v8940
          %v10279 = vunpack.c.h.b16 %v8940
          %v10280 = vunpack.c.l.b16 %v8941
          %v10281 = vunpack.c.h.b16 %v8941
          %v10282 = vunpack.c.l.b16 %v8942
          %v10283 = vunpack.c.h.b16 %v8942
          %v10284 = vunpack.c.l.b16 %v8943
          %v10285 = vunpack.c.h.b16 %v8943
          %v10286 = vunpack.c.l.b16 %v8944
          %v10287 = vunpack.c.h.b16 %v8944
          %v10288 = vunpack.c.l.b16 %v8945
          %v10289 = vunpack.c.h.b16 %v8945
          %v10290 = vunpack.c.l.b16 %v8946
          %v10291 = vunpack.c.h.b16 %v8946
          %v10292 = vunpack.c.l.b16 %v8947
          %v10293 = vunpack.c.h.b16 %v8947
          %v10294 = vunpack.c.l.b16 %v8948
          %v10295 = vunpack.c.h.b16 %v8948
          %v10296 = vunpack.c.l.b16 %v8949
          %v10297 = vunpack.c.h.b16 %v8949
          %v10298 = vunpack.c.l.b16 %v8950
          %v10299 = vunpack.c.h.b16 %v8950
          %v10300 = vunpack.c.l.b16 %v8951
          %v10301 = vunpack.c.h.b16 %v8951
          %v10302 = vunpack.c.l.b16 %v8952
          %v10303 = vunpack.c.h.b16 %v8952
          %v10304 = vunpack.c.l.b16 %v8953
          %v10305 = vunpack.c.h.b16 %v8953
          %v10306 = vunpack.c.l.b16 %v8954
          %v10307 = vunpack.c.h.b16 %v8954
          %v10308 = vunpack.c.l.b16 %v8955
          %v10309 = vunpack.c.h.b16 %v8955
          %v10310 = vunpack.c.l.b16 %v8956
          %v10311 = vunpack.c.h.b16 %v8956
          %v10312 = vunpack.c.l.b16 %v8957
          %v10313 = vunpack.c.h.b16 %v8957
          %v10314 = vunpack.c.l.b16 %v8958
          %v10315 = vunpack.c.h.b16 %v8958
          %v10316 = vunpack.c.l.b16 %v8959
          %v10317 = vunpack.c.h.b16 %v8959
          %v10318 = vunpack.c.l.b16 %v8960
          %v10319 = vunpack.c.h.b16 %v8960
          %v10320 = vunpack.c.l.b16 %v8961
          %v10321 = vunpack.c.h.b16 %v8961
          %v10322 = vunpack.c.l.b16 %v8962
          %v10323 = vunpack.c.h.b16 %v8962
          %v10324 = vunpack.c.l.b16 %v8963
          %v10325 = vunpack.c.h.b16 %v8963
          %v10326 = vunpack.c.l.b16 %v8964
          %v10327 = vunpack.c.h.b16 %v8964
          %v10328 = vunpack.c.l.b16 %v8965
          %v10329 = vunpack.c.h.b16 %v8965
          %v10330 = vunpack.c.l.b16 %v8966
          %v10331 = vunpack.c.h.b16 %v8966
          %v10332 = vunpack.c.l.b16 %v8967
          %v10333 = vunpack.c.h.b16 %v8967
          %v10334 = vunpack.c.l.b16 %v8968
          %v10335 = vunpack.c.h.b16 %v8968
          %v10336 = vunpack.c.l.b16 %v8969
          %v10337 = vunpack.c.h.b16 %v8969
          %v10338 = vunpack.c.l.b16 %v8970
          %v10339 = vunpack.c.h.b16 %v8970
          %v10340 = vunpack.c.l.b16 %v8971
          %v10341 = vunpack.c.h.b16 %v8971
          %v10342 = vunpack.c.l.b16 %v8972
          %v10343 = vunpack.c.h.b16 %v8972
          %v10344 = vunpack.c.l.b16 %v8973
          %v10345 = vunpack.c.h.b16 %v8973
          %v10346 = vunpack.c.l.b16 %v8974
          %v10347 = vunpack.c.h.b16 %v8974
          %v10348 = vunpack.c.l.b16 %v8975
          %v10349 = vunpack.c.h.b16 %v8975
          %v10350 = vunpack.c.l.b16 %v8976
          %v10351 = vunpack.c.h.b16 %v8976
          %v10352 = vunpack.c.l.b16 %v8977
          %v10353 = vunpack.c.h.b16 %v8977
          %v10354 = vunpack.c.l.b16 %v8978
          %v10355 = vunpack.c.h.b16 %v8978
          %v10356 = vunpack.c.l.b16 %v8979
          %v10357 = vunpack.c.h.b16 %v8979
          %v10358 = vunpack.c.l.b16 %v8980
          %v10359 = vunpack.c.h.b16 %v8980
          %v10360 = vunpack.c.l.b16 %v8981
          %v10361 = vunpack.c.h.b16 %v8981
          %v10362 = vunpack.c.l.b16 %v8982
          %v10363 = vunpack.c.h.b16 %v8982
          %v10364 = vunpack.c.l.b16 %v8983
          %v10365 = vunpack.c.h.b16 %v8983
          %v10366 = vunpack.c.l.b16 %v8984
          %v10367 = vunpack.c.h.b16 %v8984
          %v10368 = vunpack.c.l.b16 %v8985
          %v10369 = vunpack.c.h.b16 %v8985
          %v10370 = vunpack.c.l.b16 %v8986
          %v10371 = vunpack.c.h.b16 %v8986
          %v10372 = vunpack.c.l.b16 %v8987
          %v10373 = vunpack.c.h.b16 %v8987
          %v10374 = vunpack.c.l.b16 %v8988
          %v10375 = vunpack.c.h.b16 %v8988
          %v10376 = vunpack.c.l.b16 %v8989
          %v10377 = vunpack.c.h.b16 %v8989
          %v10378 = vunpack.c.l.b16 %v8990
          %v10379 = vunpack.c.h.b16 %v8990
          %v10380 = vunpack.c.l.b16 %v8991
          %v10381 = vunpack.c.h.b16 %v8991
          %v10382 = vunpack.c.l.b16 %v8992
          %v10383 = vunpack.c.h.b16 %v8992
          %v10384 = vunpack.c.l.b16 %v8993
          %v10385 = vunpack.c.h.b16 %v8993
          %v10386 = vunpack.c.l.b16 %v8994
          %v10387 = vunpack.c.h.b16 %v8994
          %v10388 = vunpack.c.l.b16 %v8995
          %v10389 = vunpack.c.h.b16 %v8995
          %v10390 = vunpack.c.l.b16 %v8996
          %v10391 = vunpack.c.h.b16 %v8996
          %v10392 = vunpack.c.l.b16 %v8997
          %v10393 = vunpack.c.h.b16 %v8997
          %v10394 = vunpack.c.l.b16 %v8998
          %v10395 = vunpack.c.h.b16 %v8998
          %v10396 = vunpack.c.l.b16 %v8999
          %v10397 = vunpack.c.h.b16 %v8999
          %v10398 = vunpack.c.l.b16 %v9000
          %v10399 = vunpack.c.h.b16 %v9000
          %v10400 = vunpack.c.l.b16 %v9001
          %v10401 = vunpack.c.h.b16 %v9001
          %v10402 = vunpack.c.l.b16 %v9002
          %v10403 = vunpack.c.h.b16 %v9002
          %v10404 = vunpack.c.l.b16 %v9003
          %v10405 = vunpack.c.h.b16 %v9003
          %v10406 = vunpack.c.l.b16 %v9004
          %v10407 = vunpack.c.h.b16 %v9004
          %v10408 = vunpack.c.l.b16 %v9005
          %v10409 = vunpack.c.h.b16 %v9005
          %v10410 = vunpack.c.l.b16 %v9006
          %v10411 = vunpack.c.h.b16 %v9006
          %v10412 = vunpack.c.l.b16 %v9007
          %v10413 = vunpack.c.h.b16 %v9007
          %v10414 = vunpack.c.l.b16 %v9008
          %v10415 = vunpack.c.h.b16 %v9008
          %v10416 = vunpack.c.l.b16 %v9009
          %v10417 = vunpack.c.h.b16 %v9009
          %v10418 = vunpack.c.l.b16 %v9010
          %v10419 = vunpack.c.h.b16 %v9010
          %v10420 = vunpack.c.l.b16 %v9011
          %v10421 = vunpack.c.h.b16 %v9011
          %v10422 = vunpack.c.l.b16 %v9012
          %v10423 = vunpack.c.h.b16 %v9012
          %v10424 = vunpack.c.l.b16 %v9013
          %v10425 = vunpack.c.h.b16 %v9013
          %v10426 = vunpack.c.l.b16 %v9014
          %v10427 = vunpack.c.h.b16 %v9014
          %v10428 = vunpack.c.l.b16 %v9015
          %v10429 = vunpack.c.h.b16 %v9015
          %v10430 = vunpack.c.l.b16 %v9016
          %v10431 = vunpack.c.h.b16 %v9016
          %v10432 = vunpack.c.l.b16 %v9017
          %v10433 = vunpack.c.h.b16 %v9017
          %v10434 = vunpack.c.l.b16 %v9018
          %v10435 = vunpack.c.h.b16 %v9018
          %v10436 = vunpack.c.l.b16 %v9019
          %v10437 = vunpack.c.h.b16 %v9019
          %v10438 = vunpack.c.l.b16 %v9020
          %v10439 = vunpack.c.h.b16 %v9020
          %v10440 = vunpack.c.l.b16 %v9021
          %v10441 = vunpack.c.h.b16 %v9021
          %v10442 = vunpack.c.l.b16 %v9022
          %v10443 = vunpack.c.h.b16 %v9022
          %v10444 = vunpack.c.l.b16 %v9023
          %v10445 = vunpack.c.h.b16 %v9023
          %v10446 = vunpack.c.l.b16 %v9024
          %v10447 = vunpack.c.h.b16 %v9024
          %v10448 = vunpack.c.l.b16 %v9025
          %v10449 = vunpack.c.h.b16 %v9025
          %v10450 = vunpack.c.l.b16 %v9026
          %v10451 = vunpack.c.h.b16 %v9026
          %v10452 = vunpack.c.l.b16 %v9027
          %v10453 = vunpack.c.h.b16 %v9027
          %v10454 = vunpack.c.l.b16 %v9028
          %v10455 = vunpack.c.h.b16 %v9028
          %v10456 = vunpack.c.l.b16 %v9029
          %v10457 = vunpack.c.h.b16 %v9029
          %v10458 = vunpack.c.l.b16 %v9030
          %v10459 = vunpack.c.h.b16 %v9030
          %v10460 = vunpack.c.l.b16 %v9031
          %v10461 = vunpack.c.h.b16 %v9031
          %v10462 = vunpack.c.l.b16 %v9032
          %v10463 = vunpack.c.h.b16 %v9032
          %v10464 = vunpack.c.l.b16 %v9033
          %v10465 = vunpack.c.h.b16 %v9033
          %v10466 = vunpack.c.l.b16 %v9034
          %v10467 = vunpack.c.h.b16 %v9034
          %v10468 = vunpack.c.l.b16 %v9035
          %v10469 = vunpack.c.h.b16 %v9035
          %v10470 = vunpack.c.l.b16 %v9036
          %v10471 = vunpack.c.h.b16 %v9036
          %v10472 = vunpack.c.l.b16 %v9037
          %v10473 = vunpack.c.h.b16 %v9037
          %v10474 = vunpack.c.l.b16 %v9038
          %v10475 = vunpack.c.h.b16 %v9038
          %v10476 = vunpack.c.l.b16 %v9039
          %v10477 = vunpack.c.h.b16 %v9039
          %v10478 = vunpack.c.l.b16 %v9040
          %v10479 = vunpack.c.h.b16 %v9040
          %v10480 = vunpack.c.l.b16 %v9041
          %v10481 = vunpack.c.h.b16 %v9041
          %v10482 = vunpack.c.l.b16 %v9042
          %v10483 = vunpack.c.h.b16 %v9042
          %v10484 = vunpack.c.l.b16 %v9043
          %v10485 = vunpack.c.h.b16 %v9043
          %v10486 = vunpack.c.l.b16 %v9044
          %v10487 = vunpack.c.h.b16 %v9044
          %v10488 = vunpack.c.l.b16 %v9045
          %v10489 = vunpack.c.h.b16 %v9045
          %v10490 = vunpack.c.l.b16 %v9046
          %v10491 = vunpack.c.h.b16 %v9046
          %v10492 = vunpack.c.l.b16 %v9047
          %v10493 = vunpack.c.h.b16 %v9047
          %v10494 = vunpack.c.l.b16 %v9048
          %v10495 = vunpack.c.h.b16 %v9048
          %v10496 = vunpack.c.l.b16 %v9049
          %v10497 = vunpack.c.h.b16 %v9049
          %v10498 = vunpack.c.l.b16 %v9050
          %v10499 = vunpack.c.h.b16 %v9050
          %v10500 = vunpack.c.l.b16 %v9051
          %v10501 = vunpack.c.h.b16 %v9051
          %v10502 = vunpack.c.l.b16 %v9052
          %v10503 = vunpack.c.h.b16 %v9052
          %v10504 = vunpack.c.l.b16 %v9053
          %v10505 = vunpack.c.h.b16 %v9053
          %v10506 = vunpack.c.l.b16 %v9054
          %v10507 = vunpack.c.h.b16 %v9054
          %v10508 = vunpack.c.l.b16 %v9055
          %v10509 = vunpack.c.h.b16 %v9055
          %v10510 = vunpack.c.l.b16 %v9056
          %v10511 = vunpack.c.h.b16 %v9056
          %v10512 = vunpack.c.l.b16 %v9057
          %v10513 = vunpack.c.h.b16 %v9057
          %v10514 = vunpack.c.l.b16 %v9058
          %v10515 = vunpack.c.h.b16 %v9058
          %v10516 = vunpack.c.l.b16 %v9059
          %v10517 = vunpack.c.h.b16 %v9059
          %v10518 = vunpack.c.l.b16 %v9060
          %v10519 = vunpack.c.h.b16 %v9060
          %v10520 = vunpack.c.l.b16 %v9061
          %v10521 = vunpack.c.h.b16 %v9061
          %v10522 = vunpack.c.l.b16 %v9062
          %v10523 = vunpack.c.h.b16 %v9062
          %v10524 = vunpack.c.l.b16 %v9063
          %v10525 = vunpack.c.h.b16 %v9063
          %v10526 = vunpack.c.l.b16 %v9064
          %v10527 = vunpack.c.h.b16 %v9064
          %v10528 = vunpack.c.l.b16 %v9065
          %v10529 = vunpack.c.h.b16 %v9065
          %v10530 = vunpack.c.l.b16 %v9066
          %v10531 = vunpack.c.h.b16 %v9066
          %v10532 = vunpack.c.l.b16 %v9067
          %v10533 = vunpack.c.h.b16 %v9067
          %v10534 = vunpack.c.l.b16 %v9068
          %v10535 = vunpack.c.h.b16 %v9068
          %v10536 = vunpack.c.l.b16 %v9069
          %v10537 = vunpack.c.h.b16 %v9069
          %v10538 = vunpack.c.l.b16 %v9070
          %v10539 = vunpack.c.h.b16 %v9070
          %v10540 = vunpack.c.l.b16 %v9071
          %v10541 = vunpack.c.h.b16 %v9071
          %v10542 = vunpack.c.l.b16 %v9072
          %v10543 = vunpack.c.h.b16 %v9072
          %v10544 = vunpack.c.l.b16 %v9073
          %v10545 = vunpack.c.h.b16 %v9073
          %v10546 = vunpack.c.l.b16 %v9074
          %v10547 = vunpack.c.h.b16 %v9074
          %v10548 = vunpack.c.l.b16 %v9075
          %v10549 = vunpack.c.h.b16 %v9075
          %v10550 = vunpack.c.l.b16 %v9076
          %v10551 = vunpack.c.h.b16 %v9076
          %v10552 = vunpack.c.l.b16 %v9077
          %v10553 = vunpack.c.h.b16 %v9077
          %v10554 = vunpack.c.l.b16 %v9078
          %v10555 = vunpack.c.h.b16 %v9078
          %v10556 = vunpack.c.l.b16 %v9079
          %v10557 = vunpack.c.h.b16 %v9079
          %v10558 = vunpack.c.l.b16 %v9080
          %v10559 = vunpack.c.h.b16 %v9080
          %v10560 = vunpack.c.l.b16 %v9081
          %v10561 = vunpack.c.h.b16 %v9081
          %v10562 = vunpack.c.l.b16 %v9082
          %v10563 = vunpack.c.h.b16 %v9082
          %v10564 = vunpack.c.l.b16 %v9083
          %v10565 = vunpack.c.h.b16 %v9083
          %v10566 = vunpack.c.l.b16 %v9084
          %v10567 = vunpack.c.h.b16 %v9084
          %v10568 = vunpack.c.l.b16 %v9085
          %v10569 = vunpack.c.h.b16 %v9085
          %v10570 = vunpack.c.l.b16 %v9086
          %v10571 = vunpack.c.h.b16 %v9086
          %v10572 = vunpack.c.l.b16 %v9087
          %v10573 = vunpack.c.h.b16 %v9087
          %v10574 = vunpack.c.l.b16 %v9088
          %v10575 = vunpack.c.h.b16 %v9088
          %v10576 = vunpack.c.l.b16 %v9089
          %v10577 = vunpack.c.h.b16 %v9089
          %v10578 = vunpack.c.l.b16 %v9090
          %v10579 = vunpack.c.h.b16 %v9090
          %v10580 = vunpack.c.l.b16 %v9091
          %v10581 = vunpack.c.h.b16 %v9091
          %v10582 = vunpack.c.l.b16 %v9092
          %v10583 = vunpack.c.h.b16 %v9092
          %v10584 = vunpack.c.l.b16 %v9093
          %v10585 = vunpack.c.h.b16 %v9093
          %v10586 = vunpack.c.l.b16 %v9094
          %v10587 = vunpack.c.h.b16 %v9094
          %v10588 = vunpack.c.l.b16 %v9095
          %v10589 = vunpack.c.h.b16 %v9095
          %v10590 = vunpack.c.l.b16 %v9096
          %v10591 = vunpack.c.h.b16 %v9096
          %v10592 = vunpack.c.l.b16 %v9097
          %v10593 = vunpack.c.h.b16 %v9097
          %v10594 = vunpack.c.l.b16 %v9098
          %v10595 = vunpack.c.h.b16 %v9098
          %v10596 = vunpack.c.l.b16 %v9099
          %v10597 = vunpack.c.h.b16 %v9099
          %v10598 = vunpack.c.l.b16 %v9100
          %v10599 = vunpack.c.h.b16 %v9100
          %v10600 = vunpack.c.l.b16 %v9101
          %v10601 = vunpack.c.h.b16 %v9101
          %v10602 = vunpack.c.l.b16 %v9102
          %v10603 = vunpack.c.h.b16 %v9102
          %v10604 = vunpack.c.l.b16 %v9103
          %v10605 = vunpack.c.h.b16 %v9103
          %v10606 = vunpack.c.l.b16 %v9104
          %v10607 = vunpack.c.h.b16 %v9104
          %v10608 = vunpack.c.l.b16 %v9105
          %v10609 = vunpack.c.h.b16 %v9105
          %v10610 = vunpack.c.l.b16 %v9106
          %v10611 = vunpack.c.h.b16 %v9106
          %v10612 = vunpack.c.l.b16 %v9107
          %v10613 = vunpack.c.h.b16 %v9107
          %v10614 = vunpack.c.l.b16 %v9108
          %v10615 = vunpack.c.h.b16 %v9108
          %v10616 = vunpack.c.l.b16 %v9109
          %v10617 = vunpack.c.h.b16 %v9109
          %v10618 = vunpack.c.l.b16 %v9110
          %v10619 = vunpack.c.h.b16 %v9110
          %v10620 = vunpack.c.l.b16 %v9111
          %v10621 = vunpack.c.h.b16 %v9111
          %v10622 = vunpack.c.l.b16 %v9112
          %v10623 = vunpack.c.h.b16 %v9112
          %v10624 = vunpack.c.l.b16 %v9113
          %v10625 = vunpack.c.h.b16 %v9113
          %v10626 = vunpack.c.l.b16 %v9114
          %v10627 = vunpack.c.h.b16 %v9114
          %v10628 = vunpack.c.l.b16 %v9115
          %v10629 = vunpack.c.h.b16 %v9115
          %v10630 = vunpack.c.l.b16 %v9116
          %v10631 = vunpack.c.h.b16 %v9116
          %v10632 = vunpack.c.l.b16 %v9117
          %v10633 = vunpack.c.h.b16 %v9117
          %v10634 = vunpack.c.l.b16 %v9118
          %v10635 = vunpack.c.h.b16 %v9118
          %v10636 = vunpack.c.l.b16 %v9119
          %v10637 = vunpack.c.h.b16 %v9119
          %v10638 = vunpack.c.l.b16 %v9120
          %v10639 = vunpack.c.h.b16 %v9120
          %v10640 = vunpack.c.l.b16 %v9121
          %v10641 = vunpack.c.h.b16 %v9121
          %v10642 = vunpack.c.l.b16 %v9122
          %v10643 = vunpack.c.h.b16 %v9122
          %v10644 = vunpack.c.l.b16 %v9123
          %v10645 = vunpack.c.h.b16 %v9123
          %v10646 = vunpack.c.l.b16 %v9124
          %v10647 = vunpack.c.h.b16 %v9124
          %v10648 = vunpack.c.l.b16 %v9125
          %v10649 = vunpack.c.h.b16 %v9125
          %v10650 = vunpack.c.l.b16 %v9126
          %v10651 = vunpack.c.h.b16 %v9126
          %v10652 = vunpack.c.l.b16 %v9127
          %v10653 = vunpack.c.h.b16 %v9127
          %v10654 = vunpack.c.l.b16 %v9128
          %v10655 = vunpack.c.h.b16 %v9128
          %v10656 = vunpack.c.l.b16 %v9129
          %v10657 = vunpack.c.h.b16 %v9129
          %v10658 = vunpack.c.l.b16 %v9130
          %v10659 = vunpack.c.h.b16 %v9130
          %v10660 = vunpack.c.l.b16 %v9131
          %v10661 = vunpack.c.h.b16 %v9131
          %v10662 = vunpack.c.l.b16 %v9132
          %v10663 = vunpack.c.h.b16 %v9132
          %v10664 = vunpack.c.l.b16 %v9133
          %v10665 = vunpack.c.h.b16 %v9133
          %v10666 = vunpack.c.l.b16 %v9134
          %v10667 = vunpack.c.h.b16 %v9134
          %v10668 = vunpack.c.l.b16 %v9135
          %v10669 = vunpack.c.h.b16 %v9135
          %v10670 = vunpack.c.l.b16 %v9136
          %v10671 = vunpack.c.h.b16 %v9136
          %v10672 = vunpack.c.l.b16 %v9137
          %v10673 = vunpack.c.h.b16 %v9137
          %v10674 = vunpack.c.l.b16 %v9138
          %v10675 = vunpack.c.h.b16 %v9138
          %v10676 = vunpack.c.l.b16 %v9139
          %v10677 = vunpack.c.h.b16 %v9139
          %v10678 = vunpack.c.l.b16 %v9140
          %v10679 = vunpack.c.h.b16 %v9140
          %v10680 = vunpack.c.l.b16 %v9141
          %v10681 = vunpack.c.h.b16 %v9141
          %v10682 = vunpack.c.l.b16 %v9142
          %v10683 = vunpack.c.h.b16 %v9142
          %v10684 = vunpack.c.l.b16 %v9143
          %v10685 = vunpack.c.h.b16 %v9143
          %v10686 = vunpack.c.l.b16 %v9144
          %v10687 = vunpack.c.h.b16 %v9144
          %v10688 = vunpack.c.l.b16 %v9145
          %v10689 = vunpack.c.h.b16 %v9145
          %v10690 = vunpack.c.l.b16 %v9146
          %v10691 = vunpack.c.h.b16 %v9146
          %v10692 = vunpack.c.l.b16 %v9147
          %v10693 = vunpack.c.h.b16 %v9147
          %v10694 = vunpack.c.l.b16 %v9148
          %v10695 = vunpack.c.h.b16 %v9148
          %v10696 = vunpack.c.l.b16 %v9149
          %v10697 = vunpack.c.h.b16 %v9149
          %v10698 = vunpack.c.l.b16 %v9150
          %v10699 = vunpack.c.h.b16 %v9150
          %v10700 = vunpack.c.l.b16 %v9151
          %v10701 = vunpack.c.h.b16 %v9151
          %v10702 = vunpack.c.l.b16 %v9152
          %v10703 = vunpack.c.h.b16 %v9152
          %v10704 = vunpack.c.l.b16 %v9153
          %v10705 = vunpack.c.h.b16 %v9153
          %v10706 = vunpack.c.l.b16 %v9154
          %v10707 = vunpack.c.h.b16 %v9154
          %v10708 = vunpack.c.l.b16 %v9155
          %v10709 = vunpack.c.h.b16 %v9155
          %v10710 = vunpack.c.l.b16 %v9156
          %v10711 = vunpack.c.h.b16 %v9156
          %v10712 = vunpack.c.l.b16 %v9157
          %v10713 = vunpack.c.h.b16 %v9157
          %v10714 = vunpack.c.l.b16 %v9158
          %v10715 = vunpack.c.h.b16 %v9158
          %v10716 = vunpack.c.l.b16 %v9159
          %v10717 = vunpack.c.h.b16 %v9159
          %v10718 = vunpack.c.l.b16 %v9160
          %v10719 = vunpack.c.h.b16 %v9160
          %v10720 = vunpack.c.l.b16 %v9161
          %v10721 = vunpack.c.h.b16 %v9161
          %v10722 = vunpack.c.l.b16 %v9162
          %v10723 = vunpack.c.h.b16 %v9162
          %v10724 = vunpack.c.l.b16 %v9163
          %v10725 = vunpack.c.h.b16 %v9163
          %v10726 = vunpack.c.l.b16 %v9164
          %v10727 = vunpack.c.h.b16 %v9164
          %v10728 = vunpack.c.l.b16 %v9165
          %v10729 = vunpack.c.h.b16 %v9165
          %v10730 = vunpack.c.l.b16 %v9166
          %v10731 = vunpack.c.h.b16 %v9166
          %v10732 = vunpack.c.l.b16 %v9167
          %v10733 = vunpack.c.h.b16 %v9167
          %v10734 = vunpack.c.l.b16 %v9168
          %v10735 = vunpack.c.h.b16 %v9168
          %v10736 = vunpack.c.l.b16 %v9169
          %v10737 = vunpack.c.h.b16 %v9169
          %v10738 = vunpack.c.l.b16 %v9170
          %v10739 = vunpack.c.h.b16 %v9170
          %v10740 = vunpack.c.l.b16 %v9171
          %v10741 = vunpack.c.h.b16 %v9171
          %v10742 = vunpack.c.l.b16 %v9172
          %v10743 = vunpack.c.h.b16 %v9172
          %v10744 = vunpack.c.l.b16 %v9173
          %v10745 = vunpack.c.h.b16 %v9173
          %v10746 = vunpack.c.l.b16 %v9174
          %v10747 = vunpack.c.h.b16 %v9174
          %v10748 = vunpack.c.l.b16 %v9175
          %v10749 = vunpack.c.h.b16 %v9175
          %v10750 = vunpack.c.l.b16 %v9176
          %v10751 = vunpack.c.h.b16 %v9176
          %v10752 = vunpack.c.l.b16 %v9177
          %v10753 = vunpack.c.h.b16 %v9177
          %v10754 = vunpack.c.l.b16 %v9178
          %v10755 = vunpack.c.h.b16 %v9178
          %v10756 = vunpack.c.l.b16 %v9179
          %v10757 = vunpack.c.h.b16 %v9179
          %v10758 = vpack.c.b16 %v9742, %v9734
          %v10759 = vpack.c.b16 %v9743, %v9735
          %v10760 = vpack.c.b16 %v9744, %v9736
          %v10761 = vpack.c.b16 %v9745, %v9737
          %v10762 = vpack.c.b16 %v9746, %v9738
          %v10763 = vpack.c.b16 %v9747, %v9739
          %v10764 = vpack.c.b16 %v9748, %v9740
          %v10765 = vpack.c.b16 %v9749, %v9741
          %v10766 = vpack.c.b16 %v9758, %v9750
          %v10767 = vpack.c.b16 %v9759, %v9751
          %v10768 = vpack.c.b16 %v9760, %v9752
          %v10769 = vpack.c.b16 %v9761, %v9753
          %v10770 = vpack.c.b16 %v9762, %v9754
          %v10771 = vpack.c.b16 %v9763, %v9755
          %v10772 = vpack.c.b16 %v9764, %v9756
          %v10773 = vpack.c.b16 %v9765, %v9757
          %v10774 = vpack.c.b16 %v9774, %v9766
          %v10775 = vpack.c.b16 %v9775, %v9767
          %v10776 = vpack.c.b16 %v9776, %v9768
          %v10777 = vpack.c.b16 %v9777, %v9769
          %v10778 = vpack.c.b16 %v9778, %v9770
          %v10779 = vpack.c.b16 %v9779, %v9771
          %v10780 = vpack.c.b16 %v9780, %v9772
          %v10781 = vpack.c.b16 %v9781, %v9773
          %v10782 = vpack.c.b16 %v9790, %v9782
          %v10783 = vpack.c.b16 %v9791, %v9783
          %v10784 = vpack.c.b16 %v9792, %v9784
          %v10785 = vpack.c.b16 %v9793, %v9785
          %v10786 = vpack.c.b16 %v9794, %v9786
          %v10787 = vpack.c.b16 %v9795, %v9787
          %v10788 = vpack.c.b16 %v9796, %v9788
          %v10789 = vpack.c.b16 %v9797, %v9789
          %v10790 = vpack.c.b16 %v9806, %v9798
          %v10791 = vpack.c.b16 %v9807, %v9799
          %v10792 = vpack.c.b16 %v9808, %v9800
          %v10793 = vpack.c.b16 %v9809, %v9801
          %v10794 = vpack.c.b16 %v9810, %v9802
          %v10795 = vpack.c.b16 %v9811, %v9803
          %v10796 = vpack.c.b16 %v9812, %v9804
          %v10797 = vpack.c.b16 %v9813, %v9805
          %v10798 = vpack.c.b16 %v9822, %v9814
          %v10799 = vpack.c.b16 %v9823, %v9815
          %v10800 = vpack.c.b16 %v9824, %v9816
          %v10801 = vpack.c.b16 %v9825, %v9817
          %v10802 = vpack.c.b16 %v9826, %v9818
          %v10803 = vpack.c.b16 %v9827, %v9819
          %v10804 = vpack.c.b16 %v9828, %v9820
          %v10805 = vpack.c.b16 %v9829, %v9821
          %v10806 = vpack.c.b16 %v9838, %v9830
          %v10807 = vpack.c.b16 %v9839, %v9831
          %v10808 = vpack.c.b16 %v9840, %v9832
          %v10809 = vpack.c.b16 %v9841, %v9833
          %v10810 = vpack.c.b16 %v9842, %v9834
          %v10811 = vpack.c.b16 %v9843, %v9835
          %v10812 = vpack.c.b16 %v9844, %v9836
          %v10813 = vpack.c.b16 %v9845, %v9837
          %v10814 = vpack.c.b16 %v9854, %v9846
          %v10815 = vpack.c.b16 %v9855, %v9847
          %v10816 = vpack.c.b16 %v9856, %v9848
          %v10817 = vpack.c.b16 %v9857, %v9849
          %v10818 = vpack.c.b16 %v9858, %v9850
          %v10819 = vpack.c.b16 %v9859, %v9851
          %v10820 = vpack.c.b16 %v9860, %v9852
          %v10821 = vpack.c.b16 %v9861, %v9853
          %v10822 = vpack.c.b16 %v9870, %v9862
          %v10823 = vpack.c.b16 %v9871, %v9863
          %v10824 = vpack.c.b16 %v9872, %v9864
          %v10825 = vpack.c.b16 %v9873, %v9865
          %v10826 = vpack.c.b16 %v9874, %v9866
          %v10827 = vpack.c.b16 %v9875, %v9867
          %v10828 = vpack.c.b16 %v9876, %v9868
          %v10829 = vpack.c.b16 %v9877, %v9869
          %v10830 = vpack.c.b16 %v9886, %v9878
          %v10831 = vpack.c.b16 %v9887, %v9879
          %v10832 = vpack.c.b16 %v9888, %v9880
          %v10833 = vpack.c.b16 %v9889, %v9881
          %v10834 = vpack.c.b16 %v9890, %v9882
          %v10835 = vpack.c.b16 %v9891, %v9883
          %v10836 = vpack.c.b16 %v9892, %v9884
          %v10837 = vpack.c.b16 %v9893, %v9885
          %v10838 = vpack.c.b16 %v9902, %v9894
          %v10839 = vpack.c.b16 %v9903, %v9895
          %v10840 = vpack.c.b16 %v9904, %v9896
          %v10841 = vpack.c.b16 %v9905, %v9897
          %v10842 = vpack.c.b16 %v9906, %v9898
          %v10843 = vpack.c.b16 %v9907, %v9899
          %v10844 = vpack.c.b16 %v9908, %v9900
          %v10845 = vpack.c.b16 %v9909, %v9901
          %v10846 = vpack.c.b16 %v9918, %v9910
          %v10847 = vpack.c.b16 %v9919, %v9911
          %v10848 = vpack.c.b16 %v9920, %v9912
          %v10849 = vpack.c.b16 %v9921, %v9913
          %v10850 = vpack.c.b16 %v9922, %v9914
          %v10851 = vpack.c.b16 %v9923, %v9915
          %v10852 = vpack.c.b16 %v9924, %v9916
          %v10853 = vpack.c.b16 %v9925, %v9917
          %v10854 = vpack.c.b16 %v9934, %v9926
          %v10855 = vpack.c.b16 %v9935, %v9927
          %v10856 = vpack.c.b16 %v9936, %v9928
          %v10857 = vpack.c.b16 %v9937, %v9929
          %v10858 = vpack.c.b16 %v9938, %v9930
          %v10859 = vpack.c.b16 %v9939, %v9931
          %v10860 = vpack.c.b16 %v9940, %v9932
          %v10861 = vpack.c.b16 %v9941, %v9933
          %v10862 = vpack.c.b16 %v9950, %v9942
          %v10863 = vpack.c.b16 %v9951, %v9943
          %v10864 = vpack.c.b16 %v9952, %v9944
          %v10865 = vpack.c.b16 %v9953, %v9945
          %v10866 = vpack.c.b16 %v9954, %v9946
          %v10867 = vpack.c.b16 %v9955, %v9947
          %v10868 = vpack.c.b16 %v9956, %v9948
          %v10869 = vpack.c.b16 %v9957, %v9949
          %v10870 = vpack.c.b16 %v9966, %v9958
          %v10871 = vpack.c.b16 %v9967, %v9959
          %v10872 = vpack.c.b16 %v9968, %v9960
          %v10873 = vpack.c.b16 %v9969, %v9961
          %v10874 = vpack.c.b16 %v9970, %v9962
          %v10875 = vpack.c.b16 %v9971, %v9963
          %v10876 = vpack.c.b16 %v9972, %v9964
          %v10877 = vpack.c.b16 %v9973, %v9965
          %v10878 = vpack.c.b16 %v9982, %v9974
          %v10879 = vpack.c.b16 %v9983, %v9975
          %v10880 = vpack.c.b16 %v9984, %v9976
          %v10881 = vpack.c.b16 %v9985, %v9977
          %v10882 = vpack.c.b16 %v9986, %v9978
          %v10883 = vpack.c.b16 %v9987, %v9979
          %v10884 = vpack.c.b16 %v9988, %v9980
          %v10885 = vpack.c.b16 %v9989, %v9981
          %v10886 = vpack.c.b16 %v9998, %v9990
          %v10887 = vpack.c.b16 %v9999, %v9991
          %v10888 = vpack.c.b16 %v10000, %v9992
          %v10889 = vpack.c.b16 %v10001, %v9993
          %v10890 = vpack.c.b16 %v10002, %v9994
          %v10891 = vpack.c.b16 %v10003, %v9995
          %v10892 = vpack.c.b16 %v10004, %v9996
          %v10893 = vpack.c.b16 %v10005, %v9997
          %v10894 = vpack.c.b16 %v10014, %v10006
          %v10895 = vpack.c.b16 %v10015, %v10007
          %v10896 = vpack.c.b16 %v10016, %v10008
          %v10897 = vpack.c.b16 %v10017, %v10009
          %v10898 = vpack.c.b16 %v10018, %v10010
          %v10899 = vpack.c.b16 %v10019, %v10011
          %v10900 = vpack.c.b16 %v10020, %v10012
          %v10901 = vpack.c.b16 %v10021, %v10013
          %v10902 = vpack.c.b16 %v10030, %v10022
          %v10903 = vpack.c.b16 %v10031, %v10023
          %v10904 = vpack.c.b16 %v10032, %v10024
          %v10905 = vpack.c.b16 %v10033, %v10025
          %v10906 = vpack.c.b16 %v10034, %v10026
          %v10907 = vpack.c.b16 %v10035, %v10027
          %v10908 = vpack.c.b16 %v10036, %v10028
          %v10909 = vpack.c.b16 %v10037, %v10029
          %v10910 = vpack.c.b16 %v10046, %v10038
          %v10911 = vpack.c.b16 %v10047, %v10039
          %v10912 = vpack.c.b16 %v10048, %v10040
          %v10913 = vpack.c.b16 %v10049, %v10041
          %v10914 = vpack.c.b16 %v10050, %v10042
          %v10915 = vpack.c.b16 %v10051, %v10043
          %v10916 = vpack.c.b16 %v10052, %v10044
          %v10917 = vpack.c.b16 %v10053, %v10045
          %v10918 = vpack.c.b16 %v10062, %v10054
          %v10919 = vpack.c.b16 %v10063, %v10055
          %v10920 = vpack.c.b16 %v10064, %v10056
          %v10921 = vpack.c.b16 %v10065, %v10057
          %v10922 = vpack.c.b16 %v10066, %v10058
          %v10923 = vpack.c.b16 %v10067, %v10059
          %v10924 = vpack.c.b16 %v10068, %v10060
          %v10925 = vpack.c.b16 %v10069, %v10061
          %v10926 = vpack.c.b16 %v10078, %v10070
          %v10927 = vpack.c.b16 %v10079, %v10071
          %v10928 = vpack.c.b16 %v10080, %v10072
          %v10929 = vpack.c.b16 %v10081, %v10073
          %v10930 = vpack.c.b16 %v10082, %v10074
          %v10931 = vpack.c.b16 %v10083, %v10075
          %v10932 = vpack.c.b16 %v10084, %v10076
          %v10933 = vpack.c.b16 %v10085, %v10077
          %v10934 = vpack.c.b16 %v10094, %v10086
          %v10935 = vpack.c.b16 %v10095, %v10087
          %v10936 = vpack.c.b16 %v10096, %v10088
          %v10937 = vpack.c.b16 %v10097, %v10089
          %v10938 = vpack.c.b16 %v10098, %v10090
          %v10939 = vpack.c.b16 %v10099, %v10091
          %v10940 = vpack.c.b16 %v10100, %v10092
          %v10941 = vpack.c.b16 %v10101, %v10093
          %v10942 = vpack.c.b16 %v10110, %v10102
          %v10943 = vpack.c.b16 %v10111, %v10103
          %v10944 = vpack.c.b16 %v10112, %v10104
          %v10945 = vpack.c.b16 %v10113, %v10105
          %v10946 = vpack.c.b16 %v10114, %v10106
          %v10947 = vpack.c.b16 %v10115, %v10107
          %v10948 = vpack.c.b16 %v10116, %v10108
          %v10949 = vpack.c.b16 %v10117, %v10109
          %v10950 = vpack.c.b16 %v10126, %v10118
          %v10951 = vpack.c.b16 %v10127, %v10119
          %v10952 = vpack.c.b16 %v10128, %v10120
          %v10953 = vpack.c.b16 %v10129, %v10121
          %v10954 = vpack.c.b16 %v10130, %v10122
          %v10955 = vpack.c.b16 %v10131, %v10123
          %v10956 = vpack.c.b16 %v10132, %v10124
          %v10957 = vpack.c.b16 %v10133, %v10125
          %v10958 = vpack.c.b16 %v10142, %v10134
          %v10959 = vpack.c.b16 %v10143, %v10135
          %v10960 = vpack.c.b16 %v10144, %v10136
          %v10961 = vpack.c.b16 %v10145, %v10137
          %v10962 = vpack.c.b16 %v10146, %v10138
          %v10963 = vpack.c.b16 %v10147, %v10139
          %v10964 = vpack.c.b16 %v10148, %v10140
          %v10965 = vpack.c.b16 %v10149, %v10141
          %v10966 = vpack.c.b16 %v10158, %v10150
          %v10967 = vpack.c.b16 %v10159, %v10151
          %v10968 = vpack.c.b16 %v10160, %v10152
          %v10969 = vpack.c.b16 %v10161, %v10153
          %v10970 = vpack.c.b16 %v10162, %v10154
          %v10971 = vpack.c.b16 %v10163, %v10155
          %v10972 = vpack.c.b16 %v10164, %v10156
          %v10973 = vpack.c.b16 %v10165, %v10157
          %v10974 = vpack.c.b16 %v10174, %v10166
          %v10975 = vpack.c.b16 %v10175, %v10167
          %v10976 = vpack.c.b16 %v10176, %v10168
          %v10977 = vpack.c.b16 %v10177, %v10169
          %v10978 = vpack.c.b16 %v10178, %v10170
          %v10979 = vpack.c.b16 %v10179, %v10171
          %v10980 = vpack.c.b16 %v10180, %v10172
          %v10981 = vpack.c.b16 %v10181, %v10173
          %v10982 = vpack.c.b16 %v10190, %v10182
          %v10983 = vpack.c.b16 %v10191, %v10183
          %v10984 = vpack.c.b16 %v10192, %v10184
          %v10985 = vpack.c.b16 %v10193, %v10185
          %v10986 = vpack.c.b16 %v10194, %v10186
          %v10987 = vpack.c.b16 %v10195, %v10187
          %v10988 = vpack.c.b16 %v10196, %v10188
          %v10989 = vpack.c.b16 %v10197, %v10189
          %v10990 = vpack.c.b16 %v10206, %v10198
          %v10991 = vpack.c.b16 %v10207, %v10199
          %v10992 = vpack.c.b16 %v10208, %v10200
          %v10993 = vpack.c.b16 %v10209, %v10201
          %v10994 = vpack.c.b16 %v10210, %v10202
          %v10995 = vpack.c.b16 %v10211, %v10203
          %v10996 = vpack.c.b16 %v10212, %v10204
          %v10997 = vpack.c.b16 %v10213, %v10205
          %v10998 = vpack.c.b16 %v10222, %v10214
          %v10999 = vpack.c.b16 %v10223, %v10215
          %v11000 = vpack.c.b16 %v10224, %v10216
          %v11001 = vpack.c.b16 %v10225, %v10217
          %v11002 = vpack.c.b16 %v10226, %v10218
          %v11003 = vpack.c.b16 %v10227, %v10219
          %v11004 = vpack.c.b16 %v10228, %v10220
          %v11005 = vpack.c.b16 %v10229, %v10221
          %v11006 = vpack.c.b16 %v10238, %v10230
          %v11007 = vpack.c.b16 %v10239, %v10231
          %v11008 = vpack.c.b16 %v10240, %v10232
          %v11009 = vpack.c.b16 %v10241, %v10233
          %v11010 = vpack.c.b16 %v10242, %v10234
          %v11011 = vpack.c.b16 %v10243, %v10235
          %v11012 = vpack.c.b16 %v10244, %v10236
          %v11013 = vpack.c.b16 %v10245, %v10237
          %v11014 = vpack.c.b16 %v10254, %v10246
          %v11015 = vpack.c.b16 %v10255, %v10247
          %v11016 = vpack.c.b16 %v10256, %v10248
          %v11017 = vpack.c.b16 %v10257, %v10249
          %v11018 = vpack.c.b16 %v10258, %v10250
          %v11019 = vpack.c.b16 %v10259, %v10251
          %v11020 = vpack.c.b16 %v10260, %v10252
          %v11021 = vpack.c.b16 %v10261, %v10253
          %v11022 = vpack.c.b16 %v10270, %v10262
          %v11023 = vpack.c.b16 %v10271, %v10263
          %v11024 = vpack.c.b16 %v10272, %v10264
          %v11025 = vpack.c.b16 %v10273, %v10265
          %v11026 = vpack.c.b16 %v10274, %v10266
          %v11027 = vpack.c.b16 %v10275, %v10267
          %v11028 = vpack.c.b16 %v10276, %v10268
          %v11029 = vpack.c.b16 %v10277, %v10269
          %v11030 = vpack.c.b16 %v10286, %v10278
          %v11031 = vpack.c.b16 %v10287, %v10279
          %v11032 = vpack.c.b16 %v10288, %v10280
          %v11033 = vpack.c.b16 %v10289, %v10281
          %v11034 = vpack.c.b16 %v10290, %v10282
          %v11035 = vpack.c.b16 %v10291, %v10283
          %v11036 = vpack.c.b16 %v10292, %v10284
          %v11037 = vpack.c.b16 %v10293, %v10285
          %v11038 = vpack.c.b16 %v10302, %v10294
          %v11039 = vpack.c.b16 %v10303, %v10295
          %v11040 = vpack.c.b16 %v10304, %v10296
          %v11041 = vpack.c.b16 %v10305, %v10297
          %v11042 = vpack.c.b16 %v10306, %v10298
          %v11043 = vpack.c.b16 %v10307, %v10299
          %v11044 = vpack.c.b16 %v10308, %v10300
          %v11045 = vpack.c.b16 %v10309, %v10301
          %v11046 = vpack.c.b16 %v10318, %v10310
          %v11047 = vpack.c.b16 %v10319, %v10311
          %v11048 = vpack.c.b16 %v10320, %v10312
          %v11049 = vpack.c.b16 %v10321, %v10313
          %v11050 = vpack.c.b16 %v10322, %v10314
          %v11051 = vpack.c.b16 %v10323, %v10315
          %v11052 = vpack.c.b16 %v10324, %v10316
          %v11053 = vpack.c.b16 %v10325, %v10317
          %v11054 = vpack.c.b16 %v10334, %v10326
          %v11055 = vpack.c.b16 %v10335, %v10327
          %v11056 = vpack.c.b16 %v10336, %v10328
          %v11057 = vpack.c.b16 %v10337, %v10329
          %v11058 = vpack.c.b16 %v10338, %v10330
          %v11059 = vpack.c.b16 %v10339, %v10331
          %v11060 = vpack.c.b16 %v10340, %v10332
          %v11061 = vpack.c.b16 %v10341, %v10333
          %v11062 = vpack.c.b16 %v10350, %v10342
          %v11063 = vpack.c.b16 %v10351, %v10343
          %v11064 = vpack.c.b16 %v10352, %v10344
          %v11065 = vpack.c.b16 %v10353, %v10345
          %v11066 = vpack.c.b16 %v10354, %v10346
          %v11067 = vpack.c.b16 %v10355, %v10347
          %v11068 = vpack.c.b16 %v10356, %v10348
          %v11069 = vpack.c.b16 %v10357, %v10349
          %v11070 = vpack.c.b16 %v10366, %v10358
          %v11071 = vpack.c.b16 %v10367, %v10359
          %v11072 = vpack.c.b16 %v10368, %v10360
          %v11073 = vpack.c.b16 %v10369, %v10361
          %v11074 = vpack.c.b16 %v10370, %v10362
          %v11075 = vpack.c.b16 %v10371, %v10363
          %v11076 = vpack.c.b16 %v10372, %v10364
          %v11077 = vpack.c.b16 %v10373, %v10365
          %v11078 = vpack.c.b16 %v10382, %v10374
          %v11079 = vpack.c.b16 %v10383, %v10375
          %v11080 = vpack.c.b16 %v10384, %v10376
          %v11081 = vpack.c.b16 %v10385, %v10377
          %v11082 = vpack.c.b16 %v10386, %v10378
          %v11083 = vpack.c.b16 %v10387, %v10379
          %v11084 = vpack.c.b16 %v10388, %v10380
          %v11085 = vpack.c.b16 %v10389, %v10381
          %v11086 = vpack.c.b16 %v10398, %v10390
          %v11087 = vpack.c.b16 %v10399, %v10391
          %v11088 = vpack.c.b16 %v10400, %v10392
          %v11089 = vpack.c.b16 %v10401, %v10393
          %v11090 = vpack.c.b16 %v10402, %v10394
          %v11091 = vpack.c.b16 %v10403, %v10395
          %v11092 = vpack.c.b16 %v10404, %v10396
          %v11093 = vpack.c.b16 %v10405, %v10397
          %v11094 = vpack.c.b16 %v10414, %v10406
          %v11095 = vpack.c.b16 %v10415, %v10407
          %v11096 = vpack.c.b16 %v10416, %v10408
          %v11097 = vpack.c.b16 %v10417, %v10409
          %v11098 = vpack.c.b16 %v10418, %v10410
          %v11099 = vpack.c.b16 %v10419, %v10411
          %v11100 = vpack.c.b16 %v10420, %v10412
          %v11101 = vpack.c.b16 %v10421, %v10413
          %v11102 = vpack.c.b16 %v10430, %v10422
          %v11103 = vpack.c.b16 %v10431, %v10423
          %v11104 = vpack.c.b16 %v10432, %v10424
          %v11105 = vpack.c.b16 %v10433, %v10425
          %v11106 = vpack.c.b16 %v10434, %v10426
          %v11107 = vpack.c.b16 %v10435, %v10427
          %v11108 = vpack.c.b16 %v10436, %v10428
          %v11109 = vpack.c.b16 %v10437, %v10429
          %v11110 = vpack.c.b16 %v10446, %v10438
          %v11111 = vpack.c.b16 %v10447, %v10439
          %v11112 = vpack.c.b16 %v10448, %v10440
          %v11113 = vpack.c.b16 %v10449, %v10441
          %v11114 = vpack.c.b16 %v10450, %v10442
          %v11115 = vpack.c.b16 %v10451, %v10443
          %v11116 = vpack.c.b16 %v10452, %v10444
          %v11117 = vpack.c.b16 %v10453, %v10445
          %v11118 = vpack.c.b16 %v10462, %v10454
          %v11119 = vpack.c.b16 %v10463, %v10455
          %v11120 = vpack.c.b16 %v10464, %v10456
          %v11121 = vpack.c.b16 %v10465, %v10457
          %v11122 = vpack.c.b16 %v10466, %v10458
          %v11123 = vpack.c.b16 %v10467, %v10459
          %v11124 = vpack.c.b16 %v10468, %v10460
          %v11125 = vpack.c.b16 %v10469, %v10461
          %v11126 = vpack.c.b16 %v10478, %v10470
          %v11127 = vpack.c.b16 %v10479, %v10471
          %v11128 = vpack.c.b16 %v10480, %v10472
          %v11129 = vpack.c.b16 %v10481, %v10473
          %v11130 = vpack.c.b16 %v10482, %v10474
          %v11131 = vpack.c.b16 %v10483, %v10475
          %v11132 = vpack.c.b16 %v10484, %v10476
          %v11133 = vpack.c.b16 %v10485, %v10477
          %v11134 = vpack.c.b16 %v10494, %v10486
          %v11135 = vpack.c.b16 %v10495, %v10487
          %v11136 = vpack.c.b16 %v10496, %v10488
          %v11137 = vpack.c.b16 %v10497, %v10489
          %v11138 = vpack.c.b16 %v10498, %v10490
          %v11139 = vpack.c.b16 %v10499, %v10491
          %v11140 = vpack.c.b16 %v10500, %v10492
          %v11141 = vpack.c.b16 %v10501, %v10493
          %v11142 = vpack.c.b16 %v10510, %v10502
          %v11143 = vpack.c.b16 %v10511, %v10503
          %v11144 = vpack.c.b16 %v10512, %v10504
          %v11145 = vpack.c.b16 %v10513, %v10505
          %v11146 = vpack.c.b16 %v10514, %v10506
          %v11147 = vpack.c.b16 %v10515, %v10507
          %v11148 = vpack.c.b16 %v10516, %v10508
          %v11149 = vpack.c.b16 %v10517, %v10509
          %v11150 = vpack.c.b16 %v10526, %v10518
          %v11151 = vpack.c.b16 %v10527, %v10519
          %v11152 = vpack.c.b16 %v10528, %v10520
          %v11153 = vpack.c.b16 %v10529, %v10521
          %v11154 = vpack.c.b16 %v10530, %v10522
          %v11155 = vpack.c.b16 %v10531, %v10523
          %v11156 = vpack.c.b16 %v10532, %v10524
          %v11157 = vpack.c.b16 %v10533, %v10525
          %v11158 = vpack.c.b16 %v10542, %v10534
          %v11159 = vpack.c.b16 %v10543, %v10535
          %v11160 = vpack.c.b16 %v10544, %v10536
          %v11161 = vpack.c.b16 %v10545, %v10537
          %v11162 = vpack.c.b16 %v10546, %v10538
          %v11163 = vpack.c.b16 %v10547, %v10539
          %v11164 = vpack.c.b16 %v10548, %v10540
          %v11165 = vpack.c.b16 %v10549, %v10541
          %v11166 = vpack.c.b16 %v10558, %v10550
          %v11167 = vpack.c.b16 %v10559, %v10551
          %v11168 = vpack.c.b16 %v10560, %v10552
          %v11169 = vpack.c.b16 %v10561, %v10553
          %v11170 = vpack.c.b16 %v10562, %v10554
          %v11171 = vpack.c.b16 %v10563, %v10555
          %v11172 = vpack.c.b16 %v10564, %v10556
          %v11173 = vpack.c.b16 %v10565, %v10557
          %v11174 = vpack.c.b16 %v10574, %v10566
          %v11175 = vpack.c.b16 %v10575, %v10567
          %v11176 = vpack.c.b16 %v10576, %v10568
          %v11177 = vpack.c.b16 %v10577, %v10569
          %v11178 = vpack.c.b16 %v10578, %v10570
          %v11179 = vpack.c.b16 %v10579, %v10571
          %v11180 = vpack.c.b16 %v10580, %v10572
          %v11181 = vpack.c.b16 %v10581, %v10573
          %v11182 = vpack.c.b16 %v10590, %v10582
          %v11183 = vpack.c.b16 %v10591, %v10583
          %v11184 = vpack.c.b16 %v10592, %v10584
          %v11185 = vpack.c.b16 %v10593, %v10585
          %v11186 = vpack.c.b16 %v10594, %v10586
          %v11187 = vpack.c.b16 %v10595, %v10587
          %v11188 = vpack.c.b16 %v10596, %v10588
          %v11189 = vpack.c.b16 %v10597, %v10589
          %v11190 = vpack.c.b16 %v10606, %v10598
          %v11191 = vpack.c.b16 %v10607, %v10599
          %v11192 = vpack.c.b16 %v10608, %v10600
          %v11193 = vpack.c.b16 %v10609, %v10601
          %v11194 = vpack.c.b16 %v10610, %v10602
          %v11195 = vpack.c.b16 %v10611, %v10603
          %v11196 = vpack.c.b16 %v10612, %v10604
          %v11197 = vpack.c.b16 %v10613, %v10605
          %v11198 = vpack.c.b16 %v10622, %v10614
          %v11199 = vpack.c.b16 %v10623, %v10615
          %v11200 = vpack.c.b16 %v10624, %v10616
          %v11201 = vpack.c.b16 %v10625, %v10617
          %v11202 = vpack.c.b16 %v10626, %v10618
          %v11203 = vpack.c.b16 %v10627, %v10619
          %v11204 = vpack.c.b16 %v10628, %v10620
          %v11205 = vpack.c.b16 %v10629, %v10621
          %v11206 = vpack.c.b16 %v10638, %v10630
          %v11207 = vpack.c.b16 %v10639, %v10631
          %v11208 = vpack.c.b16 %v10640, %v10632
          %v11209 = vpack.c.b16 %v10641, %v10633
          %v11210 = vpack.c.b16 %v10642, %v10634
          %v11211 = vpack.c.b16 %v10643, %v10635
          %v11212 = vpack.c.b16 %v10644, %v10636
          %v11213 = vpack.c.b16 %v10645, %v10637
          %v11214 = vpack.c.b16 %v10654, %v10646
          %v11215 = vpack.c.b16 %v10655, %v10647
          %v11216 = vpack.c.b16 %v10656, %v10648
          %v11217 = vpack.c.b16 %v10657, %v10649
          %v11218 = vpack.c.b16 %v10658, %v10650
          %v11219 = vpack.c.b16 %v10659, %v10651
          %v11220 = vpack.c.b16 %v10660, %v10652
          %v11221 = vpack.c.b16 %v10661, %v10653
          %v11222 = vpack.c.b16 %v10670, %v10662
          %v11223 = vpack.c.b16 %v10671, %v10663
          %v11224 = vpack.c.b16 %v10672, %v10664
          %v11225 = vpack.c.b16 %v10673, %v10665
          %v11226 = vpack.c.b16 %v10674, %v10666
          %v11227 = vpack.c.b16 %v10675, %v10667
          %v11228 = vpack.c.b16 %v10676, %v10668
          %v11229 = vpack.c.b16 %v10677, %v10669
          %v11230 = vpack.c.b16 %v10686, %v10678
          %v11231 = vpack.c.b16 %v10687, %v10679
          %v11232 = vpack.c.b16 %v10688, %v10680
          %v11233 = vpack.c.b16 %v10689, %v10681
          %v11234 = vpack.c.b16 %v10690, %v10682
          %v11235 = vpack.c.b16 %v10691, %v10683
          %v11236 = vpack.c.b16 %v10692, %v10684
          %v11237 = vpack.c.b16 %v10693, %v10685
          %v11238 = vpack.c.b16 %v10702, %v10694
          %v11239 = vpack.c.b16 %v10703, %v10695
          %v11240 = vpack.c.b16 %v10704, %v10696
          %v11241 = vpack.c.b16 %v10705, %v10697
          %v11242 = vpack.c.b16 %v10706, %v10698
          %v11243 = vpack.c.b16 %v10707, %v10699
          %v11244 = vpack.c.b16 %v10708, %v10700
          %v11245 = vpack.c.b16 %v10709, %v10701
          %v11246 = vpack.c.b16 %v10718, %v10710
          %v11247 = vpack.c.b16 %v10719, %v10711
          %v11248 = vpack.c.b16 %v10720, %v10712
          %v11249 = vpack.c.b16 %v10721, %v10713
          %v11250 = vpack.c.b16 %v10722, %v10714
          %v11251 = vpack.c.b16 %v10723, %v10715
          %v11252 = vpack.c.b16 %v10724, %v10716
          %v11253 = vpack.c.b16 %v10725, %v10717
          %v11254 = vpack.c.b16 %v10734, %v10726
          %v11255 = vpack.c.b16 %v10735, %v10727
          %v11256 = vpack.c.b16 %v10736, %v10728
          %v11257 = vpack.c.b16 %v10737, %v10729
          %v11258 = vpack.c.b16 %v10738, %v10730
          %v11259 = vpack.c.b16 %v10739, %v10731
          %v11260 = vpack.c.b16 %v10740, %v10732
          %v11261 = vpack.c.b16 %v10741, %v10733
          %v11262 = vpack.c.b16 %v10750, %v10742
          %v11263 = vpack.c.b16 %v10751, %v10743
          %v11264 = vpack.c.b16 %v10752, %v10744
          %v11265 = vpack.c.b16 %v10753, %v10745
          %v11266 = vpack.c.b16 %v10754, %v10746
          %v11267 = vpack.c.b16 %v10755, %v10747
          %v11268 = vpack.c.b16 %v10756, %v10748
          %v11269 = vpack.c.b16 %v10757, %v10749
          %11782 = vmatprep.subr.bf16.mxu0 %v10759
          %11783 = vmatpush1.bf16.msra.mxu0 %v10758
          %11784 = vmatprep.subr.bf16.mxu0 %v10767
          %11785 = vmatpush1.bf16.msra.mxu0 %v10766
          %11786 = vmatprep.subr.bf16.mxu0 %v10775
          %11787 = vmatpush1.bf16.msra.mxu0 %v10774
          %11788 = vmatprep.subr.bf16.mxu0 %v10783
          %11789 = vmatpush1.bf16.msra.mxu0 %v10782
          %11790 = vmatprep.subr.bf16.mxu0 %v10791
          %11791 = vmatpush1.bf16.msra.mxu0 %v10790
          %11792 = vmatprep.subr.bf16.mxu0 %v10799
          %11793 = vmatpush1.bf16.msra.mxu0 %v10798
          %11794 = vmatprep.subr.bf16.mxu0 %v10807
          %11795 = vmatpush1.bf16.msra.mxu0 %v10806
          %11796 = vmatprep.subr.bf16.mxu0 %v10815
          %11797 = vmatpush1.bf16.msra.mxu0 %v10814
          %11798 = vmatprep.subr.bf16.mxu0 %v10823
          %11799 = vmatpush1.bf16.msra.mxu0 %v10822
          %11800 = vmatprep.subr.bf16.mxu0 %v10831
          %11801 = vmatpush1.bf16.msra.mxu0 %v10830
          %11802 = vmatprep.subr.bf16.mxu0 %v10839
          %11803 = vmatpush1.bf16.msra.mxu0 %v10838
          %11804 = vmatprep.subr.bf16.mxu0 %v10847
          %11805 = vmatpush1.bf16.msra.mxu0 %v10846
          %11806 = vmatprep.subr.bf16.mxu0 %v10855
          %11807 = vmatpush1.bf16.msra.mxu0 %v10854
          %11808 = vmatprep.subr.bf16.mxu0 %v10863
          %11809 = vmatpush1.bf16.msra.mxu0 %v10862
          %11810 = vmatprep.subr.bf16.mxu0 %v10871
          %11811 = vmatpush1.bf16.msra.mxu0 %v10870
          %11812 = vmatprep.subr.bf16.mxu0 %v10879
          %11813 = vmatpush1.bf16.msra.mxu0 %v10878
          %11814 = vmatprep.mubr.bf16.mxu0 %v8661
          %11815 = vmatmul.mubr.bf16.gmra.mrb[0].mxu0 %v8660
          %v11816 = vpop.f32.mrb[0].mxu0
          %v11817 = vadd.f32 %v9185, %v11816
          %v11818 = vpop.f32.mrb[0].mxu0
          %v11819 = vadd.f32 %v9189, %v11818
          %v11820 = vpop.f32.mrb[0].mxu0
          %v11821 = vpop.f32.mrb[0].mxu0
          %11822 = vdwg.mxu0
          %11823 = vmatprep.subr.bf16.mxu0 %v10887
          %11824 = vmatpush1.bf16.msra.mxu0 %v10886
          %11825 = vmatprep.subr.bf16.mxu0 %v10895
          %11826 = vmatpush1.bf16.msra.mxu0 %v10894
          %11827 = vmatprep.subr.bf16.mxu0 %v10903
          %11828 = vmatpush1.bf16.msra.mxu0 %v10902
          %11829 = vmatprep.subr.bf16.mxu0 %v10911
          %11830 = vmatpush1.bf16.msra.mxu0 %v10910
          %11831 = vmatprep.subr.bf16.mxu0 %v10919
          %11832 = vmatpush1.bf16.msra.mxu0 %v10918
          %11833 = vmatprep.subr.bf16.mxu0 %v10927
          %11834 = vmatpush1.bf16.msra.mxu0 %v10926
          %11835 = vmatprep.subr.bf16.mxu0 %v10935
          %11836 = vmatpush1.bf16.msra.mxu0 %v10934
          %11837 = vmatprep.subr.bf16.mxu0 %v10943
          %11838 = vmatpush1.bf16.msra.mxu0 %v10942
          %11839 = vmatprep.subr.bf16.mxu0 %v10951
          %11840 = vmatpush1.bf16.msra.mxu0 %v10950
          %11841 = vmatprep.subr.bf16.mxu0 %v10959
          %11842 = vmatpush1.bf16.msra.mxu0 %v10958
          %11843 = vmatprep.subr.bf16.mxu0 %v10967
          %11844 = vmatpush1.bf16.msra.mxu0 %v10966
          %11845 = vmatprep.subr.bf16.mxu0 %v10975
          %11846 = vmatpush1.bf16.msra.mxu0 %v10974
          %11847 = vmatprep.subr.bf16.mxu0 %v10983
          %11848 = vmatpush1.bf16.msra.mxu0 %v10982
          %11849 = vmatprep.subr.bf16.mxu0 %v10991
          %11850 = vmatpush1.bf16.msra.mxu0 %v10990
          %11851 = vmatprep.subr.bf16.mxu0 %v10999
          %11852 = vmatpush1.bf16.msra.mxu0 %v10998
          %11853 = vmatprep.subr.bf16.mxu0 %v11007
          %11854 = vmatpush1.bf16.msra.mxu0 %v11006
          %11855 = vmatprep.mubr.bf16.mxu0 %v8663
          %11856 = vmatmul.mubr.bf16.gmra.mrb[0].mxu0 %v8662
          %v11857 = vpop.f32.mrb[0].mxu0
          %v11858 = vadd.f32 %v11817, %v11857
          %v11859 = vpop.f32.mrb[0].mxu0
          %v11860 = vadd.f32 %v11819, %v11859
          %v11861 = vpop.f32.mrb[0].mxu0
          %v11862 = vpop.f32.mrb[0].mxu0
          %11863 = vdwg.mxu0
          %11864 = vmatprep.subr.bf16.mxu0 %v11015
          %11865 = vmatpush1.bf16.msra.mxu0 %v11014
          %11866 = vmatprep.subr.bf16.mxu0 %v11023
          %11867 = vmatpush1.bf16.msra.mxu0 %v11022
          %11868 = vmatprep.subr.bf16.mxu0 %v11031
          %11869 = vmatpush1.bf16.msra.mxu0 %v11030
          %11870 = vmatprep.subr.bf16.mxu0 %v11039
          %11871 = vmatpush1.bf16.msra.mxu0 %v11038
          %11872 = vmatprep.subr.bf16.mxu0 %v11047
          %11873 = vmatpush1.bf16.msra.mxu0 %v11046
          %11874 = vmatprep.subr.bf16.mxu0 %v11055
          %11875 = vmatpush1.bf16.msra.mxu0 %v11054
          %11876 = vmatprep.subr.bf16.mxu0 %v11063
          %11877 = vmatpush1.bf16.msra.mxu0 %v11062
          %11878 = vmatprep.subr.bf16.mxu0 %v11071
          %11879 = vmatpush1.bf16.msra.mxu0 %v11070
          %11880 = vmatprep.subr.bf16.mxu0 %v11079
          %11881 = vmatpush1.bf16.msra.mxu0 %v11078
          %11882 = vmatprep.subr.bf16.mxu0 %v11087
          %11883 = vmatpush1.bf16.msra.mxu0 %v11086
          %11884 = vmatprep.subr.bf16.mxu0 %v11095
          %11885 = vmatpush1.bf16.msra.mxu0 %v11094
          %11886 = vmatprep.subr.bf16.mxu0 %v11103
          %11887 = vmatpush1.bf16.msra.mxu0 %v11102
          %11888 = vmatprep.subr.bf16.mxu0 %v11111
          %11889 = vmatpush1.bf16.msra.mxu0 %v11110
          %11890 = vmatprep.subr.bf16.mxu0 %v11119
          %11891 = vmatpush1.bf16.msra.mxu0 %v11118
          %11892 = vmatprep.subr.bf16.mxu0 %v11127
          %11893 = vmatpush1.bf16.msra.mxu0 %v11126
          %11894 = vmatprep.subr.bf16.mxu0 %v11135
          %11895 = vmatpush1.bf16.msra.mxu0 %v11134
          %11896 = vmatprep.mubr.bf16.mxu0 %v8665
          %11897 = vmatmul.mubr.bf16.gmra.mrb[0].mxu0 %v8664
          %v11898 = vpop.f32.mrb[0].mxu0
          %v11899 = vadd.f32 %v11858, %v11898
          %v11900 = vpop.f32.mrb[0].mxu0
          %v11901 = vadd.f32 %v11860, %v11900
          %v11902 = vpop.f32.mrb[0].mxu0
          %v11903 = vpop.f32.mrb[0].mxu0
          %11904 = vdwg.mxu0
          %11905 = vmatprep.subr.bf16.mxu0 %v11143
          %11906 = vmatpush1.bf16.msra.mxu0 %v11142
          %11907 = vmatprep.subr.bf16.mxu0 %v11151
          %11908 = vmatpush1.bf16.msra.mxu0 %v11150
          %11909 = vmatprep.subr.bf16.mxu0 %v11159
          %11910 = vmatpush1.bf16.msra.mxu0 %v11158
          %11911 = vmatprep.subr.bf16.mxu0 %v11167
          %11912 = vmatpush1.bf16.msra.mxu0 %v11166
          %11913 = vmatprep.subr.bf16.mxu0 %v11175
          %11914 = vmatpush1.bf16.msra.mxu0 %v11174
          %11915 = vmatprep.subr.bf16.mxu0 %v11183
          %11916 = vmatpush1.bf16.msra.mxu0 %v11182
          %11917 = vmatprep.subr.bf16.mxu0 %v11191
          %11918 = vmatpush1.bf16.msra.mxu0 %v11190
          %11919 = vmatprep.subr.bf16.mxu0 %v11199
          %11920 = vmatpush1.bf16.msra.mxu0 %v11198
          %11921 = vmatprep.subr.bf16.mxu0 %v11207
          %11922 = vmatpush1.bf16.msra.mxu0 %v11206
          %11923 = vmatprep.subr.bf16.mxu0 %v11215
          %11924 = vmatpush1.bf16.msra.mxu0 %v11214
          %11925 = vmatprep.subr.bf16.mxu0 %v11223
          %11926 = vmatpush1.bf16.msra.mxu0 %v11222
          %11927 = vmatprep.subr.bf16.mxu0 %v11231
          %11928 = vmatpush1.bf16.msra.mxu0 %v11230
          %11929 = vmatprep.subr.bf16.mxu0 %v11239
          %11930 = vmatpush1.bf16.msra.mxu0 %v11238
          %11931 = vmatprep.subr.bf16.mxu0 %v11247
          %11932 = vmatpush1.bf16.msra.mxu0 %v11246
          %11933 = vmatprep.subr.bf16.mxu0 %v11255
          %11934 = vmatpush1.bf16.msra.mxu0 %v11254
          %11935 = vmatprep.subr.bf16.mxu0 %v11263
          %11936 = vmatpush1.bf16.msra.mxu0 %v11262
          %11937 = vmatprep.mubr.bf16.mxu0 %v8667
          %11938 = vmatmul.mubr.bf16.gmra.mrb[0].mxu0 %v8666
          %v11939 = vpop.f32.mrb[0].mxu0
          %v11940 = vadd.f32 %v11899, %v11939
          %v11941 = vpop.f32.mrb[0].mxu0
          %v11942 = vadd.f32 %v11901, %v11941
          %v11943 = vpop.f32.mrb[0].mxu0
          %v11944 = vpop.f32.mrb[0].mxu0
          %11945 = vdwg.mxu0
          %11946 = vmatprep.subr.bf16.mxu0 %v10761
          %11947 = vmatpush1.bf16.msra.mxu0 %v10760
          %11948 = vmatprep.subr.bf16.mxu0 %v10769
          %11949 = vmatpush1.bf16.msra.mxu0 %v10768
          %11950 = vmatprep.subr.bf16.mxu0 %v10777
          %11951 = vmatpush1.bf16.msra.mxu0 %v10776
          %11952 = vmatprep.subr.bf16.mxu0 %v10785
          %11953 = vmatpush1.bf16.msra.mxu0 %v10784
          %11954 = vmatprep.subr.bf16.mxu0 %v10793
          %11955 = vmatpush1.bf16.msra.mxu0 %v10792
          %11956 = vmatprep.subr.bf16.mxu0 %v10801
          %11957 = vmatpush1.bf16.msra.mxu0 %v10800
          %11958 = vmatprep.subr.bf16.mxu0 %v10809
          %11959 = vmatpush1.bf16.msra.mxu0 %v10808
          %11960 = vmatprep.subr.bf16.mxu0 %v10817
          %11961 = vmatpush1.bf16.msra.mxu0 %v10816
          %11962 = vmatprep.subr.bf16.mxu0 %v10825
          %11963 = vmatpush1.bf16.msra.mxu0 %v10824
          %11964 = vmatprep.subr.bf16.mxu0 %v10833
          %11965 = vmatpush1.bf16.msra.mxu0 %v10832
          %11966 = vmatprep.subr.bf16.mxu0 %v10841
          %11967 = vmatpush1.bf16.msra.mxu0 %v10840
          %11968 = vmatprep.subr.bf16.mxu0 %v10849
          %11969 = vmatpush1.bf16.msra.mxu0 %v10848
          %11970 = vmatprep.subr.bf16.mxu0 %v10857
          %11971 = vmatpush1.bf16.msra.mxu0 %v10856
          %11972 = vmatprep.subr.bf16.mxu0 %v10865
          %11973 = vmatpush1.bf16.msra.mxu0 %v10864
          %11974 = vmatprep.subr.bf16.mxu0 %v10873
          %11975 = vmatpush1.bf16.msra.mxu0 %v10872
          %11976 = vmatprep.subr.bf16.mxu0 %v10881
          %11977 = vmatpush1.bf16.msra.mxu0 %v10880
          %11978 = vmatprep.mubr.bf16.mxu0 %v8661
          %11979 = vmatmul.mubr.bf16.gmra.mrb[0].mxu0 %v8660
          %v11980 = vpop.f32.mrb[0].mxu0
          %v11981 = vadd.f32 %v9193, %v11980
          %v11982 = vpop.f32.mrb[0].mxu0
          %v11983 = vadd.f32 %v9197, %v11982
          %v11984 = vpop.f32.mrb[0].mxu0
          %v11985 = vpop.f32.mrb[0].mxu0
          %11986 = vdwg.mxu0
          %11987 = vmatprep.subr.bf16.mxu0 %v10889
          %11988 = vmatpush1.bf16.msra.mxu0 %v10888
          %11989 = vmatprep.subr.bf16.mxu0 %v10897
          %11990 = vmatpush1.bf16.msra.mxu0 %v10896
          %11991 = vmatprep.subr.bf16.mxu0 %v10905
          %11992 = vmatpush1.bf16.msra.mxu0 %v10904
          %11993 = vmatprep.subr.bf16.mxu0 %v10913
          %11994 = vmatpush1.bf16.msra.mxu0 %v10912
          %11995 = vmatprep.subr.bf16.mxu0 %v10921
          %11996 = vmatpush1.bf16.msra.mxu0 %v10920
          %11997 = vmatprep.subr.bf16.mxu0 %v10929
          %11998 = vmatpush1.bf16.msra.mxu0 %v10928
          %11999 = vmatprep.subr.bf16.mxu0 %v10937
          %12000 = vmatpush1.bf16.msra.mxu0 %v10936
          %12001 = vmatprep.subr.bf16.mxu0 %v10945
          %12002 = vmatpush1.bf16.msra.mxu0 %v10944
          %12003 = vmatprep.subr.bf16.mxu0 %v10953
          %12004 = vmatpush1.bf16.msra.mxu0 %v10952
          %12005 = vmatprep.subr.bf16.mxu0 %v10961
          %12006 = vmatpush1.bf16.msra.mxu0 %v10960
          %12007 = vmatprep.subr.bf16.mxu0 %v10969
          %12008 = vmatpush1.bf16.msra.mxu0 %v10968
          %12009 = vmatprep.subr.bf16.mxu0 %v10977
          %12010 = vmatpush1.bf16.msra.mxu0 %v10976
          %12011 = vmatprep.subr.bf16.mxu0 %v10985
          %12012 = vmatpush1.bf16.msra.mxu0 %v10984
          %12013 = vmatprep.subr.bf16.mxu0 %v10993
          %12014 = vmatpush1.bf16.msra.mxu0 %v10992
          %12015 = vmatprep.subr.bf16.mxu0 %v11001
          %12016 = vmatpush1.bf16.msra.mxu0 %v11000
          %12017 = vmatprep.subr.bf16.mxu0 %v11009
          %12018 = vmatpush1.bf16.msra.mxu0 %v11008
          %12019 = vmatprep.mubr.bf16.mxu0 %v8663
          %12020 = vmatmul.mubr.bf16.gmra.mrb[0].mxu0 %v8662
          %v12021 = vpop.f32.mrb[0].mxu0
          %v12022 = vadd.f32 %v11981, %v12021
          %v12023 = vpop.f32.mrb[0].mxu0
          %v12024 = vadd.f32 %v11983, %v12023
          %v12025 = vpop.f32.mrb[0].mxu0
          %v12026 = vpop.f32.mrb[0].mxu0
          %12027 = vdwg.mxu0
          %12028 = vmatprep.subr.bf16.mxu0 %v11017
          %12029 = vmatpush1.bf16.msra.mxu0 %v11016
          %12030 = vmatprep.subr.bf16.mxu0 %v11025
          %12031 = vmatpush1.bf16.msra.mxu0 %v11024
          %12032 = vmatprep.subr.bf16.mxu0 %v11033
          %12033 = vmatpush1.bf16.msra.mxu0 %v11032
          %12034 = vmatprep.subr.bf16.mxu0 %v11041
          %12035 = vmatpush1.bf16.msra.mxu0 %v11040
          %12036 = vmatprep.subr.bf16.mxu0 %v11049
          %12037 = vmatpush1.bf16.msra.mxu0 %v11048
          %12038 = vmatprep.subr.bf16.mxu0 %v11057
          %12039 = vmatpush1.bf16.msra.mxu0 %v11056
          %12040 = vmatprep.subr.bf16.mxu0 %v11065
          %12041 = vmatpush1.bf16.msra.mxu0 %v11064
          %12042 = vmatprep.subr.bf16.mxu0 %v11073
          %12043 = vmatpush1.bf16.msra.mxu0 %v11072
          %12044 = vmatprep.subr.bf16.mxu0 %v11081
          %12045 = vmatpush1.bf16.msra.mxu0 %v11080
          %12046 = vmatprep.subr.bf16.mxu0 %v11089
          %12047 = vmatpush1.bf16.msra.mxu0 %v11088
          %12048 = vmatprep.subr.bf16.mxu0 %v11097
          %12049 = vmatpush1.bf16.msra.mxu0 %v11096
          %12050 = vmatprep.subr.bf16.mxu0 %v11105
          %12051 = vmatpush1.bf16.msra.mxu0 %v11104
          %12052 = vmatprep.subr.bf16.mxu0 %v11113
          %12053 = vmatpush1.bf16.msra.mxu0 %v11112
          %12054 = vmatprep.subr.bf16.mxu0 %v11121
          %12055 = vmatpush1.bf16.msra.mxu0 %v11120
          %12056 = vmatprep.subr.bf16.mxu0 %v11129
          %12057 = vmatpush1.bf16.msra.mxu0 %v11128
          %12058 = vmatprep.subr.bf16.mxu0 %v11137
          %12059 = vmatpush1.bf16.msra.mxu0 %v11136
          %12060 = vmatprep.mubr.bf16.mxu0 %v8665
          %12061 = vmatmul.mubr.bf16.gmra.mrb[0].mxu0 %v8664
          %v12062 = vpop.f32.mrb[0].mxu0
          %v12063 = vadd.f32 %v12022, %v12062
          %v12064 = vpop.f32.mrb[0].mxu0
          %v12065 = vadd.f32 %v12024, %v12064
          %v12066 = vpop.f32.mrb[0].mxu0
          %v12067 = vpop.f32.mrb[0].mxu0
          %12068 = vdwg.mxu0
          %12069 = vmatprep.subr.bf16.mxu0 %v11145
          %12070 = vmatpush1.bf16.msra.mxu0 %v11144
          %12071 = vmatprep.subr.bf16.mxu0 %v11153
          %12072 = vmatpush1.bf16.msra.mxu0 %v11152
          %12073 = vmatprep.subr.bf16.mxu0 %v11161
          %12074 = vmatpush1.bf16.msra.mxu0 %v11160
          %12075 = vmatprep.subr.bf16.mxu0 %v11169
          %12076 = vmatpush1.bf16.msra.mxu0 %v11168
          %12077 = vmatprep.subr.bf16.mxu0 %v11177
          %12078 = vmatpush1.bf16.msra.mxu0 %v11176
          %12079 = vmatprep.subr.bf16.mxu0 %v11185
          %12080 = vmatpush1.bf16.msra.mxu0 %v11184
          %12081 = vmatprep.subr.bf16.mxu0 %v11193
          %12082 = vmatpush1.bf16.msra.mxu0 %v11192
          %12083 = vmatprep.subr.bf16.mxu0 %v11201
          %12084 = vmatpush1.bf16.msra.mxu0 %v11200
          %12085 = vmatprep.subr.bf16.mxu0 %v11209
          %12086 = vmatpush1.bf16.msra.mxu0 %v11208
          %12087 = vmatprep.subr.bf16.mxu0 %v11217
          %12088 = vmatpush1.bf16.msra.mxu0 %v11216
          %12089 = vmatprep.subr.bf16.mxu0 %v11225
          %12090 = vmatpush1.bf16.msra.mxu0 %v11224
          %12091 = vmatprep.subr.bf16.mxu0 %v11233
          %12092 = vmatpush1.bf16.msra.mxu0 %v11232
          %12093 = vmatprep.subr.bf16.mxu0 %v11241
          %12094 = vmatpush1.bf16.msra.mxu0 %v11240
          %12095 = vmatprep.subr.bf16.mxu0 %v11249
          %12096 = vmatpush1.bf16.msra.mxu0 %v11248
          %12097 = vmatprep.subr.bf16.mxu0 %v11257
          %12098 = vmatpush1.bf16.msra.mxu0 %v11256
          %12099 = vmatprep.subr.bf16.mxu0 %v11265
          %12100 = vmatpush1.bf16.msra.mxu0 %v11264
          %12101 = vmatprep.mubr.bf16.mxu0 %v8667
          %12102 = vmatmul.mubr.bf16.gmra.mrb[0].mxu0 %v8666
          %v12103 = vpop.f32.mrb[0].mxu0
          %v12104 = vadd.f32 %v12063, %v12103
          %v12105 = vpop.f32.mrb[0].mxu0
          %v12106 = vadd.f32 %v12065, %v12105
          %v12107 = vpop.f32.mrb[0].mxu0
          %v12108 = vpop.f32.mrb[0].mxu0
          %12109 = vdwg.mxu0
          %12110 = vmatprep.subr.bf16.mxu0 %v10763
          %12111 = vmatpush1.bf16.msra.mxu0 %v10762
          %12112 = vmatprep.subr.bf16.mxu0 %v10771
          %12113 = vmatpush1.bf16.msra.mxu0 %v10770
          %12114 = vmatprep.subr.bf16.mxu0 %v10779
          %12115 = vmatpush1.bf16.msra.mxu0 %v10778
          %12116 = vmatprep.subr.bf16.mxu0 %v10787
          %12117 = vmatpush1.bf16.msra.mxu0 %v10786
          %12118 = vmatprep.subr.bf16.mxu0 %v10795
          %12119 = vmatpush1.bf16.msra.mxu0 %v10794
          %12120 = vmatprep.subr.bf16.mxu0 %v10803
          %12121 = vmatpush1.bf16.msra.mxu0 %v10802
          %12122 = vmatprep.subr.bf16.mxu0 %v10811
          %12123 = vmatpush1.bf16.msra.mxu0 %v10810
          %12124 = vmatprep.subr.bf16.mxu0 %v10819
          %12125 = vmatpush1.bf16.msra.mxu0 %v10818
          %12126 = vmatprep.subr.bf16.mxu0 %v10827
          %12127 = vmatpush1.bf16.msra.mxu0 %v10826
          %12128 = vmatprep.subr.bf16.mxu0 %v10835
          %12129 = vmatpush1.bf16.msra.mxu0 %v10834
          %12130 = vmatprep.subr.bf16.mxu0 %v10843
          %12131 = vmatpush1.bf16.msra.mxu0 %v10842
          %12132 = vmatprep.subr.bf16.mxu0 %v10851
          %12133 = vmatpush1.bf16.msra.mxu0 %v10850
          %12134 = vmatprep.subr.bf16.mxu0 %v10859
          %12135 = vmatpush1.bf16.msra.mxu0 %v10858
          %12136 = vmatprep.subr.bf16.mxu0 %v10867
          %12137 = vmatpush1.bf16.msra.mxu0 %v10866
          %12138 = vmatprep.subr.bf16.mxu0 %v10875
          %12139 = vmatpush1.bf16.msra.mxu0 %v10874
          %12140 = vmatprep.subr.bf16.mxu0 %v10883
          %12141 = vmatpush1.bf16.msra.mxu0 %v10882
          %12142 = vmatprep.mubr.bf16.mxu0 %v8661
          %12143 = vmatmul.mubr.bf16.gmra.mrb[0].mxu0 %v8660
          %v12144 = vpop.f32.mrb[0].mxu0
          %v12145 = vadd.f32 %v9201, %v12144
          %v12146 = vpop.f32.mrb[0].mxu0
          %v12147 = vadd.f32 %v9205, %v12146
          %v12148 = vpop.f32.mrb[0].mxu0
          %v12149 = vpop.f32.mrb[0].mxu0
          %12150 = vdwg.mxu0
          %12151 = vmatprep.subr.bf16.mxu0 %v10891
          %12152 = vmatpush1.bf16.msra.mxu0 %v10890
          %12153 = vmatprep.subr.bf16.mxu0 %v10899
          %12154 = vmatpush1.bf16.msra.mxu0 %v10898
          %12155 = vmatprep.subr.bf16.mxu0 %v10907
          %12156 = vmatpush1.bf16.msra.mxu0 %v10906
          %12157 = vmatprep.subr.bf16.mxu0 %v10915
          %12158 = vmatpush1.bf16.msra.mxu0 %v10914
          %12159 = vmatprep.subr.bf16.mxu0 %v10923
          %12160 = vmatpush1.bf16.msra.mxu0 %v10922
          %12161 = vmatprep.subr.bf16.mxu0 %v10931
          %12162 = vmatpush1.bf16.msra.mxu0 %v10930
          %12163 = vmatprep.subr.bf16.mxu0 %v10939
          %12164 = vmatpush1.bf16.msra.mxu0 %v10938
          %12165 = vmatprep.subr.bf16.mxu0 %v10947
          %12166 = vmatpush1.bf16.msra.mxu0 %v10946
          %12167 = vmatprep.subr.bf16.mxu0 %v10955
          %12168 = vmatpush1.bf16.msra.mxu0 %v10954
          %12169 = vmatprep.subr.bf16.mxu0 %v10963
          %12170 = vmatpush1.bf16.msra.mxu0 %v10962
          %12171 = vmatprep.subr.bf16.mxu0 %v10971
          %12172 = vmatpush1.bf16.msra.mxu0 %v10970
          %12173 = vmatprep.subr.bf16.mxu0 %v10979
          %12174 = vmatpush1.bf16.msra.mxu0 %v10978
          %12175 = vmatprep.subr.bf16.mxu0 %v10987
          %12176 = vmatpush1.bf16.msra.mxu0 %v10986
          %12177 = vmatprep.subr.bf16.mxu0 %v10995
          %12178 = vmatpush1.bf16.msra.mxu0 %v10994
          %12179 = vmatprep.subr.bf16.mxu0 %v11003
          %12180 = vmatpush1.bf16.msra.mxu0 %v11002
          %12181 = vmatprep.subr.bf16.mxu0 %v11011
          %12182 = vmatpush1.bf16.msra.mxu0 %v11010
          %12183 = vmatprep.mubr.bf16.mxu0 %v8663
          %12184 = vmatmul.mubr.bf16.gmra.mrb[0].mxu0 %v8662
          %v12185 = vpop.f32.mrb[0].mxu0
          %v12186 = vadd.f32 %v12145, %v12185
          %v12187 = vpop.f32.mrb[0].mxu0
          %v12188 = vadd.f32 %v12147, %v12187
          %v12189 = vpop.f32.mrb[0].mxu0
          %v12190 = vpop.f32.mrb[0].mxu0
          %12191 = vdwg.mxu0
          %12192 = vmatprep.subr.bf16.mxu0 %v11019
          %12193 = vmatpush1.bf16.msra.mxu0 %v11018
          %12194 = vmatprep.subr.bf16.mxu0 %v11027
          %12195 = vmatpush1.bf16.msra.mxu0 %v11026
          %12196 = vmatprep.subr.bf16.mxu0 %v11035
          %12197 = vmatpush1.bf16.msra.mxu0 %v11034
          %12198 = vmatprep.subr.bf16.mxu0 %v11043
          %12199 = vmatpush1.bf16.msra.mxu0 %v11042
          %12200 = vmatprep.subr.bf16.mxu0 %v11051
          %12201 = vmatpush1.bf16.msra.mxu0 %v11050
          %12202 = vmatprep.subr.bf16.mxu0 %v11059
          %12203 = vmatpush1.bf16.msra.mxu0 %v11058
          %12204 = vmatprep.subr.bf16.mxu0 %v11067
          %12205 = vmatpush1.bf16.msra.mxu0 %v11066
          %12206 = vmatprep.subr.bf16.mxu0 %v11075
          %12207 = vmatpush1.bf16.msra.mxu0 %v11074
          %12208 = vmatprep.subr.bf16.mxu0 %v11083
          %12209 = vmatpush1.bf16.msra.mxu0 %v11082
          %12210 = vmatprep.subr.bf16.mxu0 %v11091
          %12211 = vmatpush1.bf16.msra.mxu0 %v11090
          %12212 = vmatprep.subr.bf16.mxu0 %v11099
          %12213 = vmatpush1.bf16.msra.mxu0 %v11098
          %12214 = vmatprep.subr.bf16.mxu0 %v11107
          %12215 = vmatpush1.bf16.msra.mxu0 %v11106
          %12216 = vmatprep.subr.bf16.mxu0 %v11115
          %12217 = vmatpush1.bf16.msra.mxu0 %v11114
          %12218 = vmatprep.subr.bf16.mxu0 %v11123
          %12219 = vmatpush1.bf16.msra.mxu0 %v11122
          %12220 = vmatprep.subr.bf16.mxu0 %v11131
          %12221 = vmatpush1.bf16.msra.mxu0 %v11130
          %12222 = vmatprep.subr.bf16.mxu0 %v11139
          %12223 = vmatpush1.bf16.msra.mxu0 %v11138
          %12224 = vmatprep.mubr.bf16.mxu0 %v8665
          %12225 = vmatmul.mubr.bf16.gmra.mrb[0].mxu0 %v8664
          %v12226 = vpop.f32.mrb[0].mxu0
          %v12227 = vadd.f32 %v12186, %v12226
          %v12228 = vpop.f32.mrb[0].mxu0
          %v12229 = vadd.f32 %v12188, %v12228
          %v12230 = vpop.f32.mrb[0].mxu0
          %v12231 = vpop.f32.mrb[0].mxu0
          %12232 = vdwg.mxu0
          %12233 = vmatprep.subr.bf16.mxu0 %v11147
          %12234 = vmatpush1.bf16.msra.mxu0 %v11146
          %12235 = vmatprep.subr.bf16.mxu0 %v11155
          %12236 = vmatpush1.bf16.msra.mxu0 %v11154
          %12237 = vmatprep.subr.bf16.mxu0 %v11163
          %12238 = vmatpush1.bf16.msra.mxu0 %v11162
          %12239 = vmatprep.subr.bf16.mxu0 %v11171
          %12240 = vmatpush1.bf16.msra.mxu0 %v11170
          %12241 = vmatprep.subr.bf16.mxu0 %v11179
          %12242 = vmatpush1.bf16.msra.mxu0 %v11178
          %12243 = vmatprep.subr.bf16.mxu0 %v11187
          %12244 = vmatpush1.bf16.msra.mxu0 %v11186
          %12245 = vmatprep.subr.bf16.mxu0 %v11195
          %12246 = vmatpush1.bf16.msra.mxu0 %v11194
          %12247 = vmatprep.subr.bf16.mxu0 %v11203
          %12248 = vmatpush1.bf16.msra.mxu0 %v11202
          %12249 = vmatprep.subr.bf16.mxu0 %v11211
          %12250 = vmatpush1.bf16.msra.mxu0 %v11210
          %12251 = vmatprep.subr.bf16.mxu0 %v11219
          %12252 = vmatpush1.bf16.msra.mxu0 %v11218
          %12253 = vmatprep.subr.bf16.mxu0 %v11227
          %12254 = vmatpush1.bf16.msra.mxu0 %v11226
          %12255 = vmatprep.subr.bf16.mxu0 %v11235
          %12256 = vmatpush1.bf16.msra.mxu0 %v11234
          %12257 = vmatprep.subr.bf16.mxu0 %v11243
          %12258 = vmatpush1.bf16.msra.mxu0 %v11242
          %12259 = vmatprep.subr.bf16.mxu0 %v11251
          %12260 = vmatpush1.bf16.msra.mxu0 %v11250
          %12261 = vmatprep.subr.bf16.mxu0 %v11259
          %12262 = vmatpush1.bf16.msra.mxu0 %v11258
          %12263 = vmatprep.subr.bf16.mxu0 %v11267
          %12264 = vmatpush1.bf16.msra.mxu0 %v11266
          %12265 = vmatprep.mubr.bf16.mxu0 %v8667
          %12266 = vmatmul.mubr.bf16.gmra.mrb[0].mxu0 %v8666
          %v12267 = vpop.f32.mrb[0].mxu0
          %v12268 = vadd.f32 %v12227, %v12267
          %v12269 = vpop.f32.mrb[0].mxu0
          %v12270 = vadd.f32 %v12229, %v12269
          %v12271 = vpop.f32.mrb[0].mxu0
          %v12272 = vpop.f32.mrb[0].mxu0
          %12273 = vdwg.mxu0
          %12274 = vmatprep.subr.bf16.mxu0 %v10765
          %12275 = vmatpush1.bf16.msra.mxu0 %v10764
          %12276 = vmatprep.subr.bf16.mxu0 %v10773
          %12277 = vmatpush1.bf16.msra.mxu0 %v10772
          %12278 = vmatprep.subr.bf16.mxu0 %v10781
          %12279 = vmatpush1.bf16.msra.mxu0 %v10780
          %12280 = vmatprep.subr.bf16.mxu0 %v10789
          %12281 = vmatpush1.bf16.msra.mxu0 %v10788
          %12282 = vmatprep.subr.bf16.mxu0 %v10797
          %12283 = vmatpush1.bf16.msra.mxu0 %v10796
          %12284 = vmatprep.subr.bf16.mxu0 %v10805
          %12285 = vmatpush1.bf16.msra.mxu0 %v10804
          %12286 = vmatprep.subr.bf16.mxu0 %v10813
          %12287 = vmatpush1.bf16.msra.mxu0 %v10812
          %12288 = vmatprep.subr.bf16.mxu0 %v10821
          %12289 = vmatpush1.bf16.msra.mxu0 %v10820
          %12290 = vmatprep.subr.bf16.mxu0 %v10829
          %12291 = vmatpush1.bf16.msra.mxu0 %v10828
          %12292 = vmatprep.subr.bf16.mxu0 %v10837
          %12293 = vmatpush1.bf16.msra.mxu0 %v10836
          %12294 = vmatprep.subr.bf16.mxu0 %v10845
          %12295 = vmatpush1.bf16.msra.mxu0 %v10844
          %12296 = vmatprep.subr.bf16.mxu0 %v10853
          %12297 = vmatpush1.bf16.msra.mxu0 %v10852
          %12298 = vmatprep.subr.bf16.mxu0 %v10861
          %12299 = vmatpush1.bf16.msra.mxu0 %v10860
          %12300 = vmatprep.subr.bf16.mxu0 %v10869
          %12301 = vmatpush1.bf16.msra.mxu0 %v10868
          %12302 = vmatprep.subr.bf16.mxu0 %v10877
          %12303 = vmatpush1.bf16.msra.mxu0 %v10876
          %12304 = vmatprep.subr.bf16.mxu0 %v10885
          %12305 = vmatpush1.bf16.msra.mxu0 %v10884
          %12306 = vmatprep.mubr.bf16.mxu0 %v8661
          %12307 = vmatmul.mubr.bf16.gmra.mrb[0].mxu0 %v8660
          %v12308 = vpop.f32.mrb[0].mxu0
          %v12309 = vadd.f32 %v9209, %v12308
          %v12310 = vpop.f32.mrb[0].mxu0
          %v12311 = vadd.f32 %v9213, %v12310
          %v12312 = vpop.f32.mrb[0].mxu0
          %v12313 = vpop.f32.mrb[0].mxu0
          %12314 = vdwg.mxu0
          %12315 = vmatprep.subr.bf16.mxu0 %v10893
          %12316 = vmatpush1.bf16.msra.mxu0 %v10892
          %12317 = vmatprep.subr.bf16.mxu0 %v10901
          %12318 = vmatpush1.bf16.msra.mxu0 %v10900
          %12319 = vmatprep.subr.bf16.mxu0 %v10909
          %12320 = vmatpush1.bf16.msra.mxu0 %v10908
          %12321 = vmatprep.subr.bf16.mxu0 %v10917
          %12322 = vmatpush1.bf16.msra.mxu0 %v10916
          %12323 = vmatprep.subr.bf16.mxu0 %v10925
          %12324 = vmatpush1.bf16.msra.mxu0 %v10924
          %12325 = vmatprep.subr.bf16.mxu0 %v10933
          %12326 = vmatpush1.bf16.msra.mxu0 %v10932
          %12327 = vmatprep.subr.bf16.mxu0 %v10941
          %12328 = vmatpush1.bf16.msra.mxu0 %v10940
          %12329 = vmatprep.subr.bf16.mxu0 %v10949
          %12330 = vmatpush1.bf16.msra.mxu0 %v10948
          %12331 = vmatprep.subr.bf16.mxu0 %v10957
          %12332 = vmatpush1.bf16.msra.mxu0 %v10956
          %12333 = vmatprep.subr.bf16.mxu0 %v10965
          %12334 = vmatpush1.bf16.msra.mxu0 %v10964
          %12335 = vmatprep.subr.bf16.mxu0 %v10973
          %12336 = vmatpush1.bf16.msra.mxu0 %v10972
          %12337 = vmatprep.subr.bf16.mxu0 %v10981
          %12338 = vmatpush1.bf16.msra.mxu0 %v10980
          %12339 = vmatprep.subr.bf16.mxu0 %v10989
          %12340 = vmatpush1.bf16.msra.mxu0 %v10988
          %12341 = vmatprep.subr.bf16.mxu0 %v10997
          %12342 = vmatpush1.bf16.msra.mxu0 %v10996
          %12343 = vmatprep.subr.bf16.mxu0 %v11005
          %12344 = vmatpush1.bf16.msra.mxu0 %v11004
          %12345 = vmatprep.subr.bf16.mxu0 %v11013
          %12346 = vmatpush1.bf16.msra.mxu0 %v11012
          %12347 = vmatprep.mubr.bf16.mxu0 %v8663
          %12348 = vmatmul.mubr.bf16.gmra.mrb[0].mxu0 %v8662
          %v12349 = vpop.f32.mrb[0].mxu0
          %v12350 = vadd.f32 %v12309, %v12349
          %v12351 = vpop.f32.mrb[0].mxu0
          %v12352 = vadd.f32 %v12311, %v12351
          %v12353 = vpop.f32.mrb[0].mxu0
          %v12354 = vpop.f32.mrb[0].mxu0
          %12355 = vdwg.mxu0
          %12356 = vmatprep.subr.bf16.mxu0 %v11021
          %12357 = vmatpush1.bf16.msra.mxu0 %v11020
          %12358 = vmatprep.subr.bf16.mxu0 %v11029
          %12359 = vmatpush1.bf16.msra.mxu0 %v11028
          %12360 = vmatprep.subr.bf16.mxu0 %v11037
          %12361 = vmatpush1.bf16.msra.mxu0 %v11036
          %12362 = vmatprep.subr.bf16.mxu0 %v11045
          %12363 = vmatpush1.bf16.msra.mxu0 %v11044
          %12364 = vmatprep.subr.bf16.mxu0 %v11053
          %12365 = vmatpush1.bf16.msra.mxu0 %v11052
          %12366 = vmatprep.subr.bf16.mxu0 %v11061
          %12367 = vmatpush1.bf16.msra.mxu0 %v11060
          %12368 = vmatprep.subr.bf16.mxu0 %v11069
          %12369 = vmatpush1.bf16.msra.mxu0 %v11068
          %12370 = vmatprep.subr.bf16.mxu0 %v11077
          %12371 = vmatpush1.bf16.msra.mxu0 %v11076
          %12372 = vmatprep.subr.bf16.mxu0 %v11085
          %12373 = vmatpush1.bf16.msra.mxu0 %v11084
          %12374 = vmatprep.subr.bf16.mxu0 %v11093
          %12375 = vmatpush1.bf16.msra.mxu0 %v11092
          %12376 = vmatprep.subr.bf16.mxu0 %v11101
          %12377 = vmatpush1.bf16.msra.mxu0 %v11100
          %12378 = vmatprep.subr.bf16.mxu0 %v11109
          %12379 = vmatpush1.bf16.msra.mxu0 %v11108
          %12380 = vmatprep.subr.bf16.mxu0 %v11117
          %12381 = vmatpush1.bf16.msra.mxu0 %v11116
          %12382 = vmatprep.subr.bf16.mxu0 %v11125
          %12383 = vmatpush1.bf16.msra.mxu0 %v11124
          %12384 = vmatprep.subr.bf16.mxu0 %v11133
          %12385 = vmatpush1.bf16.msra.mxu0 %v11132
          %12386 = vmatprep.subr.bf16.mxu0 %v11141
          %12387 = vmatpush1.bf16.msra.mxu0 %v11140
          %12388 = vmatprep.mubr.bf16.mxu0 %v8665
          %12389 = vmatmul.mubr.bf16.gmra.mrb[0].mxu0 %v8664
          %v12390 = vpop.f32.mrb[0].mxu0
          %v12391 = vadd.f32 %v12350, %v12390
          %v12392 = vpop.f32.mrb[0].mxu0
          %v12393 = vadd.f32 %v12352, %v12392
          %v12394 = vpop.f32.mrb[0].mxu0
          %v12395 = vpop.f32.mrb[0].mxu0
          %12396 = vdwg.mxu0
          %12397 = vmatprep.subr.bf16.mxu0 %v11149
          %12398 = vmatpush1.bf16.msra.mxu0 %v11148
          %12399 = vmatprep.subr.bf16.mxu0 %v11157
          %12400 = vmatpush1.bf16.msra.mxu0 %v11156
          %12401 = vmatprep.subr.bf16.mxu0 %v11165
          %12402 = vmatpush1.bf16.msra.mxu0 %v11164
          %12403 = vmatprep.subr.bf16.mxu0 %v11173
          %12404 = vmatpush1.bf16.msra.mxu0 %v11172
          %12405 = vmatprep.subr.bf16.mxu0 %v11181
          %12406 = vmatpush1.bf16.msra.mxu0 %v11180
          %12407 = vmatprep.subr.bf16.mxu0 %v11189
          %12408 = vmatpush1.bf16.msra.mxu0 %v11188
          %12409 = vmatprep.subr.bf16.mxu0 %v11197
          %12410 = vmatpush1.bf16.msra.mxu0 %v11196
          %12411 = vmatprep.subr.bf16.mxu0 %v11205
          %12412 = vmatpush1.bf16.msra.mxu0 %v11204
          %12413 = vmatprep.subr.bf16.mxu0 %v11213
          %12414 = vmatpush1.bf16.msra.mxu0 %v11212
          %12415 = vmatprep.subr.bf16.mxu0 %v11221
          %12416 = vmatpush1.bf16.msra.mxu0 %v11220
          %12417 = vmatprep.subr.bf16.mxu0 %v11229
          %12418 = vmatpush1.bf16.msra.mxu0 %v11228
          %12419 = vmatprep.subr.bf16.mxu0 %v11237
          %12420 = vmatpush1.bf16.msra.mxu0 %v11236
          %12421 = vmatprep.subr.bf16.mxu0 %v11245
          %12422 = vmatpush1.bf16.msra.mxu0 %v11244
          %12423 = vmatprep.subr.bf16.mxu0 %v11253
          %12424 = vmatpush1.bf16.msra.mxu0 %v11252
          %12425 = vmatprep.subr.bf16.mxu0 %v11261
          %12426 = vmatpush1.bf16.msra.mxu0 %v11260
          %12427 = vmatprep.subr.bf16.mxu0 %v11269
          %12428 = vmatpush1.bf16.msra.mxu0 %v11268
          %12429 = vmatprep.mubr.bf16.mxu0 %v8667
          %12430 = vmatmul.mubr.bf16.gmra.mrb[0].mxu0 %v8666
          %v12431 = vpop.f32.mrb[0].mxu0
          %v12432 = vadd.f32 %v12391, %v12431
          %v12433 = vpop.f32.mrb[0].mxu0
          %v12434 = vadd.f32 %v12393, %v12433
          %v12435 = vpop.f32.mrb[0].mxu0
          %v12436 = vpop.f32.mrb[0].mxu0
          %12437 = vdwg.mxu0
          %v12438 = vmax.f32 %v11940, 0.0
          %v12439 = vmax.f32 %v11942, 0.0
          %v12440 = vmax.f32 %v12104, 0.0
          %v12441 = vmax.f32 %v12106, 0.0
          %v12442 = vmax.f32 %v12268, 0.0
          %v12443 = vmax.f32 %v12270, 0.0
          %v12444 = vmax.f32 %v12432, 0.0
          %v12445 = vmax.f32 %v12434, 0.0
          %v12446 = vpack.c.bf16 %v12438, %v12438
          %v12447 = vpack.c.bf16 %v12439, %v12439
          %v12448 = vpack.c.bf16 %v12440, %v12440
          %v12449 = vpack.c.bf16 %v12441, %v12441
          %v12450 = vpack.c.bf16 %v12442, %v12442
          %v12451 = vpack.c.bf16 %v12443, %v12443
          %v12452 = vpack.c.bf16 %v12444, %v12444
          %v12453 = vpack.c.bf16 %v12445, %v12445
          %v12454 = vld [vmem:[#allocation15] sm:$0xf]
          %v12455 = vld [vmem:[#allocation15 + $0x4] sm:$0xf]
          %v12456 = vld [vmem:[#allocation15 + $0x8] sm:$0xf]
          %v12457 = vld [vmem:[#allocation15 + $0xc] sm:$0xf]
          %v12458 = vld [vmem:[#allocation15 + $0x10] sm:$0xf]
          %v12459 = vld [vmem:[#allocation15 + $0x14] sm:$0xf]
          %v12460 = vld [vmem:[#allocation15 + $0x18] sm:$0xf]
          %v12461 = vld [vmem:[#allocation15 + $0x1c] sm:$0xf]
          %v12462 = vld [vmem:[#allocation15 + $0x20] sm:$0xf]
          %v12463 = vld [vmem:[#allocation15 + $0x24] sm:$0xf]
          %v12464 = vld [vmem:[#allocation15 + $0x28] sm:$0xf]
          %v12465 = vld [vmem:[#allocation15 + $0x2c] sm:$0xf]
          %v12466 = vld [vmem:[#allocation15 + $0x30] sm:$0xf]
          %v12467 = vld [vmem:[#allocation15 + $0x34] sm:$0xf]
          %v12468 = vld [vmem:[#allocation15 + $0x38] sm:$0xf]
          %v12469 = vld [vmem:[#allocation15 + $0x3c] sm:$0xf]
          %v12470 = vld [vmem:[#allocation15 + $0x40] sm:$0xf]
          %v12471 = vld [vmem:[#allocation15 + $0x44] sm:$0xf]
          %v12472 = vld [vmem:[#allocation15 + $0x48] sm:$0xf]
          %v12473 = vld [vmem:[#allocation15 + $0x4c] sm:$0xf]
          %v12474 = vld [vmem:[#allocation15 + $0x50] sm:$0xf]
          %v12475 = vld [vmem:[#allocation15 + $0x54] sm:$0xf]
          %v12476 = vld [vmem:[#allocation15 + $0x58] sm:$0xf]
          %v12477 = vld [vmem:[#allocation15 + $0x5c] sm:$0xf]
          %v12478 = vld [vmem:[#allocation15 + $0x60] sm:$0xf]
          %v12479 = vld [vmem:[#allocation15 + $0x64] sm:$0xf]
          %v12480 = vld [vmem:[#allocation15 + $0x68] sm:$0xf]
          %v12481 = vld [vmem:[#allocation15 + $0x6c] sm:$0xf]
          %v12482 = vld [vmem:[#allocation15 + $0x70] sm:$0xf]
          %v12483 = vld [vmem:[#allocation15 + $0x74] sm:$0xf]
          %v12484 = vld [vmem:[#allocation15 + $0x78] sm:$0xf]
          %v12485 = vld [vmem:[#allocation15 + $0x7c] sm:$0xf]
          %v12486 = vld [vmem:[#allocation15 + $0x80] sm:$0xf]
          %v12487 = vld [vmem:[#allocation15 + $0x84] sm:$0xf]
          %v12488 = vld [vmem:[#allocation15 + $0x88] sm:$0xf]
          %v12489 = vld [vmem:[#allocation15 + $0x8c] sm:$0xf]
          %v12490 = vld [vmem:[#allocation15 + $0x90] sm:$0xf]
          %v12491 = vld [vmem:[#allocation15 + $0x94] sm:$0xf]
          %v12492 = vld [vmem:[#allocation15 + $0x98] sm:$0xf]
          %v12493 = vld [vmem:[#allocation15 + $0x9c] sm:$0xf]
          %v12494 = vld [vmem:[#allocation15 + $0xa0] sm:$0xf]
          %v12495 = vld [vmem:[#allocation15 + $0xa4] sm:$0xf]
          %v12496 = vld [vmem:[#allocation15 + $0xa8] sm:$0xf]
          %v12497 = vld [vmem:[#allocation15 + $0xac] sm:$0xf]
          %v12498 = vld [vmem:[#allocation15 + $0xb0] sm:$0xf]
          %v12499 = vld [vmem:[#allocation15 + $0xb4] sm:$0xf]
          %v12500 = vld [vmem:[#allocation15 + $0xb8] sm:$0xf]
          %v12501 = vld [vmem:[#allocation15 + $0xbc] sm:$0xf]
          %v12502 = vld [vmem:[#allocation15 + $0xc0] sm:$0xf]
          %v12503 = vld [vmem:[#allocation15 + $0xc4] sm:$0xf]
          %v12504 = vld [vmem:[#allocation15 + $0xc8] sm:$0xf]
          %v12505 = vld [vmem:[#allocation15 + $0xcc] sm:$0xf]
          %v12506 = vld [vmem:[#allocation15 + $0xd0] sm:$0xf]
          %v12507 = vld [vmem:[#allocation15 + $0xd4] sm:$0xf]
          %v12508 = vld [vmem:[#allocation15 + $0xd8] sm:$0xf]
          %v12509 = vld [vmem:[#allocation15 + $0xdc] sm:$0xf]
          %v12510 = vld [vmem:[#allocation15 + $0xe0] sm:$0xf]
          %v12511 = vld [vmem:[#allocation15 + $0xe4] sm:$0xf]
          %v12512 = vld [vmem:[#allocation15 + $0xe8] sm:$0xf]
          %v12513 = vld [vmem:[#allocation15 + $0xec] sm:$0xf]
          %v12514 = vld [vmem:[#allocation15 + $0xf0] sm:$0xf]
          %v12515 = vld [vmem:[#allocation15 + $0xf4] sm:$0xf]
          %v12516 = vld [vmem:[#allocation15 + $0xf8] sm:$0xf]
          %v12517 = vld [vmem:[#allocation15 + $0xfc] sm:$0xf]
          %v12518 = vld [vmem:[#allocation15 + $0x100] sm:$0xf]
          %v12519 = vld [vmem:[#allocation15 + $0x104] sm:$0xf]
          %v12520 = vld [vmem:[#allocation15 + $0x108] sm:$0xf]
          %v12521 = vld [vmem:[#allocation15 + $0x10c] sm:$0xf]
          %v12522 = vld [vmem:[#allocation15 + $0x110] sm:$0xf]
          %v12523 = vld [vmem:[#allocation15 + $0x114] sm:$0xf]
          %v12524 = vld [vmem:[#allocation15 + $0x118] sm:$0xf]
          %v12525 = vld [vmem:[#allocation15 + $0x11c] sm:$0xf]
          %v12526 = vld [vmem:[#allocation15 + $0x120] sm:$0xf]
          %v12527 = vld [vmem:[#allocation15 + $0x124] sm:$0xf]
          %v12528 = vld [vmem:[#allocation15 + $0x128] sm:$0xf]
          %v12529 = vld [vmem:[#allocation15 + $0x12c] sm:$0xf]
          %v12530 = vld [vmem:[#allocation15 + $0x130] sm:$0xf]
          %v12531 = vld [vmem:[#allocation15 + $0x134] sm:$0xf]
          %v12532 = vld [vmem:[#allocation15 + $0x138] sm:$0xf]
          %v12533 = vld [vmem:[#allocation15 + $0x13c] sm:$0xf]
          %v12534 = vld [vmem:[#allocation15 + $0x140] sm:$0xf]
          %v12535 = vld [vmem:[#allocation15 + $0x144] sm:$0xf]
          %v12536 = vld [vmem:[#allocation15 + $0x148] sm:$0xf]
          %v12537 = vld [vmem:[#allocation15 + $0x14c] sm:$0xf]
          %v12538 = vld [vmem:[#allocation15 + $0x150] sm:$0xf]
          %v12539 = vld [vmem:[#allocation15 + $0x154] sm:$0xf]
          %v12540 = vld [vmem:[#allocation15 + $0x158] sm:$0xf]
          %v12541 = vld [vmem:[#allocation15 + $0x15c] sm:$0xf]
          %v12542 = vld [vmem:[#allocation15 + $0x160] sm:$0xf]
          %v12543 = vld [vmem:[#allocation15 + $0x164] sm:$0xf]
          %v12544 = vld [vmem:[#allocation15 + $0x168] sm:$0xf]
          %v12545 = vld [vmem:[#allocation15 + $0x16c] sm:$0xf]
          %v12546 = vld [vmem:[#allocation15 + $0x170] sm:$0xf]
          %v12547 = vld [vmem:[#allocation15 + $0x174] sm:$0xf]
          %v12548 = vld [vmem:[#allocation15 + $0x178] sm:$0xf]
          %v12549 = vld [vmem:[#allocation15 + $0x17c] sm:$0xf]
          %v12550 = vld [vmem:[#allocation15 + $0x180] sm:$0xf]
          %v12551 = vld [vmem:[#allocation15 + $0x184] sm:$0xf]
          %v12552 = vld [vmem:[#allocation15 + $0x188] sm:$0xf]
          %v12553 = vld [vmem:[#allocation15 + $0x18c] sm:$0xf]
          %v12554 = vld [vmem:[#allocation15 + $0x190] sm:$0xf]
          %v12555 = vld [vmem:[#allocation15 + $0x194] sm:$0xf]
          %v12556 = vld [vmem:[#allocation15 + $0x198] sm:$0xf]
          %v12557 = vld [vmem:[#allocation15 + $0x19c] sm:$0xf]
          %v12558 = vld [vmem:[#allocation15 + $0x1a0] sm:$0xf]
          %v12559 = vld [vmem:[#allocation15 + $0x1a4] sm:$0xf]
          %v12560 = vld [vmem:[#allocation15 + $0x1a8] sm:$0xf]
          %v12561 = vld [vmem:[#allocation15 + $0x1ac] sm:$0xf]
          %v12562 = vld [vmem:[#allocation15 + $0x1b0] sm:$0xf]
          %v12563 = vld [vmem:[#allocation15 + $0x1b4] sm:$0xf]
          %v12564 = vld [vmem:[#allocation15 + $0x1b8] sm:$0xf]
          %v12565 = vld [vmem:[#allocation15 + $0x1bc] sm:$0xf]
          %v12566 = vld [vmem:[#allocation15 + $0x1c0] sm:$0xf]
          %v12567 = vld [vmem:[#allocation15 + $0x1c4] sm:$0xf]
          %v12568 = vld [vmem:[#allocation15 + $0x1c8] sm:$0xf]
          %v12569 = vld [vmem:[#allocation15 + $0x1cc] sm:$0xf]
          %v12570 = vld [vmem:[#allocation15 + $0x1d0] sm:$0xf]
          %v12571 = vld [vmem:[#allocation15 + $0x1d4] sm:$0xf]
          %v12572 = vld [vmem:[#allocation15 + $0x1d8] sm:$0xf]
          %v12573 = vld [vmem:[#allocation15 + $0x1dc] sm:$0xf]
          %v12574 = vld [vmem:[#allocation15 + $0x1e0] sm:$0xf]
          %v12575 = vld [vmem:[#allocation15 + $0x1e4] sm:$0xf]
          %v12576 = vld [vmem:[#allocation15 + $0x1e8] sm:$0xf]
          %v12577 = vld [vmem:[#allocation15 + $0x1ec] sm:$0xf]
          %v12578 = vld [vmem:[#allocation15 + $0x1f0] sm:$0xf]
          %v12579 = vld [vmem:[#allocation15 + $0x1f4] sm:$0xf]
          %v12580 = vld [vmem:[#allocation15 + $0x1f8] sm:$0xf]
          %v12581 = vld [vmem:[#allocation15 + $0x1fc] sm:$0xf]
          %v12582 = vld [vmem:[#allocation17] sm:$0x1]
          %v12584 = vlaneseq
          %v12585 = vshrl.u32 %v12584, 7
          %v12586 = vsub.s32 0, %v12585
          %v12587 = vrot.slane %v12582, %v12586
          %v12717 = vunpack.c.l.b16 %v12454
          %v12718 = vunpack.c.l.b16 %v12455
          %v12719 = vunpack.c.l.b16 %v12456
          %v12720 = vunpack.c.l.b16 %v12457
          %v12721 = vunpack.c.l.b16 %v12458
          %v12722 = vunpack.c.l.b16 %v12459
          %v12723 = vunpack.c.l.b16 %v12460
          %v12724 = vunpack.c.l.b16 %v12461
          %v12725 = vunpack.c.l.b16 %v12462
          %v12726 = vunpack.c.l.b16 %v12463
          %v12727 = vunpack.c.l.b16 %v12464
          %v12728 = vunpack.c.l.b16 %v12465
          %v12729 = vunpack.c.l.b16 %v12466
          %v12730 = vunpack.c.l.b16 %v12467
          %v12731 = vunpack.c.l.b16 %v12468
          %v12732 = vunpack.c.l.b16 %v12469
          %v12733 = vunpack.c.l.b16 %v12470
          %v12734 = vunpack.c.l.b16 %v12471
          %v12735 = vunpack.c.l.b16 %v12472
          %v12736 = vunpack.c.l.b16 %v12473
          %v12737 = vunpack.c.l.b16 %v12474
          %v12738 = vunpack.c.l.b16 %v12475
          %v12739 = vunpack.c.l.b16 %v12476
          %v12740 = vunpack.c.l.b16 %v12477
          %v12741 = vunpack.c.l.b16 %v12478
          %v12742 = vunpack.c.l.b16 %v12479
          %v12743 = vunpack.c.l.b16 %v12480
          %v12744 = vunpack.c.l.b16 %v12481
          %v12745 = vunpack.c.l.b16 %v12482
          %v12746 = vunpack.c.l.b16 %v12483
          %v12747 = vunpack.c.l.b16 %v12484
          %v12748 = vunpack.c.l.b16 %v12485
          %v12749 = vunpack.c.l.b16 %v12486
          %v12750 = vunpack.c.l.b16 %v12487
          %v12751 = vunpack.c.l.b16 %v12488
          %v12752 = vunpack.c.l.b16 %v12489
          %v12753 = vunpack.c.l.b16 %v12490
          %v12754 = vunpack.c.l.b16 %v12491
          %v12755 = vunpack.c.l.b16 %v12492
          %v12756 = vunpack.c.l.b16 %v12493
          %v12757 = vunpack.c.l.b16 %v12494
          %v12758 = vunpack.c.l.b16 %v12495
          %v12759 = vunpack.c.l.b16 %v12496
          %v12760 = vunpack.c.l.b16 %v12497
          %v12761 = vunpack.c.l.b16 %v12498
          %v12762 = vunpack.c.l.b16 %v12499
          %v12763 = vunpack.c.l.b16 %v12500
          %v12764 = vunpack.c.l.b16 %v12501
          %v12765 = vunpack.c.l.b16 %v12502
          %v12766 = vunpack.c.l.b16 %v12503
          %v12767 = vunpack.c.l.b16 %v12504
          %v12768 = vunpack.c.l.b16 %v12505
          %v12769 = vunpack.c.l.b16 %v12506
          %v12770 = vunpack.c.l.b16 %v12507
          %v12771 = vunpack.c.l.b16 %v12508
          %v12772 = vunpack.c.l.b16 %v12509
          %v12773 = vunpack.c.l.b16 %v12510
          %v12774 = vunpack.c.l.b16 %v12511
          %v12775 = vunpack.c.l.b16 %v12512
          %v12776 = vunpack.c.l.b16 %v12513
          %v12777 = vunpack.c.l.b16 %v12514
          %v12778 = vunpack.c.l.b16 %v12515
          %v12779 = vunpack.c.l.b16 %v12516
          %v12780 = vunpack.c.l.b16 %v12517
          %v12781 = vunpack.c.l.b16 %v12518
          %v12782 = vunpack.c.l.b16 %v12519
          %v12783 = vunpack.c.l.b16 %v12520
          %v12784 = vunpack.c.l.b16 %v12521
          %v12785 = vunpack.c.l.b16 %v12522
          %v12786 = vunpack.c.l.b16 %v12523
          %v12787 = vunpack.c.l.b16 %v12524
          %v12788 = vunpack.c.l.b16 %v12525
          %v12789 = vunpack.c.l.b16 %v12526
          %v12790 = vunpack.c.l.b16 %v12527
          %v12791 = vunpack.c.l.b16 %v12528
          %v12792 = vunpack.c.l.b16 %v12529
          %v12793 = vunpack.c.l.b16 %v12530
          %v12794 = vunpack.c.l.b16 %v12531
          %v12795 = vunpack.c.l.b16 %v12532
          %v12796 = vunpack.c.l.b16 %v12533
          %v12797 = vunpack.c.l.b16 %v12534
          %v12798 = vunpack.c.l.b16 %v12535
          %v12799 = vunpack.c.l.b16 %v12536
          %v12800 = vunpack.c.l.b16 %v12537
          %v12801 = vunpack.c.l.b16 %v12538
          %v12802 = vunpack.c.l.b16 %v12539
          %v12803 = vunpack.c.l.b16 %v12540
          %v12804 = vunpack.c.l.b16 %v12541
          %v12805 = vunpack.c.l.b16 %v12542
          %v12806 = vunpack.c.l.b16 %v12543
          %v12807 = vunpack.c.l.b16 %v12544
          %v12808 = vunpack.c.l.b16 %v12545
          %v12809 = vunpack.c.l.b16 %v12546
          %v12810 = vunpack.c.l.b16 %v12547
          %v12811 = vunpack.c.l.b16 %v12548
          %v12812 = vunpack.c.l.b16 %v12549
          %v12813 = vunpack.c.l.b16 %v12550
          %v12814 = vunpack.c.l.b16 %v12551
          %v12815 = vunpack.c.l.b16 %v12552
          %v12816 = vunpack.c.l.b16 %v12553
          %v12817 = vunpack.c.l.b16 %v12554
          %v12818 = vunpack.c.l.b16 %v12555
          %v12819 = vunpack.c.l.b16 %v12556
          %v12820 = vunpack.c.l.b16 %v12557
          %v12821 = vunpack.c.l.b16 %v12558
          %v12822 = vunpack.c.l.b16 %v12559
          %v12823 = vunpack.c.l.b16 %v12560
          %v12824 = vunpack.c.l.b16 %v12561
          %v12825 = vunpack.c.l.b16 %v12562
          %v12826 = vunpack.c.l.b16 %v12563
          %v12827 = vunpack.c.l.b16 %v12564
          %v12828 = vunpack.c.l.b16 %v12565
          %v12829 = vunpack.c.l.b16 %v12566
          %v12830 = vunpack.c.l.b16 %v12567
          %v12831 = vunpack.c.l.b16 %v12568
          %v12832 = vunpack.c.l.b16 %v12569
          %v12833 = vunpack.c.l.b16 %v12570
          %v12834 = vunpack.c.l.b16 %v12571
          %v12835 = vunpack.c.l.b16 %v12572
          %v12836 = vunpack.c.l.b16 %v12573
          %v12837 = vunpack.c.l.b16 %v12574
          %v12838 = vunpack.c.l.b16 %v12575
          %v12839 = vunpack.c.l.b16 %v12576
          %v12840 = vunpack.c.l.b16 %v12577
          %v12841 = vunpack.c.l.b16 %v12578
          %v12842 = vunpack.c.l.b16 %v12579
          %v12843 = vunpack.c.l.b16 %v12580
          %v12844 = vunpack.c.l.b16 %v12581
          %v12845 = vpack.c.b16 %v12718, %v12717
          %v12846 = vpack.c.b16 %v12720, %v12719
          %v12847 = vpack.c.b16 %v12722, %v12721
          %v12848 = vpack.c.b16 %v12724, %v12723
          %v12849 = vpack.c.b16 %v12726, %v12725
          %v12850 = vpack.c.b16 %v12728, %v12727
          %v12851 = vpack.c.b16 %v12730, %v12729
          %v12852 = vpack.c.b16 %v12732, %v12731
          %v12853 = vpack.c.b16 %v12734, %v12733
          %v12854 = vpack.c.b16 %v12736, %v12735
          %v12855 = vpack.c.b16 %v12738, %v12737
          %v12856 = vpack.c.b16 %v12740, %v12739
          %v12857 = vpack.c.b16 %v12742, %v12741
          %v12858 = vpack.c.b16 %v12744, %v12743
          %v12859 = vpack.c.b16 %v12746, %v12745
          %v12860 = vpack.c.b16 %v12748, %v12747
          %v12861 = vpack.c.b16 %v12750, %v12749
          %v12862 = vpack.c.b16 %v12752, %v12751
          %v12863 = vpack.c.b16 %v12754, %v12753
          %v12864 = vpack.c.b16 %v12756, %v12755
          %v12865 = vpack.c.b16 %v12758, %v12757
          %v12866 = vpack.c.b16 %v12760, %v12759
          %v12867 = vpack.c.b16 %v12762, %v12761
          %v12868 = vpack.c.b16 %v12764, %v12763
          %v12869 = vpack.c.b16 %v12766, %v12765
          %v12870 = vpack.c.b16 %v12768, %v12767
          %v12871 = vpack.c.b16 %v12770, %v12769
          %v12872 = vpack.c.b16 %v12772, %v12771
          %v12873 = vpack.c.b16 %v12774, %v12773
          %v12874 = vpack.c.b16 %v12776, %v12775
          %v12875 = vpack.c.b16 %v12778, %v12777
          %v12876 = vpack.c.b16 %v12780, %v12779
          %v12877 = vpack.c.b16 %v12782, %v12781
          %v12878 = vpack.c.b16 %v12784, %v12783
          %v12879 = vpack.c.b16 %v12786, %v12785
          %v12880 = vpack.c.b16 %v12788, %v12787
          %v12881 = vpack.c.b16 %v12790, %v12789
          %v12882 = vpack.c.b16 %v12792, %v12791
          %v12883 = vpack.c.b16 %v12794, %v12793
          %v12884 = vpack.c.b16 %v12796, %v12795
          %v12885 = vpack.c.b16 %v12798, %v12797
          %v12886 = vpack.c.b16 %v12800, %v12799
          %v12887 = vpack.c.b16 %v12802, %v12801
          %v12888 = vpack.c.b16 %v12804, %v12803
          %v12889 = vpack.c.b16 %v12806, %v12805
          %v12890 = vpack.c.b16 %v12808, %v12807
          %v12891 = vpack.c.b16 %v12810, %v12809
          %v12892 = vpack.c.b16 %v12812, %v12811
          %v12893 = vpack.c.b16 %v12814, %v12813
          %v12894 = vpack.c.b16 %v12816, %v12815
          %v12895 = vpack.c.b16 %v12818, %v12817
          %v12896 = vpack.c.b16 %v12820, %v12819
          %v12897 = vpack.c.b16 %v12822, %v12821
          %v12898 = vpack.c.b16 %v12824, %v12823
          %v12899 = vpack.c.b16 %v12826, %v12825
          %v12900 = vpack.c.b16 %v12828, %v12827
          %v12901 = vpack.c.b16 %v12830, %v12829
          %v12902 = vpack.c.b16 %v12832, %v12831
          %v12903 = vpack.c.b16 %v12834, %v12833
          %v12904 = vpack.c.b16 %v12836, %v12835
          %v12905 = vpack.c.b16 %v12838, %v12837
          %v12906 = vpack.c.b16 %v12840, %v12839
          %v12907 = vpack.c.b16 %v12842, %v12841
          %v12908 = vpack.c.b16 %v12844, %v12843
          %12973 = vmatprep.subr.bf16.mxu0 0
          %12974 = vmatpush1.bf16.msra.mxu0 %v12845
          %12975 = vmatprep.subr.bf16.mxu0 0
          %12976 = vmatpush1.bf16.msra.mxu0 %v12846
          %12977 = vmatprep.subr.bf16.mxu0 0
          %12978 = vmatpush1.bf16.msra.mxu0 %v12847
          %12979 = vmatprep.subr.bf16.mxu0 0
          %12980 = vmatpush1.bf16.msra.mxu0 %v12848
          %12981 = vmatprep.subr.bf16.mxu0 0
          %12982 = vmatpush1.bf16.msra.mxu0 %v12849
          %12983 = vmatprep.subr.bf16.mxu0 0
          %12984 = vmatpush1.bf16.msra.mxu0 %v12850
          %12985 = vmatprep.subr.bf16.mxu0 0
          %12986 = vmatpush1.bf16.msra.mxu0 %v12851
          %12987 = vmatprep.subr.bf16.mxu0 0
          %12988 = vmatpush1.bf16.msra.mxu0 %v12852
          %12989 = vmatprep.subr.bf16.mxu0 0
          %12990 = vmatpush1.bf16.msra.mxu0 %v12853
          %12991 = vmatprep.subr.bf16.mxu0 0
          %12992 = vmatpush1.bf16.msra.mxu0 %v12854
          %12993 = vmatprep.subr.bf16.mxu0 0
          %12994 = vmatpush1.bf16.msra.mxu0 %v12855
          %12995 = vmatprep.subr.bf16.mxu0 0
          %12996 = vmatpush1.bf16.msra.mxu0 %v12856
          %12997 = vmatprep.subr.bf16.mxu0 0
          %12998 = vmatpush1.bf16.msra.mxu0 %v12857
          %12999 = vmatprep.subr.bf16.mxu0 0
          %13000 = vmatpush1.bf16.msra.mxu0 %v12858
          %13001 = vmatprep.subr.bf16.mxu0 0
          %13002 = vmatpush1.bf16.msra.mxu0 %v12859
          %13003 = vmatprep.subr.bf16.mxu0 0
          %13004 = vmatpush1.bf16.msra.mxu0 %v12860
          %13005 = vmatprep.mubr.bf16.mxu0 %v12447
          %13006 = vmatmul.mubr.bf16.gmra.mrb[0].mxu0 %v12446
          %v13007 = vpop.f32.mrb[0].mxu0
          %v13008 = vadd.f32 %v12587, %v13007
          %v13009 = vpop.f32.mrb[0].mxu0
          %v13010 = vpop.f32.mrb[0].mxu0
          %v13011 = vpop.f32.mrb[0].mxu0
          %13012 = vdwg.mxu0
          %13013 = vmatprep.subr.bf16.mxu0 0
          %13014 = vmatpush1.bf16.msra.mxu0 %v12861
          %13015 = vmatprep.subr.bf16.mxu0 0
          %13016 = vmatpush1.bf16.msra.mxu0 %v12862
          %13017 = vmatprep.subr.bf16.mxu0 0
          %13018 = vmatpush1.bf16.msra.mxu0 %v12863
          %13019 = vmatprep.subr.bf16.mxu0 0
          %13020 = vmatpush1.bf16.msra.mxu0 %v12864
          %13021 = vmatprep.subr.bf16.mxu0 0
          %13022 = vmatpush1.bf16.msra.mxu0 %v12865
          %13023 = vmatprep.subr.bf16.mxu0 0
          %13024 = vmatpush1.bf16.msra.mxu0 %v12866
          %13025 = vmatprep.subr.bf16.mxu0 0
          %13026 = vmatpush1.bf16.msra.mxu0 %v12867
          %13027 = vmatprep.subr.bf16.mxu0 0
          %13028 = vmatpush1.bf16.msra.mxu0 %v12868
          %13029 = vmatprep.subr.bf16.mxu0 0
          %13030 = vmatpush1.bf16.msra.mxu0 %v12869
          %13031 = vmatprep.subr.bf16.mxu0 0
          %13032 = vmatpush1.bf16.msra.mxu0 %v12870
          %13033 = vmatprep.subr.bf16.mxu0 0
          %13034 = vmatpush1.bf16.msra.mxu0 %v12871
          %13035 = vmatprep.subr.bf16.mxu0 0
          %13036 = vmatpush1.bf16.msra.mxu0 %v12872
          %13037 = vmatprep.subr.bf16.mxu0 0
          %13038 = vmatpush1.bf16.msra.mxu0 %v12873
          %13039 = vmatprep.subr.bf16.mxu0 0
          %13040 = vmatpush1.bf16.msra.mxu0 %v12874
          %13041 = vmatprep.subr.bf16.mxu0 0
          %13042 = vmatpush1.bf16.msra.mxu0 %v12875
          %13043 = vmatprep.subr.bf16.mxu0 0
          %13044 = vmatpush1.bf16.msra.mxu0 %v12876
          %13045 = vmatprep.mubr.bf16.mxu0 %v12449
          %13046 = vmatmul.mubr.bf16.gmra.mrb[0].mxu0 %v12448
          %v13047 = vpop.f32.mrb[0].mxu0
          %v13048 = vadd.f32 %v13008, %v13047
          %v13049 = vpop.f32.mrb[0].mxu0
          %v13050 = vpop.f32.mrb[0].mxu0
          %v13051 = vpop.f32.mrb[0].mxu0
          %13052 = vdwg.mxu0
          %13053 = vmatprep.subr.bf16.mxu0 0
          %13054 = vmatpush1.bf16.msra.mxu0 %v12877
          %13055 = vmatprep.subr.bf16.mxu0 0
          %13056 = vmatpush1.bf16.msra.mxu0 %v12878
          %13057 = vmatprep.subr.bf16.mxu0 0
          %13058 = vmatpush1.bf16.msra.mxu0 %v12879
          %13059 = vmatprep.subr.bf16.mxu0 0
          %13060 = vmatpush1.bf16.msra.mxu0 %v12880
          %13061 = vmatprep.subr.bf16.mxu0 0
          %13062 = vmatpush1.bf16.msra.mxu0 %v12881
          %13063 = vmatprep.subr.bf16.mxu0 0
          %13064 = vmatpush1.bf16.msra.mxu0 %v12882
          %13065 = vmatprep.subr.bf16.mxu0 0
          %13066 = vmatpush1.bf16.msra.mxu0 %v12883
          %13067 = vmatprep.subr.bf16.mxu0 0
          %13068 = vmatpush1.bf16.msra.mxu0 %v12884
          %13069 = vmatprep.subr.bf16.mxu0 0
          %13070 = vmatpush1.bf16.msra.mxu0 %v12885
          %13071 = vmatprep.subr.bf16.mxu0 0
          %13072 = vmatpush1.bf16.msra.mxu0 %v12886
          %13073 = vmatprep.subr.bf16.mxu0 0
          %13074 = vmatpush1.bf16.msra.mxu0 %v12887
          %13075 = vmatprep.subr.bf16.mxu0 0
          %13076 = vmatpush1.bf16.msra.mxu0 %v12888
          %13077 = vmatprep.subr.bf16.mxu0 0
          %13078 = vmatpush1.bf16.msra.mxu0 %v12889
          %13079 = vmatprep.subr.bf16.mxu0 0
          %13080 = vmatpush1.bf16.msra.mxu0 %v12890
          %13081 = vmatprep.subr.bf16.mxu0 0
          %13082 = vmatpush1.bf16.msra.mxu0 %v12891
          %13083 = vmatprep.subr.bf16.mxu0 0
          %13084 = vmatpush1.bf16.msra.mxu0 %v12892
          %13085 = vmatprep.mubr.bf16.mxu0 %v12451
          %13086 = vmatmul.mubr.bf16.gmra.mrb[0].mxu0 %v12450
          %v13087 = vpop.f32.mrb[0].mxu0
          %v13088 = vadd.f32 %v13048, %v13087
          %v13089 = vpop.f32.mrb[0].mxu0
          %v13090 = vpop.f32.mrb[0].mxu0
          %v13091 = vpop.f32.mrb[0].mxu0
          %13092 = vdwg.mxu0
          %13093 = vmatprep.subr.bf16.mxu0 0
          %13094 = vmatpush1.bf16.msra.mxu0 %v12893
          %13095 = vmatprep.subr.bf16.mxu0 0
          %13096 = vmatpush1.bf16.msra.mxu0 %v12894
          %13097 = vmatprep.subr.bf16.mxu0 0
          %13098 = vmatpush1.bf16.msra.mxu0 %v12895
          %13099 = vmatprep.subr.bf16.mxu0 0
          %13100 = vmatpush1.bf16.msra.mxu0 %v12896
          %13101 = vmatprep.subr.bf16.mxu0 0
          %13102 = vmatpush1.bf16.msra.mxu0 %v12897
          %13103 = vmatprep.subr.bf16.mxu0 0
          %13104 = vmatpush1.bf16.msra.mxu0 %v12898
          %13105 = vmatprep.subr.bf16.mxu0 0
          %13106 = vmatpush1.bf16.msra.mxu0 %v12899
          %13107 = vmatprep.subr.bf16.mxu0 0
          %13108 = vmatpush1.bf16.msra.mxu0 %v12900
          %13109 = vmatprep.subr.bf16.mxu0 0
          %13110 = vmatpush1.bf16.msra.mxu0 %v12901
          %13111 = vmatprep.subr.bf16.mxu0 0
          %13112 = vmatpush1.bf16.msra.mxu0 %v12902
          %13113 = vmatprep.subr.bf16.mxu0 0
          %13114 = vmatpush1.bf16.msra.mxu0 %v12903
          %13115 = vmatprep.subr.bf16.mxu0 0
          %13116 = vmatpush1.bf16.msra.mxu0 %v12904
          %13117 = vmatprep.subr.bf16.mxu0 0
          %13118 = vmatpush1.bf16.msra.mxu0 %v12905
          %13119 = vmatprep.subr.bf16.mxu0 0
          %13120 = vmatpush1.bf16.msra.mxu0 %v12906
          %13121 = vmatprep.subr.bf16.mxu0 0
          %13122 = vmatpush1.bf16.msra.mxu0 %v12907
          %13123 = vmatprep.subr.bf16.mxu0 0
          %13124 = vmatpush1.bf16.msra.mxu0 %v12908
          %13125 = vmatprep.mubr.bf16.mxu0 %v12453
          %13126 = vmatmul.mubr.bf16.gmra.mrb[0].mxu0 %v12452
          %v13127 = vpop.f32.mrb[0].mxu0
          %v13128 = vadd.f32 %v13088, %v13127
          %v13129 = vpop.f32.mrb[0].mxu0
          %v13130 = vpop.f32.mrb[0].mxu0
          %v13131 = vpop.f32.mrb[0].mxu0
          %13132 = vdwg.mxu0
          %v13133 = vmax.f32 %v13128, 0.0
          %13134 = vst [vmem:[#allocation18] sm:$0xff] %v13133
        $region100: #{mlp_forward.1} parent=55 // pred_fallthru
          _
        // Predicated region
        $region101: #{mlp_forward.1} parent=55 // pred_check
          %p13135 = pneg %p242
        $region102: #{mlp_forward.1} parent=55 // pred_check_branch
          %13137 = sbr.rel (%p13135) target = $region104
        $region103: #{mlp_forward.1} parent=55 // pred_region
          %s13139 = ssub.s32 128, 128
          %13140 = vsyncadd [#allocation5], %s13139
          %s13142 = sshll.u32 [#allocation18], 4
          %s13143 = int_to_ptr.vmem [resolvable:$true] %s13142
          %13145 = dma.vmem_to_hbm [thread:$0]  %s13143, 128, %s9, [#allocation5]
        $region104: #{mlp_forward.1} parent=55 // pred_fallthru
          _
        // Predicated region
        $region105: #{mlp_forward.1} parent=55 // pred_check
          %p13146 = pneg %p242
        $region106: #{mlp_forward.1} parent=55 // pred_check_branch
          %13148 = sbr.rel (%p13146) target = $region108
        $region107: #{mlp_forward.1} parent=55 // pred_region
          %13149 = dma.done [#allocation5], 128
        $region108: #{mlp_forward.1} parent=55 // pred_fallthru
          _
      $region56: #{mlp_forward.1} parent=5 // pred_fallthru
        _
      %p13150 = scmp.le.s32.totalorder 2, %s25
      // Predicated region
      $region109: #{mlp_forward.1} parent=5 // pred_check
        %p13151 = pneg %p13150
      $region110: #{mlp_forward.1} parent=5 // pred_check_branch
        %13153 = sbr.rel (%p13151) target = $region112
      $region111: #{mlp_forward.1} parent=5 // pred_region
        %s13154 = ssub.s32 %s25, 2
      $region112: #{mlp_forward.1} parent=5 // pred_fallthru
        _
    $region6: #{mlp_forward.1} parent=1 // loop_footer
      %s29 = sadd.s32 1, %s25
    $region7: #{mlp_forward.1} parent=1 // loop_footer_branch
      %24 = sbr.rel target = $region3
    $region8: #{mlp_forward.1} parent=1 // loop_exit
      _
    %13155 = vsyncpa [#allocation4], 1
    %s13156 = scalar_lea.sflag [#allocation4], 1
    %13157 = vsyncpa %s13156, 1
    %13158 = vsyncpa [#allocation7], 1
    %s13159 = scalar_lea.sflag [#allocation7], 1
    %13160 = vsyncpa %s13159, 1
    %13161 = vsyncpa [#allocation10], 1
    %13162 = vsyncpa [#allocation13], 1
    %13163 = vsyncpa [#allocation16], 1
    %13164 = vsyncpa [#allocation5], 1
    %s13165 = scalar_lea.sflag [#allocation5], 1
    %13166 = vsyncpa %s13165, 1

</llo_original>
